<compile_context>
chip_gen: v6e
topology: v6e:2x2x1
jax: 0.10.0
libtpu: 0.0.40
codegen_flags: <defaults>
</compile_context>

<pallas_src>
import functools
import math

import jax
import jax.numpy as jnp
from jax import lax
from jax.experimental import pallas as pl
from jax.experimental.pallas import tpu as pltpu


# ----------------------------- in-kernel helpers -----------------------------

def _mm(a, b):
    """MXU matmul: bf16 inputs, f32 accumulation."""
    return jnp.dot(a.astype(jnp.bfloat16), b.astype(jnp.bfloat16),
                   preferred_element_type=jnp.float32)


def _ln(x, g, b, eps):
    mu = jnp.mean(x, axis=-1, keepdims=True)
    xc = x - mu
    var = jnp.mean(xc * xc, axis=-1, keepdims=True)
    return xc * lax.rsqrt(var + eps) * g + b


# ----------------------------- Pallas kernels -----------------------------

def _encoder_branch_kernel(x_ref, embw_ref, embb_ref, pos_ref,
                           wqkv_ref, bqkv_ref, wo_ref, bo_ref,
                           ln1g_ref, ln1b_ref, w1_ref, b1_ref,
                           w2_ref, b2_ref, ln2g_ref, ln2b_ref,
                           o_ref, attn_ref, *, num_heads, eps):
    """Fused embed + full encoder stack for one batch chunk.

    grid = (batch_chunks, num_layers).  The chunk axis is 'parallel'; the
    layer axis is 'arbitrary' and the running activation is carried in the
    resident output block o_ref (its index_map is constant across layers, so
    it only flushes to HBM at the chunk boundary).
    """
    l = pl.program_id(1)
    Bc, S, D = o_ref.shape
    H = num_heads
    Dh = D // H
    scale = 1.0 / math.sqrt(Dh)

    # ---- fused embed (linear + bias + positional add) on the first layer ----
    @pl.when(l == 0)
    def _():
        xr = x_ref[...].astype(jnp.float32)              # (Bc, S, K)
        K = xr.shape[-1]
        h = _mm(xr.reshape(Bc * S, K), embw_ref[...]) + embb_ref[...]
        o_ref[...] = h.reshape(Bc, S, D) + pos_ref[0]

    x = o_ref[...].reshape(Bc * S, D)                    # layer carry, f32

    # ---- fused QKV projection over the whole folded batch ----
    qkv = _mm(x, wqkv_ref[0]) + bqkv_ref[0]              # (Bc*S, 3D)
    q = qkv[:, :D].reshape(Bc, S, D)
    k = qkv[:, D:2 * D].reshape(Bc, S, D)
    v = qkv[:, 2 * D:].reshape(Bc, S, D)

    # ---- attention: batched 3-D contractions per head, context written
    #      directly into a VMEM scratch (no concat, short live ranges) ----
    for hd in range(H):
        sl = slice(hd * Dh, (hd + 1) * Dh)
        qh = q[:, :, sl].astype(jnp.bfloat16)            # (Bc, S, Dh)
        kh = k[:, :, sl].astype(jnp.bfloat16)
        vh = v[:, :, sl].astype(jnp.bfloat16)
        s = jnp.einsum("bqd,bkd->bqk", qh, kh,
                       preferred_element_type=jnp.float32) * scale
        s = s - jnp.max(s, axis=-1, keepdims=True)
        p = jnp.exp(s)
        p = p * pl.reciprocal(jnp.sum(p, axis=-1, keepdims=True), approx=True)
        attn_ref[:, :, sl] = jnp.einsum("bqk,bkd->bqd", p.astype(jnp.bfloat16),
                                        vh, preferred_element_type=jnp.float32)

    attn = _mm(attn_ref[...].reshape(Bc * S, D), wo_ref[0]) + bo_ref[0]

    # ---- post-LN residual blocks (nn.TransformerEncoderLayer convention) ----
    x1 = _ln(x + attn, ln1g_ref[0], ln1b_ref[0], eps)
    # TODO(synk): tanh-approx GELU; exact erf-GELU / ReLU choice depends on the
    #             unspecified DualTransformerModel internals.
    f = jax.nn.gelu(_mm(x1, w1_ref[0]) + b1_ref[0])
    f = _mm(f, w2_ref[0]) + b2_ref[0]
    x2 = _ln(x1 + f, ln2g_ref[0], ln2b_ref[0], eps)

    o_ref[...] = x2.reshape(Bc, S, D)                    # resident layer carry


def _fusion_head_kernel(img_ref, ts_ref,
                        img_pw_ref, img_pb_ref, ts_pw_ref, ts_pb_ref,
                        w1i_ref, w1t_ref, b1_ref, hw_ref, hb_ref, o_ref):
    """Whole-batch fused head: mean-pool, project both branches, fusion MLP."""
    img_feat = jnp.mean(img_ref[...].astype(jnp.float32), axis=1)   # (B, Di)
    ts_feat = jnp.mean(ts_ref[...].astype(jnp.float32), axis=1)     # (B, Dt)
    img_p = _mm(img_feat, img_pw_ref[...]) + img_pb_ref[...]
    ts_p = _mm(ts_feat, ts_pw_ref[...]) + ts_pb_ref[...]
    # concat([img_p, ts_p]) @ W1  ==  img_p @ W1_img + ts_p @ W1_time
    h = jax.nn.gelu(_mm(img_p, w1i_ref[...]) + _mm(ts_p, w1t_ref[...])
                    + b1_ref[...])
    o_ref[...] = (_mm(h, hw_ref[...]) + hb_ref[...]).astype(o_ref.dtype)


# ----------------------------- kernel wrappers -----------------------------

def _default_batch_chunks(batch):
    """2-way parallel batch chunking on v7x (2 TCs/chip), fully folded otherwise."""
    if batch % 2 != 0:
        return 1
    try:
        kind = jax.devices()[0].device_kind.lower()
    except Exception:
        return 1
    return 2 if ("v7" in kind or "7x" in kind) else 1


def encoder_branch(x_raw, emb_w, emb_b, pos, bp, num_heads, eps=1e-5):
    """Fused embed + stacked encoder for one branch in a single pallas_call."""
    B, S, K = x_raw.shape
    D = emb_w.shape[1]
    L = bp["wqkv"].shape[0]
    Fd = bp["ff_w1"].shape[2]
    chunks = _default_batch_chunks(B)
    Bc = B // chunks

    per_layer_flops = B * (2 * S * D * 3 * D    # fused QKV projection
                           + 4 * S * S * D      # attention matmuls
                           + 2 * S * D * D      # output projection
                           + 4 * S * D * Fd)    # feed-forward
    cost = pl.CostEstimate(
        flops=int(L * per_layer_flops + 2 * B * S * K * D),
        transcendentals=int(B * L * (num_heads * S * S + S * Fd)),
        bytes_accessed=int(B * S * K * 4 + B * S * D * 4
                           + K * D * 2 + D * 4 + S * D * 4
                           + sum(int(v.size) * v.dtype.itemsize
                                 for v in bp.values())))

    # VMEM budget: double-buffered per-layer weights + embed + activation slab.
    # TODO(synk): if `need` approaches 64 MiB (v7x physical VMEM) at realistic
    #             dims, tile the FF matmuls along Fd instead of raising further.
    w_layer_bytes = (D * 3 * D + D * D + 2 * D * Fd) * 2 + (10 * D + 3 * Fd) * 4
    emb_bytes = K * D * 2 + D * 4 + S * D * 4
    act_bytes = Bc * S * (K + 6 * D + 2 * Fd) * 4
    need = 2 * w_layer_bytes + 2 * emb_bytes + 2 * act_bytes + (2 << 20)
    vmem_limit = None if need <= (32 << 20) else int(min(need, 64 << 20))

    def wspec(shape):
        return pl.BlockSpec((1,) + shape, lambda c, l: (l, 0, 0))

    kernel = functools.partial(_encoder_branch_kernel,
                               num_heads=num_heads, eps=eps)
    return pl.pallas_call(
        kernel,
        out_shape=jax.ShapeDtypeStruct((B, S, D), jnp.float32),
        grid=(chunks, L),
        in_specs=[
            pl.BlockSpec((Bc, S, K), lambda c, l: (c, 0, 0)),
            pl.BlockSpec((K, D), lambda c, l: (0, 0)),
            pl.BlockSpec((1, D), lambda c, l: (0, 0)),
            pl.BlockSpec((1, S, D), lambda c, l: (0, 0, 0)),
            wspec((D, 3 * D)), wspec((1, 3 * D)),
            wspec((D, D)), wspec((1, D)),
            wspec((1, D)), wspec((1, D)),
            wspec((D, Fd)), wspec((1, Fd)),
            wspec((Fd, D)), wspec((1, D)),
            wspec((1, D)), wspec((1, D)),
        ],
        out_specs=pl.BlockSpec((Bc, S, D), lambda c, l: (c, 0, 0)),
        scratch_shapes=[pltpu.VMEM((Bc, S, D), jnp.float32)],
        compiler_params=pltpu.CompilerParams(
            dimension_semantics=("parallel", "arbitrary"),
            vmem_limit_bytes=vmem_limit),
        cost_estimate=cost,
    )(x_raw, emb_w, emb_b, pos,
      bp["wqkv"], bp["bqkv"], bp["wo"], bp["bo"],
      bp["ln1_g"], bp["ln1_b"], bp["ff_w1"], bp["ff_b1"],
      bp["ff_w2"], bp["ff_b2"], bp["ln2_g"], bp["ln2_b"])


def fusion_head(img_x, ts_x, p):
    """Mean-pool, project, fuse and classify the whole batch in one call."""
    B, Si, Di = img_x.shape
    St, Dt = ts_x.shape[1], ts_x.shape[2]
    Fd = p["img_proj_w"].shape[1]
    C = p["head_w"].shape[1]
    cost = pl.CostEstimate(
        flops=int(B * (2 * Di * Fd + 2 * Dt * Fd + 4 * Fd * Fd + 2 * Fd * C)),
        transcendentals=int(B * Fd),
        bytes_accessed=int(4 * B * (Si * Di + St * Dt) + 4 * B * C
                           + 2 * (Di * Fd + Dt * Fd + 2 * Fd * Fd + Fd * C)))
    return pl.pallas_call(
        _fusion_head_kernel,
        out_shape=jax.ShapeDtypeStruct((B, C), jnp.float32),
        cost_estimate=cost,
    )(img_x, ts_x, p["img_proj_w"], p["img_proj_b"],
      p["time_proj_w"], p["time_proj_b"],
      p["fuse_w1_img"], p["fuse_w1_time"], p["fuse_b1"],
      p["head_w"], p["head_b"])


# ----------------------------- model pieces -----------------------------

def extract_patches(images, patch_size):
    """NCHW -> (B, num_patches, C*p*p), done once per forward in plain XLA."""
    B, C, H, W = images.shape
    p = patch_size
    x = images.reshape(B, C, H // p, p, W // p, p)
    x = x.transpose(0, 2, 4, 1, 3, 5)                      # B, Hp, Wp, C, p, p
    return x.reshape(B, (H // p) * (W // p), C * p * p)


def dual_transformer_forward(params, images, time_series, cfg):
    # ----- image branch (ViT-style), embed fused into the encoder kernel -----
    patches = extract_patches(images, cfg["patch_size"])
    x = encoder_branch(patches, params["img_patch_w"], params["img_patch_b"],
                       params["img_pos"], params["img_branch"],
                       cfg["img_num_heads"])

    # ----- time-series branch -----
    t = encoder_branch(time_series, params["time_in_w"], params["time_in_b"],
                       params["time_pos"], params["time_branch"],
                       cfg["time_num_heads"])

    # ----- fusion head (whole batch, one call) -----
    return fusion_head(x, t, params)


# ----------------------------- parameter init -----------------------------

def _branch_params(key, L, d, ff, std=0.02):
    ks = jax.random.split(key, 4 * L + 1)
    ki = iter(ks)

    def w(shape):
        return (jax.random.normal(next(ki), shape, jnp.float32)
                * std).astype(jnp.bfloat16)

    return {
        "wqkv": jnp.stack([w((d, 3 * d)) for _ in range(L)]),   # fused Q|K|V
        "bqkv": jnp.zeros((L, 1, 3 * d), jnp.float32),
        "wo": jnp.stack([w((d, d)) for _ in range(L)]),
        "bo": jnp.zeros((L, 1, d), jnp.float32),
        "ln1_g": jnp.ones((L, 1, d), jnp.float32),
        "ln1_b": jnp.zeros((L, 1, d), jnp.float32),
        "ff_w1": jnp.stack([w((d, ff)) for _ in range(L)]),
        "ff_b1": jnp.zeros((L, 1, ff), jnp.float32),
        "ff_w2": jnp.stack([w((ff, d)) for _ in range(L)]),
        "ff_b2": jnp.zeros((L, 1, d), jnp.float32),
        "ln2_g": jnp.ones((L, 1, d), jnp.float32),
        "ln2_b": jnp.zeros((L, 1, d), jnp.float32),
    }


def init_params(key, cfg):
    Di, Dt, Fd = cfg["img_embed_dim"], cfg["time_embed_dim"], cfg["fusion_dim"]
    num_patches = (cfg["img_size"] // cfg["patch_size"]) ** 2
    patch_dim = cfg["in_channels"] * cfg["patch_size"] ** 2
    std = 0.02
    ks = jax.random.split(key, 12)

    def w(k, shape):
        return (jax.random.normal(k, shape, jnp.float32) * std).astype(jnp.bfloat16)

    p = {}
    p["img_patch_w"] = w(ks[0], (patch_dim, Di))
    p["img_patch_b"] = jnp.zeros((1, Di), jnp.float32)
    p["img_pos"] = jax.random.normal(ks[1], (1, num_patches, Di), jnp.float32) * std
    p["img_branch"] = _branch_params(ks[2], cfg["img_num_layers"], Di,
                                     cfg["img_ff_dim"])
    p["time_in_w"] = w(ks[3], (cfg["time_input_dim"], Dt))
    p["time_in_b"] = jnp.zeros((1, Dt), jnp.float32)
    p["time_pos"] = jax.random.normal(ks[4], (1, cfg["max_len"], Dt), jnp.float32) * std
    p["time_branch"] = _branch_params(ks[5], cfg["time_num_layers"], Dt,
                                      cfg["time_ff_dim"])
    p["img_proj_w"] = w(ks[6], (Di, Fd))
    p["img_proj_b"] = jnp.zeros((1, Fd), jnp.float32)
    p["time_proj_w"] = w(ks[7], (Dt, Fd))
    p["time_proj_b"] = jnp.zeros((1, Fd), jnp.float32)
    p["fuse_w1_img"] = w(ks[8], (Fd, Fd))     # first half of (2F, F) fusion W1
    p["fuse_w1_time"] = w(ks[9], (Fd, Fd))    # second half
    p["fuse_b1"] = jnp.zeros((1, Fd), jnp.float32)
    p["head_w"] = w(ks[10], (Fd, cfg["num_classes"]))
    p["head_b"] = jnp.zeros((1, cfg["num_classes"]), jnp.float32)
    return p


# ----------------------------- main -----------------------------

if __name__ == "__main__":
    # Scaled-down config with the same geometry as the PyTorch module.
    # Sequence lengths are multiples of 8 and embed dims multiples of 128 so
    # all in-kernel (B,S,D)<->(B*S,D) reshapes are layout-trivial.
    cfg = dict(
        img_size=32, patch_size=8, in_channels=3,         # 16 patches, K=192
        time_input_dim=8, max_len=8,
        img_embed_dim=128, time_embed_dim=128, fusion_dim=128,
        img_num_heads=4, time_num_heads=4,
        img_ff_dim=512, time_ff_dim=512,
        img_num_layers=2, time_num_layers=1,
        num_classes=1,
    )

    key = jax.random.PRNGKey(0)
    kp, kimg, kts = jax.random.split(key, 3)
    params = init_params(kp, cfg)

    batch = 2
    images = jax.random.normal(
        kimg, (batch, cfg["in_channels"], cfg["img_size"], cfg["img_size"]),
        jnp.float32)
    time_series = jax.random.normal(
        kts, (batch, cfg["max_len"], cfg["time_input_dim"]), jnp.float32)

    @jax.jit
    def forward(p, im, ts):
        return dual_transformer_forward(p, im, ts, cfg)

    fused_logits = forward(params, images, time_series)
    fused_logits = jax.block_until_ready(fused_logits)
    assert fused_logits.shape == (batch, cfg["num_classes"])
    assert bool(jnp.all(jnp.isfinite(fused_logits)))
    print("KERNEL_OK")
</pallas_src>

<mosaic_0001>
module attributes {stable_mosaic.version = 11 : i64} {
  func.func @_encoder_branch_kernel(%arg0: i32, %arg1: i32, %arg2: memref<2x16x192xf32, #tpu.memory_space<vmem>>, %arg3: memref<192x128xbf16, #tpu.memory_space<vmem>>, %arg4: memref<1x128xf32, #tpu.memory_space<vmem>>, %arg5: memref<1x16x128xf32, #tpu.memory_space<vmem>>, %arg6: memref<1x128x384xbf16, #tpu.memory_space<vmem>>, %arg7: memref<1x1x384xf32, #tpu.memory_space<vmem>>, %arg8: memref<1x128x128xbf16, #tpu.memory_space<vmem>>, %arg9: memref<1x1x128xf32, #tpu.memory_space<vmem>>, %arg10: memref<1x1x128xf32, #tpu.memory_space<vmem>>, %arg11: memref<1x1x128xf32, #tpu.memory_space<vmem>>, %arg12: memref<1x128x512xbf16, #tpu.memory_space<vmem>>, %arg13: memref<1x1x512xf32, #tpu.memory_space<vmem>>, %arg14: memref<1x512x128xbf16, #tpu.memory_space<vmem>>, %arg15: memref<1x1x128xf32, #tpu.memory_space<vmem>>, %arg16: memref<1x1x128xf32, #tpu.memory_space<vmem>>, %arg17: memref<1x1x128xf32, #tpu.memory_space<vmem>>, %arg18: memref<2x16x128xf32, #tpu.memory_space<vmem>>, %arg19: memref<2x16x128xf32, #tpu.memory_space<vmem>>) attributes {dimension_semantics = [#tpu.dimension_semantics<parallel>, #tpu.dimension_semantics<arbitrary>], iteration_bounds = array<i64: 1, 2>, scalar_prefetch = 0 : i64, scratch_operands = 1 : i64, tpu.core_type = #tpu.core_type<tc>, window_params = [{transform_indices = @transform_0, window_bounds = array<i64: 2, 16, 192>}, {pipeline_mode = #tpu.pipeline_mode<synchronous>, transform_indices = @transform_1, window_bounds = array<i64: 192, 128>}, {pipeline_mode = #tpu.pipeline_mode<synchronous>, transform_indices = @transform_2, window_bounds = array<i64: 1, 128>}, {pipeline_mode = #tpu.pipeline_mode<synchronous>, transform_indices = @transform_3, window_bounds = array<i64: 1, 16, 128>}, {transform_indices = @transform_4, window_bounds = array<i64: 1, 128, 384>}, {transform_indices = @transform_5, window_bounds = array<i64: 1, 1, 384>}, {transform_indices = @transform_6, window_bounds = array<i64: 1, 128, 128>}, {transform_indices = @transform_7, window_bounds = array<i64: 1, 1, 128>}, {transform_indices = @transform_8, window_bounds = array<i64: 1, 1, 128>}, {transform_indices = @transform_9, window_bounds = array<i64: 1, 1, 128>}, {transform_indices = @transform_10, window_bounds = array<i64: 1, 128, 512>}, {transform_indices = @transform_11, window_bounds = array<i64: 1, 1, 512>}, {transform_indices = @transform_12, window_bounds = array<i64: 1, 512, 128>}, {transform_indices = @transform_13, window_bounds = array<i64: 1, 1, 128>}, {transform_indices = @transform_14, window_bounds = array<i64: 1, 1, 128>}, {transform_indices = @transform_15, window_bounds = array<i64: 1, 1, 128>}, {transform_indices = @transform_16, window_bounds = array<i64: 2, 16, 128>}]} {
    %c0_i32 = arith.constant 0 : i32
    %0 = arith.cmpi eq, %arg1, %c0_i32 : i32
    %1 = arith.extui %0 : i1 to i32
    %c0_i32_0 = arith.constant 0 : i32
    %2 = arith.cmpi ne, %1, %c0_i32_0 : i32
    scf.if %2 {
      %c0_91 = arith.constant 0 : index
      %c0_92 = arith.constant 0 : index
      %c0_93 = arith.constant 0 : index
      %198 = vector.load %arg2[%c0_91, %c0_92, %c0_93] : memref<2x16x192xf32, #tpu.memory_space<vmem>>, vector<2x16x192xf32>
      %199 = vector.shape_cast %198 : vector<2x16x192xf32> to vector<32x192xf32>
      %c0_94 = arith.constant 0 : index
      %c0_95 = arith.constant 0 : index
      %200 = vector.load %arg3[%c0_94, %c0_95] : memref<192x128xbf16, #tpu.memory_space<vmem>>, vector<192x128xbf16>
      %201 = arith.truncf %199 : vector<32x192xf32> to vector<32x192xbf16>
      %cst_96 = arith.constant dense<0.000000e+00> : vector<32x128xf32>
      %202 = tpu.matmul %201, %200, %cst_96 {dimension_numbers = #tpu.dot_dimension_numbers<[1], [0], [0], [1], [0, 0, 1, 1], [], []>} : vector<32x192xbf16>, vector<192x128xbf16>, vector<32x128xf32> -> vector<32x128xf32>
      %c0_97 = arith.constant 0 : index
      %c0_98 = arith.constant 0 : index
      %203 = vector.load %arg4[%c0_97, %c0_98] : memref<1x128xf32, #tpu.memory_space<vmem>>, vector<1x128xf32>
      %204 = vector.broadcast %203 : vector<1x128xf32> to vector<32x128xf32>
      %205 = arith.addf %202, %204 : vector<32x128xf32>
      %206 = vector.shape_cast %205 : vector<32x128xf32> to vector<2x16x128xf32>
      %c0_99 = arith.constant 0 : index
      %c0_100 = arith.constant 0 : index
      %c0_101 = arith.constant 0 : index
      %207 = vector.load %arg5[%c0_99, %c0_100, %c0_101] : memref<1x16x128xf32, #tpu.memory_space<vmem>>, vector<1x16x128xf32>
      %208 = vector.shape_cast %207 : vector<1x16x128xf32> to vector<16x128xf32>
      %209 = vector.shape_cast %208 : vector<16x128xf32> to vector<1x16x128xf32>
      %210 = vector.broadcast %209 : vector<1x16x128xf32> to vector<2x16x128xf32>
      %211 = arith.addf %206, %210 : vector<2x16x128xf32>
      %c0_102 = arith.constant 0 : index
      %c0_103 = arith.constant 0 : index
      %c0_104 = arith.constant 0 : index
      %212 = vector.load %arg18[%c0_102, %c0_103, %c0_104] : memref<2x16x128xf32, #tpu.memory_space<vmem>>, vector<2x16x128xf32>
      tpu.vector_store %arg18[%c0_102, %c0_103, %c0_104], %211 {strides = array<i32>} : memref<2x16x128xf32, #tpu.memory_space<vmem>>, vector<2x16x128xf32>,
    } else {
    }
    %c0 = arith.constant 0 : index
    %c0_1 = arith.constant 0 : index
    %c0_2 = arith.constant 0 : index
    %3 = vector.load %arg18[%c0, %c0_1, %c0_2] : memref<2x16x128xf32, #tpu.memory_space<vmem>>, vector<2x16x128xf32>
    %4 = vector.shape_cast %3 : vector<2x16x128xf32> to vector<32x128xf32>
    %c0_3 = arith.constant 0 : index
    %c0_4 = arith.constant 0 : index
    %c0_5 = arith.constant 0 : index
    %5 = vector.load %arg6[%c0_3, %c0_4, %c0_5] : memref<1x128x384xbf16, #tpu.memory_space<vmem>>, vector<1x128x384xbf16>
    %6 = vector.shape_cast %5 : vector<1x128x384xbf16> to vector<128x384xbf16>
    %7 = arith.truncf %4 : vector<32x128xf32> to vector<32x128xbf16>
    %cst = arith.constant dense<0.000000e+00> : vector<32x384xf32>
    %8 = tpu.matmul %7, %6, %cst {dimension_numbers = #tpu.dot_dimension_numbers<[1], [0], [0], [1], [0, 0, 1, 1], [], []>} : vector<32x128xbf16>, vector<128x384xbf16>, vector<32x384xf32> -> vector<32x384xf32>
    %c0_6 = arith.constant 0 : index
    %c0_7 = arith.constant 0 : index
    %c0_8 = arith.constant 0 : index
    %9 = vector.load %arg7[%c0_6, %c0_7, %c0_8] : memref<1x1x384xf32, #tpu.memory_space<vmem>>, vector<1x1x384xf32>
    %10 = vector.shape_cast %9 : vector<1x1x384xf32> to vector<1x384xf32>
    %11 = vector.broadcast %10 : vector<1x384xf32> to vector<32x384xf32>
    %12 = arith.addf %8, %11 : vector<32x384xf32>
    %13 = vector.extract_strided_slice %12 {offsets = [0, 0], sizes = [32, 128], strides = [1, 1]} : vector<32x384xf32> to vector<32x128xf32>
    %14 = vector.shape_cast %13 : vector<32x128xf32> to vector<2x16x128xf32>
    %15 = vector.extract_strided_slice %12 {offsets = [0, 128], sizes = [32, 128], strides = [1, 1]} : vector<32x384xf32> to vector<32x128xf32>
    %16 = vector.shape_cast %15 : vector<32x128xf32> to vector<2x16x128xf32>
    %17 = vector.extract_strided_slice %12 {offsets = [0, 256], sizes = [32, 128], strides = [1, 1]} : vector<32x384xf32> to vector<32x128xf32>
    %18 = vector.shape_cast %17 : vector<32x128xf32> to vector<2x16x128xf32>
    %19 = vector.extract_strided_slice %14 {offsets = [0, 0, 0], sizes = [2, 16, 32], strides = [1, 1, 1]} : vector<2x16x128xf32> to vector<2x16x32xf32>
    %20 = arith.truncf %19 : vector<2x16x32xf32> to vector<2x16x32xbf16>
    %21 = vector.extract_strided_slice %16 {offsets = [0, 0, 0], sizes = [2, 16, 32], strides = [1, 1, 1]} : vector<2x16x128xf32> to vector<2x16x32xf32>
    %22 = arith.truncf %21 : vector<2x16x32xf32> to vector<2x16x32xbf16>
    %23 = vector.extract_strided_slice %18 {offsets = [0, 0, 0], sizes = [2, 16, 32], strides = [1, 1, 1]} : vector<2x16x128xf32> to vector<2x16x32xf32>
    %24 = arith.truncf %23 : vector<2x16x32xf32> to vector<2x16x32xbf16>
    "tpu.trace_start"() <{level = 10 : i32, message = "bqd,bkd->bqk"}> : () -> ()
    %cst_9 = arith.constant dense<0.000000e+00> : vector<2x16x16xf32>
    %25 = tpu.matmul %20, %22, %cst_9 {dimension_numbers = #tpu.dot_dimension_numbers<[2], [2], [1], [1], [0, 0, 0, 1, 1, 1], [0], [0]>} : vector<2x16x32xbf16>, vector<2x16x32xbf16>, vector<2x16x16xf32> -> vector<2x16x16xf32>
    "tpu.trace_stop"() : () -> ()
    %cst_10 = arith.constant 0.176776692 : f32
    %26 = vector.broadcast %cst_10 : f32 to vector<2x16x16xf32>
    %27 = arith.mulf %25, %26 : vector<2x16x16xf32>
    %cst_11 = arith.constant dense<0xFF800000> : vector<2x16xf32>
    %28 = vector.multi_reduction <maximumf>, %27, %cst_11 [2] : vector<2x16x16xf32> to vector<2x16xf32>
    %29 = vector.shape_cast %28 : vector<2x16xf32> to vector<2x16x1xf32>
    %30 = vector.broadcast %29 : vector<2x16x1xf32> to vector<2x16x16xf32>
    %31 = arith.subf %27, %30 : vector<2x16x16xf32>
    %32 = math.exp %31 : vector<2x16x16xf32>
    %cst_12 = arith.constant dense<0.000000e+00> : vector<2x16xf32>
    %33 = vector.multi_reduction <add>, %32, %cst_12 [2] : vector<2x16x16xf32> to vector<2x16xf32>
    %34 = vector.shape_cast %33 : vector<2x16xf32> to vector<2x16x1xf32>
    %35 = tpu.reciprocal %34 {approx = true} : vector<2x16x1xf32> -> vector<2x16x1xf32>
    %36 = vector.broadcast %35 : vector<2x16x1xf32> to vector<2x16x16xf32>
    %37 = arith.mulf %32, %36 : vector<2x16x16xf32>
    %38 = arith.truncf %37 : vector<2x16x16xf32> to vector<2x16x16xbf16>
    "tpu.trace_start"() <{level = 10 : i32, message = "bqk,bkd->bqd"}> : () -> ()
    %cst_13 = arith.constant dense<0.000000e+00> : vector<2x16x32xf32>
    %39 = tpu.matmul %38, %24, %cst_13 {dimension_numbers = #tpu.dot_dimension_numbers<[2], [1], [1], [2], [0, 0, 0, 1, 1, 2], [0], [0]>} : vector<2x16x16xbf16>, vector<2x16x32xbf16>, vector<2x16x32xf32> -> vector<2x16x32xf32>
    "tpu.trace_stop"() : () -> ()
    %c0_14 = arith.constant 0 : index
    %c0_15 = arith.constant 0 : index
    %c0_16 = arith.constant 0 : index
    %40 = vector.load %arg19[%c0_14, %c0_15, %c0_16] : memref<2x16x128xf32, #tpu.memory_space<vmem>>, vector<2x16x32xf32>
    tpu.vector_store %arg19[%c0_14, %c0_15, %c0_16], %39 {strides = array<i32>} : memref<2x16x128xf32, #tpu.memory_space<vmem>>, vector<2x16x32xf32>,
    %41 = vector.extract_strided_slice %14 {offsets = [0, 0, 32], sizes = [2, 16, 32], strides = [1, 1, 1]} : vector<2x16x128xf32> to vector<2x16x32xf32>
    %42 = arith.truncf %41 : vector<2x16x32xf32> to vector<2x16x32xbf16>
    %43 = vector.extract_strided_slice %16 {offsets = [0, 0, 32], sizes = [2, 16, 32], strides = [1, 1, 1]} : vector<2x16x128xf32> to vector<2x16x32xf32>
    %44 = arith.truncf %43 : vector<2x16x32xf32> to vector<2x16x32xbf16>
    %45 = vector.extract_strided_slice %18 {offsets = [0, 0, 32], sizes = [2, 16, 32], strides = [1, 1, 1]} : vector<2x16x128xf32> to vector<2x16x32xf32>
    %46 = arith.truncf %45 : vector<2x16x32xf32> to vector<2x16x32xbf16>
    "tpu.trace_start"() <{level = 10 : i32, message = "bqd,bkd->bqk"}> : () -> ()
    %cst_17 = arith.constant dense<0.000000e+00> : vector<2x16x16xf32>
    %47 = tpu.matmul %42, %44, %cst_17 {dimension_numbers = #tpu.dot_dimension_numbers<[2], [2], [1], [1], [0, 0, 0, 1, 1, 1], [0], [0]>} : vector<2x16x32xbf16>, vector<2x16x32xbf16>, vector<2x16x16xf32> -> vector<2x16x16xf32>
    "tpu.trace_stop"() : () -> ()
    %cst_18 = arith.constant 0.176776692 : f32
    %48 = vector.broadcast %cst_18 : f32 to vector<2x16x16xf32>
    %49 = arith.mulf %47, %48 : vector<2x16x16xf32>
    %cst_19 = arith.constant dense<0xFF800000> : vector<2x16xf32>
    %50 = vector.multi_reduction <maximumf>, %49, %cst_19 [2] : vector<2x16x16xf32> to vector<2x16xf32>
    %51 = vector.shape_cast %50 : vector<2x16xf32> to vector<2x16x1xf32>
    %52 = vector.broadcast %51 : vector<2x16x1xf32> to vector<2x16x16xf32>
    %53 = arith.subf %49, %52 : vector<2x16x16xf32>
    %54 = math.exp %53 : vector<2x16x16xf32>
    %cst_20 = arith.constant dense<0.000000e+00> : vector<2x16xf32>
    %55 = vector.multi_reduction <add>, %54, %cst_20 [2] : vector<2x16x16xf32> to vector<2x16xf32>
    %56 = vector.shape_cast %55 : vector<2x16xf32> to vector<2x16x1xf32>
    %57 = tpu.reciprocal %56 {approx = true} : vector<2x16x1xf32> -> vector<2x16x1xf32>
    %58 = vector.broadcast %57 : vector<2x16x1xf32> to vector<2x16x16xf32>
    %59 = arith.mulf %54, %58 : vector<2x16x16xf32>
    %60 = arith.truncf %59 : vector<2x16x16xf32> to vector<2x16x16xbf16>
    "tpu.trace_start"() <{level = 10 : i32, message = "bqk,bkd->bqd"}> : () -> ()
    %cst_21 = arith.constant dense<0.000000e+00> : vector<2x16x32xf32>
    %61 = tpu.matmul %60, %46, %cst_21 {dimension_numbers = #tpu.dot_dimension_numbers<[2], [1], [1], [2], [0, 0, 0, 1, 1, 2], [0], [0]>} : vector<2x16x16xbf16>, vector<2x16x32xbf16>, vector<2x16x32xf32> -> vector<2x16x32xf32>
    "tpu.trace_stop"() : () -> ()
    %c0_22 = arith.constant 0 : index
    %c0_23 = arith.constant 0 : index
    %c32 = arith.constant 32 : index
    %62 = vector.load %arg19[%c0_22, %c0_23, %c32] : memref<2x16x128xf32, #tpu.memory_space<vmem>>, vector<2x16x32xf32>
    tpu.vector_store %arg19[%c0_22, %c0_23, %c32], %61 {strides = array<i32>} : memref<2x16x128xf32, #tpu.memory_space<vmem>>, vector<2x16x32xf32>,
    %63 = vector.extract_strided_slice %14 {offsets = [0, 0, 64], sizes = [2, 16, 32], strides = [1, 1, 1]} : vector<2x16x128xf32> to vector<2x16x32xf32>
    %64 = arith.truncf %63 : vector<2x16x32xf32> to vector<2x16x32xbf16>
    %65 = vector.extract_strided_slice %16 {offsets = [0, 0, 64], sizes = [2, 16, 32], strides = [1, 1, 1]} : vector<2x16x128xf32> to vector<2x16x32xf32>
    %66 = arith.truncf %65 : vector<2x16x32xf32> to vector<2x16x32xbf16>
    %67 = vector.extract_strided_slice %18 {offsets = [0, 0, 64], sizes = [2, 16, 32], strides = [1, 1, 1]} : vector<2x16x128xf32> to vector<2x16x32xf32>
    %68 = arith.truncf %67 : vector<2x16x32xf32> to vector<2x16x32xbf16>
    "tpu.trace_start"() <{level = 10 : i32, message = "bqd,bkd->bqk"}> : () -> ()
    %cst_24 = arith.constant dense<0.000000e+00> : vector<2x16x16xf32>
    %69 = tpu.matmul %64, %66, %cst_24 {dimension_numbers = #tpu.dot_dimension_numbers<[2], [2], [1], [1], [0, 0, 0, 1, 1, 1], [0], [0]>} : vector<2x16x32xbf16>, vector<2x16x32xbf16>, vector<2x16x16xf32> -> vector<2x16x16xf32>
    "tpu.trace_stop"() : () -> ()
    %cst_25 = arith.constant 0.176776692 : f32
    %70 = vector.broadcast %cst_25 : f32 to vector<2x16x16xf32>
    %71 = arith.mulf %69, %70 : vector<2x16x16xf32>
    %cst_26 = arith.constant dense<0xFF800000> : vector<2x16xf32>
    %72 = vector.multi_reduction <maximumf>, %71, %cst_26 [2] : vector<2x16x16xf32> to vector<2x16xf32>
    %73 = vector.shape_cast %72 : vector<2x16xf32> to vector<2x16x1xf32>
    %74 = vector.broadcast %73 : vector<2x16x1xf32> to vector<2x16x16xf32>
    %75 = arith.subf %71, %74 : vector<2x16x16xf32>
    %76 = math.exp %75 : vector<2x16x16xf32>
    %cst_27 = arith.constant dense<0.000000e+00> : vector<2x16xf32>
    %77 = vector.multi_reduction <add>, %76, %cst_27 [2] : vector<2x16x16xf32> to vector<2x16xf32>
    %78 = vector.shape_cast %77 : vector<2x16xf32> to vector<2x16x1xf32>
    %79 = tpu.reciprocal %78 {approx = true} : vector<2x16x1xf32> -> vector<2x16x1xf32>
    %80 = vector.broadcast %79 : vector<2x16x1xf32> to vector<2x16x16xf32>
    %81 = arith.mulf %76, %80 : vector<2x16x16xf32>
    %82 = arith.truncf %81 : vector<2x16x16xf32> to vector<2x16x16xbf16>
    "tpu.trace_start"() <{level = 10 : i32, message = "bqk,bkd->bqd"}> : () -> ()
    %cst_28 = arith.constant dense<0.000000e+00> : vector<2x16x32xf32>
    %83 = tpu.matmul %82, %68, %cst_28 {dimension_numbers = #tpu.dot_dimension_numbers<[2], [1], [1], [2], [0, 0, 0, 1, 1, 2], [0], [0]>} : vector<2x16x16xbf16>, vector<2x16x32xbf16>, vector<2x16x32xf32> -> vector<2x16x32xf32>
    "tpu.trace_stop"() : () -> ()
    %c0_29 = arith.constant 0 : index
    %c0_30 = arith.constant 0 : index
    %c64 = arith.constant 64 : index
    %84 = vector.load %arg19[%c0_29, %c0_30, %c64] : memref<2x16x128xf32, #tpu.memory_space<vmem>>, vector<2x16x32xf32>
    tpu.vector_store %arg19[%c0_29, %c0_30, %c64], %83 {strides = array<i32>} : memref<2x16x128xf32, #tpu.memory_space<vmem>>, vector<2x16x32xf32>,
    %85 = vector.extract_strided_slice %14 {offsets = [0, 0, 96], sizes = [2, 16, 32], strides = [1, 1, 1]} : vector<2x16x128xf32> to vector<2x16x32xf32>
    %86 = arith.truncf %85 : vector<2x16x32xf32> to vector<2x16x32xbf16>
    %87 = vector.extract_strided_slice %16 {offsets = [0, 0, 96], sizes = [2, 16, 32], strides = [1, 1, 1]} : vector<2x16x128xf32> to vector<2x16x32xf32>
    %88 = arith.truncf %87 : vector<2x16x32xf32> to vector<2x16x32xbf16>
    %89 = vector.extract_strided_slice %18 {offsets = [0, 0, 96], sizes = [2, 16, 32], strides = [1, 1, 1]} : vector<2x16x128xf32> to vector<2x16x32xf32>
    %90 = arith.truncf %89 : vector<2x16x32xf32> to vector<2x16x32xbf16>
    "tpu.trace_start"() <{level = 10 : i32, message = "bqd,bkd->bqk"}> : () -> ()
    %cst_31 = arith.constant dense<0.000000e+00> : vector<2x16x16xf32>
    %91 = tpu.matmul %86, %88, %cst_31 {dimension_numbers = #tpu.dot_dimension_numbers<[2], [2], [1], [1], [0, 0, 0, 1, 1, 1], [0], [0]>} : vector<2x16x32xbf16>, vector<2x16x32xbf16>, vector<2x16x16xf32> -> vector<2x16x16xf32>
    "tpu.trace_stop"() : () -> ()
    %cst_32 = arith.constant 0.176776692 : f32
    %92 = vector.broadcast %cst_32 : f32 to vector<2x16x16xf32>
    %93 = arith.mulf %91, %92 : vector<2x16x16xf32>
    %cst_33 = arith.constant dense<0xFF800000> : vector<2x16xf32>
    %94 = vector.multi_reduction <maximumf>, %93, %cst_33 [2] : vector<2x16x16xf32> to vector<2x16xf32>
    %95 = vector.shape_cast %94 : vector<2x16xf32> to vector<2x16x1xf32>
    %96 = vector.broadcast %95 : vector<2x16x1xf32> to vector<2x16x16xf32>
    %97 = arith.subf %93, %96 : vector<2x16x16xf32>
    %98 = math.exp %97 : vector<2x16x16xf32>
    %cst_34 = arith.constant dense<0.000000e+00> : vector<2x16xf32>
    %99 = vector.multi_reduction <add>, %98, %cst_34 [2] : vector<2x16x16xf32> to vector<2x16xf32>
    %100 = vector.shape_cast %99 : vector<2x16xf32> to vector<2x16x1xf32>
    %101 = tpu.reciprocal %100 {approx = true} : vector<2x16x1xf32> -> vector<2x16x1xf32>
    %102 = vector.broadcast %101 : vector<2x16x1xf32> to vector<2x16x16xf32>
    %103 = arith.mulf %98, %102 : vector<2x16x16xf32>
    %104 = arith.truncf %103 : vector<2x16x16xf32> to vector<2x16x16xbf16>
    "tpu.trace_start"() <{level = 10 : i32, message = "bqk,bkd->bqd"}> : () -> ()
    %cst_35 = arith.constant dense<0.000000e+00> : vector<2x16x32xf32>
    %105 = tpu.matmul %104, %90, %cst_35 {dimension_numbers = #tpu.dot_dimension_numbers<[2], [1], [1], [2], [0, 0, 0, 1, 1, 2], [0], [0]>} : vector<2x16x16xbf16>, vector<2x16x32xbf16>, vector<2x16x32xf32> -> vector<2x16x32xf32>
    "tpu.trace_stop"() : () -> ()
    %c0_36 = arith.constant 0 : index
    %c0_37 = arith.constant 0 : index
    %c96 = arith.constant 96 : index
    %106 = vector.load %arg19[%c0_36, %c0_37, %c96] : memref<2x16x128xf32, #tpu.memory_space<vmem>>, vector<2x16x32xf32>
    tpu.vector_store %arg19[%c0_36, %c0_37, %c96], %105 {strides = array<i32>} : memref<2x16x128xf32, #tpu.memory_space<vmem>>, vector<2x16x32xf32>,
    %c0_38 = arith.constant 0 : index
    %c0_39 = arith.constant 0 : index
    %c0_40 = arith.constant 0 : index
    %107 = vector.load %arg19[%c0_38, %c0_39, %c0_40] : memref<2x16x128xf32, #tpu.memory_space<vmem>>, vector<2x16x128xf32>
    %108 = vector.shape_cast %107 : vector<2x16x128xf32> to vector<32x128xf32>
    %c0_41 = arith.constant 0 : index
    %c0_42 = arith.constant 0 : index
    %c0_43 = arith.constant 0 : index
    %109 = vector.load %arg8[%c0_41, %c0_42, %c0_43] : memref<1x128x128xbf16, #tpu.memory_space<vmem>>, vector<1x128x128xbf16>
    %110 = vector.shape_cast %109 : vector<1x128x128xbf16> to vector<128x128xbf16>
    %111 = arith.truncf %108 : vector<32x128xf32> to vector<32x128xbf16>
    %cst_44 = arith.constant dense<0.000000e+00> : vector<32x128xf32>
    %112 = tpu.matmul %111, %110, %cst_44 {dimension_numbers = #tpu.dot_dimension_numbers<[1], [0], [0], [1], [0, 0, 1, 1], [], []>} : vector<32x128xbf16>, vector<128x128xbf16>, vector<32x128xf32> -> vector<32x128xf32>
    %c0_45 = arith.constant 0 : index
    %c0_46 = arith.constant 0 : index
    %c0_47 = arith.constant 0 : index
    %113 = vector.load %arg9[%c0_45, %c0_46, %c0_47] : memref<1x1x128xf32, #tpu.memory_space<vmem>>, vector<1x1x128xf32>
    %114 = vector.shape_cast %113 : vector<1x1x128xf32> to vector<1x128xf32>
    %115 = vector.broadcast %114 : vector<1x128xf32> to vector<32x128xf32>
    %116 = arith.addf %112, %115 : vector<32x128xf32>
    %117 = arith.addf %4, %116 : vector<32x128xf32>
    %c0_48 = arith.constant 0 : index
    %c0_49 = arith.constant 0 : index
    %c0_50 = arith.constant 0 : index
    %118 = vector.load %arg10[%c0_48, %c0_49, %c0_50] : memref<1x1x128xf32, #tpu.memory_space<vmem>>, vector<1x1x128xf32>
    %119 = vector.shape_cast %118 : vector<1x1x128xf32> to vector<1x128xf32>
    %c0_51 = arith.constant 0 : index
    %c0_52 = arith.constant 0 : index
    %c0_53 = arith.constant 0 : index
    %120 = vector.load %arg11[%c0_51, %c0_52, %c0_53] : memref<1x1x128xf32, #tpu.memory_space<vmem>>, vector<1x1x128xf32>
    %121 = vector.shape_cast %120 : vector<1x1x128xf32> to vector<1x128xf32>
    %cst_54 = arith.constant dense<0.000000e+00> : vector<32xf32>
    %122 = vector.multi_reduction <add>, %117, %cst_54 [1] : vector<32x128xf32> to vector<32xf32>
    %123 = vector.shape_cast %122 : vector<32xf32> to vector<32x1xf32>
    %cst_55 = arith.constant 1.280000e+02 : f32
    %124 = vector.broadcast %cst_55 : f32 to vector<32x1xf32>
    %125 = arith.divf %123, %124 : vector<32x1xf32>
    %126 = vector.broadcast %125 : vector<32x1xf32> to vector<32x128xf32>
    %127 = arith.subf %117, %126 : vector<32x128xf32>
    %128 = arith.mulf %127, %127 : vector<32x128xf32>
    %cst_56 = arith.constant dense<0.000000e+00> : vector<32xf32>
    %129 = vector.multi_reduction <add>, %128, %cst_56 [1] : vector<32x128xf32> to vector<32xf32>
    %130 = vector.shape_cast %129 : vector<32xf32> to vector<32x1xf32>
    %cst_57 = arith.constant 1.280000e+02 : f32
    %131 = vector.broadcast %cst_57 : f32 to vector<32x1xf32>
    %132 = arith.divf %130, %131 : vector<32x1xf32>
    %cst_58 = arith.constant 9.99999974E-6 : f32
    %133 = vector.broadcast %cst_58 : f32 to vector<32x1xf32>
    %134 = arith.addf %132, %133 : vector<32x1xf32>
    %135 = math.rsqrt %134 : vector<32x1xf32>
    %136 = vector.broadcast %135 : vector<32x1xf32> to vector<32x128xf32>
    %137 = arith.mulf %127, %136 : vector<32x128xf32>
    %138 = vector.broadcast %119 : vector<1x128xf32> to vector<32x128xf32>
    %139 = arith.mulf %137, %138 : vector<32x128xf32>
    %140 = vector.broadcast %121 : vector<1x128xf32> to vector<32x128xf32>
    %141 = arith.addf %139, %140 : vector<32x128xf32>
    %c0_59 = arith.constant 0 : index
    %c0_60 = arith.constant 0 : index
    %c0_61 = arith.constant 0 : index
    %142 = vector.load %arg12[%c0_59, %c0_60, %c0_61] : memref<1x128x512xbf16, #tpu.memory_space<vmem>>, vector<1x128x512xbf16>
    %143 = vector.shape_cast %142 : vector<1x128x512xbf16> to vector<128x512xbf16>
    %144 = arith.truncf %141 : vector<32x128xf32> to vector<32x128xbf16>
    %cst_62 = arith.constant dense<0.000000e+00> : vector<32x512xf32>
    %145 = tpu.matmul %144, %143, %cst_62 {dimension_numbers = #tpu.dot_dimension_numbers<[1], [0], [0], [1], [0, 0, 1, 1], [], []>} : vector<32x128xbf16>, vector<128x512xbf16>, vector<32x512xf32> -> vector<32x512xf32>
    %c0_63 = arith.constant 0 : index
    %c0_64 = arith.constant 0 : index
    %c0_65 = arith.constant 0 : index
    %146 = vector.load %arg13[%c0_63, %c0_64, %c0_65] : memref<1x1x512xf32, #tpu.memory_space<vmem>>, vector<1x1x512xf32>
    %147 = vector.shape_cast %146 : vector<1x1x512xf32> to vector<1x512xf32>
    %148 = vector.broadcast %147 : vector<1x512xf32> to vector<32x512xf32>
    %149 = arith.addf %145, %148 : vector<32x512xf32>
    %150 = arith.mulf %149, %149 : vector<32x512xf32>
    %151 = arith.mulf %149, %150 : vector<32x512xf32>
    %cst_66 = arith.constant 4.471500e-02 : f32
    %152 = vector.broadcast %cst_66 : f32 to vector<32x512xf32>
    %153 = arith.mulf %152, %151 : vector<32x512xf32>
    %154 = arith.addf %149, %153 : vector<32x512xf32>
    %cst_67 = arith.constant 0.797884583 : f32
    %155 = vector.broadcast %cst_67 : f32 to vector<32x512xf32>
    %156 = arith.mulf %155, %154 : vector<32x512xf32>
    %157 = math.tanh %156 : vector<32x512xf32>
    %cst_68 = arith.constant 1.000000e+00 : f32
    %158 = vector.broadcast %cst_68 : f32 to vector<32x512xf32>
    %159 = arith.addf %158, %157 : vector<32x512xf32>
    %cst_69 = arith.constant 5.000000e-01 : f32
    %160 = vector.broadcast %cst_69 : f32 to vector<32x512xf32>
    %161 = arith.mulf %160, %159 : vector<32x512xf32>
    %162 = arith.mulf %149, %161 : vector<32x512xf32>
    %c0_70 = arith.constant 0 : index
    %c0_71 = arith.constant 0 : index
    %c0_72 = arith.constant 0 : index
    %163 = vector.load %arg14[%c0_70, %c0_71, %c0_72] : memref<1x512x128xbf16, #tpu.memory_space<vmem>>, vector<1x512x128xbf16>
    %164 = vector.shape_cast %163 : vector<1x512x128xbf16> to vector<512x128xbf16>
    %165 = arith.truncf %162 : vector<32x512xf32> to vector<32x512xbf16>
    %cst_73 = arith.constant dense<0.000000e+00> : vector<32x128xf32>
    %166 = tpu.matmul %165, %164, %cst_73 {dimension_numbers = #tpu.dot_dimension_numbers<[1], [0], [0], [1], [0, 0, 1, 1], [], []>} : vector<32x512xbf16>, vector<512x128xbf16>, vector<32x128xf32> -> vector<32x128xf32>
    %c0_74 = arith.constant 0 : index
    %c0_75 = arith.constant 0 : index
    %c0_76 = arith.constant 0 : index
    %167 = vector.load %arg15[%c0_74, %c0_75, %c0_76] : memref<1x1x128xf32, #tpu.memory_space<vmem>>, vector<1x1x128xf32>
    %168 = vector.shape_cast %167 : vector<1x1x128xf32> to vector<1x128xf32>
    %169 = vector.broadcast %168 : vector<1x128xf32> to vector<32x128xf32>
    %170 = arith.addf %166, %169 : vector<32x128xf32>
    %171 = arith.addf %141, %170 : vector<32x128xf32>
    %c0_77 = arith.constant 0 : index
    %c0_78 = arith.constant 0 : index
    %c0_79 = arith.constant 0 : index
    %172 = vector.load %arg16[%c0_77, %c0_78, %c0_79] : memref<1x1x128xf32, #tpu.memory_space<vmem>>, vector<1x1x128xf32>
    %173 = vector.shape_cast %172 : vector<1x1x128xf32> to vector<1x128xf32>
    %c0_80 = arith.constant 0 : index
    %c0_81 = arith.constant 0 : index
    %c0_82 = arith.constant 0 : index
    %174 = vector.load %arg17[%c0_80, %c0_81, %c0_82] : memref<1x1x128xf32, #tpu.memory_space<vmem>>, vector<1x1x128xf32>
    %175 = vector.shape_cast %174 : vector<1x1x128xf32> to vector<1x128xf32>
    %cst_83 = arith.constant dense<0.000000e+00> : vector<32xf32>
    %176 = vector.multi_reduction <add>, %171, %cst_83 [1] : vector<32x128xf32> to vector<32xf32>
    %177 = vector.shape_cast %176 : vector<32xf32> to vector<32x1xf32>
    %cst_84 = arith.constant 1.280000e+02 : f32
    %178 = vector.broadcast %cst_84 : f32 to vector<32x1xf32>
    %179 = arith.divf %177, %178 : vector<32x1xf32>
    %180 = vector.broadcast %179 : vector<32x1xf32> to vector<32x128xf32>
    %181 = arith.subf %171, %180 : vector<32x128xf32>
    %182 = arith.mulf %181, %181 : vector<32x128xf32>
    %cst_85 = arith.constant dense<0.000000e+00> : vector<32xf32>
    %183 = vector.multi_reduction <add>, %182, %cst_85 [1] : vector<32x128xf32> to vector<32xf32>
    %184 = vector.shape_cast %183 : vector<32xf32> to vector<32x1xf32>
    %cst_86 = arith.constant 1.280000e+02 : f32
    %185 = vector.broadcast %cst_86 : f32 to vector<32x1xf32>
    %186 = arith.divf %184, %185 : vector<32x1xf32>
    %cst_87 = arith.constant 9.99999974E-6 : f32
    %187 = vector.broadcast %cst_87 : f32 to vector<32x1xf32>
    %188 = arith.addf %186, %187 : vector<32x1xf32>
    %189 = math.rsqrt %188 : vector<32x1xf32>
    %190 = vector.broadcast %189 : vector<32x1xf32> to vector<32x128xf32>
    %191 = arith.mulf %181, %190 : vector<32x128xf32>
    %192 = vector.broadcast %173 : vector<1x128xf32> to vector<32x128xf32>
    %193 = arith.mulf %191, %192 : vector<32x128xf32>
    %194 = vector.broadcast %175 : vector<1x128xf32> to vector<32x128xf32>
    %195 = arith.addf %193, %194 : vector<32x128xf32>
    %196 = vector.shape_cast %195 : vector<32x128xf32> to vector<2x16x128xf32>
    %c0_88 = arith.constant 0 : index
    %c0_89 = arith.constant 0 : index
    %c0_90 = arith.constant 0 : index
    %197 = vector.load %arg18[%c0_88, %c0_89, %c0_90] : memref<2x16x128xf32, #tpu.memory_space<vmem>>, vector<2x16x128xf32>
    tpu.vector_store %arg18[%c0_88, %c0_89, %c0_90], %196 {strides = array<i32>} : memref<2x16x128xf32, #tpu.memory_space<vmem>>, vector<2x16x128xf32>,
    return
  }
  func.func @transform_0(%arg0: i32, %arg1: i32) -> (i32, i32, i32) {
    %c0_i32 = arith.constant 0 : i32
    %c0_i32_0 = arith.constant 0 : i32
    %c0_i32_1 = arith.constant 0 : i32
    return %arg0, %c0_i32, %c0_i32_0 : i32, i32, i32
  }
  func.func @transform_1(%arg0: i32, %arg1: i32) -> (i32, i32) {
    %c0_i32 = arith.constant 0 : i32
    %c0_i32_0 = arith.constant 0 : i32
    %c0_i32_1 = arith.constant 0 : i32
    return %c0_i32, %c0_i32_0 : i32, i32
  }
  func.func @transform_2(%arg0: i32, %arg1: i32) -> (i32, i32) {
    %c0_i32 = arith.constant 0 : i32
    %c0_i32_0 = arith.constant 0 : i32
    %c0_i32_1 = arith.constant 0 : i32
    return %c0_i32, %c0_i32_0 : i32, i32
  }
  func.func @transform_3(%arg0: i32, %arg1: i32) -> (i32, i32, i32) {
    %c0_i32 = arith.constant 0 : i32
    %c0_i32_0 = arith.constant 0 : i32
    %c0_i32_1 = arith.constant 0 : i32
    %c0_i32_2 = arith.constant 0 : i32
    return %c0_i32, %c0_i32_0, %c0_i32_1 : i32, i32, i32
  }
  func.func @transform_4(%arg0: i32, %arg1: i32) -> (i32, i32, i32) {
    %c0_i32 = arith.constant 0 : i32
    %c0_i32_0 = arith.constant 0 : i32
    %c0_i32_1 = arith.constant 0 : i32
    return %arg1, %c0_i32, %c0_i32_0 : i32, i32, i32
  }
  func.func @transform_5(%arg0: i32, %arg1: i32) -> (i32, i32, i32) {
    %c0_i32 = arith.constant 0 : i32
    %c0_i32_0 = arith.constant 0 : i32
    %c0_i32_1 = arith.constant 0 : i32
    return %arg1, %c0_i32, %c0_i32_0 : i32, i32, i32
  }
  func.func @transform_6(%arg0: i32, %arg1: i32) -> (i32, i32, i32) {
    %c0_i32 = arith.constant 0 : i32
    %c0_i32_0 = arith.constant 0 : i32
    %c0_i32_1 = arith.constant 0 : i32
    return %arg1, %c0_i32, %c0_i32_0 : i32, i32, i32
  }
  func.func @transform_7(%arg0: i32, %arg1: i32) -> (i32, i32, i32) {
    %c0_i32 = arith.constant 0 : i32
    %c0_i32_0 = arith.constant 0 : i32
    %c0_i32_1 = arith.constant 0 : i32
    return %arg1, %c0_i32, %c0_i32_0 : i32, i32, i32
  }
  func.func @transform_8(%arg0: i32, %arg1: i32) -> (i32, i32, i32) {
    %c0_i32 = arith.constant 0 : i32
    %c0_i32_0 = arith.constant 0 : i32
    %c0_i32_1 = arith.constant 0 : i32
    return %arg1, %c0_i32, %c0_i32_0 : i32, i32, i32
  }
  func.func @transform_9(%arg0: i32, %arg1: i32) -> (i32, i32, i32) {
    %c0_i32 = arith.constant 0 : i32
    %c0_i32_0 = arith.constant 0 : i32
    %c0_i32_1 = arith.constant 0 : i32
    return %arg1, %c0_i32, %c0_i32_0 : i32, i32, i32
  }
  func.func @transform_10(%arg0: i32, %arg1: i32) -> (i32, i32, i32) {
    %c0_i32 = arith.constant 0 : i32
    %c0_i32_0 = arith.constant 0 : i32
    %c0_i32_1 = arith.constant 0 : i32
    return %arg1, %c0_i32, %c0_i32_0 : i32, i32, i32
  }
  func.func @transform_11(%arg0: i32, %arg1: i32) -> (i32, i32, i32) {
    %c0_i32 = arith.constant 0 : i32
    %c0_i32_0 = arith.constant 0 : i32
    %c0_i32_1 = arith.constant 0 : i32
    return %arg1, %c0_i32, %c0_i32_0 : i32, i32, i32
  }
  func.func @transform_12(%arg0: i32, %arg1: i32) -> (i32, i32, i32) {
    %c0_i32 = arith.constant 0 : i32
    %c0_i32_0 = arith.constant 0 : i32
    %c0_i32_1 = arith.constant 0 : i32
    return %arg1, %c0_i32, %c0_i32_0 : i32, i32, i32
  }
  func.func @transform_13(%arg0: i32, %arg1: i32) -> (i32, i32, i32) {
    %c0_i32 = arith.constant 0 : i32
    %c0_i32_0 = arith.constant 0 : i32
    %c0_i32_1 = arith.constant 0 : i32
    return %arg1, %c0_i32, %c0_i32_0 : i32, i32, i32
  }
  func.func @transform_14(%arg0: i32, %arg1: i32) -> (i32, i32, i32) {
    %c0_i32 = arith.constant 0 : i32
    %c0_i32_0 = arith.constant 0 : i32
    %c0_i32_1 = arith.constant 0 : i32
    return %arg1, %c0_i32, %c0_i32_0 : i32, i32, i32
  }
  func.func @transform_15(%arg0: i32, %arg1: i32) -> (i32, i32, i32) {
    %c0_i32 = arith.constant 0 : i32
    %c0_i32_0 = arith.constant 0 : i32
    %c0_i32_1 = arith.constant 0 : i32
    return %arg1, %c0_i32, %c0_i32_0 : i32, i32, i32
  }
  func.func @transform_16(%arg0: i32, %arg1: i32) -> (i32, i32, i32) {
    %c0_i32 = arith.constant 0 : i32
    %c0_i32_0 = arith.constant 0 : i32
    %c0_i32_1 = arith.constant 0 : i32
    return %arg0, %c0_i32, %c0_i32_0 : i32, i32, i32
  }
}

module attributes {stable_mosaic.version = 11 : i64} {
  func.func @_fusion_head_kernel(%arg0: memref<2x16x128xf32, #tpu.memory_space<vmem>>, %arg1: memref<2x8x128xf32, #tpu.memory_space<vmem>>, %arg2: memref<128x128xbf16, #tpu.memory_space<vmem>>, %arg3: memref<1x128xf32, #tpu.memory_space<vmem>>, %arg4: memref<128x128xbf16, #tpu.memory_space<vmem>>, %arg5: memref<1x128xf32, #tpu.memory_space<vmem>>, %arg6: memref<128x128xbf16, #tpu.memory_space<vmem>>, %arg7: memref<128x128xbf16, #tpu.memory_space<vmem>>, %arg8: memref<1x128xf32, #tpu.memory_space<vmem>>, %arg9: memref<128x1xbf16, #tpu.memory_space<vmem>>, %arg10: memref<1x1xf32, #tpu.memory_space<vmem>>, %arg11: memref<2x1xf32, #tpu.memory_space<vmem>>) attributes {dimension_semantics = [], scalar_prefetch = 0 : i64, scratch_operands = 0 : i64, tpu.core_type = #tpu.core_type<tc>} {
    %c0 = arith.constant 0 : index
    %c0_0 = arith.constant 0 : index
    %c0_1 = arith.constant 0 : index
    %0 = vector.load %arg0[%c0, %c0_0, %c0_1] : memref<2x16x128xf32, #tpu.memory_space<vmem>>, vector<2x16x128xf32>
    %cst = arith.constant dense<0.000000e+00> : vector<2x128xf32>
    %1 = vector.multi_reduction <add>, %0, %cst [1] : vector<2x16x128xf32> to vector<2x128xf32>
    %cst_2 = arith.constant 1.600000e+01 : f32
    %2 = vector.broadcast %cst_2 : f32 to vector<2x128xf32>
    %3 = arith.divf %1, %2 : vector<2x128xf32>
    %c0_3 = arith.constant 0 : index
    %c0_4 = arith.constant 0 : index
    %c0_5 = arith.constant 0 : index
    %4 = vector.load %arg1[%c0_3, %c0_4, %c0_5] : memref<2x8x128xf32, #tpu.memory_space<vmem>>, vector<2x8x128xf32>
    %cst_6 = arith.constant dense<0.000000e+00> : vector<2x128xf32>
    %5 = vector.multi_reduction <add>, %4, %cst_6 [1] : vector<2x8x128xf32> to vector<2x128xf32>
    %cst_7 = arith.constant 8.000000e+00 : f32
    %6 = vector.broadcast %cst_7 : f32 to vector<2x128xf32>
    %7 = arith.divf %5, %6 : vector<2x128xf32>
    %c0_8 = arith.constant 0 : index
    %c0_9 = arith.constant 0 : index
    %8 = vector.load %arg2[%c0_8, %c0_9] : memref<128x128xbf16, #tpu.memory_space<vmem>>, vector<128x128xbf16>
    %9 = arith.truncf %3 : vector<2x128xf32> to vector<2x128xbf16>
    %cst_10 = arith.constant dense<0.000000e+00> : vector<2x128xf32>
    %10 = tpu.matmul %9, %8, %cst_10 {dimension_numbers = #tpu.dot_dimension_numbers<[1], [0], [0], [1], [0, 0, 1, 1], [], []>} : vector<2x128xbf16>, vector<128x128xbf16>, vector<2x128xf32> -> vector<2x128xf32>
    %c0_11 = arith.constant 0 : index
    %c0_12 = arith.constant 0 : index
    %11 = vector.load %arg3[%c0_11, %c0_12] : memref<1x128xf32, #tpu.memory_space<vmem>>, vector<1x128xf32>
    %12 = vector.broadcast %11 : vector<1x128xf32> to vector<2x128xf32>
    %13 = arith.addf %10, %12 : vector<2x128xf32>
    %c0_13 = arith.constant 0 : index
    %c0_14 = arith.constant 0 : index
    %14 = vector.load %arg4[%c0_13, %c0_14] : memref<128x128xbf16, #tpu.memory_space<vmem>>, vector<128x128xbf16>
    %15 = arith.truncf %7 : vector<2x128xf32> to vector<2x128xbf16>
    %cst_15 = arith.constant dense<0.000000e+00> : vector<2x128xf32>
    %16 = tpu.matmul %15, %14, %cst_15 {dimension_numbers = #tpu.dot_dimension_numbers<[1], [0], [0], [1], [0, 0, 1, 1], [], []>} : vector<2x128xbf16>, vector<128x128xbf16>, vector<2x128xf32> -> vector<2x128xf32>
    %c0_16 = arith.constant 0 : index
    %c0_17 = arith.constant 0 : index
    %17 = vector.load %arg5[%c0_16, %c0_17] : memref<1x128xf32, #tpu.memory_space<vmem>>, vector<1x128xf32>
    %18 = vector.broadcast %17 : vector<1x128xf32> to vector<2x128xf32>
    %19 = arith.addf %16, %18 : vector<2x128xf32>
    %c0_18 = arith.constant 0 : index
    %c0_19 = arith.constant 0 : index
    %20 = vector.load %arg6[%c0_18, %c0_19] : memref<128x128xbf16, #tpu.memory_space<vmem>>, vector<128x128xbf16>
    %21 = arith.truncf %13 : vector<2x128xf32> to vector<2x128xbf16>
    %cst_20 = arith.constant dense<0.000000e+00> : vector<2x128xf32>
    %22 = tpu.matmul %21, %20, %cst_20 {dimension_numbers = #tpu.dot_dimension_numbers<[1], [0], [0], [1], [0, 0, 1, 1], [], []>} : vector<2x128xbf16>, vector<128x128xbf16>, vector<2x128xf32> -> vector<2x128xf32>
    %c0_21 = arith.constant 0 : index
    %c0_22 = arith.constant 0 : index
    %23 = vector.load %arg7[%c0_21, %c0_22] : memref<128x128xbf16, #tpu.memory_space<vmem>>, vector<128x128xbf16>
    %24 = arith.truncf %19 : vector<2x128xf32> to vector<2x128xbf16>
    %cst_23 = arith.constant dense<0.000000e+00> : vector<2x128xf32>
    %25 = tpu.matmul %24, %23, %cst_23 {dimension_numbers = #tpu.dot_dimension_numbers<[1], [0], [0], [1], [0, 0, 1, 1], [], []>} : vector<2x128xbf16>, vector<128x128xbf16>, vector<2x128xf32> -> vector<2x128xf32>
    %26 = arith.addf %22, %25 : vector<2x128xf32>
    %c0_24 = arith.constant 0 : index
    %c0_25 = arith.constant 0 : index
    %27 = vector.load %arg8[%c0_24, %c0_25] : memref<1x128xf32, #tpu.memory_space<vmem>>, vector<1x128xf32>
    %28 = vector.broadcast %27 : vector<1x128xf32> to vector<2x128xf32>
    %29 = arith.addf %26, %28 : vector<2x128xf32>
    %30 = arith.mulf %29, %29 : vector<2x128xf32>
    %31 = arith.mulf %29, %30 : vector<2x128xf32>
    %cst_26 = arith.constant 4.471500e-02 : f32
    %32 = vector.broadcast %cst_26 : f32 to vector<2x128xf32>
    %33 = arith.mulf %32, %31 : vector<2x128xf32>
    %34 = arith.addf %29, %33 : vector<2x128xf32>
    %cst_27 = arith.constant 0.797884583 : f32
    %35 = vector.broadcast %cst_27 : f32 to vector<2x128xf32>
    %36 = arith.mulf %35, %34 : vector<2x128xf32>
    %37 = math.tanh %36 : vector<2x128xf32>
    %cst_28 = arith.constant 1.000000e+00 : f32
    %38 = vector.broadcast %cst_28 : f32 to vector<2x128xf32>
    %39 = arith.addf %38, %37 : vector<2x128xf32>
    %cst_29 = arith.constant 5.000000e-01 : f32
    %40 = vector.broadcast %cst_29 : f32 to vector<2x128xf32>
    %41 = arith.mulf %40, %39 : vector<2x128xf32>
    %42 = arith.mulf %29, %41 : vector<2x128xf32>
    %c0_30 = arith.constant 0 : index
    %c0_31 = arith.constant 0 : index
    %43 = vector.load %arg9[%c0_30, %c0_31] : memref<128x1xbf16, #tpu.memory_space<vmem>>, vector<128x1xbf16>
    %44 = arith.truncf %42 : vector<2x128xf32> to vector<2x128xbf16>
    %cst_32 = arith.constant dense<0.000000e+00> : vector<2x1xf32>
    %45 = tpu.matmul %44, %43, %cst_32 {dimension_numbers = #tpu.dot_dimension_numbers<[1], [0], [0], [1], [0, 0, 1, 1], [], []>} : vector<2x128xbf16>, vector<128x1xbf16>, vector<2x1xf32> -> vector<2x1xf32>
    %c0_33 = arith.constant 0 : index
    %c0_34 = arith.constant 0 : index
    %46 = vector.load %arg10[%c0_33, %c0_34] : memref<1x1xf32, #tpu.memory_space<vmem>>, vector<1x1xf32>
    %47 = vector.broadcast %46 : vector<1x1xf32> to vector<2x1xf32>
    %48 = arith.addf %45, %47 : vector<2x1xf32>
    %c0_35 = arith.constant 0 : index
    %c0_36 = arith.constant 0 : index
    %49 = vector.load %arg11[%c0_35, %c0_36] : memref<2x1xf32, #tpu.memory_space<vmem>>, vector<2x1xf32>
    tpu.vector_store %arg11[%c0_35, %c0_36], %48 {strides = array<i32>} : memref<2x1xf32, #tpu.memory_space<vmem>>, vector<2x1xf32>,
    return
  }
}

module attributes {stable_mosaic.version = 11 : i64} {
  func.func @_encoder_branch_kernel(%arg0: i32, %arg1: i32, %arg2: memref<2x8x8xf32, #tpu.memory_space<vmem>>, %arg3: memref<8x128xbf16, #tpu.memory_space<vmem>>, %arg4: memref<1x128xf32, #tpu.memory_space<vmem>>, %arg5: memref<1x8x128xf32, #tpu.memory_space<vmem>>, %arg6: memref<1x128x384xbf16, #tpu.memory_space<vmem>>, %arg7: memref<1x1x384xf32, #tpu.memory_space<vmem>>, %arg8: memref<1x128x128xbf16, #tpu.memory_space<vmem>>, %arg9: memref<1x1x128xf32, #tpu.memory_space<vmem>>, %arg10: memref<1x1x128xf32, #tpu.memory_space<vmem>>, %arg11: memref<1x1x128xf32, #tpu.memory_space<vmem>>, %arg12: memref<1x128x512xbf16, #tpu.memory_space<vmem>>, %arg13: memref<1x1x512xf32, #tpu.memory_space<vmem>>, %arg14: memref<1x512x128xbf16, #tpu.memory_space<vmem>>, %arg15: memref<1x1x128xf32, #tpu.memory_space<vmem>>, %arg16: memref<1x1x128xf32, #tpu.memory_space<vmem>>, %arg17: memref<1x1x128xf32, #tpu.memory_space<vmem>>, %arg18: memref<2x8x128xf32, #tpu.memory_space<vmem>>, %arg19: memref<2x8x128xf32, #tpu.memory_space<vmem>>) attributes {dimension_semantics = [#tpu.dimension_semantics<parallel>, #tpu.dimension_semantics<arbitrary>], iteration_bounds = array<i64: 1, 1>, scalar_prefetch = 0 : i64, scratch_operands = 1 : i64, tpu.core_type = #tpu.core_type<tc>, window_params = [{transform_indices = @transform_0, window_bounds = array<i64: 2, 8, 8>}, {pipeline_mode = #tpu.pipeline_mode<synchronous>, transform_indices = @transform_1, window_bounds = array<i64: 8, 128>}, {pipeline_mode = #tpu.pipeline_mode<synchronous>, transform_indices = @transform_2, window_bounds = array<i64: 1, 128>}, {pipeline_mode = #tpu.pipeline_mode<synchronous>, transform_indices = @transform_3, window_bounds = array<i64: 1, 8, 128>}, {transform_indices = @transform_4, window_bounds = array<i64: 1, 128, 384>}, {transform_indices = @transform_5, window_bounds = array<i64: 1, 1, 384>}, {transform_indices = @transform_6, window_bounds = array<i64: 1, 128, 128>}, {transform_indices = @transform_7, window_bounds = array<i64: 1, 1, 128>}, {transform_indices = @transform_8, window_bounds = array<i64: 1, 1, 128>}, {transform_indices = @transform_9, window_bounds = array<i64: 1, 1, 128>}, {transform_indices = @transform_10, window_bounds = array<i64: 1, 128, 512>}, {transform_indices = @transform_11, window_bounds = array<i64: 1, 1, 512>}, {transform_indices = @transform_12, window_bounds = array<i64: 1, 512, 128>}, {transform_indices = @transform_13, window_bounds = array<i64: 1, 1, 128>}, {transform_indices = @transform_14, window_bounds = array<i64: 1, 1, 128>}, {transform_indices = @transform_15, window_bounds = array<i64: 1, 1, 128>}, {transform_indices = @transform_16, window_bounds = array<i64: 2, 8, 128>}]} {
    %c0_i32 = arith.constant 0 : i32
    %0 = arith.cmpi eq, %arg1, %c0_i32 : i32
    %1 = arith.extui %0 : i1 to i32
    %c0_i32_0 = arith.constant 0 : i32
    %2 = arith.cmpi ne, %1, %c0_i32_0 : i32
    scf.if %2 {
      %c0_91 = arith.constant 0 : index
      %c0_92 = arith.constant 0 : index
      %c0_93 = arith.constant 0 : index
      %198 = vector.load %arg2[%c0_91, %c0_92, %c0_93] : memref<2x8x8xf32, #tpu.memory_space<vmem>>, vector<2x8x8xf32>
      %199 = vector.shape_cast %198 : vector<2x8x8xf32> to vector<16x8xf32>
      %c0_94 = arith.constant 0 : index
      %c0_95 = arith.constant 0 : index
      %200 = vector.load %arg3[%c0_94, %c0_95] : memref<8x128xbf16, #tpu.memory_space<vmem>>, vector<8x128xbf16>
      %201 = arith.truncf %199 : vector<16x8xf32> to vector<16x8xbf16>
      %cst_96 = arith.constant dense<0.000000e+00> : vector<16x128xf32>
      %202 = tpu.matmul %201, %200, %cst_96 {dimension_numbers = #tpu.dot_dimension_numbers<[1], [0], [0], [1], [0, 0, 1, 1], [], []>} : vector<16x8xbf16>, vector<8x128xbf16>, vector<16x128xf32> -> vector<16x128xf32>
      %c0_97 = arith.constant 0 : index
      %c0_98 = arith.constant 0 : index
      %203 = vector.load %arg4[%c0_97, %c0_98] : memref<1x128xf32, #tpu.memory_space<vmem>>, vector<1x128xf32>
      %204 = vector.broadcast %203 : vector<1x128xf32> to vector<16x128xf32>
      %205 = arith.addf %202, %204 : vector<16x128xf32>
      %206 = vector.shape_cast %205 : vector<16x128xf32> to vector<2x8x128xf32>
      %c0_99 = arith.constant 0 : index
      %c0_100 = arith.constant 0 : index
      %c0_101 = arith.constant 0 : index
      %207 = vector.load %arg5[%c0_99, %c0_100, %c0_101] : memref<1x8x128xf32, #tpu.memory_space<vmem>>, vector<1x8x128xf32>
      %208 = vector.shape_cast %207 : vector<1x8x128xf32> to vector<8x128xf32>
      %209 = vector.shape_cast %208 : vector<8x128xf32> to vector<1x8x128xf32>
      %210 = vector.broadcast %209 : vector<1x8x128xf32> to vector<2x8x128xf32>
      %211 = arith.addf %206, %210 : vector<2x8x128xf32>
      %c0_102 = arith.constant 0 : index
      %c0_103 = arith.constant 0 : index
      %c0_104 = arith.constant 0 : index
      %212 = vector.load %arg18[%c0_102, %c0_103, %c0_104] : memref<2x8x128xf32, #tpu.memory_space<vmem>>, vector<2x8x128xf32>
      tpu.vector_store %arg18[%c0_102, %c0_103, %c0_104], %211 {strides = array<i32>} : memref<2x8x128xf32, #tpu.memory_space<vmem>>, vector<2x8x128xf32>,
    } else {
    }
    %c0 = arith.constant 0 : index
    %c0_1 = arith.constant 0 : index
    %c0_2 = arith.constant 0 : index
    %3 = vector.load %arg18[%c0, %c0_1, %c0_2] : memref<2x8x128xf32, #tpu.memory_space<vmem>>, vector<2x8x128xf32>
    %4 = vector.shape_cast %3 : vector<2x8x128xf32> to vector<16x128xf32>
    %c0_3 = arith.constant 0 : index
    %c0_4 = arith.constant 0 : index
    %c0_5 = arith.constant 0 : index
    %5 = vector.load %arg6[%c0_3, %c0_4, %c0_5] : memref<1x128x384xbf16, #tpu.memory_space<vmem>>, vector<1x128x384xbf16>
    %6 = vector.shape_cast %5 : vector<1x128x384xbf16> to vector<128x384xbf16>
    %7 = arith.truncf %4 : vector<16x128xf32> to vector<16x128xbf16>
    %cst = arith.constant dense<0.000000e+00> : vector<16x384xf32>
    %8 = tpu.matmul %7, %6, %cst {dimension_numbers = #tpu.dot_dimension_numbers<[1], [0], [0], [1], [0, 0, 1, 1], [], []>} : vector<16x128xbf16>, vector<128x384xbf16>, vector<16x384xf32> -> vector<16x384xf32>
    %c0_6 = arith.constant 0 : index
    %c0_7 = arith.constant 0 : index
    %c0_8 = arith.constant 0 : index
    %9 = vector.load %arg7[%c0_6, %c0_7, %c0_8] : memref<1x1x384xf32, #tpu.memory_space<vmem>>, vector<1x1x384xf32>
    %10 = vector.shape_cast %9 : vector<1x1x384xf32> to vector<1x384xf32>
    %11 = vector.broadcast %10 : vector<1x384xf32> to vector<16x384xf32>
    %12 = arith.addf %8, %11 : vector<16x384xf32>
    %13 = vector.extract_strided_slice %12 {offsets = [0, 0], sizes = [16, 128], strides = [1, 1]} : vector<16x384xf32> to vector<16x128xf32>
    %14 = vector.shape_cast %13 : vector<16x128xf32> to vector<2x8x128xf32>
    %15 = vector.extract_strided_slice %12 {offsets = [0, 128], sizes = [16, 128], strides = [1, 1]} : vector<16x384xf32> to vector<16x128xf32>
    %16 = vector.shape_cast %15 : vector<16x128xf32> to vector<2x8x128xf32>
    %17 = vector.extract_strided_slice %12 {offsets = [0, 256], sizes = [16, 128], strides = [1, 1]} : vector<16x384xf32> to vector<16x128xf32>
    %18 = vector.shape_cast %17 : vector<16x128xf32> to vector<2x8x128xf32>
    %19 = vector.extract_strided_slice %14 {offsets = [0, 0, 0], sizes = [2, 8, 32], strides = [1, 1, 1]} : vector<2x8x128xf32> to vector<2x8x32xf32>
    %20 = arith.truncf %19 : vector<2x8x32xf32> to vector<2x8x32xbf16>
    %21 = vector.extract_strided_slice %16 {offsets = [0, 0, 0], sizes = [2, 8, 32], strides = [1, 1, 1]} : vector<2x8x128xf32> to vector<2x8x32xf32>
    %22 = arith.truncf %21 : vector<2x8x32xf32> to vector<2x8x32xbf16>
    %23 = vector.extract_strided_slice %18 {offsets = [0, 0, 0], sizes = [2, 8, 32], strides = [1, 1, 1]} : vector<2x8x128xf32> to vector<2x8x32xf32>
    %24 = arith.truncf %23 : vector<2x8x32xf32> to vector<2x8x32xbf16>
    "tpu.trace_start"() <{level = 10 : i32, message = "bqd,bkd->bqk"}> : () -> ()
    %cst_9 = arith.constant dense<0.000000e+00> : vector<2x8x8xf32>
    %25 = tpu.matmul %20, %22, %cst_9 {dimension_numbers = #tpu.dot_dimension_numbers<[2], [2], [1], [1], [0, 0, 0, 1, 1, 1], [0], [0]>} : vector<2x8x32xbf16>, vector<2x8x32xbf16>, vector<2x8x8xf32> -> vector<2x8x8xf32>
    "tpu.trace_stop"() : () -> ()
    %cst_10 = arith.constant 0.176776692 : f32
    %26 = vector.broadcast %cst_10 : f32 to vector<2x8x8xf32>
    %27 = arith.mulf %25, %26 : vector<2x8x8xf32>
    %cst_11 = arith.constant dense<0xFF800000> : vector<2x8xf32>
    %28 = vector.multi_reduction <maximumf>, %27, %cst_11 [2] : vector<2x8x8xf32> to vector<2x8xf32>
    %29 = vector.shape_cast %28 : vector<2x8xf32> to vector<2x8x1xf32>
    %30 = vector.broadcast %29 : vector<2x8x1xf32> to vector<2x8x8xf32>
    %31 = arith.subf %27, %30 : vector<2x8x8xf32>
    %32 = math.exp %31 : vector<2x8x8xf32>
    %cst_12 = arith.constant dense<0.000000e+00> : vector<2x8xf32>
    %33 = vector.multi_reduction <add>, %32, %cst_12 [2] : vector<2x8x8xf32> to vector<2x8xf32>
    %34 = vector.shape_cast %33 : vector<2x8xf32> to vector<2x8x1xf32>
    %35 = tpu.reciprocal %34 {approx = true} : vector<2x8x1xf32> -> vector<2x8x1xf32>
    %36 = vector.broadcast %35 : vector<2x8x1xf32> to vector<2x8x8xf32>
    %37 = arith.mulf %32, %36 : vector<2x8x8xf32>
    %38 = arith.truncf %37 : vector<2x8x8xf32> to vector<2x8x8xbf16>
    "tpu.trace_start"() <{level = 10 : i32, message = "bqk,bkd->bqd"}> : () -> ()
    %cst_13 = arith.constant dense<0.000000e+00> : vector<2x8x32xf32>
    %39 = tpu.matmul %38, %24, %cst_13 {dimension_numbers = #tpu.dot_dimension_numbers<[2], [1], [1], [2], [0, 0, 0, 1, 1, 2], [0], [0]>} : vector<2x8x8xbf16>, vector<2x8x32xbf16>, vector<2x8x32xf32> -> vector<2x8x32xf32>
    "tpu.trace_stop"() : () -> ()
    %c0_14 = arith.constant 0 : index
    %c0_15 = arith.constant 0 : index
    %c0_16 = arith.constant 0 : index
    %40 = vector.load %arg19[%c0_14, %c0_15, %c0_16] : memref<2x8x128xf32, #tpu.memory_space<vmem>>, vector<2x8x32xf32>
    tpu.vector_store %arg19[%c0_14, %c0_15, %c0_16], %39 {strides = array<i32>} : memref<2x8x128xf32, #tpu.memory_space<vmem>>, vector<2x8x32xf32>,
    %41 = vector.extract_strided_slice %14 {offsets = [0, 0, 32], sizes = [2, 8, 32], strides = [1, 1, 1]} : vector<2x8x128xf32> to vector<2x8x32xf32>
    %42 = arith.truncf %41 : vector<2x8x32xf32> to vector<2x8x32xbf16>
    %43 = vector.extract_strided_slice %16 {offsets = [0, 0, 32], sizes = [2, 8, 32], strides = [1, 1, 1]} : vector<2x8x128xf32> to vector<2x8x32xf32>
    %44 = arith.truncf %43 : vector<2x8x32xf32> to vector<2x8x32xbf16>
    %45 = vector.extract_strided_slice %18 {offsets = [0, 0, 32], sizes = [2, 8, 32], strides = [1, 1, 1]} : vector<2x8x128xf32> to vector<2x8x32xf32>
    %46 = arith.truncf %45 : vector<2x8x32xf32> to vector<2x8x32xbf16>
    "tpu.trace_start"() <{level = 10 : i32, message = "bqd,bkd->bqk"}> : () -> ()
    %cst_17 = arith.constant dense<0.000000e+00> : vector<2x8x8xf32>
    %47 = tpu.matmul %42, %44, %cst_17 {dimension_numbers = #tpu.dot_dimension_numbers<[2], [2], [1], [1], [0, 0, 0, 1, 1, 1], [0], [0]>} : vector<2x8x32xbf16>, vector<2x8x32xbf16>, vector<2x8x8xf32> -> vector<2x8x8xf32>
    "tpu.trace_stop"() : () -> ()
    %cst_18 = arith.constant 0.176776692 : f32
    %48 = vector.broadcast %cst_18 : f32 to vector<2x8x8xf32>
    %49 = arith.mulf %47, %48 : vector<2x8x8xf32>
    %cst_19 = arith.constant dense<0xFF800000> : vector<2x8xf32>
    %50 = vector.multi_reduction <maximumf>, %49, %cst_19 [2] : vector<2x8x8xf32> to vector<2x8xf32>
    %51 = vector.shape_cast %50 : vector<2x8xf32> to vector<2x8x1xf32>
    %52 = vector.broadcast %51 : vector<2x8x1xf32> to vector<2x8x8xf32>
    %53 = arith.subf %49, %52 : vector<2x8x8xf32>
    %54 = math.exp %53 : vector<2x8x8xf32>
    %cst_20 = arith.constant dense<0.000000e+00> : vector<2x8xf32>
    %55 = vector.multi_reduction <add>, %54, %cst_20 [2] : vector<2x8x8xf32> to vector<2x8xf32>
    %56 = vector.shape_cast %55 : vector<2x8xf32> to vector<2x8x1xf32>
    %57 = tpu.reciprocal %56 {approx = true} : vector<2x8x1xf32> -> vector<2x8x1xf32>
    %58 = vector.broadcast %57 : vector<2x8x1xf32> to vector<2x8x8xf32>
    %59 = arith.mulf %54, %58 : vector<2x8x8xf32>
    %60 = arith.truncf %59 : vector<2x8x8xf32> to vector<2x8x8xbf16>
    "tpu.trace_start"() <{level = 10 : i32, message = "bqk,bkd->bqd"}> : () -> ()
    %cst_21 = arith.constant dense<0.000000e+00> : vector<2x8x32xf32>
    %61 = tpu.matmul %60, %46, %cst_21 {dimension_numbers = #tpu.dot_dimension_numbers<[2], [1], [1], [2], [0, 0, 0, 1, 1, 2], [0], [0]>} : vector<2x8x8xbf16>, vector<2x8x32xbf16>, vector<2x8x32xf32> -> vector<2x8x32xf32>
    "tpu.trace_stop"() : () -> ()
    %c0_22 = arith.constant 0 : index
    %c0_23 = arith.constant 0 : index
    %c32 = arith.constant 32 : index
    %62 = vector.load %arg19[%c0_22, %c0_23, %c32] : memref<2x8x128xf32, #tpu.memory_space<vmem>>, vector<2x8x32xf32>
    tpu.vector_store %arg19[%c0_22, %c0_23, %c32], %61 {strides = array<i32>} : memref<2x8x128xf32, #tpu.memory_space<vmem>>, vector<2x8x32xf32>,
    %63 = vector.extract_strided_slice %14 {offsets = [0, 0, 64], sizes = [2, 8, 32], strides = [1, 1, 1]} : vector<2x8x128xf32> to vector<2x8x32xf32>
    %64 = arith.truncf %63 : vector<2x8x32xf32> to vector<2x8x32xbf16>
    %65 = vector.extract_strided_slice %16 {offsets = [0, 0, 64], sizes = [2, 8, 32], strides = [1, 1, 1]} : vector<2x8x128xf32> to vector<2x8x32xf32>
    %66 = arith.truncf %65 : vector<2x8x32xf32> to vector<2x8x32xbf16>
    %67 = vector.extract_strided_slice %18 {offsets = [0, 0, 64], sizes = [2, 8, 32], strides = [1, 1, 1]} : vector<2x8x128xf32> to vector<2x8x32xf32>
    %68 = arith.truncf %67 : vector<2x8x32xf32> to vector<2x8x32xbf16>
    "tpu.trace_start"() <{level = 10 : i32, message = "bqd,bkd->bqk"}> : () -> ()
    %cst_24 = arith.constant dense<0.000000e+00> : vector<2x8x8xf32>
    %69 = tpu.matmul %64, %66, %cst_24 {dimension_numbers = #tpu.dot_dimension_numbers<[2], [2], [1], [1], [0, 0, 0, 1, 1, 1], [0], [0]>} : vector<2x8x32xbf16>, vector<2x8x32xbf16>, vector<2x8x8xf32> -> vector<2x8x8xf32>
    "tpu.trace_stop"() : () -> ()
    %cst_25 = arith.constant 0.176776692 : f32
    %70 = vector.broadcast %cst_25 : f32 to vector<2x8x8xf32>
    %71 = arith.mulf %69, %70 : vector<2x8x8xf32>
    %cst_26 = arith.constant dense<0xFF800000> : vector<2x8xf32>
    %72 = vector.multi_reduction <maximumf>, %71, %cst_26 [2] : vector<2x8x8xf32> to vector<2x8xf32>
    %73 = vector.shape_cast %72 : vector<2x8xf32> to vector<2x8x1xf32>
    %74 = vector.broadcast %73 : vector<2x8x1xf32> to vector<2x8x8xf32>
    %75 = arith.subf %71, %74 : vector<2x8x8xf32>
    %76 = math.exp %75 : vector<2x8x8xf32>
    %cst_27 = arith.constant dense<0.000000e+00> : vector<2x8xf32>
    %77 = vector.multi_reduction <add>, %76, %cst_27 [2] : vector<2x8x8xf32> to vector<2x8xf32>
    %78 = vector.shape_cast %77 : vector<2x8xf32> to vector<2x8x1xf32>
    %79 = tpu.reciprocal %78 {approx = true} : vector<2x8x1xf32> -> vector<2x8x1xf32>
    %80 = vector.broadcast %79 : vector<2x8x1xf32> to vector<2x8x8xf32>
    %81 = arith.mulf %76, %80 : vector<2x8x8xf32>
    %82 = arith.truncf %81 : vector<2x8x8xf32> to vector<2x8x8xbf16>
    "tpu.trace_start"() <{level = 10 : i32, message = "bqk,bkd->bqd"}> : () -> ()
    %cst_28 = arith.constant dense<0.000000e+00> : vector<2x8x32xf32>
    %83 = tpu.matmul %82, %68, %cst_28 {dimension_numbers = #tpu.dot_dimension_numbers<[2], [1], [1], [2], [0, 0, 0, 1, 1, 2], [0], [0]>} : vector<2x8x8xbf16>, vector<2x8x32xbf16>, vector<2x8x32xf32> -> vector<2x8x32xf32>
    "tpu.trace_stop"() : () -> ()
    %c0_29 = arith.constant 0 : index
    %c0_30 = arith.constant 0 : index
    %c64 = arith.constant 64 : index
    %84 = vector.load %arg19[%c0_29, %c0_30, %c64] : memref<2x8x128xf32, #tpu.memory_space<vmem>>, vector<2x8x32xf32>
    tpu.vector_store %arg19[%c0_29, %c0_30, %c64], %83 {strides = array<i32>} : memref<2x8x128xf32, #tpu.memory_space<vmem>>, vector<2x8x32xf32>,
    %85 = vector.extract_strided_slice %14 {offsets = [0, 0, 96], sizes = [2, 8, 32], strides = [1, 1, 1]} : vector<2x8x128xf32> to vector<2x8x32xf32>
    %86 = arith.truncf %85 : vector<2x8x32xf32> to vector<2x8x32xbf16>
    %87 = vector.extract_strided_slice %16 {offsets = [0, 0, 96], sizes = [2, 8, 32], strides = [1, 1, 1]} : vector<2x8x128xf32> to vector<2x8x32xf32>
    %88 = arith.truncf %87 : vector<2x8x32xf32> to vector<2x8x32xbf16>
    %89 = vector.extract_strided_slice %18 {offsets = [0, 0, 96], sizes = [2, 8, 32], strides = [1, 1, 1]} : vector<2x8x128xf32> to vector<2x8x32xf32>
    %90 = arith.truncf %89 : vector<2x8x32xf32> to vector<2x8x32xbf16>
    "tpu.trace_start"() <{level = 10 : i32, message = "bqd,bkd->bqk"}> : () -> ()
    %cst_31 = arith.constant dense<0.000000e+00> : vector<2x8x8xf32>
    %91 = tpu.matmul %86, %88, %cst_31 {dimension_numbers = #tpu.dot_dimension_numbers<[2], [2], [1], [1], [0, 0, 0, 1, 1, 1], [0], [0]>} : vector<2x8x32xbf16>, vector<2x8x32xbf16>, vector<2x8x8xf32> -> vector<2x8x8xf32>
    "tpu.trace_stop"() : () -> ()
    %cst_32 = arith.constant 0.176776692 : f32
    %92 = vector.broadcast %cst_32 : f32 to vector<2x8x8xf32>
    %93 = arith.mulf %91, %92 : vector<2x8x8xf32>
    %cst_33 = arith.constant dense<0xFF800000> : vector<2x8xf32>
    %94 = vector.multi_reduction <maximumf>, %93, %cst_33 [2] : vector<2x8x8xf32> to vector<2x8xf32>
    %95 = vector.shape_cast %94 : vector<2x8xf32> to vector<2x8x1xf32>
    %96 = vector.broadcast %95 : vector<2x8x1xf32> to vector<2x8x8xf32>
    %97 = arith.subf %93, %96 : vector<2x8x8xf32>
    %98 = math.exp %97 : vector<2x8x8xf32>
    %cst_34 = arith.constant dense<0.000000e+00> : vector<2x8xf32>
    %99 = vector.multi_reduction <add>, %98, %cst_34 [2] : vector<2x8x8xf32> to vector<2x8xf32>
    %100 = vector.shape_cast %99 : vector<2x8xf32> to vector<2x8x1xf32>
    %101 = tpu.reciprocal %100 {approx = true} : vector<2x8x1xf32> -> vector<2x8x1xf32>
    %102 = vector.broadcast %101 : vector<2x8x1xf32> to vector<2x8x8xf32>
    %103 = arith.mulf %98, %102 : vector<2x8x8xf32>
    %104 = arith.truncf %103 : vector<2x8x8xf32> to vector<2x8x8xbf16>
    "tpu.trace_start"() <{level = 10 : i32, message = "bqk,bkd->bqd"}> : () -> ()
    %cst_35 = arith.constant dense<0.000000e+00> : vector<2x8x32xf32>
    %105 = tpu.matmul %104, %90, %cst_35 {dimension_numbers = #tpu.dot_dimension_numbers<[2], [1], [1], [2], [0, 0, 0, 1, 1, 2], [0], [0]>} : vector<2x8x8xbf16>, vector<2x8x32xbf16>, vector<2x8x32xf32> -> vector<2x8x32xf32>
    "tpu.trace_stop"() : () -> ()
    %c0_36 = arith.constant 0 : index
    %c0_37 = arith.constant 0 : index
    %c96 = arith.constant 96 : index
    %106 = vector.load %arg19[%c0_36, %c0_37, %c96] : memref<2x8x128xf32, #tpu.memory_space<vmem>>, vector<2x8x32xf32>
    tpu.vector_store %arg19[%c0_36, %c0_37, %c96], %105 {strides = array<i32>} : memref<2x8x128xf32, #tpu.memory_space<vmem>>, vector<2x8x32xf32>,
    %c0_38 = arith.constant 0 : index
    %c0_39 = arith.constant 0 : index
    %c0_40 = arith.constant 0 : index
    %107 = vector.load %arg19[%c0_38, %c0_39, %c0_40] : memref<2x8x128xf32, #tpu.memory_space<vmem>>, vector<2x8x128xf32>
    %108 = vector.shape_cast %107 : vector<2x8x128xf32> to vector<16x128xf32>
    %c0_41 = arith.constant 0 : index
    %c0_42 = arith.constant 0 : index
    %c0_43 = arith.constant 0 : index
    %109 = vector.load %arg8[%c0_41, %c0_42, %c0_43] : memref<1x128x128xbf16, #tpu.memory_space<vmem>>, vector<1x128x128xbf16>
    %110 = vector.shape_cast %109 : vector<1x128x128xbf16> to vector<128x128xbf16>
    %111 = arith.truncf %108 : vector<16x128xf32> to vector<16x128xbf16>
    %cst_44 = arith.constant dense<0.000000e+00> : vector<16x128xf32>
    %112 = tpu.matmul %111, %110, %cst_44 {dimension_numbers = #tpu.dot_dimension_numbers<[1], [0], [0], [1], [0, 0, 1, 1], [], []>} : vector<16x128xbf16>, vector<128x128xbf16>, vector<16x128xf32> -> vector<16x128xf32>
    %c0_45 = arith.constant 0 : index
    %c0_46 = arith.constant 0 : index
    %c0_47 = arith.constant 0 : index
    %113 = vector.load %arg9[%c0_45, %c0_46, %c0_47] : memref<1x1x128xf32, #tpu.memory_space<vmem>>, vector<1x1x128xf32>
    %114 = vector.shape_cast %113 : vector<1x1x128xf32> to vector<1x128xf32>
    %115 = vector.broadcast %114 : vector<1x128xf32> to vector<16x128xf32>
    %116 = arith.addf %112, %115 : vector<16x128xf32>
    %117 = arith.addf %4, %116 : vector<16x128xf32>
    %c0_48 = arith.constant 0 : index
    %c0_49 = arith.constant 0 : index
    %c0_50 = arith.constant 0 : index
    %118 = vector.load %arg10[%c0_48, %c0_49, %c0_50] : memref<1x1x128xf32, #tpu.memory_space<vmem>>, vector<1x1x128xf32>
    %119 = vector.shape_cast %118 : vector<1x1x128xf32> to vector<1x128xf32>
    %c0_51 = arith.constant 0 : index
    %c0_52 = arith.constant 0 : index
    %c0_53 = arith.constant 0 : index
    %120 = vector.load %arg11[%c0_51, %c0_52, %c0_53] : memref<1x1x128xf32, #tpu.memory_space<vmem>>, vector<1x1x128xf32>
    %121 = vector.shape_cast %120 : vector<1x1x128xf32> to vector<1x128xf32>
    %cst_54 = arith.constant dense<0.000000e+00> : vector<16xf32>
    %122 = vector.multi_reduction <add>, %117, %cst_54 [1] : vector<16x128xf32> to vector<16xf32>
    %123 = vector.shape_cast %122 : vector<16xf32> to vector<16x1xf32>
    %cst_55 = arith.constant 1.280000e+02 : f32
    %124 = vector.broadcast %cst_55 : f32 to vector<16x1xf32>
    %125 = arith.divf %123, %124 : vector<16x1xf32>
    %126 = vector.broadcast %125 : vector<16x1xf32> to vector<16x128xf32>
    %127 = arith.subf %117, %126 : vector<16x128xf32>
    %128 = arith.mulf %127, %127 : vector<16x128xf32>
    %cst_56 = arith.constant dense<0.000000e+00> : vector<16xf32>
    %129 = vector.multi_reduction <add>, %128, %cst_56 [1] : vector<16x128xf32> to vector<16xf32>
    %130 = vector.shape_cast %129 : vector<16xf32> to vector<16x1xf32>
    %cst_57 = arith.constant 1.280000e+02 : f32
    %131 = vector.broadcast %cst_57 : f32 to vector<16x1xf32>
    %132 = arith.divf %130, %131 : vector<16x1xf32>
    %cst_58 = arith.constant 9.99999974E-6 : f32
    %133 = vector.broadcast %cst_58 : f32 to vector<16x1xf32>
    %134 = arith.addf %132, %133 : vector<16x1xf32>
    %135 = math.rsqrt %134 : vector<16x1xf32>
    %136 = vector.broadcast %135 : vector<16x1xf32> to vector<16x128xf32>
    %137 = arith.mulf %127, %136 : vector<16x128xf32>
    %138 = vector.broadcast %119 : vector<1x128xf32> to vector<16x128xf32>
    %139 = arith.mulf %137, %138 : vector<16x128xf32>
    %140 = vector.broadcast %121 : vector<1x128xf32> to vector<16x128xf32>
    %141 = arith.addf %139, %140 : vector<16x128xf32>
    %c0_59 = arith.constant 0 : index
    %c0_60 = arith.constant 0 : index
    %c0_61 = arith.constant 0 : index
    %142 = vector.load %arg12[%c0_59, %c0_60, %c0_61] : memref<1x128x512xbf16, #tpu.memory_space<vmem>>, vector<1x128x512xbf16>
    %143 = vector.shape_cast %142 : vector<1x128x512xbf16> to vector<128x512xbf16>
    %144 = arith.truncf %141 : vector<16x128xf32> to vector<16x128xbf16>
    %cst_62 = arith.constant dense<0.000000e+00> : vector<16x512xf32>
    %145 = tpu.matmul %144, %143, %cst_62 {dimension_numbers = #tpu.dot_dimension_numbers<[1], [0], [0], [1], [0, 0, 1, 1], [], []>} : vector<16x128xbf16>, vector<128x512xbf16>, vector<16x512xf32> -> vector<16x512xf32>
    %c0_63 = arith.constant 0 : index
    %c0_64 = arith.constant 0 : index
    %c0_65 = arith.constant 0 : index
    %146 = vector.load %arg13[%c0_63, %c0_64, %c0_65] : memref<1x1x512xf32, #tpu.memory_space<vmem>>, vector<1x1x512xf32>
    %147 = vector.shape_cast %146 : vector<1x1x512xf32> to vector<1x512xf32>
    %148 = vector.broadcast %147 : vector<1x512xf32> to vector<16x512xf32>
    %149 = arith.addf %145, %148 : vector<16x512xf32>
    %150 = arith.mulf %149, %149 : vector<16x512xf32>
    %151 = arith.mulf %149, %150 : vector<16x512xf32>
    %cst_66 = arith.constant 4.471500e-02 : f32
    %152 = vector.broadcast %cst_66 : f32 to vector<16x512xf32>
    %153 = arith.mulf %152, %151 : vector<16x512xf32>
    %154 = arith.addf %149, %153 : vector<16x512xf32>
    %cst_67 = arith.constant 0.797884583 : f32
    %155 = vector.broadcast %cst_67 : f32 to vector<16x512xf32>
    %156 = arith.mulf %155, %154 : vector<16x512xf32>
    %157 = math.tanh %156 : vector<16x512xf32>
    %cst_68 = arith.constant 1.000000e+00 : f32
    %158 = vector.broadcast %cst_68 : f32 to vector<16x512xf32>
    %159 = arith.addf %158, %157 : vector<16x512xf32>
    %cst_69 = arith.constant 5.000000e-01 : f32
    %160 = vector.broadcast %cst_69 : f32 to vector<16x512xf32>
    %161 = arith.mulf %160, %159 : vector<16x512xf32>
    %162 = arith.mulf %149, %161 : vector<16x512xf32>
    %c0_70 = arith.constant 0 : index
    %c0_71 = arith.constant 0 : index
    %c0_72 = arith.constant 0 : index
    %163 = vector.load %arg14[%c0_70, %c0_71, %c0_72] : memref<1x512x128xbf16, #tpu.memory_space<vmem>>, vector<1x512x128xbf16>
    %164 = vector.shape_cast %163 : vector<1x512x128xbf16> to vector<512x128xbf16>
    %165 = arith.truncf %162 : vector<16x512xf32> to vector<16x512xbf16>
    %cst_73 = arith.constant dense<0.000000e+00> : vector<16x128xf32>
    %166 = tpu.matmul %165, %164, %cst_73 {dimension_numbers = #tpu.dot_dimension_numbers<[1], [0], [0], [1], [0, 0, 1, 1], [], []>} : vector<16x512xbf16>, vector<512x128xbf16>, vector<16x128xf32> -> vector<16x128xf32>
    %c0_74 = arith.constant 0 : index
    %c0_75 = arith.constant 0 : index
    %c0_76 = arith.constant 0 : index
    %167 = vector.load %arg15[%c0_74, %c0_75, %c0_76] : memref<1x1x128xf32, #tpu.memory_space<vmem>>, vector<1x1x128xf32>
    %168 = vector.shape_cast %167 : vector<1x1x128xf32> to vector<1x128xf32>
    %169 = vector.broadcast %168 : vector<1x128xf32> to vector<16x128xf32>
    %170 = arith.addf %166, %169 : vector<16x128xf32>
    %171 = arith.addf %141, %170 : vector<16x128xf32>
    %c0_77 = arith.constant 0 : index
    %c0_78 = arith.constant 0 : index
    %c0_79 = arith.constant 0 : index
    %172 = vector.load %arg16[%c0_77, %c0_78, %c0_79] : memref<1x1x128xf32, #tpu.memory_space<vmem>>, vector<1x1x128xf32>
    %173 = vector.shape_cast %172 : vector<1x1x128xf32> to vector<1x128xf32>
    %c0_80 = arith.constant 0 : index
    %c0_81 = arith.constant 0 : index
    %c0_82 = arith.constant 0 : index
    %174 = vector.load %arg17[%c0_80, %c0_81, %c0_82] : memref<1x1x128xf32, #tpu.memory_space<vmem>>, vector<1x1x128xf32>
    %175 = vector.shape_cast %174 : vector<1x1x128xf32> to vector<1x128xf32>
    %cst_83 = arith.constant dense<0.000000e+00> : vector<16xf32>
    %176 = vector.multi_reduction <add>, %171, %cst_83 [1] : vector<16x128xf32> to vector<16xf32>
    %177 = vector.shape_cast %176 : vector<16xf32> to vector<16x1xf32>
    %cst_84 = arith.constant 1.280000e+02 : f32
    %178 = vector.broadcast %cst_84 : f32 to vector<16x1xf32>
    %179 = arith.divf %177, %178 : vector<16x1xf32>
    %180 = vector.broadcast %179 : vector<16x1xf32> to vector<16x128xf32>
    %181 = arith.subf %171, %180 : vector<16x128xf32>
    %182 = arith.mulf %181, %181 : vector<16x128xf32>
    %cst_85 = arith.constant dense<0.000000e+00> : vector<16xf32>
    %183 = vector.multi_reduction <add>, %182, %cst_85 [1] : vector<16x128xf32> to vector<16xf32>
    %184 = vector.shape_cast %183 : vector<16xf32> to vector<16x1xf32>
    %cst_86 = arith.constant 1.280000e+02 : f32
    %185 = vector.broadcast %cst_86 : f32 to vector<16x1xf32>
    %186 = arith.divf %184, %185 : vector<16x1xf32>
    %cst_87 = arith.constant 9.99999974E-6 : f32
    %187 = vector.broadcast %cst_87 : f32 to vector<16x1xf32>
    %188 = arith.addf %186, %187 : vector<16x1xf32>
    %189 = math.rsqrt %188 : vector<16x1xf32>
    %190 = vector.broadcast %189 : vector<16x1xf32> to vector<16x128xf32>
    %191 = arith.mulf %181, %190 : vector<16x128xf32>
    %192 = vector.broadcast %173 : vector<1x128xf32> to vector<16x128xf32>
    %193 = arith.mulf %191, %192 : vector<16x128xf32>
    %194 = vector.broadcast %175 : vector<1x128xf32> to vector<16x128xf32>
    %195 = arith.addf %193, %194 : vector<16x128xf32>
    %196 = vector.shape_cast %195 : vector<16x128xf32> to vector<2x8x128xf32>
    %c0_88 = arith.constant 0 : index
    %c0_89 = arith.constant 0 : index
    %c0_90 = arith.constant 0 : index
    %197 = vector.load %arg18[%c0_88, %c0_89, %c0_90] : memref<2x8x128xf32, #tpu.memory_space<vmem>>, vector<2x8x128xf32>
    tpu.vector_store %arg18[%c0_88, %c0_89, %c0_90], %196 {strides = array<i32>} : memref<2x8x128xf32, #tpu.memory_space<vmem>>, vector<2x8x128xf32>,
    return
  }
  func.func @transform_0(%arg0: i32, %arg1: i32) -> (i32, i32, i32) {
    %c0_i32 = arith.constant 0 : i32
    %c0_i32_0 = arith.constant 0 : i32
    %c0_i32_1 = arith.constant 0 : i32
    return %arg0, %c0_i32, %c0_i32_0 : i32, i32, i32
  }
  func.func @transform_1(%arg0: i32, %arg1: i32) -> (i32, i32) {
    %c0_i32 = arith.constant 0 : i32
    %c0_i32_0 = arith.constant 0 : i32
    %c0_i32_1 = arith.constant 0 : i32
    return %c0_i32, %c0_i32_0 : i32, i32
  }
  func.func @transform_2(%arg0: i32, %arg1: i32) -> (i32, i32) {
    %c0_i32 = arith.constant 0 : i32
    %c0_i32_0 = arith.constant 0 : i32
    %c0_i32_1 = arith.constant 0 : i32
    return %c0_i32, %c0_i32_0 : i32, i32
  }
  func.func @transform_3(%arg0: i32, %arg1: i32) -> (i32, i32, i32) {
    %c0_i32 = arith.constant 0 : i32
    %c0_i32_0 = arith.constant 0 : i32
    %c0_i32_1 = arith.constant 0 : i32
    %c0_i32_2 = arith.constant 0 : i32
    return %c0_i32, %c0_i32_0, %c0_i32_1 : i32, i32, i32
  }
  func.func @transform_4(%arg0: i32, %arg1: i32) -> (i32, i32, i32) {
    %c0_i32 = arith.constant 0 : i32
    %c0_i32_0 = arith.constant 0 : i32
    %c0_i32_1 = arith.constant 0 : i32
    return %arg1, %c0_i32, %c0_i32_0 : i32, i32, i32
  }
  func.func @transform_5(%arg0: i32, %arg1: i32) -> (i32, i32, i32) {
    %c0_i32 = arith.constant 0 : i32
    %c0_i32_0 = arith.constant 0 : i32
    %c0_i32_1 = arith.constant 0 : i32
    return %arg1, %c0_i32, %c0_i32_0 : i32, i32, i32
  }
  func.func @transform_6(%arg0: i32, %arg1: i32) -> (i32, i32, i32) {
    %c0_i32 = arith.constant 0 : i32
    %c0_i32_0 = arith.constant 0 : i32
    %c0_i32_1 = arith.constant 0 : i32
    return %arg1, %c0_i32, %c0_i32_0 : i32, i32, i32
  }
  func.func @transform_7(%arg0: i32, %arg1: i32) -> (i32, i32, i32) {
    %c0_i32 = arith.constant 0 : i32
    %c0_i32_0 = arith.constant 0 : i32
    %c0_i32_1 = arith.constant 0 : i32
    return %arg1, %c0_i32, %c0_i32_0 : i32, i32, i32
  }
  func.func @transform_8(%arg0: i32, %arg1: i32) -> (i32, i32, i32) {
    %c0_i32 = arith.constant 0 : i32
    %c0_i32_0 = arith.constant 0 : i32
    %c0_i32_1 = arith.constant 0 : i32
    return %arg1, %c0_i32, %c0_i32_0 : i32, i32, i32
  }
  func.func @transform_9(%arg0: i32, %arg1: i32) -> (i32, i32, i32) {
    %c0_i32 = arith.constant 0 : i32
    %c0_i32_0 = arith.constant 0 : i32
    %c0_i32_1 = arith.constant 0 : i32
    return %arg1, %c0_i32, %c0_i32_0 : i32, i32, i32
  }
  func.func @transform_10(%arg0: i32, %arg1: i32) -> (i32, i32, i32) {
    %c0_i32 = arith.constant 0 : i32
    %c0_i32_0 = arith.constant 0 : i32
    %c0_i32_1 = arith.constant 0 : i32
    return %arg1, %c0_i32, %c0_i32_0 : i32, i32, i32
  }
  func.func @transform_11(%arg0: i32, %arg1: i32) -> (i32, i32, i32) {
    %c0_i32 = arith.constant 0 : i32
    %c0_i32_0 = arith.constant 0 : i32
    %c0_i32_1 = arith.constant 0 : i32
    return %arg1, %c0_i32, %c0_i32_0 : i32, i32, i32
  }
  func.func @transform_12(%arg0: i32, %arg1: i32) -> (i32, i32, i32) {
    %c0_i32 = arith.constant 0 : i32
    %c0_i32_0 = arith.constant 0 : i32
    %c0_i32_1 = arith.constant 0 : i32
    return %arg1, %c0_i32, %c0_i32_0 : i32, i32, i32
  }
  func.func @transform_13(%arg0: i32, %arg1: i32) -> (i32, i32, i32) {
    %c0_i32 = arith.constant 0 : i32
    %c0_i32_0 = arith.constant 0 : i32
    %c0_i32_1 = arith.constant 0 : i32
    return %arg1, %c0_i32, %c0_i32_0 : i32, i32, i32
  }
  func.func @transform_14(%arg0: i32, %arg1: i32) -> (i32, i32, i32) {
    %c0_i32 = arith.constant 0 : i32
    %c0_i32_0 = arith.constant 0 : i32
    %c0_i32_1 = arith.constant 0 : i32
    return %arg1, %c0_i32, %c0_i32_0 : i32, i32, i32
  }
  func.func @transform_15(%arg0: i32, %arg1: i32) -> (i32, i32, i32) {
    %c0_i32 = arith.constant 0 : i32
    %c0_i32_0 = arith.constant 0 : i32
    %c0_i32_1 = arith.constant 0 : i32
    return %arg1, %c0_i32, %c0_i32_0 : i32, i32, i32
  }
  func.func @transform_16(%arg0: i32, %arg1: i32) -> (i32, i32, i32) {
    %c0_i32 = arith.constant 0 : i32
    %c0_i32_0 = arith.constant 0 : i32
    %c0_i32_1 = arith.constant 0 : i32
    return %arg0, %c0_i32, %c0_i32_0 : i32, i32, i32
  }
}

</mosaic_0001>

<llo_original>
// kernel: forward.5
$region0: #{forward.5}
  #allocation0 [shape = 'u32[]', space=smem, size = 0x4, offset = 0x4, fixed_abs, tag = 'smem constant byte address 0x4 - core index']
  #allocation1 [shape = 'u32[144,128]{1,0:T(1,128)}', space=vmem, size = 0x12000, scoped, tag = 'internal scratch']
  #allocation2 [shape = 'f32[1,1]{1,0:T(1,128)S(1)}', space=vmem, size = 0x200, scoped, tag = 'scoped memory for forward.5']
  %s0 = inlined_call_operand.vmem [shape: f32[2,16,128], index: 0, kind: input, shape index: {}]
  %s1 = inlined_call_operand.vmem [shape: f32[2,8,128], index: 1, kind: input, shape index: {}]
  %s2 = inlined_call_operand.vmem [shape: bf16[128,128], index: 2, kind: input, shape index: {}]
  %s3 = inlined_call_operand.vmem [shape: f32[1,128], index: 3, kind: input, shape index: {}]
  %s4 = inlined_call_operand.vmem [shape: bf16[128,128], index: 4, kind: input, shape index: {}]
  %s5 = inlined_call_operand.vmem [shape: f32[1,128], index: 5, kind: input, shape index: {}]
  %s6 = inlined_call_operand.vmem [shape: bf16[128,128], index: 6, kind: input, shape index: {}]
  %s7 = inlined_call_operand.vmem [shape: bf16[128,128], index: 7, kind: input, shape index: {}]
  %s8 = inlined_call_operand.vmem [shape: f32[1,128], index: 8, kind: input, shape index: {}]
  %s9 = inlined_call_operand.vmem [shape: bf16[128,1], index: 9, kind: input, shape index: {}]
  %s10 = inlined_call_operand.<no memory space> [shape: f32[1,1], index: 10, kind: input, shape index: {}]
  %s11 = inlined_call_operand.vmem [shape: f32[2,1], index: 11, kind: output, shape index: {}]
  %s12 = sld [smem:[#allocation0]]
  $region54: #{forward.5} parent=0
    _
  %s14 = ssub.s32 1, %s12
  %s15 = scalar_select 0, %s14, %s12
  %v16 = vstv %s10
  %17 = vst [vmem:[#allocation2] sm:$0x1] %v16
  // Predicated region
  $region2: #{forward.5} parent=0 // pred_check
    _
  $region3: #{forward.5} parent=0 // pred_check_branch
    %19 = sbr.rel (0) target = $region5
  $region4: #{forward.5} parent=0 // pred_region
    _
  $region5: #{forward.5} parent=0 // pred_fallthru
    _
  // Predicated region
  $region6: #{forward.5} parent=0 // pred_check
    _
  $region7: #{forward.5} parent=0 // pred_check_branch
    %21 = sbr.rel (0) target = $region9
  $region8: #{forward.5} parent=0 // pred_region
    _
  $region9: #{forward.5} parent=0 // pred_fallthru
    _
  // Predicated region
  $region10: #{forward.5} parent=0 // pred_check
    _
  $region11: #{forward.5} parent=0 // pred_check_branch
    %23 = sbr.rel (0) target = $region13
  $region12: #{forward.5} parent=0 // pred_region
    _
  $region13: #{forward.5} parent=0 // pred_fallthru
    _
  // Predicated region
  $region14: #{forward.5} parent=0 // pred_check
    _
  $region15: #{forward.5} parent=0 // pred_check_branch
    %25 = sbr.rel (0) target = $region17
  $region16: #{forward.5} parent=0 // pred_region
    _
  $region17: #{forward.5} parent=0 // pred_fallthru
    _
  // Predicated region
  $region18: #{forward.5} parent=0 // pred_check
    _
  $region19: #{forward.5} parent=0 // pred_check_branch
    %27 = sbr.rel (0) target = $region21
  $region20: #{forward.5} parent=0 // pred_region
    _
  $region21: #{forward.5} parent=0 // pred_fallthru
    _
  // Predicated region
  $region22: #{forward.5} parent=0 // pred_check
    _
  $region23: #{forward.5} parent=0 // pred_check_branch
    %29 = sbr.rel (0) target = $region25
  $region24: #{forward.5} parent=0 // pred_region
    _
  $region25: #{forward.5} parent=0 // pred_fallthru
    _
  // Predicated region
  $region26: #{forward.5} parent=0 // pred_check
    _
  $region27: #{forward.5} parent=0 // pred_check_branch
    %31 = sbr.rel (0) target = $region29
  $region28: #{forward.5} parent=0 // pred_region
    _
  $region29: #{forward.5} parent=0 // pred_fallthru
    _
  // Predicated region
  $region30: #{forward.5} parent=0 // pred_check
    _
  $region31: #{forward.5} parent=0 // pred_check_branch
    %33 = sbr.rel (0) target = $region33
  $region32: #{forward.5} parent=0 // pred_region
    _
  $region33: #{forward.5} parent=0 // pred_fallthru
    _
  // Predicated region
  $region34: #{forward.5} parent=0 // pred_check
    _
  $region35: #{forward.5} parent=0 // pred_check_branch
    %35 = sbr.rel (0) target = $region37
  $region36: #{forward.5} parent=0 // pred_region
    _
  $region37: #{forward.5} parent=0 // pred_fallthru
    _
  // Predicated region
  $region38: #{forward.5} parent=0 // pred_check
    _
  $region39: #{forward.5} parent=0 // pred_check_branch
    %37 = sbr.rel (0) target = $region41
  $region40: #{forward.5} parent=0 // pred_region
    _
  $region41: #{forward.5} parent=0 // pred_fallthru
    _
  // Predicated region
  $region42: #{forward.5} parent=0 // pred_check
    _
  $region43: #{forward.5} parent=0 // pred_check_branch
    %39 = sbr.rel (0) target = $region45
  $region44: #{forward.5} parent=0 // pred_region
    _
  $region45: #{forward.5} parent=0 // pred_fallthru
    _
  %v41 = vld [vmem:[%s0] sm:$0xff]
  %v42 = vld [vmem:[%s0 + $0x8] sm:$0xff]
  %v43 = vld [vmem:[%s0 + $0x10] sm:$0xff]
  %v44 = vld [vmem:[%s0 + $0x18] sm:$0xff]
  %v45 = vadd.f32 %v41, %v42
  %v46 = vrot.slane %v45, 4
  %v47 = vadd.f32 %v45, %v46
  %v48 = vrot.slane %v47, 2
  %v49 = vadd.f32 %v47, %v48
  %v50 = vrot.slane %v49, 1
  %v51 = vadd.f32 %v49, %v50
  %v52 = vadd.f32 %v43, %v44
  %v53 = vrot.slane %v52, 4
  %v54 = vadd.f32 %v52, %v53
  %v55 = vrot.slane %v54, 2
  %v56 = vadd.f32 %v54, %v55
  %v57 = vrot.slane %v56, 1
  %v58 = vadd.f32 %v56, %v57
  %v59 = vrcp.pop 16.0
  %v60 = vmul.f32 %v51, %v59
  %v61 = vmul.f32 %v58, %v59
  %v62 = vld [vmem:[%s1] sm:$0xff]
  %v63 = vld [vmem:[%s1 + $0x8] sm:$0xff]
  %v64 = vrot.slane %v62, 4
  %v65 = vadd.f32 %v62, %v64
  %v66 = vrot.slane %v65, 2
  %v67 = vadd.f32 %v65, %v66
  %v68 = vrot.slane %v67, 1
  %v69 = vadd.f32 %v67, %v68
  %v70 = vrot.slane %v63, 4
  %v71 = vadd.f32 %v63, %v70
  %v72 = vrot.slane %v71, 2
  %v73 = vadd.f32 %v71, %v72
  %v74 = vrot.slane %v73, 1
  %v75 = vadd.f32 %v73, %v74
  %v76 = vrcp.pop 8.0
  %v77 = vmul.f32 %v69, %v76
  %v78 = vmul.f32 %v75, %v76
  %v79 = vld [vmem:[%s2] sm:$0xf]
  %v80 = vld [vmem:[%s2 + $0x4] sm:$0xf]
  %v81 = vld [vmem:[%s2 + $0x8] sm:$0xf]
  %v82 = vld [vmem:[%s2 + $0xc] sm:$0xf]
  %v83 = vld [vmem:[%s2 + $0x10] sm:$0xf]
  %v84 = vld [vmem:[%s2 + $0x14] sm:$0xf]
  %v85 = vld [vmem:[%s2 + $0x18] sm:$0xf]
  %v86 = vld [vmem:[%s2 + $0x1c] sm:$0xf]
  %v87 = vld [vmem:[%s2 + $0x20] sm:$0xf]
  %v88 = vld [vmem:[%s2 + $0x24] sm:$0xf]
  %v89 = vld [vmem:[%s2 + $0x28] sm:$0xf]
  %v90 = vld [vmem:[%s2 + $0x2c] sm:$0xf]
  %v91 = vld [vmem:[%s2 + $0x30] sm:$0xf]
  %v92 = vld [vmem:[%s2 + $0x34] sm:$0xf]
  %v93 = vld [vmem:[%s2 + $0x38] sm:$0xf]
  %v94 = vld [vmem:[%s2 + $0x3c] sm:$0xf]
  %v95 = vpack.c.bf16 %v60, %v60
  %v96 = vpack.c.bf16 %v61, %v61
  %v97 = vld [vmem:[%s3] sm:$0x1]
  %v99 = vlaneseq
  %v100 = vshrl.u32 %v99, 7
  %v101 = vsub.s32 0, %v100
  %v102 = vrot.slane %v97, %v101
  %v106 = vunpack.c.l.b16 %v95
  %v107 = vunpack.c.l.b16 %v96
  %vm108 = vcmask 1041409
  %v109 = vsel %vm108, %v107, %v106
  %v110 = vpack.c.b16 %v109, %v109
  %v128 = vunpack.c.l.b16 %v79
  %v129 = vunpack.c.l.b16 %v80
  %v130 = vunpack.c.l.b16 %v81
  %v131 = vunpack.c.l.b16 %v82
  %v132 = vunpack.c.l.b16 %v83
  %v133 = vunpack.c.l.b16 %v84
  %v134 = vunpack.c.l.b16 %v85
  %v135 = vunpack.c.l.b16 %v86
  %v136 = vunpack.c.l.b16 %v87
  %v137 = vunpack.c.l.b16 %v88
  %v138 = vunpack.c.l.b16 %v89
  %v139 = vunpack.c.l.b16 %v90
  %v140 = vunpack.c.l.b16 %v91
  %v141 = vunpack.c.l.b16 %v92
  %v142 = vunpack.c.l.b16 %v93
  %v143 = vunpack.c.l.b16 %v94
  %v144 = vpack.c.b16 %v129, %v128
  %v145 = vpack.c.b16 %v131, %v130
  %v146 = vpack.c.b16 %v133, %v132
  %v147 = vpack.c.b16 %v135, %v134
  %v148 = vpack.c.b16 %v137, %v136
  %v149 = vpack.c.b16 %v139, %v138
  %v150 = vpack.c.b16 %v141, %v140
  %v151 = vpack.c.b16 %v143, %v142
  %160 = vmatprep.subr.bf16.mxu0 0
  %161 = vmatpush1.bf16.msra.mxu0 %v151
  %162 = vmatprep.subr.bf16.mxu0 0
  %163 = vmatpush1.bf16.msra.mxu0 %v150
  %164 = vmatprep.subr.bf16.mxu0 0
  %165 = vmatpush1.bf16.msra.mxu0 %v149
  %166 = vmatprep.subr.bf16.mxu0 0
  %167 = vmatpush1.bf16.msra.mxu0 %v148
  %168 = vmatprep.subr.bf16.mxu0 0
  %169 = vmatpush1.bf16.msra.mxu0 %v147
  %170 = vmatprep.subr.bf16.mxu0 0
  %171 = vmatpush1.bf16.msra.mxu0 %v146
  %172 = vmatprep.subr.bf16.mxu0 0
  %173 = vmatpush1.bf16.msra.mxu0 %v145
  %174 = vmatprep.subr.bf16.mxu0 0
  %175 = vmatpush1.bf16.msra.mxu0 %v144
  %176 = vmatprep.subr.bf16.mxu0 0
  %177 = vmatpush2.bf16.msra.mxu0 0
  %178 = vmatprep.subr.bf16.mxu0 0
  %179 = vmatpush2.bf16.msra.mxu0 0
  %180 = vmatprep.subr.bf16.mxu0 0
  %181 = vmatpush2.bf16.msra.mxu0 0
  %182 = vmatprep.subr.bf16.mxu0 0
  %183 = vmatpush2.bf16.msra.mxu0 0
  %184 = vmatprep.subr.bf16.mxu0 0
  %185 = vmatpush2.bf16.msra.mxu0 0
  %186 = vmatprep.subr.bf16.mxu0 0
  %187 = vmatpush2.bf16.msra.mxu0 0
  %188 = vmatprep.subr.bf16.mxu0 0
  %189 = vmatpush2.bf16.msra.mxu0 0
  %190 = vmatprep.subr.bf16.mxu0 0
  %191 = vmatpush2.bf16.msra.mxu0 0
  %192 = vmatprep.mubr.bf16.mxu0 0
  %193 = vmatmul.mubr.bf16.gmra.mxu0 %v110
  %v194 = vpop.f32.mrf.mxu0
  %v195 = vadd.f32 %v102, %v194
  %v196 = vpop.f32.mrf.mxu0
  %v197 = vpop.f32.mrf.mxu0
  %v198 = vpop.f32.mrf.mxu0
  %199 = vdwg.mxu0
  %v200 = vld [vmem:[%s4] sm:$0xf]
  %v201 = vld [vmem:[%s4 + $0x4] sm:$0xf]
  %v202 = vld [vmem:[%s4 + $0x8] sm:$0xf]
  %v203 = vld [vmem:[%s4 + $0xc] sm:$0xf]
  %v204 = vld [vmem:[%s4 + $0x10] sm:$0xf]
  %v205 = vld [vmem:[%s4 + $0x14] sm:$0xf]
  %v206 = vld [vmem:[%s4 + $0x18] sm:$0xf]
  %v207 = vld [vmem:[%s4 + $0x1c] sm:$0xf]
  %v208 = vld [vmem:[%s4 + $0x20] sm:$0xf]
  %v209 = vld [vmem:[%s4 + $0x24] sm:$0xf]
  %v210 = vld [vmem:[%s4 + $0x28] sm:$0xf]
  %v211 = vld [vmem:[%s4 + $0x2c] sm:$0xf]
  %v212 = vld [vmem:[%s4 + $0x30] sm:$0xf]
  %v213 = vld [vmem:[%s4 + $0x34] sm:$0xf]
  %v214 = vld [vmem:[%s4 + $0x38] sm:$0xf]
  %v215 = vld [vmem:[%s4 + $0x3c] sm:$0xf]
  %v216 = vpack.c.bf16 %v77, %v77
  %v217 = vpack.c.bf16 %v78, %v78
  %v218 = vld [vmem:[%s5] sm:$0x1]
  %v220 = vlaneseq
  %v221 = vshrl.u32 %v220, 7
  %v222 = vsub.s32 0, %v221
  %v223 = vrot.slane %v218, %v222
  %v227 = vunpack.c.l.b16 %v216
  %v228 = vunpack.c.l.b16 %v217
  %v229 = vsel %vm108, %v228, %v227
  %v230 = vpack.c.b16 %v229, %v229
  %v248 = vunpack.c.l.b16 %v200
  %v249 = vunpack.c.l.b16 %v201
  %v250 = vunpack.c.l.b16 %v202
  %v251 = vunpack.c.l.b16 %v203
  %v252 = vunpack.c.l.b16 %v204
  %v253 = vunpack.c.l.b16 %v205
  %v254 = vunpack.c.l.b16 %v206
  %v255 = vunpack.c.l.b16 %v207
  %v256 = vunpack.c.l.b16 %v208
  %v257 = vunpack.c.l.b16 %v209
  %v258 = vunpack.c.l.b16 %v210
  %v259 = vunpack.c.l.b16 %v211
  %v260 = vunpack.c.l.b16 %v212
  %v261 = vunpack.c.l.b16 %v213
  %v262 = vunpack.c.l.b16 %v214
  %v263 = vunpack.c.l.b16 %v215
  %v264 = vpack.c.b16 %v249, %v248
  %v265 = vpack.c.b16 %v251, %v250
  %v266 = vpack.c.b16 %v253, %v252
  %v267 = vpack.c.b16 %v255, %v254
  %v268 = vpack.c.b16 %v257, %v256
  %v269 = vpack.c.b16 %v259, %v258
  %v270 = vpack.c.b16 %v261, %v260
  %v271 = vpack.c.b16 %v263, %v262
  %280 = vmatprep.subr.bf16.mxu0 0
  %281 = vmatpush1.bf16.msra.mxu0 %v271
  %282 = vmatprep.subr.bf16.mxu0 0
  %283 = vmatpush1.bf16.msra.mxu0 %v270
  %284 = vmatprep.subr.bf16.mxu0 0
  %285 = vmatpush1.bf16.msra.mxu0 %v269
  %286 = vmatprep.subr.bf16.mxu0 0
  %287 = vmatpush1.bf16.msra.mxu0 %v268
  %288 = vmatprep.subr.bf16.mxu0 0
  %289 = vmatpush1.bf16.msra.mxu0 %v267
  %290 = vmatprep.subr.bf16.mxu0 0
  %291 = vmatpush1.bf16.msra.mxu0 %v266
  %292 = vmatprep.subr.bf16.mxu0 0
  %293 = vmatpush1.bf16.msra.mxu0 %v265
  %294 = vmatprep.subr.bf16.mxu0 0
  %295 = vmatpush1.bf16.msra.mxu0 %v264
  %296 = vmatprep.subr.bf16.mxu0 0
  %297 = vmatpush2.bf16.msra.mxu0 0
  %298 = vmatprep.subr.bf16.mxu0 0
  %299 = vmatpush2.bf16.msra.mxu0 0
  %300 = vmatprep.subr.bf16.mxu0 0
  %301 = vmatpush2.bf16.msra.mxu0 0
  %302 = vmatprep.subr.bf16.mxu0 0
  %303 = vmatpush2.bf16.msra.mxu0 0
  %304 = vmatprep.subr.bf16.mxu0 0
  %305 = vmatpush2.bf16.msra.mxu0 0
  %306 = vmatprep.subr.bf16.mxu0 0
  %307 = vmatpush2.bf16.msra.mxu0 0
  %308 = vmatprep.subr.bf16.mxu0 0
  %309 = vmatpush2.bf16.msra.mxu0 0
  %310 = vmatprep.subr.bf16.mxu0 0
  %311 = vmatpush2.bf16.msra.mxu0 0
  %312 = vmatprep.mubr.bf16.mxu0 0
  %313 = vmatmul.mubr.bf16.gmra.mxu0 %v230
  %v314 = vpop.f32.mrf.mxu0
  %v315 = vadd.f32 %v223, %v314
  %v316 = vpop.f32.mrf.mxu0
  %v317 = vpop.f32.mrf.mxu0
  %v318 = vpop.f32.mrf.mxu0
  %319 = vdwg.mxu0
  %v320 = vld [vmem:[%s6] sm:$0xf]
  %v321 = vld [vmem:[%s6 + $0x4] sm:$0xf]
  %v322 = vld [vmem:[%s6 + $0x8] sm:$0xf]
  %v323 = vld [vmem:[%s6 + $0xc] sm:$0xf]
  %v324 = vld [vmem:[%s6 + $0x10] sm:$0xf]
  %v325 = vld [vmem:[%s6 + $0x14] sm:$0xf]
  %v326 = vld [vmem:[%s6 + $0x18] sm:$0xf]
  %v327 = vld [vmem:[%s6 + $0x1c] sm:$0xf]
  %v328 = vld [vmem:[%s6 + $0x20] sm:$0xf]
  %v329 = vld [vmem:[%s6 + $0x24] sm:$0xf]
  %v330 = vld [vmem:[%s6 + $0x28] sm:$0xf]
  %v331 = vld [vmem:[%s6 + $0x2c] sm:$0xf]
  %v332 = vld [vmem:[%s6 + $0x30] sm:$0xf]
  %v333 = vld [vmem:[%s6 + $0x34] sm:$0xf]
  %v334 = vld [vmem:[%s6 + $0x38] sm:$0xf]
  %v335 = vld [vmem:[%s6 + $0x3c] sm:$0xf]
  %v336 = vpack.c.bf16 %v195, %v195
  %v337 = vld [vmem:[%s7] sm:$0xf]
  %v338 = vld [vmem:[%s7 + $0x4] sm:$0xf]
  %v339 = vld [vmem:[%s7 + $0x8] sm:$0xf]
  %v340 = vld [vmem:[%s7 + $0xc] sm:$0xf]
  %v341 = vld [vmem:[%s7 + $0x10] sm:$0xf]
  %v342 = vld [vmem:[%s7 + $0x14] sm:$0xf]
  %v343 = vld [vmem:[%s7 + $0x18] sm:$0xf]
  %v344 = vld [vmem:[%s7 + $0x1c] sm:$0xf]
  %v345 = vld [vmem:[%s7 + $0x20] sm:$0xf]
  %v346 = vld [vmem:[%s7 + $0x24] sm:$0xf]
  %v347 = vld [vmem:[%s7 + $0x28] sm:$0xf]
  %v348 = vld [vmem:[%s7 + $0x2c] sm:$0xf]
  %v349 = vld [vmem:[%s7 + $0x30] sm:$0xf]
  %v350 = vld [vmem:[%s7 + $0x34] sm:$0xf]
  %v351 = vld [vmem:[%s7 + $0x38] sm:$0xf]
  %v352 = vld [vmem:[%s7 + $0x3c] sm:$0xf]
  %v353 = vpack.c.bf16 %v315, %v315
  %v370 = vunpack.c.l.b16 %v337
  %v371 = vunpack.c.l.b16 %v338
  %v372 = vunpack.c.l.b16 %v339
  %v373 = vunpack.c.l.b16 %v340
  %v374 = vunpack.c.l.b16 %v341
  %v375 = vunpack.c.l.b16 %v342
  %v376 = vunpack.c.l.b16 %v343
  %v377 = vunpack.c.l.b16 %v344
  %v378 = vunpack.c.l.b16 %v345
  %v379 = vunpack.c.l.b16 %v346
  %v380 = vunpack.c.l.b16 %v347
  %v381 = vunpack.c.l.b16 %v348
  %v382 = vunpack.c.l.b16 %v349
  %v383 = vunpack.c.l.b16 %v350
  %v384 = vunpack.c.l.b16 %v351
  %v385 = vunpack.c.l.b16 %v352
  %v386 = vpack.c.b16 %v371, %v370
  %v387 = vpack.c.b16 %v373, %v372
  %v388 = vpack.c.b16 %v375, %v374
  %v389 = vpack.c.b16 %v377, %v376
  %v390 = vpack.c.b16 %v379, %v378
  %v391 = vpack.c.b16 %v381, %v380
  %v392 = vpack.c.b16 %v383, %v382
  %v393 = vpack.c.b16 %v385, %v384
  %402 = vmatprep.subr.bf16.mxu0 0
  %403 = vmatpush1.bf16.msra.mxu0 %v393
  %404 = vmatprep.subr.bf16.mxu0 0
  %405 = vmatpush1.bf16.msra.mxu0 %v392
  %406 = vmatprep.subr.bf16.mxu0 0
  %407 = vmatpush1.bf16.msra.mxu0 %v391
  %408 = vmatprep.subr.bf16.mxu0 0
  %409 = vmatpush1.bf16.msra.mxu0 %v390
  %410 = vmatprep.subr.bf16.mxu0 0
  %411 = vmatpush1.bf16.msra.mxu0 %v389
  %412 = vmatprep.subr.bf16.mxu0 0
  %413 = vmatpush1.bf16.msra.mxu0 %v388
  %414 = vmatprep.subr.bf16.mxu0 0
  %415 = vmatpush1.bf16.msra.mxu0 %v387
  %416 = vmatprep.subr.bf16.mxu0 0
  %417 = vmatpush1.bf16.msra.mxu0 %v386
  %418 = vmatprep.subr.bf16.mxu0 0
  %419 = vmatpush2.bf16.msra.mxu0 0
  %420 = vmatprep.subr.bf16.mxu0 0
  %421 = vmatpush2.bf16.msra.mxu0 0
  %422 = vmatprep.subr.bf16.mxu0 0
  %423 = vmatpush2.bf16.msra.mxu0 0
  %424 = vmatprep.subr.bf16.mxu0 0
  %425 = vmatpush2.bf16.msra.mxu0 0
  %426 = vmatprep.subr.bf16.mxu0 0
  %427 = vmatpush2.bf16.msra.mxu0 0
  %428 = vmatprep.subr.bf16.mxu0 0
  %429 = vmatpush2.bf16.msra.mxu0 0
  %430 = vmatprep.subr.bf16.mxu0 0
  %431 = vmatpush2.bf16.msra.mxu0 0
  %432 = vmatprep.subr.bf16.mxu0 0
  %433 = vmatpush2.bf16.msra.mxu0 0
  %434 = vmatprep.mubr.bf16.mxu0 0
  %435 = vmatmul.mubr.bf16.gmra.mxu0 %v353
  %v436 = vpop.f32.mrf.mxu0
  %v437 = vadd.f32 0.0, %v436
  %v438 = vpop.f32.mrf.mxu0
  %v439 = vpop.f32.mrf.mxu0
  %v440 = vpop.f32.mrf.mxu0
  %441 = vdwg.mxu0
  %v458 = vunpack.c.l.b16 %v320
  %v459 = vunpack.c.l.b16 %v321
  %v460 = vunpack.c.l.b16 %v322
  %v461 = vunpack.c.l.b16 %v323
  %v462 = vunpack.c.l.b16 %v324
  %v463 = vunpack.c.l.b16 %v325
  %v464 = vunpack.c.l.b16 %v326
  %v465 = vunpack.c.l.b16 %v327
  %v466 = vunpack.c.l.b16 %v328
  %v467 = vunpack.c.l.b16 %v329
  %v468 = vunpack.c.l.b16 %v330
  %v469 = vunpack.c.l.b16 %v331
  %v470 = vunpack.c.l.b16 %v332
  %v471 = vunpack.c.l.b16 %v333
  %v472 = vunpack.c.l.b16 %v334
  %v473 = vunpack.c.l.b16 %v335
  %v474 = vpack.c.b16 %v459, %v458
  %v475 = vpack.c.b16 %v461, %v460
  %v476 = vpack.c.b16 %v463, %v462
  %v477 = vpack.c.b16 %v465, %v464
  %v478 = vpack.c.b16 %v467, %v466
  %v479 = vpack.c.b16 %v469, %v468
  %v480 = vpack.c.b16 %v471, %v470
  %v481 = vpack.c.b16 %v473, %v472
  %490 = vmatprep.subr.bf16.mxu0 0
  %491 = vmatpush1.bf16.msra.mxu0 %v481
  %492 = vmatprep.subr.bf16.mxu0 0
  %493 = vmatpush1.bf16.msra.mxu0 %v480
  %494 = vmatprep.subr.bf16.mxu0 0
  %495 = vmatpush1.bf16.msra.mxu0 %v479
  %496 = vmatprep.subr.bf16.mxu0 0
  %497 = vmatpush1.bf16.msra.mxu0 %v478
  %498 = vmatprep.subr.bf16.mxu0 0
  %499 = vmatpush1.bf16.msra.mxu0 %v477
  %500 = vmatprep.subr.bf16.mxu0 0
  %501 = vmatpush1.bf16.msra.mxu0 %v476
  %502 = vmatprep.subr.bf16.mxu0 0
  %503 = vmatpush1.bf16.msra.mxu0 %v475
  %504 = vmatprep.subr.bf16.mxu0 0
  %505 = vmatpush1.bf16.msra.mxu0 %v474
  %506 = vmatprep.subr.bf16.mxu0 0
  %507 = vmatpush2.bf16.msra.mxu0 0
  %508 = vmatprep.subr.bf16.mxu0 0
  %509 = vmatpush2.bf16.msra.mxu0 0
  %510 = vmatprep.subr.bf16.mxu0 0
  %511 = vmatpush2.bf16.msra.mxu0 0
  %512 = vmatprep.subr.bf16.mxu0 0
  %513 = vmatpush2.bf16.msra.mxu0 0
  %514 = vmatprep.subr.bf16.mxu0 0
  %515 = vmatpush2.bf16.msra.mxu0 0
  %516 = vmatprep.subr.bf16.mxu0 0
  %517 = vmatpush2.bf16.msra.mxu0 0
  %518 = vmatprep.subr.bf16.mxu0 0
  %519 = vmatpush2.bf16.msra.mxu0 0
  %520 = vmatprep.subr.bf16.mxu0 0
  %521 = vmatpush2.bf16.msra.mxu0 0
  %522 = vmatprep.mubr.bf16.mxu0 0
  %523 = vmatmul.mubr.bf16.gmra.mxu0 %v336
  %v524 = vpop.f32.mrf.mxu0
  %v525 = vadd.f32 %v437, %v524
  %v526 = vpop.f32.mrf.mxu0
  %v527 = vpop.f32.mrf.mxu0
  %v528 = vpop.f32.mrf.mxu0
  %529 = vdwg.mxu0
  %v530 = vld [vmem:[%s8] sm:$0x1]
  %v532 = vlaneseq
  %v533 = vshrl.u32 %v532, 7
  %v534 = vsub.s32 0, %v533
  %v535 = vrot.slane %v530, %v534
  %v537 = vadd.f32 %v525, %v535
  %v538 = vmul.f32 %v537, %v537
  %v539 = vmul.f32 %v537, %v538
  %v540 = vmul.f32 %v539, 0.044715
  %v541 = vadd.f32 %v537, %v540
  %v542 = vmul.f32 %v541, 0.7978846
  %v543 = vtanh.pop %v542
  %v544 = vadd.f32 %v543, 1.0
  %v545 = vmul.f32 %v544, 0.5
  %v546 = vmul.f32 %v537, %v545
  %v547 = vld [vmem:[%s9] sm:$0xf]
  %v548 = vld [vmem:[%s9 + $0x4] sm:$0xf]
  %v549 = vld [vmem:[%s9 + $0x8] sm:$0xf]
  %v550 = vld [vmem:[%s9 + $0xc] sm:$0xf]
  %v551 = vld [vmem:[%s9 + $0x10] sm:$0xf]
  %v552 = vld [vmem:[%s9 + $0x14] sm:$0xf]
  %v553 = vld [vmem:[%s9 + $0x18] sm:$0xf]
  %v554 = vld [vmem:[%s9 + $0x1c] sm:$0xf]
  %v555 = vld [vmem:[%s9 + $0x20] sm:$0xf]
  %v556 = vld [vmem:[%s9 + $0x24] sm:$0xf]
  %v557 = vld [vmem:[%s9 + $0x28] sm:$0xf]
  %v558 = vld [vmem:[%s9 + $0x2c] sm:$0xf]
  %v559 = vld [vmem:[%s9 + $0x30] sm:$0xf]
  %v560 = vld [vmem:[%s9 + $0x34] sm:$0xf]
  %v561 = vld [vmem:[%s9 + $0x38] sm:$0xf]
  %v562 = vld [vmem:[%s9 + $0x3c] sm:$0xf]
  %v563 = vpack.c.bf16 %v546, %v546
  %v564 = vld [vmem:[#allocation2] sm:$0x1]
  %v566 = vlaneseq
  %v567 = vshrl.u32 %v566, 7
  %v568 = vsub.s32 0, %v567
  %v569 = vrot.slane %v564, %v568
  %v587 = vunpack.c.l.b16 %v547
  %v588 = vunpack.c.l.b16 %v548
  %v589 = vunpack.c.l.b16 %v549
  %v590 = vunpack.c.l.b16 %v550
  %v591 = vunpack.c.l.b16 %v551
  %v592 = vunpack.c.l.b16 %v552
  %v593 = vunpack.c.l.b16 %v553
  %v594 = vunpack.c.l.b16 %v554
  %v595 = vunpack.c.l.b16 %v555
  %v596 = vunpack.c.l.b16 %v556
  %v597 = vunpack.c.l.b16 %v557
  %v598 = vunpack.c.l.b16 %v558
  %v599 = vunpack.c.l.b16 %v559
  %v600 = vunpack.c.l.b16 %v560
  %v601 = vunpack.c.l.b16 %v561
  %v602 = vunpack.c.l.b16 %v562
  %v603 = vpack.c.b16 %v588, %v587
  %v604 = vpack.c.b16 %v590, %v589
  %v605 = vpack.c.b16 %v592, %v591
  %v606 = vpack.c.b16 %v594, %v593
  %v607 = vpack.c.b16 %v596, %v595
  %v608 = vpack.c.b16 %v598, %v597
  %v609 = vpack.c.b16 %v600, %v599
  %v610 = vpack.c.b16 %v602, %v601
  %619 = vmatprep.subr.bf16.mxu0 0
  %620 = vmatpush1.bf16.msra.mxu0 %v610
  %621 = vmatprep.subr.bf16.mxu0 0
  %622 = vmatpush1.bf16.msra.mxu0 %v609
  %623 = vmatprep.subr.bf16.mxu0 0
  %624 = vmatpush1.bf16.msra.mxu0 %v608
  %625 = vmatprep.subr.bf16.mxu0 0
  %626 = vmatpush1.bf16.msra.mxu0 %v607
  %627 = vmatprep.subr.bf16.mxu0 0
  %628 = vmatpush1.bf16.msra.mxu0 %v606
  %629 = vmatprep.subr.bf16.mxu0 0
  %630 = vmatpush1.bf16.msra.mxu0 %v605
  %631 = vmatprep.subr.bf16.mxu0 0
  %632 = vmatpush1.bf16.msra.mxu0 %v604
  %633 = vmatprep.subr.bf16.mxu0 0
  %634 = vmatpush1.bf16.msra.mxu0 %v603
  %635 = vmatprep.subr.bf16.mxu0 0
  %636 = vmatpush2.bf16.msra.mxu0 0
  %637 = vmatprep.subr.bf16.mxu0 0
  %638 = vmatpush2.bf16.msra.mxu0 0
  %639 = vmatprep.subr.bf16.mxu0 0
  %640 = vmatpush2.bf16.msra.mxu0 0
  %641 = vmatprep.subr.bf16.mxu0 0
  %642 = vmatpush2.bf16.msra.mxu0 0
  %643 = vmatprep.subr.bf16.mxu0 0
  %644 = vmatpush2.bf16.msra.mxu0 0
  %645 = vmatprep.subr.bf16.mxu0 0
  %646 = vmatpush2.bf16.msra.mxu0 0
  %647 = vmatprep.subr.bf16.mxu0 0
  %648 = vmatpush2.bf16.msra.mxu0 0
  %649 = vmatprep.subr.bf16.mxu0 0
  %650 = vmatpush2.bf16.msra.mxu0 0
  %651 = vmatprep.mubr.bf16.mxu0 0
  %652 = vmatmul.mubr.bf16.gmra.mxu0 %v563
  %v653 = vpop.f32.mrf.mxu0
  %v654 = vadd.f32 %v569, %v653
  %v655 = vpop.f32.mrf.mxu0
  %v656 = vpop.f32.mrf.mxu0
  %v657 = vpop.f32.mrf.mxu0
  %658 = vdwg.mxu0
  %vm659 = vcmask 1024
  %660 = vst.msk [vmem:[%s11] sm:$0x3] %vm659, %v654
  // Predicated region
  $region46: #{forward.5} parent=0 // pred_check
    _
  $region47: #{forward.5} parent=0 // pred_check_branch
    %662 = sbr.rel (0) target = $region49
  $region48: #{forward.5} parent=0 // pred_region
    _
  $region49: #{forward.5} parent=0 // pred_fallthru
    _
  // Predicated region
  $region50: #{forward.5} parent=0 // pred_check
    _
  $region51: #{forward.5} parent=0 // pred_check_branch
    %664 = sbr.rel (0) target = $region53
  $region52: #{forward.5} parent=0 // pred_region
    _
  $region53: #{forward.5} parent=0 // pred_fallthru
    _

// kernel: forward.3
$region0: #{forward.3}
  #allocation0 [shape = 'u32[]', space=smem, size = 0x4, offset = 0x4, fixed_abs, tag = 'smem constant byte address 0x4 - core index']
  #allocation1 [shape = 'u32[144,128]{1,0:T(1,128)}', space=vmem, size = 0x12000, scoped, tag = 'internal scratch']
  #allocation2 [shape = 'f32[2,16,128]{2,1,0:T(8,128)}', space=vmem, size = 0x4000, scoped, tag = 'scratch operand']
  %s0 = inlined_call_operand.vmem [shape: f32[2,16,192], index: 0, kind: input, shape index: {}]
  %s1 = inlined_call_operand.vmem [shape: bf16[192,128], index: 1, kind: input, shape index: {}]
  %s2 = inlined_call_operand.vmem [shape: f32[1,128], index: 2, kind: input, shape index: {}]
  %s3 = inlined_call_operand.vmem [shape: f32[1,16,128], index: 3, kind: input, shape index: {}]
  %s4 = inlined_call_operand.vmem [shape: bf16[2,128,384], index: 4, kind: input, shape index: {}]
  %s5 = inlined_call_operand.vmem [shape: f32[2,1,384], index: 5, kind: input, shape index: {}]
  %s6 = inlined_call_operand.vmem [shape: bf16[2,128,128], index: 6, kind: input, shape index: {}]
  %s7 = inlined_call_operand.vmem [shape: f32[2,1,128], index: 7, kind: input, shape index: {}]
  %s8 = inlined_call_operand.vmem [shape: f32[2,1,128], index: 8, kind: input, shape index: {}]
  %s9 = inlined_call_operand.vmem [shape: f32[2,1,128], index: 9, kind: input, shape index: {}]
  %s10 = inlined_call_operand.vmem [shape: bf16[2,128,512], index: 10, kind: input, shape index: {}]
  %s11 = inlined_call_operand.vmem [shape: f32[2,1,512], index: 11, kind: input, shape index: {}]
  %s12 = inlined_call_operand.vmem [shape: bf16[2,512,128], index: 12, kind: input, shape index: {}]
  %s13 = inlined_call_operand.vmem [shape: f32[2,1,128], index: 13, kind: input, shape index: {}]
  %s14 = inlined_call_operand.vmem [shape: f32[2,1,128], index: 14, kind: input, shape index: {}]
  %s15 = inlined_call_operand.vmem [shape: f32[2,1,128], index: 15, kind: input, shape index: {}]
  %s16 = inlined_call_operand.vmem [shape: f32[2,16,128], index: 16, kind: output, shape index: {}]
  %s17 = sld [smem:[#allocation0]]
  $region101: #{forward.3} parent=0
    _
  %s19 = ssub.s32 1, %s17
  %s20 = scalar_select 0, %s19, %s17
  loop: start=0, step=1, limit=4
  $region2: #{forward.3} parent=0 // loop_pre_header
    _
  $region3: #{forward.3} parent=0 // loop_header
    %s22 = sphi 0, %s26
    %p23 = scmp.ge.s32.totalorder %s22, 4
    %s29 = sphi 0, %s41
    %s30 = sphi 0, %s37
    %s31 = sphi 0, %s29
    %s32 = sphi 0, %s30
    %s33 = sphi 0, %s31
    %s34 = sphi 0, %s32
    %s44 = sphi 0, %s46
    %s47 = sphi 0, %s44
    %s48 = sphi 0, %s47
    %s64 = sphi 0, %s48
    %s68 = sphi 0, %s68
    %s70 = sphi 0, %s68
    %s71 = sphi 0, %s70
    %s85 = sphi 0, %s71
    %s89 = sphi 0, %s89
    %s91 = sphi 0, %s89
    %s92 = sphi 0, %s91
    %s106 = sphi 0, %s92
    %s110 = sphi 0, %s110
    %s112 = sphi 0, %s110
    %s113 = sphi 0, %s112
    %s127 = sphi 0, %s113
    %s133 = sphi 0, %s135
    %s136 = sphi 0, %s133
    %s137 = sphi 0, %s136
    %s153 = sphi 0, %s137
    %s159 = sphi 0, %s161
    %s162 = sphi 0, %s159
    %s163 = sphi 0, %s162
    %s179 = sphi 0, %s163
    %s185 = sphi 0, %s187
    %s188 = sphi 0, %s185
    %s189 = sphi 0, %s188
    %s205 = sphi 0, %s189
    %s211 = sphi 0, %s213
    %s214 = sphi 0, %s211
    %s215 = sphi 0, %s214
    %s231 = sphi 0, %s215
    %s237 = sphi 0, %s239
    %s240 = sphi 0, %s237
    %s241 = sphi 0, %s240
    %s257 = sphi 0, %s241
    %s263 = sphi 0, %s265
    %s266 = sphi 0, %s263
    %s267 = sphi 0, %s266
    %s283 = sphi 0, %s267
    %s289 = sphi 0, %s291
    %s292 = sphi 0, %s289
    %s293 = sphi 0, %s292
    %s309 = sphi 0, %s293
    %s315 = sphi 0, %s317
    %s318 = sphi 0, %s315
    %s319 = sphi 0, %s318
    %s335 = sphi 0, %s319
    %s341 = sphi 0, %s343
    %s344 = sphi 0, %s341
    %s345 = sphi 0, %s344
    %s361 = sphi 0, %s345
    %s367 = sphi 0, %s369
    %s370 = sphi 0, %s367
    %s371 = sphi 0, %s370
    %s387 = sphi 0, %s371
    %s393 = sphi 0, %s395
    %s396 = sphi 0, %s393
    %s397 = sphi 0, %s396
    %s413 = sphi 0, %s397
    %s419 = sphi 0, %s421
    %s422 = sphi 0, %s419
    %s423 = sphi 0, %s422
    %s439 = sphi 0, %s423
    %s445 = sphi 0, %s447
    %s448 = sphi 0, %s445
    %s449 = sphi 0, %s448
    %s465 = sphi 0, %s449
  $region4: #{forward.3} parent=0 // loop_header_branch
    %25 = sbr.rel (%p23) target = $region8
  $region5: #{forward.3} parent=0 // loop_body
    %s27 = ssub.s32 %s22, 1
    %s28 = ssub.s32 %s22, 2
    %s35 = sadd.s32 1, %s30
    %p36 = scmp.ge.s32.totalorder %s35, 2
    %s37 = scalar_select %p36, 0, %s35
    %s38 = sadd.s32 1, %s29
    %s39 = scalar_select %p36, %s38, %s29
    %p40 = scmp.ge.s32.totalorder %s39, 1
    %s41 = scalar_select %p40, 0, %s39
    %s42 = ssub.s32 %s29, %s41
    %p43 = scmp.eq.s32.totalorder %s42, 0
    %s45 = sadd.s32 %s44, 1
    %s46 = scalar_select %p43, %s44, %s45
    %p49 = pneg %p43
    %p50 = scmp.eq.s32.totalorder %s22, 1
    %p51 = por %p49, %p50
    %p52 = scmp.ne.s32.totalorder %s44, %s47
    %p53 = scmp.eq.s32.totalorder %s22, 0
    %p54 = por %p52, %p53
    %p55 = scmp.ne.s32.totalorder %s44, %s47
    %p56 = scmp.eq.s32.totalorder %s27, 1
    %p57 = por %p55, %p56
    %p58 = scmp.ne.s32.totalorder %s47, %s48
    %p59 = scmp.eq.s32.totalorder %s27, 0
    %p60 = por %p58, %p59
    %p61 = scmp.ne.s32.totalorder %s47, %s48
    %p62 = scmp.eq.s32.totalorder %s28, 1
    %p63 = por %p61, %p62
    %p65 = scmp.ne.s32.totalorder %s48, %s64
    %p66 = scmp.eq.s32.totalorder %s28, 0
    %p67 = por %p65, %p66
    %s69 = sadd.s32 %s68, 1
    %p72 = scmp.eq.s32.totalorder %s22, 1
    %p73 = scmp.ne.s32.totalorder %s68, %s70
    %p74 = scmp.eq.s32.totalorder %s22, 0
    %p75 = por %p73, %p74
    %p76 = scmp.ne.s32.totalorder %s68, %s70
    %p77 = scmp.eq.s32.totalorder %s27, 1
    %p78 = por %p76, %p77
    %p79 = scmp.ne.s32.totalorder %s70, %s71
    %p80 = scmp.eq.s32.totalorder %s27, 0
    %p81 = por %p79, %p80
    %p82 = scmp.ne.s32.totalorder %s70, %s71
    %p83 = scmp.eq.s32.totalorder %s28, 1
    %p84 = por %p82, %p83
    %p86 = scmp.ne.s32.totalorder %s71, %s85
    %p87 = scmp.eq.s32.totalorder %s28, 0
    %p88 = por %p86, %p87
    %s90 = sadd.s32 %s89, 1
    %p93 = scmp.eq.s32.totalorder %s22, 1
    %p94 = scmp.ne.s32.totalorder %s89, %s91
    %p95 = scmp.eq.s32.totalorder %s22, 0
    %p96 = por %p94, %p95
    %p97 = scmp.ne.s32.totalorder %s89, %s91
    %p98 = scmp.eq.s32.totalorder %s27, 1
    %p99 = por %p97, %p98
    %p100 = scmp.ne.s32.totalorder %s91, %s92
    %p101 = scmp.eq.s32.totalorder %s27, 0
    %p102 = por %p100, %p101
    %p103 = scmp.ne.s32.totalorder %s91, %s92
    %p104 = scmp.eq.s32.totalorder %s28, 1
    %p105 = por %p103, %p104
    %p107 = scmp.ne.s32.totalorder %s92, %s106
    %p108 = scmp.eq.s32.totalorder %s28, 0
    %p109 = por %p107, %p108
    %s111 = sadd.s32 %s110, 1
    %p114 = scmp.eq.s32.totalorder %s22, 1
    %p115 = scmp.ne.s32.totalorder %s110, %s112
    %p116 = scmp.eq.s32.totalorder %s22, 0
    %p117 = por %p115, %p116
    %p118 = scmp.ne.s32.totalorder %s110, %s112
    %p119 = scmp.eq.s32.totalorder %s27, 1
    %p120 = por %p118, %p119
    %p121 = scmp.ne.s32.totalorder %s112, %s113
    %p122 = scmp.eq.s32.totalorder %s27, 0
    %p123 = por %p121, %p122
    %p124 = scmp.ne.s32.totalorder %s112, %s113
    %p125 = scmp.eq.s32.totalorder %s28, 1
    %p126 = por %p124, %p125
    %p128 = scmp.ne.s32.totalorder %s113, %s127
    %p129 = scmp.eq.s32.totalorder %s28, 0
    %p130 = por %p128, %p129
    %s131 = ssub.s32 %s30, %s37
    %p132 = scmp.eq.s32.totalorder %s131, 0
    %s134 = sadd.s32 %s133, 1
    %s135 = scalar_select %p132, %s133, %s134
    %p138 = pneg %p132
    %p139 = scmp.eq.s32.totalorder %s22, 1
    %p140 = por %p138, %p139
    %p141 = scmp.ne.s32.totalorder %s133, %s136
    %p142 = scmp.eq.s32.totalorder %s22, 0
    %p143 = por %p141, %p142
    %p144 = scmp.ne.s32.totalorder %s133, %s136
    %p145 = scmp.eq.s32.totalorder %s27, 1
    %p146 = por %p144, %p145
    %p147 = scmp.ne.s32.totalorder %s136, %s137
    %p148 = scmp.eq.s32.totalorder %s27, 0
    %p149 = por %p147, %p148
    %p150 = scmp.ne.s32.totalorder %s136, %s137
    %p151 = scmp.eq.s32.totalorder %s28, 1
    %p152 = por %p150, %p151
    %p154 = scmp.ne.s32.totalorder %s137, %s153
    %p155 = scmp.eq.s32.totalorder %s28, 0
    %p156 = por %p154, %p155
    %s157 = ssub.s32 %s30, %s37
    %p158 = scmp.eq.s32.totalorder %s157, 0
    %s160 = sadd.s32 %s159, 1
    %s161 = scalar_select %p158, %s159, %s160
    %p164 = pneg %p158
    %p165 = scmp.eq.s32.totalorder %s22, 1
    %p166 = por %p164, %p165
    %p167 = scmp.ne.s32.totalorder %s159, %s162
    %p168 = scmp.eq.s32.totalorder %s22, 0
    %p169 = por %p167, %p168
    %p170 = scmp.ne.s32.totalorder %s159, %s162
    %p171 = scmp.eq.s32.totalorder %s27, 1
    %p172 = por %p170, %p171
    %p173 = scmp.ne.s32.totalorder %s162, %s163
    %p174 = scmp.eq.s32.totalorder %s27, 0
    %p175 = por %p173, %p174
    %p176 = scmp.ne.s32.totalorder %s162, %s163
    %p177 = scmp.eq.s32.totalorder %s28, 1
    %p178 = por %p176, %p177
    %p180 = scmp.ne.s32.totalorder %s163, %s179
    %p181 = scmp.eq.s32.totalorder %s28, 0
    %p182 = por %p180, %p181
    %s183 = ssub.s32 %s30, %s37
    %p184 = scmp.eq.s32.totalorder %s183, 0
    %s186 = sadd.s32 %s185, 1
    %s187 = scalar_select %p184, %s185, %s186
    %p190 = pneg %p184
    %p191 = scmp.eq.s32.totalorder %s22, 1
    %p192 = por %p190, %p191
    %p193 = scmp.ne.s32.totalorder %s185, %s188
    %p194 = scmp.eq.s32.totalorder %s22, 0
    %p195 = por %p193, %p194
    %p196 = scmp.ne.s32.totalorder %s185, %s188
    %p197 = scmp.eq.s32.totalorder %s27, 1
    %p198 = por %p196, %p197
    %p199 = scmp.ne.s32.totalorder %s188, %s189
    %p200 = scmp.eq.s32.totalorder %s27, 0
    %p201 = por %p199, %p200
    %p202 = scmp.ne.s32.totalorder %s188, %s189
    %p203 = scmp.eq.s32.totalorder %s28, 1
    %p204 = por %p202, %p203
    %p206 = scmp.ne.s32.totalorder %s189, %s205
    %p207 = scmp.eq.s32.totalorder %s28, 0
    %p208 = por %p206, %p207
    %s209 = ssub.s32 %s30, %s37
    %p210 = scmp.eq.s32.totalorder %s209, 0
    %s212 = sadd.s32 %s211, 1
    %s213 = scalar_select %p210, %s211, %s212
    %p216 = pneg %p210
    %p217 = scmp.eq.s32.totalorder %s22, 1
    %p218 = por %p216, %p217
    %p219 = scmp.ne.s32.totalorder %s211, %s214
    %p220 = scmp.eq.s32.totalorder %s22, 0
    %p221 = por %p219, %p220
    %p222 = scmp.ne.s32.totalorder %s211, %s214
    %p223 = scmp.eq.s32.totalorder %s27, 1
    %p224 = por %p222, %p223
    %p225 = scmp.ne.s32.totalorder %s214, %s215
    %p226 = scmp.eq.s32.totalorder %s27, 0
    %p227 = por %p225, %p226
    %p228 = scmp.ne.s32.totalorder %s214, %s215
    %p229 = scmp.eq.s32.totalorder %s28, 1
    %p230 = por %p228, %p229
    %p232 = scmp.ne.s32.totalorder %s215, %s231
    %p233 = scmp.eq.s32.totalorder %s28, 0
    %p234 = por %p232, %p233
    %s235 = ssub.s32 %s30, %s37
    %p236 = scmp.eq.s32.totalorder %s235, 0
    %s238 = sadd.s32 %s237, 1
    %s239 = scalar_select %p236, %s237, %s238
    %p242 = pneg %p236
    %p243 = scmp.eq.s32.totalorder %s22, 1
    %p244 = por %p242, %p243
    %p245 = scmp.ne.s32.totalorder %s237, %s240
    %p246 = scmp.eq.s32.totalorder %s22, 0
    %p247 = por %p245, %p246
    %p248 = scmp.ne.s32.totalorder %s237, %s240
    %p249 = scmp.eq.s32.totalorder %s27, 1
    %p250 = por %p248, %p249
    %p251 = scmp.ne.s32.totalorder %s240, %s241
    %p252 = scmp.eq.s32.totalorder %s27, 0
    %p253 = por %p251, %p252
    %p254 = scmp.ne.s32.totalorder %s240, %s241
    %p255 = scmp.eq.s32.totalorder %s28, 1
    %p256 = por %p254, %p255
    %p258 = scmp.ne.s32.totalorder %s241, %s257
    %p259 = scmp.eq.s32.totalorder %s28, 0
    %p260 = por %p258, %p259
    %s261 = ssub.s32 %s30, %s37
    %p262 = scmp.eq.s32.totalorder %s261, 0
    %s264 = sadd.s32 %s263, 1
    %s265 = scalar_select %p262, %s263, %s264
    %p268 = pneg %p262
    %p269 = scmp.eq.s32.totalorder %s22, 1
    %p270 = por %p268, %p269
    %p271 = scmp.ne.s32.totalorder %s263, %s266
    %p272 = scmp.eq.s32.totalorder %s22, 0
    %p273 = por %p271, %p272
    %p274 = scmp.ne.s32.totalorder %s263, %s266
    %p275 = scmp.eq.s32.totalorder %s27, 1
    %p276 = por %p274, %p275
    %p277 = scmp.ne.s32.totalorder %s266, %s267
    %p278 = scmp.eq.s32.totalorder %s27, 0
    %p279 = por %p277, %p278
    %p280 = scmp.ne.s32.totalorder %s266, %s267
    %p281 = scmp.eq.s32.totalorder %s28, 1
    %p282 = por %p280, %p281
    %p284 = scmp.ne.s32.totalorder %s267, %s283
    %p285 = scmp.eq.s32.totalorder %s28, 0
    %p286 = por %p284, %p285
    %s287 = ssub.s32 %s30, %s37
    %p288 = scmp.eq.s32.totalorder %s287, 0
    %s290 = sadd.s32 %s289, 1
    %s291 = scalar_select %p288, %s289, %s290
    %p294 = pneg %p288
    %p295 = scmp.eq.s32.totalorder %s22, 1
    %p296 = por %p294, %p295
    %p297 = scmp.ne.s32.totalorder %s289, %s292
    %p298 = scmp.eq.s32.totalorder %s22, 0
    %p299 = por %p297, %p298
    %p300 = scmp.ne.s32.totalorder %s289, %s292
    %p301 = scmp.eq.s32.totalorder %s27, 1
    %p302 = por %p300, %p301
    %p303 = scmp.ne.s32.totalorder %s292, %s293
    %p304 = scmp.eq.s32.totalorder %s27, 0
    %p305 = por %p303, %p304
    %p306 = scmp.ne.s32.totalorder %s292, %s293
    %p307 = scmp.eq.s32.totalorder %s28, 1
    %p308 = por %p306, %p307
    %p310 = scmp.ne.s32.totalorder %s293, %s309
    %p311 = scmp.eq.s32.totalorder %s28, 0
    %p312 = por %p310, %p311
    %s313 = ssub.s32 %s30, %s37
    %p314 = scmp.eq.s32.totalorder %s313, 0
    %s316 = sadd.s32 %s315, 1
    %s317 = scalar_select %p314, %s315, %s316
    %p320 = pneg %p314
    %p321 = scmp.eq.s32.totalorder %s22, 1
    %p322 = por %p320, %p321
    %p323 = scmp.ne.s32.totalorder %s315, %s318
    %p324 = scmp.eq.s32.totalorder %s22, 0
    %p325 = por %p323, %p324
    %p326 = scmp.ne.s32.totalorder %s315, %s318
    %p327 = scmp.eq.s32.totalorder %s27, 1
    %p328 = por %p326, %p327
    %p329 = scmp.ne.s32.totalorder %s318, %s319
    %p330 = scmp.eq.s32.totalorder %s27, 0
    %p331 = por %p329, %p330
    %p332 = scmp.ne.s32.totalorder %s318, %s319
    %p333 = scmp.eq.s32.totalorder %s28, 1
    %p334 = por %p332, %p333
    %p336 = scmp.ne.s32.totalorder %s319, %s335
    %p337 = scmp.eq.s32.totalorder %s28, 0
    %p338 = por %p336, %p337
    %s339 = ssub.s32 %s30, %s37
    %p340 = scmp.eq.s32.totalorder %s339, 0
    %s342 = sadd.s32 %s341, 1
    %s343 = scalar_select %p340, %s341, %s342
    %p346 = pneg %p340
    %p347 = scmp.eq.s32.totalorder %s22, 1
    %p348 = por %p346, %p347
    %p349 = scmp.ne.s32.totalorder %s341, %s344
    %p350 = scmp.eq.s32.totalorder %s22, 0
    %p351 = por %p349, %p350
    %p352 = scmp.ne.s32.totalorder %s341, %s344
    %p353 = scmp.eq.s32.totalorder %s27, 1
    %p354 = por %p352, %p353
    %p355 = scmp.ne.s32.totalorder %s344, %s345
    %p356 = scmp.eq.s32.totalorder %s27, 0
    %p357 = por %p355, %p356
    %p358 = scmp.ne.s32.totalorder %s344, %s345
    %p359 = scmp.eq.s32.totalorder %s28, 1
    %p360 = por %p358, %p359
    %p362 = scmp.ne.s32.totalorder %s345, %s361
    %p363 = scmp.eq.s32.totalorder %s28, 0
    %p364 = por %p362, %p363
    %s365 = ssub.s32 %s30, %s37
    %p366 = scmp.eq.s32.totalorder %s365, 0
    %s368 = sadd.s32 %s367, 1
    %s369 = scalar_select %p366, %s367, %s368
    %p372 = pneg %p366
    %p373 = scmp.eq.s32.totalorder %s22, 1
    %p374 = por %p372, %p373
    %p375 = scmp.ne.s32.totalorder %s367, %s370
    %p376 = scmp.eq.s32.totalorder %s22, 0
    %p377 = por %p375, %p376
    %p378 = scmp.ne.s32.totalorder %s367, %s370
    %p379 = scmp.eq.s32.totalorder %s27, 1
    %p380 = por %p378, %p379
    %p381 = scmp.ne.s32.totalorder %s370, %s371
    %p382 = scmp.eq.s32.totalorder %s27, 0
    %p383 = por %p381, %p382
    %p384 = scmp.ne.s32.totalorder %s370, %s371
    %p385 = scmp.eq.s32.totalorder %s28, 1
    %p386 = por %p384, %p385
    %p388 = scmp.ne.s32.totalorder %s371, %s387
    %p389 = scmp.eq.s32.totalorder %s28, 0
    %p390 = por %p388, %p389
    %s391 = ssub.s32 %s30, %s37
    %p392 = scmp.eq.s32.totalorder %s391, 0
    %s394 = sadd.s32 %s393, 1
    %s395 = scalar_select %p392, %s393, %s394
    %p398 = pneg %p392
    %p399 = scmp.eq.s32.totalorder %s22, 1
    %p400 = por %p398, %p399
    %p401 = scmp.ne.s32.totalorder %s393, %s396
    %p402 = scmp.eq.s32.totalorder %s22, 0
    %p403 = por %p401, %p402
    %p404 = scmp.ne.s32.totalorder %s393, %s396
    %p405 = scmp.eq.s32.totalorder %s27, 1
    %p406 = por %p404, %p405
    %p407 = scmp.ne.s32.totalorder %s396, %s397
    %p408 = scmp.eq.s32.totalorder %s27, 0
    %p409 = por %p407, %p408
    %p410 = scmp.ne.s32.totalorder %s396, %s397
    %p411 = scmp.eq.s32.totalorder %s28, 1
    %p412 = por %p410, %p411
    %p414 = scmp.ne.s32.totalorder %s397, %s413
    %p415 = scmp.eq.s32.totalorder %s28, 0
    %p416 = por %p414, %p415
    %s417 = ssub.s32 %s30, %s37
    %p418 = scmp.eq.s32.totalorder %s417, 0
    %s420 = sadd.s32 %s419, 1
    %s421 = scalar_select %p418, %s419, %s420
    %p424 = pneg %p418
    %p425 = scmp.eq.s32.totalorder %s22, 1
    %p426 = por %p424, %p425
    %p427 = scmp.ne.s32.totalorder %s419, %s422
    %p428 = scmp.eq.s32.totalorder %s22, 0
    %p429 = por %p427, %p428
    %p430 = scmp.ne.s32.totalorder %s419, %s422
    %p431 = scmp.eq.s32.totalorder %s27, 1
    %p432 = por %p430, %p431
    %p433 = scmp.ne.s32.totalorder %s422, %s423
    %p434 = scmp.eq.s32.totalorder %s27, 0
    %p435 = por %p433, %p434
    %p436 = scmp.ne.s32.totalorder %s422, %s423
    %p437 = scmp.eq.s32.totalorder %s28, 1
    %p438 = por %p436, %p437
    %p440 = scmp.ne.s32.totalorder %s423, %s439
    %p441 = scmp.eq.s32.totalorder %s28, 0
    %p442 = por %p440, %p441
    %s443 = ssub.s32 %s29, %s41
    %p444 = scmp.eq.s32.totalorder %s443, 0
    %s446 = sadd.s32 %s445, 1
    %s447 = scalar_select %p444, %s445, %s446
    %p450 = pneg %p444
    %p451 = scmp.eq.s32.totalorder %s22, 1
    %p452 = por %p450, %p451
    %p453 = scmp.ne.s32.totalorder %s445, %s448
    %p454 = scmp.eq.s32.totalorder %s22, 0
    %p455 = por %p453, %p454
    %p456 = scmp.ne.s32.totalorder %s445, %s448
    %p457 = scmp.eq.s32.totalorder %s27, 1
    %p458 = por %p456, %p457
    %p459 = scmp.ne.s32.totalorder %s448, %s449
    %p460 = scmp.eq.s32.totalorder %s27, 0
    %p461 = por %p459, %p460
    %p462 = scmp.ne.s32.totalorder %s448, %s449
    %p463 = scmp.eq.s32.totalorder %s28, 1
    %p464 = por %p462, %p463
    %p466 = scmp.ne.s32.totalorder %s449, %s465
    %p467 = scmp.eq.s32.totalorder %s28, 0
    %p468 = por %p466, %p467
    %p469 = scmp.le.s32.totalorder 1, %s22
    %p470 = scmp.lt.s32.totalorder %s22, 3
    %p471 = pnand %p469, %p470
    %p472 = pneg %p471
    // Predicated region
    $region9: #{forward.3} parent=5 // pred_check
      _
    $region10: #{forward.3} parent=5 // pred_check_branch
      %474 = sbr.rel (%p471) target = $region12
    $region11: #{forward.3} parent=5 // pred_region
      %s475 = ssub.s32 %s22, 1
      // Predicated region
      $region13: #{forward.3} parent=11 // pred_check
        %p476 = pneg %p60
      $region14: #{forward.3} parent=11 // pred_check_branch
        %478 = sbr.rel (%p476) target = $region16
      $region15: #{forward.3} parent=11 // pred_region
        %s479 = smul.u32 2, %s31
        %p480 = scmp.lt.s32.totalorder %s479, 1
        %s481 = scalar_select %p480, %s479, 1
        %s482 = smul.addr %s481, 4
        %s483 = smul.addr %s482, 8
        %s484 = scalar_lea.vmem %s0, %s483
        %s485 = smul.u32 2, %s31
      $region16: #{forward.3} parent=11 // pred_fallthru
        _
      // Predicated region
      $region17: #{forward.3} parent=11 // pred_check
        %p486 = pneg %p81
      $region18: #{forward.3} parent=11 // pred_check_branch
        %488 = sbr.rel (%p486) target = $region20
      $region19: #{forward.3} parent=11 // pred_region
        _
      $region20: #{forward.3} parent=11 // pred_fallthru
        _
      // Predicated region
      $region21: #{forward.3} parent=11 // pred_check
        %p489 = pneg %p102
      $region22: #{forward.3} parent=11 // pred_check_branch
        %491 = sbr.rel (%p489) target = $region24
      $region23: #{forward.3} parent=11 // pred_region
        _
      $region24: #{forward.3} parent=11 // pred_fallthru
        _
      // Predicated region
      $region25: #{forward.3} parent=11 // pred_check
        %p492 = pneg %p123
      $region26: #{forward.3} parent=11 // pred_check_branch
        %494 = sbr.rel (%p492) target = $region28
      $region27: #{forward.3} parent=11 // pred_region
        _
      $region28: #{forward.3} parent=11 // pred_fallthru
        _
    $region12: #{forward.3} parent=5 // pred_fallthru
      _
    %p495 = scmp.lt.s32.totalorder %s22, 2
    // Predicated region
    $region29: #{forward.3} parent=5 // pred_check
      %p496 = pneg %p495
    $region30: #{forward.3} parent=5 // pred_check_branch
      %498 = sbr.rel (%p496) target = $region32
    $region31: #{forward.3} parent=5 // pred_region
      // Predicated region
      $region33: #{forward.3} parent=31 // pred_check
        %p499 = pneg %p143
      $region34: #{forward.3} parent=31 // pred_check_branch
        %501 = sbr.rel (%p499) target = $region36
      $region35: #{forward.3} parent=31 // pred_region
        %p502 = scmp.lt.s32.totalorder %s30, 1
        %s503 = scalar_select %p502, %s30, 1
        %s504 = smul.addr %s503, 48
        %s505 = smul.addr %s504, 4
        %s506 = scalar_lea.vmem %s4, %s505
      $region36: #{forward.3} parent=31 // pred_fallthru
        _
      // Predicated region
      $region37: #{forward.3} parent=31 // pred_check
        %p507 = pneg %p169
      $region38: #{forward.3} parent=31 // pred_check_branch
        %509 = sbr.rel (%p507) target = $region40
      $region39: #{forward.3} parent=31 // pred_region
        %p510 = scmp.lt.s32.totalorder %s30, 1
        %s511 = scalar_select %p510, %s30, 1
        %s512 = smul.addr %s511, 3
        %s513 = scalar_lea.vmem %s5, %s512
      $region40: #{forward.3} parent=31 // pred_fallthru
        _
      // Predicated region
      $region41: #{forward.3} parent=31 // pred_check
        %p514 = pneg %p195
      $region42: #{forward.3} parent=31 // pred_check_branch
        %516 = sbr.rel (%p514) target = $region44
      $region43: #{forward.3} parent=31 // pred_region
        %p517 = scmp.lt.s32.totalorder %s30, 1
        %s518 = scalar_select %p517, %s30, 1
        %s519 = smul.addr %s518, 16
        %s520 = smul.addr %s519, 4
        %s521 = scalar_lea.vmem %s6, %s520
      $region44: #{forward.3} parent=31 // pred_fallthru
        _
      // Predicated region
      $region45: #{forward.3} parent=31 // pred_check
        %p522 = pneg %p221
      $region46: #{forward.3} parent=31 // pred_check_branch
        %524 = sbr.rel (%p522) target = $region48
      $region47: #{forward.3} parent=31 // pred_region
        %p525 = scmp.lt.s32.totalorder %s30, 1
        %s526 = scalar_select %p525, %s30, 1
        %s527 = scalar_lea.vmem %s7, %s526
      $region48: #{forward.3} parent=31 // pred_fallthru
        _
      // Predicated region
      $region49: #{forward.3} parent=31 // pred_check
        %p528 = pneg %p247
      $region50: #{forward.3} parent=31 // pred_check_branch
        %530 = sbr.rel (%p528) target = $region52
      $region51: #{forward.3} parent=31 // pred_region
        %p531 = scmp.lt.s32.totalorder %s30, 1
        %s532 = scalar_select %p531, %s30, 1
        %s533 = scalar_lea.vmem %s8, %s532
      $region52: #{forward.3} parent=31 // pred_fallthru
        _
      // Predicated region
      $region53: #{forward.3} parent=31 // pred_check
        %p534 = pneg %p273
      $region54: #{forward.3} parent=31 // pred_check_branch
        %536 = sbr.rel (%p534) target = $region56
      $region55: #{forward.3} parent=31 // pred_region
        %p537 = scmp.lt.s32.totalorder %s30, 1
        %s538 = scalar_select %p537, %s30, 1
        %s539 = scalar_lea.vmem %s9, %s538
      $region56: #{forward.3} parent=31 // pred_fallthru
        _
      // Predicated region
      $region57: #{forward.3} parent=31 // pred_check
        %p540 = pneg %p299
      $region58: #{forward.3} parent=31 // pred_check_branch
        %542 = sbr.rel (%p540) target = $region60
      $region59: #{forward.3} parent=31 // pred_region
        %p543 = scmp.lt.s32.totalorder %s30, 1
        %s544 = scalar_select %p543, %s30, 1
        %s545 = smul.addr %s544, 64
        %s546 = smul.addr %s545, 4
        %s547 = scalar_lea.vmem %s10, %s546
      $region60: #{forward.3} parent=31 // pred_fallthru
        _
      // Predicated region
      $region61: #{forward.3} parent=31 // pred_check
        %p548 = pneg %p325
      $region62: #{forward.3} parent=31 // pred_check_branch
        %550 = sbr.rel (%p548) target = $region64
      $region63: #{forward.3} parent=31 // pred_region
        %p551 = scmp.lt.s32.totalorder %s30, 1
        %s552 = scalar_select %p551, %s30, 1
        %s553 = smul.addr %s552, 4
        %s554 = scalar_lea.vmem %s11, %s553
      $region64: #{forward.3} parent=31 // pred_fallthru
        _
      // Predicated region
      $region65: #{forward.3} parent=31 // pred_check
        %p555 = pneg %p351
      $region66: #{forward.3} parent=31 // pred_check_branch
        %557 = sbr.rel (%p555) target = $region68
      $region67: #{forward.3} parent=31 // pred_region
        %p558 = scmp.lt.s32.totalorder %s30, 1
        %s559 = scalar_select %p558, %s30, 1
        %s560 = smul.addr %s559, 64
        %s561 = smul.addr %s560, 4
        %s562 = scalar_lea.vmem %s12, %s561
      $region68: #{forward.3} parent=31 // pred_fallthru
        _
      // Predicated region
      $region69: #{forward.3} parent=31 // pred_check
        %p563 = pneg %p377
      $region70: #{forward.3} parent=31 // pred_check_branch
        %565 = sbr.rel (%p563) target = $region72
      $region71: #{forward.3} parent=31 // pred_region
        %p566 = scmp.lt.s32.totalorder %s30, 1
        %s567 = scalar_select %p566, %s30, 1
        %s568 = scalar_lea.vmem %s13, %s567
      $region72: #{forward.3} parent=31 // pred_fallthru
        _
      // Predicated region
      $region73: #{forward.3} parent=31 // pred_check
        %p569 = pneg %p403
      $region74: #{forward.3} parent=31 // pred_check_branch
        %571 = sbr.rel (%p569) target = $region76
      $region75: #{forward.3} parent=31 // pred_region
        %p572 = scmp.lt.s32.totalorder %s30, 1
        %s573 = scalar_select %p572, %s30, 1
        %s574 = scalar_lea.vmem %s14, %s573
      $region76: #{forward.3} parent=31 // pred_fallthru
        _
      // Predicated region
      $region77: #{forward.3} parent=31 // pred_check
        %p575 = pneg %p429
      $region78: #{forward.3} parent=31 // pred_check_branch
        %577 = sbr.rel (%p575) target = $region80
      $region79: #{forward.3} parent=31 // pred_region
        %p578 = scmp.lt.s32.totalorder %s30, 1
        %s579 = scalar_select %p578, %s30, 1
        %s580 = scalar_lea.vmem %s15, %s579
      $region80: #{forward.3} parent=31 // pred_fallthru
        _
    $region32: #{forward.3} parent=5 // pred_fallthru
      _
    %p581 = scmp.le.s32.totalorder 1, %s22
    %p582 = scmp.lt.s32.totalorder %s22, 3
    %p583 = pnand %p581, %p582
    %p584 = pneg %p583
    // Predicated region
    $region81: #{forward.3} parent=5 // pred_check
      _
    $region82: #{forward.3} parent=5 // pred_check_branch
      %586 = sbr.rel (%p583) target = $region84
    $region83: #{forward.3} parent=5 // pred_region
      %s587 = ssub.s32 %s22, 1
      %s588 = smul.u32 2, %s31
      %p589 = scmp.lt.s32.totalorder %s588, 1
      %s590 = scalar_select %p589, %s588, 1
      %s591 = smul.addr %s590, 4
      %s592 = smul.addr %s591, 8
      %s593 = scalar_lea.vmem %s0, %s592
      %p594 = pneg %p60
      %p595 = pneg %p57
      %p596 = pneg %p81
      %p597 = pneg %p78
      %p598 = pneg %p102
      %p599 = pneg %p99
      %p600 = pneg %p123
      %p601 = pneg %p120
      %p602 = scmp.lt.s32.totalorder %s32, 1
      %s603 = scalar_select %p602, %s32, 1
      %s604 = smul.addr %s603, 48
      %s605 = smul.addr %s604, 4
      %s606 = scalar_lea.vmem %s4, %s605
      %p607 = pneg %p149
      %p608 = pneg %p146
      %p609 = scmp.lt.s32.totalorder %s32, 1
      %s610 = scalar_select %p609, %s32, 1
      %s611 = smul.addr %s610, 3
      %s612 = scalar_lea.vmem %s5, %s611
      %p613 = pneg %p175
      %p614 = pneg %p172
      %p615 = scmp.lt.s32.totalorder %s32, 1
      %s616 = scalar_select %p615, %s32, 1
      %s617 = smul.addr %s616, 16
      %s618 = smul.addr %s617, 4
      %s619 = scalar_lea.vmem %s6, %s618
      %p620 = pneg %p201
      %p621 = pneg %p198
      %p622 = scmp.lt.s32.totalorder %s32, 1
      %s623 = scalar_select %p622, %s32, 1
      %s624 = scalar_lea.vmem %s7, %s623
      %p625 = pneg %p227
      %p626 = pneg %p224
      %p627 = scmp.lt.s32.totalorder %s32, 1
      %s628 = scalar_select %p627, %s32, 1
      %s629 = scalar_lea.vmem %s8, %s628
      %p630 = pneg %p253
      %p631 = pneg %p250
      %p632 = scmp.lt.s32.totalorder %s32, 1
      %s633 = scalar_select %p632, %s32, 1
      %s634 = scalar_lea.vmem %s9, %s633
      %p635 = pneg %p279
      %p636 = pneg %p276
      %p637 = scmp.lt.s32.totalorder %s32, 1
      %s638 = scalar_select %p637, %s32, 1
      %s639 = smul.addr %s638, 64
      %s640 = smul.addr %s639, 4
      %s641 = scalar_lea.vmem %s10, %s640
      %p642 = pneg %p305
      %p643 = pneg %p302
      %p644 = scmp.lt.s32.totalorder %s32, 1
      %s645 = scalar_select %p644, %s32, 1
      %s646 = smul.addr %s645, 4
      %s647 = scalar_lea.vmem %s11, %s646
      %p648 = pneg %p331
      %p649 = pneg %p328
      %p650 = scmp.lt.s32.totalorder %s32, 1
      %s651 = scalar_select %p650, %s32, 1
      %s652 = smul.addr %s651, 64
      %s653 = smul.addr %s652, 4
      %s654 = scalar_lea.vmem %s12, %s653
      %p655 = pneg %p357
      %p656 = pneg %p354
      %p657 = scmp.lt.s32.totalorder %s32, 1
      %s658 = scalar_select %p657, %s32, 1
      %s659 = scalar_lea.vmem %s13, %s658
      %p660 = pneg %p383
      %p661 = pneg %p380
      %p662 = scmp.lt.s32.totalorder %s32, 1
      %s663 = scalar_select %p662, %s32, 1
      %s664 = scalar_lea.vmem %s14, %s663
      %p665 = pneg %p409
      %p666 = pneg %p406
      %p667 = scmp.lt.s32.totalorder %s32, 1
      %s668 = scalar_select %p667, %s32, 1
      %s669 = scalar_lea.vmem %s15, %s668
      %p670 = pneg %p435
      %p671 = pneg %p432
      %p672 = pneg %p461
      %p673 = pneg %p458
      %s674 = smul.u32 2, %s31
      %p675 = scmp.lt.s32.totalorder %s674, 1
      %s676 = scalar_select %p675, %s674, 1
      %s677 = smul.addr %s676, 2
      %s678 = smul.addr %s677, 8
      %s679 = scalar_lea.vmem %s16, %s678
      %s680 = smul.u32 2, %s31
      %p681 = scmp.lt.s32.totalorder %s680, 1
      %s682 = scalar_select %p681, %s680, 1
      %s683 = smul.addr %s682, 4
      %s684 = smul.addr %s683, 8
      %s685 = scalar_lea.vmem %s0, %s684
      %s686 = smul.u32 2, %s31
      %p687 = scmp.lt.s32.totalorder %s32, 1
      %s688 = scalar_select %p687, %s32, 1
      %s689 = smul.addr %s688, 48
      %s690 = smul.addr %s689, 4
      %s691 = scalar_lea.vmem %s4, %s690
      %p692 = scmp.lt.s32.totalorder %s32, 1
      %s693 = scalar_select %p692, %s32, 1
      %s694 = smul.addr %s693, 3
      %s695 = scalar_lea.vmem %s5, %s694
      %p696 = scmp.lt.s32.totalorder %s32, 1
      %s697 = scalar_select %p696, %s32, 1
      %s698 = smul.addr %s697, 16
      %s699 = smul.addr %s698, 4
      %s700 = scalar_lea.vmem %s6, %s699
      %p701 = scmp.lt.s32.totalorder %s32, 1
      %s702 = scalar_select %p701, %s32, 1
      %s703 = scalar_lea.vmem %s7, %s702
      %p704 = scmp.lt.s32.totalorder %s32, 1
      %s705 = scalar_select %p704, %s32, 1
      %s706 = scalar_lea.vmem %s8, %s705
      %p707 = scmp.lt.s32.totalorder %s32, 1
      %s708 = scalar_select %p707, %s32, 1
      %s709 = scalar_lea.vmem %s9, %s708
      %p710 = scmp.lt.s32.totalorder %s32, 1
      %s711 = scalar_select %p710, %s32, 1
      %s712 = smul.addr %s711, 64
      %s713 = smul.addr %s712, 4
      %s714 = scalar_lea.vmem %s10, %s713
      %p715 = scmp.lt.s32.totalorder %s32, 1
      %s716 = scalar_select %p715, %s32, 1
      %s717 = smul.addr %s716, 4
      %s718 = scalar_lea.vmem %s11, %s717
      %p719 = scmp.lt.s32.totalorder %s32, 1
      %s720 = scalar_select %p719, %s32, 1
      %s721 = smul.addr %s720, 64
      %s722 = smul.addr %s721, 4
      %s723 = scalar_lea.vmem %s12, %s722
      %p724 = scmp.lt.s32.totalorder %s32, 1
      %s725 = scalar_select %p724, %s32, 1
      %s726 = scalar_lea.vmem %s13, %s725
      %p727 = scmp.lt.s32.totalorder %s32, 1
      %s728 = scalar_select %p727, %s32, 1
      %s729 = scalar_lea.vmem %s14, %s728
      %p730 = scmp.lt.s32.totalorder %s32, 1
      %s731 = scalar_select %p730, %s32, 1
      %s732 = scalar_lea.vmem %s15, %s731
      %s733 = smul.u32 2, %s31
      %p734 = scmp.lt.s32.totalorder %s733, 1
      %s735 = scalar_select %p734, %s733, 1
      %s736 = smul.addr %s735, 2
      %s737 = smul.addr %s736, 8
      %s738 = scalar_lea.vmem %s16, %s737
      %s739 = smul.u32 2, %s31
      %p741 = scmp.eq.s32.totalorder %s32, 0
      // Predicated region
      $region85: #{forward.3} parent=83 // pred_check
        %p742 = pneg %p741
      $region86: #{forward.3} parent=83 // pred_check_branch
        %744 = sbr.rel (%p742) target = $region88
      $region87: #{forward.3} parent=83 // pred_region
        %v745 = vld [vmem:[%s685] sm:$0xff]
        %v746 = vld [vmem:[%s685 + $0x8] sm:$0xff]
        %v747 = vld [vmem:[%s685 + $0x10] sm:$0xff]
        %v748 = vld [vmem:[%s685 + $0x18] sm:$0xff]
        %v749 = vld [vmem:[%s685 + $0x20] sm:$0xff]
        %v750 = vld [vmem:[%s685 + $0x28] sm:$0xff]
        %v751 = vld [vmem:[%s685 + $0x30] sm:$0xff]
        %v752 = vld [vmem:[%s685 + $0x38] sm:$0xff]
        %v753 = vld [vmem:[%s1] sm:$0xf]
        %v754 = vld [vmem:[%s1 + $0x4] sm:$0xf]
        %v755 = vld [vmem:[%s1 + $0x8] sm:$0xf]
        %v756 = vld [vmem:[%s1 + $0xc] sm:$0xf]
        %v757 = vld [vmem:[%s1 + $0x10] sm:$0xf]
        %v758 = vld [vmem:[%s1 + $0x14] sm:$0xf]
        %v759 = vld [vmem:[%s1 + $0x18] sm:$0xf]
        %v760 = vld [vmem:[%s1 + $0x1c] sm:$0xf]
        %v761 = vld [vmem:[%s1 + $0x20] sm:$0xf]
        %v762 = vld [vmem:[%s1 + $0x24] sm:$0xf]
        %v763 = vld [vmem:[%s1 + $0x28] sm:$0xf]
        %v764 = vld [vmem:[%s1 + $0x2c] sm:$0xf]
        %v765 = vld [vmem:[%s1 + $0x30] sm:$0xf]
        %v766 = vld [vmem:[%s1 + $0x34] sm:$0xf]
        %v767 = vld [vmem:[%s1 + $0x38] sm:$0xf]
        %v768 = vld [vmem:[%s1 + $0x3c] sm:$0xf]
        %v769 = vld [vmem:[%s1 + $0x40] sm:$0xf]
        %v770 = vld [vmem:[%s1 + $0x44] sm:$0xf]
        %v771 = vld [vmem:[%s1 + $0x48] sm:$0xf]
        %v772 = vld [vmem:[%s1 + $0x4c] sm:$0xf]
        %v773 = vld [vmem:[%s1 + $0x50] sm:$0xf]
        %v774 = vld [vmem:[%s1 + $0x54] sm:$0xf]
        %v775 = vld [vmem:[%s1 + $0x58] sm:$0xf]
        %v776 = vld [vmem:[%s1 + $0x5c] sm:$0xf]
        %v777 = vpack.c.bf16 %v747, %v745
        %v778 = vpack.c.bf16 %v748, %v746
        %v779 = vpack.c.bf16 %v751, %v749
        %v780 = vpack.c.bf16 %v752, %v750
        %v781 = vld [vmem:[%s2] sm:$0x1]
        %v783 = vlaneseq
        %v784 = vshrl.u32 %v783, 7
        %v785 = vsub.s32 0, %v784
        %v786 = vrot.slane %v781, %v785
        %v812 = vunpack.c.l.b16 %v753
        %v813 = vunpack.c.l.b16 %v754
        %v814 = vunpack.c.l.b16 %v755
        %v815 = vunpack.c.l.b16 %v756
        %v816 = vunpack.c.l.b16 %v757
        %v817 = vunpack.c.l.b16 %v758
        %v818 = vunpack.c.l.b16 %v759
        %v819 = vunpack.c.l.b16 %v760
        %v820 = vunpack.c.l.b16 %v761
        %v821 = vunpack.c.l.b16 %v762
        %v822 = vunpack.c.l.b16 %v763
        %v823 = vunpack.c.l.b16 %v764
        %v824 = vunpack.c.l.b16 %v765
        %v825 = vunpack.c.l.b16 %v766
        %v826 = vunpack.c.l.b16 %v767
        %v827 = vunpack.c.l.b16 %v768
        %v828 = vunpack.c.l.b16 %v769
        %v829 = vunpack.c.l.b16 %v770
        %v830 = vunpack.c.l.b16 %v771
        %v831 = vunpack.c.l.b16 %v772
        %v832 = vunpack.c.l.b16 %v773
        %v833 = vunpack.c.l.b16 %v774
        %v834 = vunpack.c.l.b16 %v775
        %v835 = vunpack.c.l.b16 %v776
        %v836 = vpack.c.b16 %v813, %v812
        %v837 = vpack.c.b16 %v815, %v814
        %v838 = vpack.c.b16 %v817, %v816
        %v839 = vpack.c.b16 %v819, %v818
        %v840 = vpack.c.b16 %v821, %v820
        %v841 = vpack.c.b16 %v823, %v822
        %v842 = vpack.c.b16 %v825, %v824
        %v843 = vpack.c.b16 %v827, %v826
        %v844 = vpack.c.b16 %v829, %v828
        %v845 = vpack.c.b16 %v831, %v830
        %v846 = vpack.c.b16 %v833, %v832
        %v847 = vpack.c.b16 %v835, %v834
        %vm860 = vcmask 523264
        %v862 = vsel %vm860, %v778, 0
        %v865 = vsel %vm860, %v780, 0
        %867 = vmatprep.subr.bf16.mxu0 0
        %868 = vmatpush1.bf16.msra.mxu0 %v843
        %869 = vmatprep.subr.bf16.mxu0 0
        %870 = vmatpush1.bf16.msra.mxu0 %v842
        %871 = vmatprep.subr.bf16.mxu0 0
        %872 = vmatpush1.bf16.msra.mxu0 %v841
        %873 = vmatprep.subr.bf16.mxu0 0
        %874 = vmatpush1.bf16.msra.mxu0 %v840
        %875 = vmatprep.subr.bf16.mxu0 0
        %876 = vmatpush1.bf16.msra.mxu0 %v839
        %877 = vmatprep.subr.bf16.mxu0 0
        %878 = vmatpush1.bf16.msra.mxu0 %v838
        %879 = vmatprep.subr.bf16.mxu0 0
        %880 = vmatpush1.bf16.msra.mxu0 %v837
        %881 = vmatprep.subr.bf16.mxu0 0
        %882 = vmatpush1.bf16.msra.mxu0 %v836
        %883 = vmatprep.subr.bf16.mxu0 0
        %884 = vmatpush2.bf16.msra.mxu0 0
        %885 = vmatprep.subr.bf16.mxu0 0
        %886 = vmatpush2.bf16.msra.mxu0 0
        %887 = vmatprep.subr.bf16.mxu0 0
        %888 = vmatpush2.bf16.msra.mxu0 0
        %889 = vmatprep.subr.bf16.mxu0 0
        %890 = vmatpush2.bf16.msra.mxu0 0
        %891 = vmatprep.subr.bf16.mxu0 0
        %892 = vmatpush2.bf16.msra.mxu0 %v847
        %893 = vmatprep.subr.bf16.mxu0 0
        %894 = vmatpush2.bf16.msra.mxu0 %v846
        %895 = vmatprep.subr.bf16.mxu0 0
        %896 = vmatpush2.bf16.msra.mxu0 %v845
        %897 = vmatprep.subr.bf16.mxu0 0
        %898 = vmatpush2.bf16.msra.mxu0 %v844
        %899 = vmatprep.mubr.bf16.mxu0 %v862
        %900 = vmatmul.mubr.bf16.gmra.mxu0 %v777
        %v901 = vpop.f32.mrf.mxu0
        %v902 = vadd.f32 %v786, %v901
        %v903 = vpop.f32.mrf.mxu0
        %v904 = vpop.f32.mrf.mxu0
        %v905 = vadd.f32 %v786, %v904
        %v906 = vpop.f32.mrf.mxu0
        %907 = vmatprep.mubr.bf16.mxu0 %v865
        %908 = vmatmul.mubr.bf16.gmra.mxu0 %v779
        %v909 = vpop.f32.mrf.mxu0
        %v910 = vadd.f32 %v786, %v909
        %v911 = vpop.f32.mrf.mxu0
        %v912 = vpop.f32.mrf.mxu0
        %v913 = vadd.f32 %v786, %v912
        %v914 = vpop.f32.mrf.mxu0
        %915 = vdwg.mxu0
        %v916 = vld [vmem:[%s3] sm:$0xff]
        %v917 = vld [vmem:[%s3 + $0x8] sm:$0xff]
        %v918 = vadd.f32 %v902, %v916
        %v919 = vadd.f32 %v905, %v917
        %v920 = vadd.f32 %v910, %v916
        %v921 = vadd.f32 %v913, %v917
        %922 = vst [vmem:[%s738] sm:$0xff] %v918
        %923 = vst [vmem:[%s738 + $0x8] sm:$0xff] %v919
        %924 = vst [vmem:[%s738 + $0x10] sm:$0xff] %v920
        %925 = vst [vmem:[%s738 + $0x18] sm:$0xff] %v921
      $region88: #{forward.3} parent=83 // pred_fallthru
        _
      %v926 = vld [vmem:[%s738] sm:$0xff]
      %v927 = vld [vmem:[%s738 + $0x8] sm:$0xff]
      %v928 = vld [vmem:[%s738 + $0x10] sm:$0xff]
      %v929 = vld [vmem:[%s738 + $0x18] sm:$0xff]
      %v930 = vld [vmem:[%s691] sm:$0xff]
      %v931 = vld [vmem:[%s691 + $0x8] sm:$0xf]
      %v932 = vld [vmem:[%s691 + $0xc] sm:$0xff]
      %v933 = vld [vmem:[%s691 + $0x14] sm:$0xf]
      %v934 = vld [vmem:[%s691 + $0x18] sm:$0xff]
      %v935 = vld [vmem:[%s691 + $0x20] sm:$0xf]
      %v936 = vld [vmem:[%s691 + $0x24] sm:$0xff]
      %v937 = vld [vmem:[%s691 + $0x2c] sm:$0xf]
      %v938 = vld [vmem:[%s691 + $0x30] sm:$0xff]
      %v939 = vld [vmem:[%s691 + $0x38] sm:$0xf]
      %v940 = vld [vmem:[%s691 + $0x3c] sm:$0xff]
      %v941 = vld [vmem:[%s691 + $0x44] sm:$0xf]
      %v942 = vld [vmem:[%s691 + $0x48] sm:$0xff]
      %v943 = vld [vmem:[%s691 + $0x50] sm:$0xf]
      %v944 = vld [vmem:[%s691 + $0x54] sm:$0xff]
      %v945 = vld [vmem:[%s691 + $0x5c] sm:$0xf]
      %v946 = vld [vmem:[%s691 + $0x60] sm:$0xff]
      %v947 = vld [vmem:[%s691 + $0x68] sm:$0xf]
      %v948 = vld [vmem:[%s691 + $0x6c] sm:$0xff]
      %v949 = vld [vmem:[%s691 + $0x74] sm:$0xf]
      %v950 = vld [vmem:[%s691 + $0x78] sm:$0xff]
      %v951 = vld [vmem:[%s691 + $0x80] sm:$0xf]
      %v952 = vld [vmem:[%s691 + $0x84] sm:$0xff]
      %v953 = vld [vmem:[%s691 + $0x8c] sm:$0xf]
      %v954 = vld [vmem:[%s691 + $0x90] sm:$0xff]
      %v955 = vld [vmem:[%s691 + $0x98] sm:$0xf]
      %v956 = vld [vmem:[%s691 + $0x9c] sm:$0xff]
      %v957 = vld [vmem:[%s691 + $0xa4] sm:$0xf]
      %v958 = vld [vmem:[%s691 + $0xa8] sm:$0xff]
      %v959 = vld [vmem:[%s691 + $0xb0] sm:$0xf]
      %v960 = vld [vmem:[%s691 + $0xb4] sm:$0xff]
      %v961 = vld [vmem:[%s691 + $0xbc] sm:$0xf]
      %v962 = vpack.c.bf16 %v927, %v926
      %v963 = vpack.c.bf16 %v929, %v928
      %v964 = vld [vmem:[%s695] sm:$0x7]
      %v966 = vlaneseq
      %v967 = vshrl.u32 %v966, 7
      %v968 = vsub.s32 0, %v967
      %v969 = vrot.slane %v964, %v968
      %v970 = vlaneseq
      %v971 = vshrl.u32 %v970, 7
      %v972 = vsub.s32 1, %v971
      %v973 = vrot.slane %v964, %v972
      %v974 = vlaneseq
      %v975 = vshrl.u32 %v974, 7
      %v976 = vsub.s32 2, %v975
      %v977 = vrot.slane %v964, %v976
      %v1013 = vunpack.c.l.b16 %v930
      %v1014 = vunpack.c.h.b16 %v930
      %v1015 = vunpack.c.l.b16 %v931
      %v1016 = vunpack.c.l.b16 %v932
      %v1017 = vunpack.c.h.b16 %v932
      %v1018 = vunpack.c.l.b16 %v933
      %v1019 = vunpack.c.l.b16 %v934
      %v1020 = vunpack.c.h.b16 %v934
      %v1021 = vunpack.c.l.b16 %v935
      %v1022 = vunpack.c.l.b16 %v936
      %v1023 = vunpack.c.h.b16 %v936
      %v1024 = vunpack.c.l.b16 %v937
      %v1025 = vunpack.c.l.b16 %v938
      %v1026 = vunpack.c.h.b16 %v938
      %v1027 = vunpack.c.l.b16 %v939
      %v1028 = vunpack.c.l.b16 %v940
      %v1029 = vunpack.c.h.b16 %v940
      %v1030 = vunpack.c.l.b16 %v941
      %v1031 = vunpack.c.l.b16 %v942
      %v1032 = vunpack.c.h.b16 %v942
      %v1033 = vunpack.c.l.b16 %v943
      %v1034 = vunpack.c.l.b16 %v944
      %v1035 = vunpack.c.h.b16 %v944
      %v1036 = vunpack.c.l.b16 %v945
      %v1037 = vunpack.c.l.b16 %v946
      %v1038 = vunpack.c.h.b16 %v946
      %v1039 = vunpack.c.l.b16 %v947
      %v1040 = vunpack.c.l.b16 %v948
      %v1041 = vunpack.c.h.b16 %v948
      %v1042 = vunpack.c.l.b16 %v949
      %v1043 = vunpack.c.l.b16 %v950
      %v1044 = vunpack.c.h.b16 %v950
      %v1045 = vunpack.c.l.b16 %v951
      %v1046 = vunpack.c.l.b16 %v952
      %v1047 = vunpack.c.h.b16 %v952
      %v1048 = vunpack.c.l.b16 %v953
      %v1049 = vunpack.c.l.b16 %v954
      %v1050 = vunpack.c.h.b16 %v954
      %v1051 = vunpack.c.l.b16 %v955
      %v1052 = vunpack.c.l.b16 %v956
      %v1053 = vunpack.c.h.b16 %v956
      %v1054 = vunpack.c.l.b16 %v957
      %v1055 = vunpack.c.l.b16 %v958
      %v1056 = vunpack.c.h.b16 %v958
      %v1057 = vunpack.c.l.b16 %v959
      %v1058 = vunpack.c.l.b16 %v960
      %v1059 = vunpack.c.h.b16 %v960
      %v1060 = vunpack.c.l.b16 %v961
      %v1061 = vpack.c.b16 %v1016, %v1013
      %v1062 = vpack.c.b16 %v1017, %v1014
      %v1063 = vpack.c.b16 %v1018, %v1015
      %v1064 = vpack.c.b16 %v1022, %v1019
      %v1065 = vpack.c.b16 %v1023, %v1020
      %v1066 = vpack.c.b16 %v1024, %v1021
      %v1067 = vpack.c.b16 %v1028, %v1025
      %v1068 = vpack.c.b16 %v1029, %v1026
      %v1069 = vpack.c.b16 %v1030, %v1027
      %v1070 = vpack.c.b16 %v1034, %v1031
      %v1071 = vpack.c.b16 %v1035, %v1032
      %v1072 = vpack.c.b16 %v1036, %v1033
      %v1073 = vpack.c.b16 %v1040, %v1037
      %v1074 = vpack.c.b16 %v1041, %v1038
      %v1075 = vpack.c.b16 %v1042, %v1039
      %v1076 = vpack.c.b16 %v1046, %v1043
      %v1077 = vpack.c.b16 %v1047, %v1044
      %v1078 = vpack.c.b16 %v1048, %v1045
      %v1079 = vpack.c.b16 %v1052, %v1049
      %v1080 = vpack.c.b16 %v1053, %v1050
      %v1081 = vpack.c.b16 %v1054, %v1051
      %v1082 = vpack.c.b16 %v1058, %v1055
      %v1083 = vpack.c.b16 %v1059, %v1056
      %v1084 = vpack.c.b16 %v1060, %v1057
      %1109 = vmatprep.subr.bf16.mxu0 %v1083
      %1110 = vmatpush1.bf16.msra.mxu0 %v1082
      %1111 = vmatprep.subr.bf16.mxu0 %v1080
      %1112 = vmatpush1.bf16.msra.mxu0 %v1079
      %1113 = vmatprep.subr.bf16.mxu0 %v1077
      %1114 = vmatpush1.bf16.msra.mxu0 %v1076
      %1115 = vmatprep.subr.bf16.mxu0 %v1074
      %1116 = vmatpush1.bf16.msra.mxu0 %v1073
      %1117 = vmatprep.subr.bf16.mxu0 %v1071
      %1118 = vmatpush1.bf16.msra.mxu0 %v1070
      %1119 = vmatprep.subr.bf16.mxu0 %v1068
      %1120 = vmatpush1.bf16.msra.mxu0 %v1067
      %1121 = vmatprep.subr.bf16.mxu0 %v1065
      %1122 = vmatpush1.bf16.msra.mxu0 %v1064
      %1123 = vmatprep.subr.bf16.mxu0 %v1062
      %1124 = vmatpush1.bf16.msra.mxu0 %v1061
      %1125 = vmatprep.subr.bf16.mxu0 0
      %1126 = vmatpush2.bf16.msra.mxu0 0
      %1127 = vmatprep.subr.bf16.mxu0 0
      %1128 = vmatpush2.bf16.msra.mxu0 0
      %1129 = vmatprep.subr.bf16.mxu0 0
      %1130 = vmatpush2.bf16.msra.mxu0 0
      %1131 = vmatprep.subr.bf16.mxu0 0
      %1132 = vmatpush2.bf16.msra.mxu0 0
      %1133 = vmatprep.subr.bf16.mxu0 0
      %1134 = vmatpush2.bf16.msra.mxu0 0
      %1135 = vmatprep.subr.bf16.mxu0 0
      %1136 = vmatpush2.bf16.msra.mxu0 0
      %1137 = vmatprep.subr.bf16.mxu0 0
      %1138 = vmatpush2.bf16.msra.mxu0 0
      %1139 = vmatprep.subr.bf16.mxu0 0
      %1140 = vmatpush2.bf16.msra.mxu0 0
      %1141 = vmatprep.mubr.bf16.mxu0 0
      %1142 = vmatmul.mubr.bf16.gmra.mxu0 %v962
      %v1143 = vpop.f32.mrf.mxu0
      %v1144 = vadd.f32 %v969, %v1143
      %v1145 = vpop.f32.mrf.mxu0
      %v1146 = vadd.f32 %v973, %v1145
      %v1147 = vpop.f32.mrf.mxu0
      %v1148 = vadd.f32 %v969, %v1147
      %v1149 = vpop.f32.mrf.mxu0
      %v1150 = vadd.f32 %v973, %v1149
      %1151 = vmatprep.mubr.bf16.mxu0 0
      %1152 = vmatmul.mubr.bf16.gmra.mxu0 %v963
      %v1153 = vpop.f32.mrf.mxu0
      %v1154 = vadd.f32 %v969, %v1153
      %v1155 = vpop.f32.mrf.mxu0
      %v1156 = vadd.f32 %v973, %v1155
      %v1157 = vpop.f32.mrf.mxu0
      %v1158 = vadd.f32 %v969, %v1157
      %v1159 = vpop.f32.mrf.mxu0
      %v1160 = vadd.f32 %v973, %v1159
      %1161 = vdwg.mxu0
      %1162 = vmatprep.subr.bf16.mxu0 0
      %1163 = vmatpush1.bf16.msra.mxu0 %v1084
      %1164 = vmatprep.subr.bf16.mxu0 0
      %1165 = vmatpush1.bf16.msra.mxu0 %v1081
      %1166 = vmatprep.subr.bf16.mxu0 0
      %1167 = vmatpush1.bf16.msra.mxu0 %v1078
      %1168 = vmatprep.subr.bf16.mxu0 0
      %1169 = vmatpush1.bf16.msra.mxu0 %v1075
      %1170 = vmatprep.subr.bf16.mxu0 0
      %1171 = vmatpush1.bf16.msra.mxu0 %v1072
      %1172 = vmatprep.subr.bf16.mxu0 0
      %1173 = vmatpush1.bf16.msra.mxu0 %v1069
      %1174 = vmatprep.subr.bf16.mxu0 0
      %1175 = vmatpush1.bf16.msra.mxu0 %v1066
      %1176 = vmatprep.subr.bf16.mxu0 0
      %1177 = vmatpush1.bf16.msra.mxu0 %v1063
      %1178 = vmatprep.subr.bf16.mxu0 0
      %1179 = vmatpush2.bf16.msra.mxu0 0
      %1180 = vmatprep.subr.bf16.mxu0 0
      %1181 = vmatpush2.bf16.msra.mxu0 0
      %1182 = vmatprep.subr.bf16.mxu0 0
      %1183 = vmatpush2.bf16.msra.mxu0 0
      %1184 = vmatprep.subr.bf16.mxu0 0
      %1185 = vmatpush2.bf16.msra.mxu0 0
      %1186 = vmatprep.subr.bf16.mxu0 0
      %1187 = vmatpush2.bf16.msra.mxu0 0
      %1188 = vmatprep.subr.bf16.mxu0 0
      %1189 = vmatpush2.bf16.msra.mxu0 0
      %1190 = vmatprep.subr.bf16.mxu0 0
      %1191 = vmatpush2.bf16.msra.mxu0 0
      %1192 = vmatprep.subr.bf16.mxu0 0
      %1193 = vmatpush2.bf16.msra.mxu0 0
      %1194 = vmatprep.mubr.bf16.mxu0 0
      %1195 = vmatmul.mubr.bf16.gmra.mxu0 %v962
      %v1196 = vpop.f32.mrf.mxu0
      %v1197 = vadd.f32 %v977, %v1196
      %v1198 = vpop.f32.mrf.mxu0
      %v1199 = vpop.f32.mrf.mxu0
      %v1200 = vadd.f32 %v977, %v1199
      %v1201 = vpop.f32.mrf.mxu0
      %1202 = vmatprep.mubr.bf16.mxu0 0
      %1203 = vmatmul.mubr.bf16.gmra.mxu0 %v963
      %v1204 = vpop.f32.mrf.mxu0
      %v1205 = vadd.f32 %v977, %v1204
      %v1206 = vpop.f32.mrf.mxu0
      %v1207 = vpop.f32.mrf.mxu0
      %v1208 = vadd.f32 %v977, %v1207
      %v1209 = vpop.f32.mrf.mxu0
      %1210 = vdwg.mxu0
      %v1211 = vpack.c.bf16 %v1148, %v1144
      %v1212 = vpack.c.bf16 %v1158, %v1154
      %v1213 = vpack.c.bf16 %v1150, %v1146
      %v1214 = vpack.c.bf16 %v1160, %v1156
      %v1215 = vpack.c.bf16 %v1200, %v1197
      %v1216 = vpack.c.bf16 %v1208, %v1205
      %vm1217 = vcmask 261120
      %v1219 = vsel %vm1217, %v1211, 0
      %v1222 = vsel %vm1217, %v1213, 0
      %1224 = vmatprep.subr.bf16.mxu0 0
      %1225 = vmatpush1.bf16.xpose.msra.mxu0 0
      %1226 = vmatprep.subr.bf16.mxu0 0
      %1227 = vmatpush1.bf16.xpose.msra.mxu0 0
      %1228 = vmatprep.subr.bf16.mxu0 0
      %1229 = vmatpush1.bf16.xpose.msra.mxu0 0
      %1230 = vmatprep.subr.bf16.mxu0 0
      %1231 = vmatpush1.bf16.xpose.msra.mxu0 0
      %1232 = vmatprep.subr.bf16.mxu0 0
      %1233 = vmatpush1.bf16.xpose.msra.mxu0 0
      %1234 = vmatprep.subr.bf16.mxu0 0
      %1235 = vmatpush1.bf16.xpose.msra.mxu0 0
      %1236 = vmatprep.subr.bf16.mxu0 0
      %1237 = vmatpush1.bf16.xpose.msra.mxu0 0
      %1238 = vmatprep.subr.bf16.mxu0 0
      %1239 = vmatpush1.bf16.xpose.msra.mxu0 %v1222
      %1240 = vmatprep.subr.bf16.mxu0 0
      %1241 = vmatpush2.bf16.xpose.msra.mxu0 0
      %1242 = vmatprep.subr.bf16.mxu0 0
      %1243 = vmatpush2.bf16.xpose.msra.mxu0 0
      %1244 = vmatprep.subr.bf16.mxu0 0
      %1245 = vmatpush2.bf16.xpose.msra.mxu0 0
      %1246 = vmatprep.subr.bf16.mxu0 0
      %1247 = vmatpush2.bf16.xpose.msra.mxu0 0
      %1248 = vmatprep.subr.bf16.mxu0 0
      %1249 = vmatpush2.bf16.xpose.msra.mxu0 0
      %1250 = vmatprep.subr.bf16.mxu0 0
      %1251 = vmatpush2.bf16.xpose.msra.mxu0 0
      %1252 = vmatprep.subr.bf16.mxu0 0
      %1253 = vmatpush2.bf16.xpose.msra.mxu0 0
      %1254 = vmatprep.subr.bf16.mxu0 0
      %1255 = vmatpush2.bf16.xpose.msra.mxu0 0
      %1256 = vmatprep.mubr.bf16.mxu0 0
      %1257 = vmatmul.mubr.bf16.gmra.mxu0 %v1219
      %v1258 = vpop.f32.mrf.mxu0
      %v1259 = vadd.f32 0.0, %v1258
      %v1260 = vpop.f32.mrf.mxu0
      %v1261 = vpop.f32.mrf.mxu0
      %v1262 = vadd.f32 0.0, %v1261
      %v1263 = vpop.f32.mrf.mxu0
      %1264 = vdwg.mxu0
      %v1266 = vsel %vm1217, %v1212, 0
      %v1269 = vsel %vm1217, %v1214, 0
      %1271 = vmatprep.subr.bf16.mxu0 0
      %1272 = vmatpush1.bf16.xpose.msra.mxu0 0
      %1273 = vmatprep.subr.bf16.mxu0 0
      %1274 = vmatpush1.bf16.xpose.msra.mxu0 0
      %1275 = vmatprep.subr.bf16.mxu0 0
      %1276 = vmatpush1.bf16.xpose.msra.mxu0 0
      %1277 = vmatprep.subr.bf16.mxu0 0
      %1278 = vmatpush1.bf16.xpose.msra.mxu0 0
      %1279 = vmatprep.subr.bf16.mxu0 0
      %1280 = vmatpush1.bf16.xpose.msra.mxu0 0
      %1281 = vmatprep.subr.bf16.mxu0 0
      %1282 = vmatpush1.bf16.xpose.msra.mxu0 0
      %1283 = vmatprep.subr.bf16.mxu0 0
      %1284 = vmatpush1.bf16.xpose.msra.mxu0 0
      %1285 = vmatprep.subr.bf16.mxu0 0
      %1286 = vmatpush1.bf16.xpose.msra.mxu0 %v1269
      %1287 = vmatprep.subr.bf16.mxu0 0
      %1288 = vmatpush2.bf16.xpose.msra.mxu0 0
      %1289 = vmatprep.subr.bf16.mxu0 0
      %1290 = vmatpush2.bf16.xpose.msra.mxu0 0
      %1291 = vmatprep.subr.bf16.mxu0 0
      %1292 = vmatpush2.bf16.xpose.msra.mxu0 0
      %1293 = vmatprep.subr.bf16.mxu0 0
      %1294 = vmatpush2.bf16.xpose.msra.mxu0 0
      %1295 = vmatprep.subr.bf16.mxu0 0
      %1296 = vmatpush2.bf16.xpose.msra.mxu0 0
      %1297 = vmatprep.subr.bf16.mxu0 0
      %1298 = vmatpush2.bf16.xpose.msra.mxu0 0
      %1299 = vmatprep.subr.bf16.mxu0 0
      %1300 = vmatpush2.bf16.xpose.msra.mxu0 0
      %1301 = vmatprep.subr.bf16.mxu0 0
      %1302 = vmatpush2.bf16.xpose.msra.mxu0 0
      %1303 = vmatprep.mubr.bf16.mxu0 0
      %1304 = vmatmul.mubr.bf16.gmra.mxu0 %v1266
      %v1305 = vpop.f32.mrf.mxu0
      %v1306 = vadd.f32 0.0, %v1305
      %v1307 = vpop.f32.mrf.mxu0
      %v1308 = vpop.f32.mrf.mxu0
      %v1309 = vadd.f32 0.0, %v1308
      %v1310 = vpop.f32.mrf.mxu0
      %1311 = vdwg.mxu0
      %v1312 = vmul.f32 %v1259, 0.17677669
      %v1313 = vmul.f32 %v1262, 0.17677669
      %v1314 = vmul.f32 %v1306, 0.17677669
      %v1315 = vmul.f32 %v1309, 0.17677669
      %vm1316 = vcmask 130048
      %v1317 = vsel %vm1316, %v1312, -inf
      %1318 = vmax.xlane.f32.xlu0 %v1317
      %v1319 = vpop.xlane.xlu0 %1318
      %v1320 = vsel %vm1316, %v1313, -inf
      %1321 = vmax.xlane.f32.xlu0 %v1320
      %v1322 = vpop.xlane.xlu0 %1321
      %v1323 = vsel %vm1316, %v1314, -inf
      %1324 = vmax.xlane.f32.xlu0 %v1323
      %v1325 = vpop.xlane.xlu0 %1324
      %v1326 = vsel %vm1316, %v1315, -inf
      %1327 = vmax.xlane.f32.xlu0 %v1326
      %v1328 = vpop.xlane.xlu0 %1327
      %v1329 = vsub.f32 %v1312, %v1319
      %v1330 = vsub.f32 %v1313, %v1322
      %v1331 = vsub.f32 %v1314, %v1325
      %v1332 = vsub.f32 %v1315, %v1328
      %v1333 = vmul.f32 %v1329, 1.442695
      %v1334 = vpow.pop %v1333
      %v1335 = vmul.f32 %v1330, 1.442695
      %v1336 = vpow.pop %v1335
      %v1337 = vmul.f32 %v1331, 1.442695
      %v1338 = vpow.pop %v1337
      %v1339 = vmul.f32 %v1332, 1.442695
      %v1340 = vpow.pop %v1339
      %v1341 = vsel %vm1316, %v1334, 0.0
      %1342 = vadd.xlane.f32.xlu0 %v1341
      %v1343 = vpop.xlane.xlu0 %1342
      %v1344 = vsel %vm1316, %v1336, 0.0
      %1345 = vadd.xlane.f32.xlu0 %v1344
      %v1346 = vpop.xlane.xlu0 %1345
      %v1347 = vsel %vm1316, %v1338, 0.0
      %1348 = vadd.xlane.f32.xlu0 %v1347
      %v1349 = vpop.xlane.xlu0 %1348
      %v1350 = vsel %vm1316, %v1340, 0.0
      %1351 = vadd.xlane.f32.xlu0 %v1350
      %v1352 = vpop.xlane.xlu0 %1351
      %v1353 = vrcp.pop %v1343
      %v1354 = vrcp.pop %v1346
      %v1355 = vrcp.pop %v1349
      %v1356 = vrcp.pop %v1352
      %v1357 = vmul.f32 %v1334, %v1353
      %v1358 = vmul.f32 %v1336, %v1354
      %v1359 = vmul.f32 %v1338, %v1355
      %v1360 = vmul.f32 %v1340, %v1356
      %v1361 = vpack.c.bf16 %v1358, %v1357
      %v1362 = vpack.c.bf16 %v1360, %v1359
      %v1364 = vsel %vm1316, %v1361, 0
      %1366 = vmatprep.subr.bf16.mxu0 0
      %1367 = vmatpush1.bf16.msra.mxu0 0
      %1368 = vmatprep.subr.bf16.mxu0 0
      %1369 = vmatpush1.bf16.msra.mxu0 0
      %1370 = vmatprep.subr.bf16.mxu0 0
      %1371 = vmatpush1.bf16.msra.mxu0 0
      %1372 = vmatprep.subr.bf16.mxu0 0
      %1373 = vmatpush1.bf16.msra.mxu0 0
      %1374 = vmatprep.subr.bf16.mxu0 0
      %1375 = vmatpush1.bf16.msra.mxu0 0
      %1376 = vmatprep.subr.bf16.mxu0 0
      %1377 = vmatpush1.bf16.msra.mxu0 0
      %1378 = vmatprep.subr.bf16.mxu0 0
      %1379 = vmatpush1.bf16.msra.mxu0 0
      %1380 = vmatprep.subr.bf16.mxu0 0
      %1381 = vmatpush1.bf16.msra.mxu0 %v1215
      %1382 = vmatprep.subr.bf16.mxu0 0
      %1383 = vmatpush2.bf16.msra.mxu0 0
      %1384 = vmatprep.subr.bf16.mxu0 0
      %1385 = vmatpush2.bf16.msra.mxu0 0
      %1386 = vmatprep.subr.bf16.mxu0 0
      %1387 = vmatpush2.bf16.msra.mxu0 0
      %1388 = vmatprep.subr.bf16.mxu0 0
      %1389 = vmatpush2.bf16.msra.mxu0 0
      %1390 = vmatprep.subr.bf16.mxu0 0
      %1391 = vmatpush2.bf16.msra.mxu0 0
      %1392 = vmatprep.subr.bf16.mxu0 0
      %1393 = vmatpush2.bf16.msra.mxu0 0
      %1394 = vmatprep.subr.bf16.mxu0 0
      %1395 = vmatpush2.bf16.msra.mxu0 0
      %1396 = vmatprep.subr.bf16.mxu0 0
      %1397 = vmatpush2.bf16.msra.mxu0 0
      %1398 = vmatprep.mubr.bf16.mxu0 0
      %1399 = vmatmul.mubr.bf16.gmra.mxu0 %v1364
      %v1400 = vpop.f32.mrf.mxu0
      %v1401 = vadd.f32 0.0, %v1400
      %v1402 = vpop.f32.mrf.mxu0
      %v1403 = vpop.f32.mrf.mxu0
      %v1404 = vadd.f32 0.0, %v1403
      %v1405 = vpop.f32.mrf.mxu0
      %1406 = vdwg.mxu0
      %v1408 = vsel %vm1316, %v1362, 0
      %1410 = vmatprep.subr.bf16.mxu0 0
      %1411 = vmatpush1.bf16.msra.mxu0 0
      %1412 = vmatprep.subr.bf16.mxu0 0
      %1413 = vmatpush1.bf16.msra.mxu0 0
      %1414 = vmatprep.subr.bf16.mxu0 0
      %1415 = vmatpush1.bf16.msra.mxu0 0
      %1416 = vmatprep.subr.bf16.mxu0 0
      %1417 = vmatpush1.bf16.msra.mxu0 0
      %1418 = vmatprep.subr.bf16.mxu0 0
      %1419 = vmatpush1.bf16.msra.mxu0 0
      %1420 = vmatprep.subr.bf16.mxu0 0
      %1421 = vmatpush1.bf16.msra.mxu0 0
      %1422 = vmatprep.subr.bf16.mxu0 0
      %1423 = vmatpush1.bf16.msra.mxu0 0
      %1424 = vmatprep.subr.bf16.mxu0 0
      %1425 = vmatpush1.bf16.msra.mxu0 %v1216
      %1426 = vmatprep.subr.bf16.mxu0 0
      %1427 = vmatpush2.bf16.msra.mxu0 0
      %1428 = vmatprep.subr.bf16.mxu0 0
      %1429 = vmatpush2.bf16.msra.mxu0 0
      %1430 = vmatprep.subr.bf16.mxu0 0
      %1431 = vmatpush2.bf16.msra.mxu0 0
      %1432 = vmatprep.subr.bf16.mxu0 0
      %1433 = vmatpush2.bf16.msra.mxu0 0
      %1434 = vmatprep.subr.bf16.mxu0 0
      %1435 = vmatpush2.bf16.msra.mxu0 0
      %1436 = vmatprep.subr.bf16.mxu0 0
      %1437 = vmatpush2.bf16.msra.mxu0 0
      %1438 = vmatprep.subr.bf16.mxu0 0
      %1439 = vmatpush2.bf16.msra.mxu0 0
      %1440 = vmatprep.subr.bf16.mxu0 0
      %1441 = vmatpush2.bf16.msra.mxu0 0
      %1442 = vmatprep.mubr.bf16.mxu0 0
      %1443 = vmatmul.mubr.bf16.gmra.mxu0 %v1408
      %v1444 = vpop.f32.mrf.mxu0
      %v1445 = vadd.f32 0.0, %v1444
      %v1446 = vpop.f32.mrf.mxu0
      %v1447 = vpop.f32.mrf.mxu0
      %v1448 = vadd.f32 0.0, %v1447
      %v1449 = vpop.f32.mrf.mxu0
      %1450 = vdwg.mxu0
      %1451 = vst.msk [vmem:[#allocation2] sm:$0xff] %vm1217, %v1401
      %1452 = vst.msk [vmem:[#allocation2 + $0x8] sm:$0xff] %vm1217, %v1404
      %1453 = vst.msk [vmem:[#allocation2 + $0x10] sm:$0xff] %vm1217, %v1445
      %1454 = vst.msk [vmem:[#allocation2 + $0x18] sm:$0xff] %vm1217, %v1448
      %1456 = vrot.lane.b32.xlu0 %v1211, 96
      %v1457 = vpop.permute.xlu0 %1456
      %1459 = vrot.lane.b32.xlu0 %v1213, 96
      %v1460 = vpop.permute.xlu0 %1459
      %v1462 = vsel %vm1217, %v1457, 0
      %v1465 = vsel %vm1217, %v1460, 0
      %1467 = vmatprep.subr.bf16.mxu0 0
      %1468 = vmatpush1.bf16.xpose.msra.mxu0 0
      %1469 = vmatprep.subr.bf16.mxu0 0
      %1470 = vmatpush1.bf16.xpose.msra.mxu0 0
      %1471 = vmatprep.subr.bf16.mxu0 0
      %1472 = vmatpush1.bf16.xpose.msra.mxu0 0
      %1473 = vmatprep.subr.bf16.mxu0 0
      %1474 = vmatpush1.bf16.xpose.msra.mxu0 0
      %1475 = vmatprep.subr.bf16.mxu0 0
      %1476 = vmatpush1.bf16.xpose.msra.mxu0 0
      %1477 = vmatprep.subr.bf16.mxu0 0
      %1478 = vmatpush1.bf16.xpose.msra.mxu0 0
      %1479 = vmatprep.subr.bf16.mxu0 0
      %1480 = vmatpush1.bf16.xpose.msra.mxu0 0
      %1481 = vmatprep.subr.bf16.mxu0 0
      %1482 = vmatpush1.bf16.xpose.msra.mxu0 %v1465
      %1483 = vmatprep.subr.bf16.mxu0 0
      %1484 = vmatpush2.bf16.xpose.msra.mxu0 0
      %1485 = vmatprep.subr.bf16.mxu0 0
      %1486 = vmatpush2.bf16.xpose.msra.mxu0 0
      %1487 = vmatprep.subr.bf16.mxu0 0
      %1488 = vmatpush2.bf16.xpose.msra.mxu0 0
      %1489 = vmatprep.subr.bf16.mxu0 0
      %1490 = vmatpush2.bf16.xpose.msra.mxu0 0
      %1491 = vmatprep.subr.bf16.mxu0 0
      %1492 = vmatpush2.bf16.xpose.msra.mxu0 0
      %1493 = vmatprep.subr.bf16.mxu0 0
      %1494 = vmatpush2.bf16.xpose.msra.mxu0 0
      %1495 = vmatprep.subr.bf16.mxu0 0
      %1496 = vmatpush2.bf16.xpose.msra.mxu0 0
      %1497 = vmatprep.subr.bf16.mxu0 0
      %1498 = vmatpush2.bf16.xpose.msra.mxu0 0
      %1499 = vmatprep.mubr.bf16.mxu0 0
      %1500 = vmatmul.mubr.bf16.gmra.mxu0 %v1462
      %v1501 = vpop.f32.mrf.mxu0
      %v1502 = vadd.f32 0.0, %v1501
      %v1503 = vpop.f32.mrf.mxu0
      %v1504 = vpop.f32.mrf.mxu0
      %v1505 = vadd.f32 0.0, %v1504
      %v1506 = vpop.f32.mrf.mxu0
      %1507 = vdwg.mxu0
      %1509 = vrot.lane.b32.xlu0 %v1212, 96
      %v1510 = vpop.permute.xlu0 %1509
      %1512 = vrot.lane.b32.xlu0 %v1214, 96
      %v1513 = vpop.permute.xlu0 %1512
      %v1515 = vsel %vm1217, %v1510, 0
      %v1518 = vsel %vm1217, %v1513, 0
      %1520 = vmatprep.subr.bf16.mxu0 0
      %1521 = vmatpush1.bf16.xpose.msra.mxu0 0
      %1522 = vmatprep.subr.bf16.mxu0 0
      %1523 = vmatpush1.bf16.xpose.msra.mxu0 0
      %1524 = vmatprep.subr.bf16.mxu0 0
      %1525 = vmatpush1.bf16.xpose.msra.mxu0 0
      %1526 = vmatprep.subr.bf16.mxu0 0
      %1527 = vmatpush1.bf16.xpose.msra.mxu0 0
      %1528 = vmatprep.subr.bf16.mxu0 0
      %1529 = vmatpush1.bf16.xpose.msra.mxu0 0
      %1530 = vmatprep.subr.bf16.mxu0 0
      %1531 = vmatpush1.bf16.xpose.msra.mxu0 0
      %1532 = vmatprep.subr.bf16.mxu0 0
      %1533 = vmatpush1.bf16.xpose.msra.mxu0 0
      %1534 = vmatprep.subr.bf16.mxu0 0
      %1535 = vmatpush1.bf16.xpose.msra.mxu0 %v1518
      %1536 = vmatprep.subr.bf16.mxu0 0
      %1537 = vmatpush2.bf16.xpose.msra.mxu0 0
      %1538 = vmatprep.subr.bf16.mxu0 0
      %1539 = vmatpush2.bf16.xpose.msra.mxu0 0
      %1540 = vmatprep.subr.bf16.mxu0 0
      %1541 = vmatpush2.bf16.xpose.msra.mxu0 0
      %1542 = vmatprep.subr.bf16.mxu0 0
      %1543 = vmatpush2.bf16.xpose.msra.mxu0 0
      %1544 = vmatprep.subr.bf16.mxu0 0
      %1545 = vmatpush2.bf16.xpose.msra.mxu0 0
      %1546 = vmatprep.subr.bf16.mxu0 0
      %1547 = vmatpush2.bf16.xpose.msra.mxu0 0
      %1548 = vmatprep.subr.bf16.mxu0 0
      %1549 = vmatpush2.bf16.xpose.msra.mxu0 0
      %1550 = vmatprep.subr.bf16.mxu0 0
      %1551 = vmatpush2.bf16.xpose.msra.mxu0 0
      %1552 = vmatprep.mubr.bf16.mxu0 0
      %1553 = vmatmul.mubr.bf16.gmra.mxu0 %v1515
      %v1554 = vpop.f32.mrf.mxu0
      %v1555 = vadd.f32 0.0, %v1554
      %v1556 = vpop.f32.mrf.mxu0
      %v1557 = vpop.f32.mrf.mxu0
      %v1558 = vadd.f32 0.0, %v1557
      %v1559 = vpop.f32.mrf.mxu0
      %1560 = vdwg.mxu0
      %v1561 = vmul.f32 %v1502, 0.17677669
      %v1562 = vmul.f32 %v1505, 0.17677669
      %v1563 = vmul.f32 %v1555, 0.17677669
      %v1564 = vmul.f32 %v1558, 0.17677669
      %v1565 = vsel %vm1316, %v1561, -inf
      %1566 = vmax.xlane.f32.xlu0 %v1565
      %v1567 = vpop.xlane.xlu0 %1566
      %v1568 = vsel %vm1316, %v1562, -inf
      %1569 = vmax.xlane.f32.xlu0 %v1568
      %v1570 = vpop.xlane.xlu0 %1569
      %v1571 = vsel %vm1316, %v1563, -inf
      %1572 = vmax.xlane.f32.xlu0 %v1571
      %v1573 = vpop.xlane.xlu0 %1572
      %v1574 = vsel %vm1316, %v1564, -inf
      %1575 = vmax.xlane.f32.xlu0 %v1574
      %v1576 = vpop.xlane.xlu0 %1575
      %v1577 = vsub.f32 %v1561, %v1567
      %v1578 = vsub.f32 %v1562, %v1570
      %v1579 = vsub.f32 %v1563, %v1573
      %v1580 = vsub.f32 %v1564, %v1576
      %v1581 = vmul.f32 %v1577, 1.442695
      %v1582 = vpow.pop %v1581
      %v1583 = vmul.f32 %v1578, 1.442695
      %v1584 = vpow.pop %v1583
      %v1585 = vmul.f32 %v1579, 1.442695
      %v1586 = vpow.pop %v1585
      %v1587 = vmul.f32 %v1580, 1.442695
      %v1588 = vpow.pop %v1587
      %v1589 = vsel %vm1316, %v1582, 0.0
      %1590 = vadd.xlane.f32.xlu0 %v1589
      %v1591 = vpop.xlane.xlu0 %1590
      %v1592 = vsel %vm1316, %v1584, 0.0
      %1593 = vadd.xlane.f32.xlu0 %v1592
      %v1594 = vpop.xlane.xlu0 %1593
      %v1595 = vsel %vm1316, %v1586, 0.0
      %1596 = vadd.xlane.f32.xlu0 %v1595
      %v1597 = vpop.xlane.xlu0 %1596
      %v1598 = vsel %vm1316, %v1588, 0.0
      %1599 = vadd.xlane.f32.xlu0 %v1598
      %v1600 = vpop.xlane.xlu0 %1599
      %v1601 = vrcp.pop %v1591
      %v1602 = vrcp.pop %v1594
      %v1603 = vrcp.pop %v1597
      %v1604 = vrcp.pop %v1600
      %v1605 = vmul.f32 %v1582, %v1601
      %v1606 = vmul.f32 %v1584, %v1602
      %v1607 = vmul.f32 %v1586, %v1603
      %v1608 = vmul.f32 %v1588, %v1604
      %v1609 = vpack.c.bf16 %v1606, %v1605
      %v1610 = vpack.c.bf16 %v1608, %v1607
      %1612 = vrot.lane.b32.xlu0 %v1215, 96
      %v1613 = vpop.permute.xlu0 %1612
      %v1616 = vsel %vm1316, %v1609, 0
      %1618 = vmatprep.subr.bf16.mxu0 0
      %1619 = vmatpush1.bf16.msra.mxu0 0
      %1620 = vmatprep.subr.bf16.mxu0 0
      %1621 = vmatpush1.bf16.msra.mxu0 0
      %1622 = vmatprep.subr.bf16.mxu0 0
      %1623 = vmatpush1.bf16.msra.mxu0 0
      %1624 = vmatprep.subr.bf16.mxu0 0
      %1625 = vmatpush1.bf16.msra.mxu0 0
      %1626 = vmatprep.subr.bf16.mxu0 0
      %1627 = vmatpush1.bf16.msra.mxu0 0
      %1628 = vmatprep.subr.bf16.mxu0 0
      %1629 = vmatpush1.bf16.msra.mxu0 0
      %1630 = vmatprep.subr.bf16.mxu0 0
      %1631 = vmatpush1.bf16.msra.mxu0 0
      %1632 = vmatprep.subr.bf16.mxu0 0
      %1633 = vmatpush1.bf16.msra.mxu0 %v1613
      %1634 = vmatprep.subr.bf16.mxu0 0
      %1635 = vmatpush2.bf16.msra.mxu0 0
      %1636 = vmatprep.subr.bf16.mxu0 0
      %1637 = vmatpush2.bf16.msra.mxu0 0
      %1638 = vmatprep.subr.bf16.mxu0 0
      %1639 = vmatpush2.bf16.msra.mxu0 0
      %1640 = vmatprep.subr.bf16.mxu0 0
      %1641 = vmatpush2.bf16.msra.mxu0 0
      %1642 = vmatprep.subr.bf16.mxu0 0
      %1643 = vmatpush2.bf16.msra.mxu0 0
      %1644 = vmatprep.subr.bf16.mxu0 0
      %1645 = vmatpush2.bf16.msra.mxu0 0
      %1646 = vmatprep.subr.bf16.mxu0 0
      %1647 = vmatpush2.bf16.msra.mxu0 0
      %1648 = vmatprep.subr.bf16.mxu0 0
      %1649 = vmatpush2.bf16.msra.mxu0 0
      %1650 = vmatprep.mubr.bf16.mxu0 0
      %1651 = vmatmul.mubr.bf16.gmra.mxu0 %v1616
      %v1652 = vpop.f32.mrf.mxu0
      %v1653 = vadd.f32 0.0, %v1652
      %v1654 = vpop.f32.mrf.mxu0
      %v1655 = vpop.f32.mrf.mxu0
      %v1656 = vadd.f32 0.0, %v1655
      %v1657 = vpop.f32.mrf.mxu0
      %1658 = vdwg.mxu0
      %1660 = vrot.lane.b32.xlu0 %v1216, 96
      %v1661 = vpop.permute.xlu0 %1660
      %v1664 = vsel %vm1316, %v1610, 0
      %1666 = vmatprep.subr.bf16.mxu0 0
      %1667 = vmatpush1.bf16.msra.mxu0 0
      %1668 = vmatprep.subr.bf16.mxu0 0
      %1669 = vmatpush1.bf16.msra.mxu0 0
      %1670 = vmatprep.subr.bf16.mxu0 0
      %1671 = vmatpush1.bf16.msra.mxu0 0
      %1672 = vmatprep.subr.bf16.mxu0 0
      %1673 = vmatpush1.bf16.msra.mxu0 0
      %1674 = vmatprep.subr.bf16.mxu0 0
      %1675 = vmatpush1.bf16.msra.mxu0 0
      %1676 = vmatprep.subr.bf16.mxu0 0
      %1677 = vmatpush1.bf16.msra.mxu0 0
      %1678 = vmatprep.subr.bf16.mxu0 0
      %1679 = vmatpush1.bf16.msra.mxu0 0
      %1680 = vmatprep.subr.bf16.mxu0 0
      %1681 = vmatpush1.bf16.msra.mxu0 %v1661
      %1682 = vmatprep.subr.bf16.mxu0 0
      %1683 = vmatpush2.bf16.msra.mxu0 0
      %1684 = vmatprep.subr.bf16.mxu0 0
      %1685 = vmatpush2.bf16.msra.mxu0 0
      %1686 = vmatprep.subr.bf16.mxu0 0
      %1687 = vmatpush2.bf16.msra.mxu0 0
      %1688 = vmatprep.subr.bf16.mxu0 0
      %1689 = vmatpush2.bf16.msra.mxu0 0
      %1690 = vmatprep.subr.bf16.mxu0 0
      %1691 = vmatpush2.bf16.msra.mxu0 0
      %1692 = vmatprep.subr.bf16.mxu0 0
      %1693 = vmatpush2.bf16.msra.mxu0 0
      %1694 = vmatprep.subr.bf16.mxu0 0
      %1695 = vmatpush2.bf16.msra.mxu0 0
      %1696 = vmatprep.subr.bf16.mxu0 0
      %1697 = vmatpush2.bf16.msra.mxu0 0
      %1698 = vmatprep.mubr.bf16.mxu0 0
      %1699 = vmatmul.mubr.bf16.gmra.mxu0 %v1664
      %v1700 = vpop.f32.mrf.mxu0
      %v1701 = vadd.f32 0.0, %v1700
      %v1702 = vpop.f32.mrf.mxu0
      %v1703 = vpop.f32.mrf.mxu0
      %v1704 = vadd.f32 0.0, %v1703
      %v1705 = vpop.f32.mrf.mxu0
      %1706 = vdwg.mxu0
      %1711 = vrot.lane.b32.xlu0 %v1653, 32
      %v1712 = vpop.permute.xlu0 %1711
      %1713 = vrot.lane.b32.xlu0 %v1656, 32
      %v1714 = vpop.permute.xlu0 %1713
      %1715 = vrot.lane.b32.xlu0 %v1701, 32
      %v1716 = vpop.permute.xlu0 %1715
      %1717 = vrot.lane.b32.xlu0 %v1704, 32
      %v1718 = vpop.permute.xlu0 %1717
      %vm1723 = vcmask 523520
      %1724 = vst.msk [vmem:[#allocation2] sm:$0xff] %vm1723, %v1712
      %1725 = vst.msk [vmem:[#allocation2 + $0x8] sm:$0xff] %vm1723, %v1714
      %1726 = vst.msk [vmem:[#allocation2 + $0x10] sm:$0xff] %vm1723, %v1716
      %1727 = vst.msk [vmem:[#allocation2 + $0x18] sm:$0xff] %vm1723, %v1718
      %1728 = vrot.lane.b32.xlu0 %v1211, 64
      %v1729 = vpop.permute.xlu0 %1728
      %1730 = vrot.lane.b32.xlu0 %v1213, 64
      %v1731 = vpop.permute.xlu0 %1730
      %v1733 = vsel %vm1217, %v1729, 0
      %v1736 = vsel %vm1217, %v1731, 0
      %1738 = vmatprep.subr.bf16.mxu0 0
      %1739 = vmatpush1.bf16.xpose.msra.mxu0 0
      %1740 = vmatprep.subr.bf16.mxu0 0
      %1741 = vmatpush1.bf16.xpose.msra.mxu0 0
      %1742 = vmatprep.subr.bf16.mxu0 0
      %1743 = vmatpush1.bf16.xpose.msra.mxu0 0
      %1744 = vmatprep.subr.bf16.mxu0 0
      %1745 = vmatpush1.bf16.xpose.msra.mxu0 0
      %1746 = vmatprep.subr.bf16.mxu0 0
      %1747 = vmatpush1.bf16.xpose.msra.mxu0 0
      %1748 = vmatprep.subr.bf16.mxu0 0
      %1749 = vmatpush1.bf16.xpose.msra.mxu0 0
      %1750 = vmatprep.subr.bf16.mxu0 0
      %1751 = vmatpush1.bf16.xpose.msra.mxu0 0
      %1752 = vmatprep.subr.bf16.mxu0 0
      %1753 = vmatpush1.bf16.xpose.msra.mxu0 %v1736
      %1754 = vmatprep.subr.bf16.mxu0 0
      %1755 = vmatpush2.bf16.xpose.msra.mxu0 0
      %1756 = vmatprep.subr.bf16.mxu0 0
      %1757 = vmatpush2.bf16.xpose.msra.mxu0 0
      %1758 = vmatprep.subr.bf16.mxu0 0
      %1759 = vmatpush2.bf16.xpose.msra.mxu0 0
      %1760 = vmatprep.subr.bf16.mxu0 0
      %1761 = vmatpush2.bf16.xpose.msra.mxu0 0
      %1762 = vmatprep.subr.bf16.mxu0 0
      %1763 = vmatpush2.bf16.xpose.msra.mxu0 0
      %1764 = vmatprep.subr.bf16.mxu0 0
      %1765 = vmatpush2.bf16.xpose.msra.mxu0 0
      %1766 = vmatprep.subr.bf16.mxu0 0
      %1767 = vmatpush2.bf16.xpose.msra.mxu0 0
      %1768 = vmatprep.subr.bf16.mxu0 0
      %1769 = vmatpush2.bf16.xpose.msra.mxu0 0
      %1770 = vmatprep.mubr.bf16.mxu0 0
      %1771 = vmatmul.mubr.bf16.gmra.mxu0 %v1733
      %v1772 = vpop.f32.mrf.mxu0
      %v1773 = vadd.f32 0.0, %v1772
      %v1774 = vpop.f32.mrf.mxu0
      %v1775 = vpop.f32.mrf.mxu0
      %v1776 = vadd.f32 0.0, %v1775
      %v1777 = vpop.f32.mrf.mxu0
      %1778 = vdwg.mxu0
      %1779 = vrot.lane.b32.xlu0 %v1212, 64
      %v1780 = vpop.permute.xlu0 %1779
      %1781 = vrot.lane.b32.xlu0 %v1214, 64
      %v1782 = vpop.permute.xlu0 %1781
      %v1784 = vsel %vm1217, %v1780, 0
      %v1787 = vsel %vm1217, %v1782, 0
      %1789 = vmatprep.subr.bf16.mxu0 0
      %1790 = vmatpush1.bf16.xpose.msra.mxu0 0
      %1791 = vmatprep.subr.bf16.mxu0 0
      %1792 = vmatpush1.bf16.xpose.msra.mxu0 0
      %1793 = vmatprep.subr.bf16.mxu0 0
      %1794 = vmatpush1.bf16.xpose.msra.mxu0 0
      %1795 = vmatprep.subr.bf16.mxu0 0
      %1796 = vmatpush1.bf16.xpose.msra.mxu0 0
      %1797 = vmatprep.subr.bf16.mxu0 0
      %1798 = vmatpush1.bf16.xpose.msra.mxu0 0
      %1799 = vmatprep.subr.bf16.mxu0 0
      %1800 = vmatpush1.bf16.xpose.msra.mxu0 0
      %1801 = vmatprep.subr.bf16.mxu0 0
      %1802 = vmatpush1.bf16.xpose.msra.mxu0 0
      %1803 = vmatprep.subr.bf16.mxu0 0
      %1804 = vmatpush1.bf16.xpose.msra.mxu0 %v1787
      %1805 = vmatprep.subr.bf16.mxu0 0
      %1806 = vmatpush2.bf16.xpose.msra.mxu0 0
      %1807 = vmatprep.subr.bf16.mxu0 0
      %1808 = vmatpush2.bf16.xpose.msra.mxu0 0
      %1809 = vmatprep.subr.bf16.mxu0 0
      %1810 = vmatpush2.bf16.xpose.msra.mxu0 0
      %1811 = vmatprep.subr.bf16.mxu0 0
      %1812 = vmatpush2.bf16.xpose.msra.mxu0 0
      %1813 = vmatprep.subr.bf16.mxu0 0
      %1814 = vmatpush2.bf16.xpose.msra.mxu0 0
      %1815 = vmatprep.subr.bf16.mxu0 0
      %1816 = vmatpush2.bf16.xpose.msra.mxu0 0
      %1817 = vmatprep.subr.bf16.mxu0 0
      %1818 = vmatpush2.bf16.xpose.msra.mxu0 0
      %1819 = vmatprep.subr.bf16.mxu0 0
      %1820 = vmatpush2.bf16.xpose.msra.mxu0 0
      %1821 = vmatprep.mubr.bf16.mxu0 0
      %1822 = vmatmul.mubr.bf16.gmra.mxu0 %v1784
      %v1823 = vpop.f32.mrf.mxu0
      %v1824 = vadd.f32 0.0, %v1823
      %v1825 = vpop.f32.mrf.mxu0
      %v1826 = vpop.f32.mrf.mxu0
      %v1827 = vadd.f32 0.0, %v1826
      %v1828 = vpop.f32.mrf.mxu0
      %1829 = vdwg.mxu0
      %v1830 = vmul.f32 %v1773, 0.17677669
      %v1831 = vmul.f32 %v1776, 0.17677669
      %v1832 = vmul.f32 %v1824, 0.17677669
      %v1833 = vmul.f32 %v1827, 0.17677669
      %v1834 = vsel %vm1316, %v1830, -inf
      %1835 = vmax.xlane.f32.xlu0 %v1834
      %v1836 = vpop.xlane.xlu0 %1835
      %v1837 = vsel %vm1316, %v1831, -inf
      %1838 = vmax.xlane.f32.xlu0 %v1837
      %v1839 = vpop.xlane.xlu0 %1838
      %v1840 = vsel %vm1316, %v1832, -inf
      %1841 = vmax.xlane.f32.xlu0 %v1840
      %v1842 = vpop.xlane.xlu0 %1841
      %v1843 = vsel %vm1316, %v1833, -inf
      %1844 = vmax.xlane.f32.xlu0 %v1843
      %v1845 = vpop.xlane.xlu0 %1844
      %v1846 = vsub.f32 %v1830, %v1836
      %v1847 = vsub.f32 %v1831, %v1839
      %v1848 = vsub.f32 %v1832, %v1842
      %v1849 = vsub.f32 %v1833, %v1845
      %v1850 = vmul.f32 %v1846, 1.442695
      %v1851 = vpow.pop %v1850
      %v1852 = vmul.f32 %v1847, 1.442695
      %v1853 = vpow.pop %v1852
      %v1854 = vmul.f32 %v1848, 1.442695
      %v1855 = vpow.pop %v1854
      %v1856 = vmul.f32 %v1849, 1.442695
      %v1857 = vpow.pop %v1856
      %v1858 = vsel %vm1316, %v1851, 0.0
      %1859 = vadd.xlane.f32.xlu0 %v1858
      %v1860 = vpop.xlane.xlu0 %1859
      %v1861 = vsel %vm1316, %v1853, 0.0
      %1862 = vadd.xlane.f32.xlu0 %v1861
      %v1863 = vpop.xlane.xlu0 %1862
      %v1864 = vsel %vm1316, %v1855, 0.0
      %1865 = vadd.xlane.f32.xlu0 %v1864
      %v1866 = vpop.xlane.xlu0 %1865
      %v1867 = vsel %vm1316, %v1857, 0.0
      %1868 = vadd.xlane.f32.xlu0 %v1867
      %v1869 = vpop.xlane.xlu0 %1868
      %v1870 = vrcp.pop %v1860
      %v1871 = vrcp.pop %v1863
      %v1872 = vrcp.pop %v1866
      %v1873 = vrcp.pop %v1869
      %v1874 = vmul.f32 %v1851, %v1870
      %v1875 = vmul.f32 %v1853, %v1871
      %v1876 = vmul.f32 %v1855, %v1872
      %v1877 = vmul.f32 %v1857, %v1873
      %v1878 = vpack.c.bf16 %v1875, %v1874
      %v1879 = vpack.c.bf16 %v1877, %v1876
      %1880 = vrot.lane.b32.xlu0 %v1215, 64
      %v1881 = vpop.permute.xlu0 %1880
      %v1884 = vsel %vm1316, %v1878, 0
      %1886 = vmatprep.subr.bf16.mxu0 0
      %1887 = vmatpush1.bf16.msra.mxu0 0
      %1888 = vmatprep.subr.bf16.mxu0 0
      %1889 = vmatpush1.bf16.msra.mxu0 0
      %1890 = vmatprep.subr.bf16.mxu0 0
      %1891 = vmatpush1.bf16.msra.mxu0 0
      %1892 = vmatprep.subr.bf16.mxu0 0
      %1893 = vmatpush1.bf16.msra.mxu0 0
      %1894 = vmatprep.subr.bf16.mxu0 0
      %1895 = vmatpush1.bf16.msra.mxu0 0
      %1896 = vmatprep.subr.bf16.mxu0 0
      %1897 = vmatpush1.bf16.msra.mxu0 0
      %1898 = vmatprep.subr.bf16.mxu0 0
      %1899 = vmatpush1.bf16.msra.mxu0 0
      %1900 = vmatprep.subr.bf16.mxu0 0
      %1901 = vmatpush1.bf16.msra.mxu0 %v1881
      %1902 = vmatprep.subr.bf16.mxu0 0
      %1903 = vmatpush2.bf16.msra.mxu0 0
      %1904 = vmatprep.subr.bf16.mxu0 0
      %1905 = vmatpush2.bf16.msra.mxu0 0
      %1906 = vmatprep.subr.bf16.mxu0 0
      %1907 = vmatpush2.bf16.msra.mxu0 0
      %1908 = vmatprep.subr.bf16.mxu0 0
      %1909 = vmatpush2.bf16.msra.mxu0 0
      %1910 = vmatprep.subr.bf16.mxu0 0
      %1911 = vmatpush2.bf16.msra.mxu0 0
      %1912 = vmatprep.subr.bf16.mxu0 0
      %1913 = vmatpush2.bf16.msra.mxu0 0
      %1914 = vmatprep.subr.bf16.mxu0 0
      %1915 = vmatpush2.bf16.msra.mxu0 0
      %1916 = vmatprep.subr.bf16.mxu0 0
      %1917 = vmatpush2.bf16.msra.mxu0 0
      %1918 = vmatprep.mubr.bf16.mxu0 0
      %1919 = vmatmul.mubr.bf16.gmra.mxu0 %v1884
      %v1920 = vpop.f32.mrf.mxu0
      %v1921 = vadd.f32 0.0, %v1920
      %v1922 = vpop.f32.mrf.mxu0
      %v1923 = vpop.f32.mrf.mxu0
      %v1924 = vadd.f32 0.0, %v1923
      %v1925 = vpop.f32.mrf.mxu0
      %1926 = vdwg.mxu0
      %1927 = vrot.lane.b32.xlu0 %v1216, 64
      %v1928 = vpop.permute.xlu0 %1927
      %v1931 = vsel %vm1316, %v1879, 0
      %1933 = vmatprep.subr.bf16.mxu0 0
      %1934 = vmatpush1.bf16.msra.mxu0 0
      %1935 = vmatprep.subr.bf16.mxu0 0
      %1936 = vmatpush1.bf16.msra.mxu0 0
      %1937 = vmatprep.subr.bf16.mxu0 0
      %1938 = vmatpush1.bf16.msra.mxu0 0
      %1939 = vmatprep.subr.bf16.mxu0 0
      %1940 = vmatpush1.bf16.msra.mxu0 0
      %1941 = vmatprep.subr.bf16.mxu0 0
      %1942 = vmatpush1.bf16.msra.mxu0 0
      %1943 = vmatprep.subr.bf16.mxu0 0
      %1944 = vmatpush1.bf16.msra.mxu0 0
      %1945 = vmatprep.subr.bf16.mxu0 0
      %1946 = vmatpush1.bf16.msra.mxu0 0
      %1947 = vmatprep.subr.bf16.mxu0 0
      %1948 = vmatpush1.bf16.msra.mxu0 %v1928
      %1949 = vmatprep.subr.bf16.mxu0 0
      %1950 = vmatpush2.bf16.msra.mxu0 0
      %1951 = vmatprep.subr.bf16.mxu0 0
      %1952 = vmatpush2.bf16.msra.mxu0 0
      %1953 = vmatprep.subr.bf16.mxu0 0
      %1954 = vmatpush2.bf16.msra.mxu0 0
      %1955 = vmatprep.subr.bf16.mxu0 0
      %1956 = vmatpush2.bf16.msra.mxu0 0
      %1957 = vmatprep.subr.bf16.mxu0 0
      %1958 = vmatpush2.bf16.msra.mxu0 0
      %1959 = vmatprep.subr.bf16.mxu0 0
      %1960 = vmatpush2.bf16.msra.mxu0 0
      %1961 = vmatprep.subr.bf16.mxu0 0
      %1962 = vmatpush2.bf16.msra.mxu0 0
      %1963 = vmatprep.subr.bf16.mxu0 0
      %1964 = vmatpush2.bf16.msra.mxu0 0
      %1965 = vmatprep.mubr.bf16.mxu0 0
      %1966 = vmatmul.mubr.bf16.gmra.mxu0 %v1931
      %v1967 = vpop.f32.mrf.mxu0
      %v1968 = vadd.f32 0.0, %v1967
      %v1969 = vpop.f32.mrf.mxu0
      %v1970 = vpop.f32.mrf.mxu0
      %v1971 = vadd.f32 0.0, %v1970
      %v1972 = vpop.f32.mrf.mxu0
      %1973 = vdwg.mxu0
      %1978 = vrot.lane.b32.xlu0 %v1921, 64
      %v1979 = vpop.permute.xlu0 %1978
      %1980 = vrot.lane.b32.xlu0 %v1924, 64
      %v1981 = vpop.permute.xlu0 %1980
      %1982 = vrot.lane.b32.xlu0 %v1968, 64
      %v1983 = vpop.permute.xlu0 %1982
      %1984 = vrot.lane.b32.xlu0 %v1971, 64
      %v1985 = vpop.permute.xlu0 %1984
      %vm1990 = vcmask 785920
      %1991 = vst.msk [vmem:[#allocation2] sm:$0xff] %vm1990, %v1979
      %1992 = vst.msk [vmem:[#allocation2 + $0x8] sm:$0xff] %vm1990, %v1981
      %1993 = vst.msk [vmem:[#allocation2 + $0x10] sm:$0xff] %vm1990, %v1983
      %1994 = vst.msk [vmem:[#allocation2 + $0x18] sm:$0xff] %vm1990, %v1985
      %1995 = vrot.lane.b32.xlu0 %v1211, 32
      %v1996 = vpop.permute.xlu0 %1995
      %1997 = vrot.lane.b32.xlu0 %v1213, 32
      %v1998 = vpop.permute.xlu0 %1997
      %v2000 = vsel %vm1217, %v1996, 0
      %v2003 = vsel %vm1217, %v1998, 0
      %2005 = vmatprep.subr.bf16.mxu0 0
      %2006 = vmatpush1.bf16.xpose.msra.mxu0 0
      %2007 = vmatprep.subr.bf16.mxu0 0
      %2008 = vmatpush1.bf16.xpose.msra.mxu0 0
      %2009 = vmatprep.subr.bf16.mxu0 0
      %2010 = vmatpush1.bf16.xpose.msra.mxu0 0
      %2011 = vmatprep.subr.bf16.mxu0 0
      %2012 = vmatpush1.bf16.xpose.msra.mxu0 0
      %2013 = vmatprep.subr.bf16.mxu0 0
      %2014 = vmatpush1.bf16.xpose.msra.mxu0 0
      %2015 = vmatprep.subr.bf16.mxu0 0
      %2016 = vmatpush1.bf16.xpose.msra.mxu0 0
      %2017 = vmatprep.subr.bf16.mxu0 0
      %2018 = vmatpush1.bf16.xpose.msra.mxu0 0
      %2019 = vmatprep.subr.bf16.mxu0 0
      %2020 = vmatpush1.bf16.xpose.msra.mxu0 %v2003
      %2021 = vmatprep.subr.bf16.mxu0 0
      %2022 = vmatpush2.bf16.xpose.msra.mxu0 0
      %2023 = vmatprep.subr.bf16.mxu0 0
      %2024 = vmatpush2.bf16.xpose.msra.mxu0 0
      %2025 = vmatprep.subr.bf16.mxu0 0
      %2026 = vmatpush2.bf16.xpose.msra.mxu0 0
      %2027 = vmatprep.subr.bf16.mxu0 0
      %2028 = vmatpush2.bf16.xpose.msra.mxu0 0
      %2029 = vmatprep.subr.bf16.mxu0 0
      %2030 = vmatpush2.bf16.xpose.msra.mxu0 0
      %2031 = vmatprep.subr.bf16.mxu0 0
      %2032 = vmatpush2.bf16.xpose.msra.mxu0 0
      %2033 = vmatprep.subr.bf16.mxu0 0
      %2034 = vmatpush2.bf16.xpose.msra.mxu0 0
      %2035 = vmatprep.subr.bf16.mxu0 0
      %2036 = vmatpush2.bf16.xpose.msra.mxu0 0
      %2037 = vmatprep.mubr.bf16.mxu0 0
      %2038 = vmatmul.mubr.bf16.gmra.mxu0 %v2000
      %v2039 = vpop.f32.mrf.mxu0
      %v2040 = vadd.f32 0.0, %v2039
      %v2041 = vpop.f32.mrf.mxu0
      %v2042 = vpop.f32.mrf.mxu0
      %v2043 = vadd.f32 0.0, %v2042
      %v2044 = vpop.f32.mrf.mxu0
      %2045 = vdwg.mxu0
      %2046 = vrot.lane.b32.xlu0 %v1212, 32
      %v2047 = vpop.permute.xlu0 %2046
      %2048 = vrot.lane.b32.xlu0 %v1214, 32
      %v2049 = vpop.permute.xlu0 %2048
      %v2051 = vsel %vm1217, %v2047, 0
      %v2054 = vsel %vm1217, %v2049, 0
      %2056 = vmatprep.subr.bf16.mxu0 0
      %2057 = vmatpush1.bf16.xpose.msra.mxu0 0
      %2058 = vmatprep.subr.bf16.mxu0 0
      %2059 = vmatpush1.bf16.xpose.msra.mxu0 0
      %2060 = vmatprep.subr.bf16.mxu0 0
      %2061 = vmatpush1.bf16.xpose.msra.mxu0 0
      %2062 = vmatprep.subr.bf16.mxu0 0
      %2063 = vmatpush1.bf16.xpose.msra.mxu0 0
      %2064 = vmatprep.subr.bf16.mxu0 0
      %2065 = vmatpush1.bf16.xpose.msra.mxu0 0
      %2066 = vmatprep.subr.bf16.mxu0 0
      %2067 = vmatpush1.bf16.xpose.msra.mxu0 0
      %2068 = vmatprep.subr.bf16.mxu0 0
      %2069 = vmatpush1.bf16.xpose.msra.mxu0 0
      %2070 = vmatprep.subr.bf16.mxu0 0
      %2071 = vmatpush1.bf16.xpose.msra.mxu0 %v2054
      %2072 = vmatprep.subr.bf16.mxu0 0
      %2073 = vmatpush2.bf16.xpose.msra.mxu0 0
      %2074 = vmatprep.subr.bf16.mxu0 0
      %2075 = vmatpush2.bf16.xpose.msra.mxu0 0
      %2076 = vmatprep.subr.bf16.mxu0 0
      %2077 = vmatpush2.bf16.xpose.msra.mxu0 0
      %2078 = vmatprep.subr.bf16.mxu0 0
      %2079 = vmatpush2.bf16.xpose.msra.mxu0 0
      %2080 = vmatprep.subr.bf16.mxu0 0
      %2081 = vmatpush2.bf16.xpose.msra.mxu0 0
      %2082 = vmatprep.subr.bf16.mxu0 0
      %2083 = vmatpush2.bf16.xpose.msra.mxu0 0
      %2084 = vmatprep.subr.bf16.mxu0 0
      %2085 = vmatpush2.bf16.xpose.msra.mxu0 0
      %2086 = vmatprep.subr.bf16.mxu0 0
      %2087 = vmatpush2.bf16.xpose.msra.mxu0 0
      %2088 = vmatprep.mubr.bf16.mxu0 0
      %2089 = vmatmul.mubr.bf16.gmra.mxu0 %v2051
      %v2090 = vpop.f32.mrf.mxu0
      %v2091 = vadd.f32 0.0, %v2090
      %v2092 = vpop.f32.mrf.mxu0
      %v2093 = vpop.f32.mrf.mxu0
      %v2094 = vadd.f32 0.0, %v2093
      %v2095 = vpop.f32.mrf.mxu0
      %2096 = vdwg.mxu0
      %v2097 = vmul.f32 %v2040, 0.17677669
      %v2098 = vmul.f32 %v2043, 0.17677669
      %v2099 = vmul.f32 %v2091, 0.17677669
      %v2100 = vmul.f32 %v2094, 0.17677669
      %v2101 = vsel %vm1316, %v2097, -inf
      %2102 = vmax.xlane.f32.xlu0 %v2101
      %v2103 = vpop.xlane.xlu0 %2102
      %v2104 = vsel %vm1316, %v2098, -inf
      %2105 = vmax.xlane.f32.xlu0 %v2104
      %v2106 = vpop.xlane.xlu0 %2105
      %v2107 = vsel %vm1316, %v2099, -inf
      %2108 = vmax.xlane.f32.xlu0 %v2107
      %v2109 = vpop.xlane.xlu0 %2108
      %v2110 = vsel %vm1316, %v2100, -inf
      %2111 = vmax.xlane.f32.xlu0 %v2110
      %v2112 = vpop.xlane.xlu0 %2111
      %v2113 = vsub.f32 %v2097, %v2103
      %v2114 = vsub.f32 %v2098, %v2106
      %v2115 = vsub.f32 %v2099, %v2109
      %v2116 = vsub.f32 %v2100, %v2112
      %v2117 = vmul.f32 %v2113, 1.442695
      %v2118 = vpow.pop %v2117
      %v2119 = vmul.f32 %v2114, 1.442695
      %v2120 = vpow.pop %v2119
      %v2121 = vmul.f32 %v2115, 1.442695
      %v2122 = vpow.pop %v2121
      %v2123 = vmul.f32 %v2116, 1.442695
      %v2124 = vpow.pop %v2123
      %v2125 = vsel %vm1316, %v2118, 0.0
      %2126 = vadd.xlane.f32.xlu0 %v2125
      %v2127 = vpop.xlane.xlu0 %2126
      %v2128 = vsel %vm1316, %v2120, 0.0
      %2129 = vadd.xlane.f32.xlu0 %v2128
      %v2130 = vpop.xlane.xlu0 %2129
      %v2131 = vsel %vm1316, %v2122, 0.0
      %2132 = vadd.xlane.f32.xlu0 %v2131
      %v2133 = vpop.xlane.xlu0 %2132
      %v2134 = vsel %vm1316, %v2124, 0.0
      %2135 = vadd.xlane.f32.xlu0 %v2134
      %v2136 = vpop.xlane.xlu0 %2135
      %v2137 = vrcp.pop %v2127
      %v2138 = vrcp.pop %v2130
      %v2139 = vrcp.pop %v2133
      %v2140 = vrcp.pop %v2136
      %v2141 = vmul.f32 %v2118, %v2137
      %v2142 = vmul.f32 %v2120, %v2138
      %v2143 = vmul.f32 %v2122, %v2139
      %v2144 = vmul.f32 %v2124, %v2140
      %v2145 = vpack.c.bf16 %v2142, %v2141
      %v2146 = vpack.c.bf16 %v2144, %v2143
      %2147 = vrot.lane.b32.xlu0 %v1215, 32
      %v2148 = vpop.permute.xlu0 %2147
      %v2151 = vsel %vm1316, %v2145, 0
      %2153 = vmatprep.subr.bf16.mxu0 0
      %2154 = vmatpush1.bf16.msra.mxu0 0
      %2155 = vmatprep.subr.bf16.mxu0 0
      %2156 = vmatpush1.bf16.msra.mxu0 0
      %2157 = vmatprep.subr.bf16.mxu0 0
      %2158 = vmatpush1.bf16.msra.mxu0 0
      %2159 = vmatprep.subr.bf16.mxu0 0
      %2160 = vmatpush1.bf16.msra.mxu0 0
      %2161 = vmatprep.subr.bf16.mxu0 0
      %2162 = vmatpush1.bf16.msra.mxu0 0
      %2163 = vmatprep.subr.bf16.mxu0 0
      %2164 = vmatpush1.bf16.msra.mxu0 0
      %2165 = vmatprep.subr.bf16.mxu0 0
      %2166 = vmatpush1.bf16.msra.mxu0 0
      %2167 = vmatprep.subr.bf16.mxu0 0
      %2168 = vmatpush1.bf16.msra.mxu0 %v2148
      %2169 = vmatprep.subr.bf16.mxu0 0
      %2170 = vmatpush2.bf16.msra.mxu0 0
      %2171 = vmatprep.subr.bf16.mxu0 0
      %2172 = vmatpush2.bf16.msra.mxu0 0
      %2173 = vmatprep.subr.bf16.mxu0 0
      %2174 = vmatpush2.bf16.msra.mxu0 0
      %2175 = vmatprep.subr.bf16.mxu0 0
      %2176 = vmatpush2.bf16.msra.mxu0 0
      %2177 = vmatprep.subr.bf16.mxu0 0
      %2178 = vmatpush2.bf16.msra.mxu0 0
      %2179 = vmatprep.subr.bf16.mxu0 0
      %2180 = vmatpush2.bf16.msra.mxu0 0
      %2181 = vmatprep.subr.bf16.mxu0 0
      %2182 = vmatpush2.bf16.msra.mxu0 0
      %2183 = vmatprep.subr.bf16.mxu0 0
      %2184 = vmatpush2.bf16.msra.mxu0 0
      %2185 = vmatprep.mubr.bf16.mxu0 0
      %2186 = vmatmul.mubr.bf16.gmra.mxu0 %v2151
      %v2187 = vpop.f32.mrf.mxu0
      %v2188 = vadd.f32 0.0, %v2187
      %v2189 = vpop.f32.mrf.mxu0
      %v2190 = vpop.f32.mrf.mxu0
      %v2191 = vadd.f32 0.0, %v2190
      %v2192 = vpop.f32.mrf.mxu0
      %2193 = vdwg.mxu0
      %2194 = vrot.lane.b32.xlu0 %v1216, 32
      %v2195 = vpop.permute.xlu0 %2194
      %v2198 = vsel %vm1316, %v2146, 0
      %2200 = vmatprep.subr.bf16.mxu0 0
      %2201 = vmatpush1.bf16.msra.mxu0 0
      %2202 = vmatprep.subr.bf16.mxu0 0
      %2203 = vmatpush1.bf16.msra.mxu0 0
      %2204 = vmatprep.subr.bf16.mxu0 0
      %2205 = vmatpush1.bf16.msra.mxu0 0
      %2206 = vmatprep.subr.bf16.mxu0 0
      %2207 = vmatpush1.bf16.msra.mxu0 0
      %2208 = vmatprep.subr.bf16.mxu0 0
      %2209 = vmatpush1.bf16.msra.mxu0 0
      %2210 = vmatprep.subr.bf16.mxu0 0
      %2211 = vmatpush1.bf16.msra.mxu0 0
      %2212 = vmatprep.subr.bf16.mxu0 0
      %2213 = vmatpush1.bf16.msra.mxu0 0
      %2214 = vmatprep.subr.bf16.mxu0 0
      %2215 = vmatpush1.bf16.msra.mxu0 %v2195
      %2216 = vmatprep.subr.bf16.mxu0 0
      %2217 = vmatpush2.bf16.msra.mxu0 0
      %2218 = vmatprep.subr.bf16.mxu0 0
      %2219 = vmatpush2.bf16.msra.mxu0 0
      %2220 = vmatprep.subr.bf16.mxu0 0
      %2221 = vmatpush2.bf16.msra.mxu0 0
      %2222 = vmatprep.subr.bf16.mxu0 0
      %2223 = vmatpush2.bf16.msra.mxu0 0
      %2224 = vmatprep.subr.bf16.mxu0 0
      %2225 = vmatpush2.bf16.msra.mxu0 0
      %2226 = vmatprep.subr.bf16.mxu0 0
      %2227 = vmatpush2.bf16.msra.mxu0 0
      %2228 = vmatprep.subr.bf16.mxu0 0
      %2229 = vmatpush2.bf16.msra.mxu0 0
      %2230 = vmatprep.subr.bf16.mxu0 0
      %2231 = vmatpush2.bf16.msra.mxu0 0
      %2232 = vmatprep.mubr.bf16.mxu0 0
      %2233 = vmatmul.mubr.bf16.gmra.mxu0 %v2198
      %v2234 = vpop.f32.mrf.mxu0
      %v2235 = vadd.f32 0.0, %v2234
      %v2236 = vpop.f32.mrf.mxu0
      %v2237 = vpop.f32.mrf.mxu0
      %v2238 = vadd.f32 0.0, %v2237
      %v2239 = vpop.f32.mrf.mxu0
      %2240 = vdwg.mxu0
      %2245 = vrot.lane.b32.xlu0 %v2188, 96
      %v2246 = vpop.permute.xlu0 %2245
      %2247 = vrot.lane.b32.xlu0 %v2191, 96
      %v2248 = vpop.permute.xlu0 %2247
      %2249 = vrot.lane.b32.xlu0 %v2235, 96
      %v2250 = vpop.permute.xlu0 %2249
      %2251 = vrot.lane.b32.xlu0 %v2238, 96
      %v2252 = vpop.permute.xlu0 %2251
      %vm2257 = vcmask 1048320
      %2258 = vst.msk [vmem:[#allocation2] sm:$0xff] %vm2257, %v2246
      %2259 = vst.msk [vmem:[#allocation2 + $0x8] sm:$0xff] %vm2257, %v2248
      %2260 = vst.msk [vmem:[#allocation2 + $0x10] sm:$0xff] %vm2257, %v2250
      %2261 = vst.msk [vmem:[#allocation2 + $0x18] sm:$0xff] %vm2257, %v2252
      %v2262 = vld [vmem:[#allocation2] sm:$0xff]
      %v2263 = vld [vmem:[#allocation2 + $0x8] sm:$0xff]
      %v2264 = vld [vmem:[#allocation2 + $0x10] sm:$0xff]
      %v2265 = vld [vmem:[#allocation2 + $0x18] sm:$0xff]
      %v2266 = vld [vmem:[%s700] sm:$0xf]
      %v2267 = vld [vmem:[%s700 + $0x4] sm:$0xf]
      %v2268 = vld [vmem:[%s700 + $0x8] sm:$0xf]
      %v2269 = vld [vmem:[%s700 + $0xc] sm:$0xf]
      %v2270 = vld [vmem:[%s700 + $0x10] sm:$0xf]
      %v2271 = vld [vmem:[%s700 + $0x14] sm:$0xf]
      %v2272 = vld [vmem:[%s700 + $0x18] sm:$0xf]
      %v2273 = vld [vmem:[%s700 + $0x1c] sm:$0xf]
      %v2274 = vld [vmem:[%s700 + $0x20] sm:$0xf]
      %v2275 = vld [vmem:[%s700 + $0x24] sm:$0xf]
      %v2276 = vld [vmem:[%s700 + $0x28] sm:$0xf]
      %v2277 = vld [vmem:[%s700 + $0x2c] sm:$0xf]
      %v2278 = vld [vmem:[%s700 + $0x30] sm:$0xf]
      %v2279 = vld [vmem:[%s700 + $0x34] sm:$0xf]
      %v2280 = vld [vmem:[%s700 + $0x38] sm:$0xf]
      %v2281 = vld [vmem:[%s700 + $0x3c] sm:$0xf]
      %v2282 = vpack.c.bf16 %v2263, %v2262
      %v2283 = vpack.c.bf16 %v2265, %v2264
      %v2284 = vld [vmem:[%s703] sm:$0x1]
      %v2286 = vlaneseq
      %v2287 = vshrl.u32 %v2286, 7
      %v2288 = vsub.s32 0, %v2287
      %v2289 = vrot.slane %v2284, %v2288
      %v2307 = vunpack.c.l.b16 %v2266
      %v2308 = vunpack.c.l.b16 %v2267
      %v2309 = vunpack.c.l.b16 %v2268
      %v2310 = vunpack.c.l.b16 %v2269
      %v2311 = vunpack.c.l.b16 %v2270
      %v2312 = vunpack.c.l.b16 %v2271
      %v2313 = vunpack.c.l.b16 %v2272
      %v2314 = vunpack.c.l.b16 %v2273
      %v2315 = vunpack.c.l.b16 %v2274
      %v2316 = vunpack.c.l.b16 %v2275
      %v2317 = vunpack.c.l.b16 %v2276
      %v2318 = vunpack.c.l.b16 %v2277
      %v2319 = vunpack.c.l.b16 %v2278
      %v2320 = vunpack.c.l.b16 %v2279
      %v2321 = vunpack.c.l.b16 %v2280
      %v2322 = vunpack.c.l.b16 %v2281
      %v2323 = vpack.c.b16 %v2308, %v2307
      %v2324 = vpack.c.b16 %v2310, %v2309
      %v2325 = vpack.c.b16 %v2312, %v2311
      %v2326 = vpack.c.b16 %v2314, %v2313
      %v2327 = vpack.c.b16 %v2316, %v2315
      %v2328 = vpack.c.b16 %v2318, %v2317
      %v2329 = vpack.c.b16 %v2320, %v2319
      %v2330 = vpack.c.b16 %v2322, %v2321
      %2339 = vmatprep.subr.bf16.mxu0 0
      %2340 = vmatpush1.bf16.msra.mxu0 %v2330
      %2341 = vmatprep.subr.bf16.mxu0 0
      %2342 = vmatpush1.bf16.msra.mxu0 %v2329
      %2343 = vmatprep.subr.bf16.mxu0 0
      %2344 = vmatpush1.bf16.msra.mxu0 %v2328
      %2345 = vmatprep.subr.bf16.mxu0 0
      %2346 = vmatpush1.bf16.msra.mxu0 %v2327
      %2347 = vmatprep.subr.bf16.mxu0 0
      %2348 = vmatpush1.bf16.msra.mxu0 %v2326
      %2349 = vmatprep.subr.bf16.mxu0 0
      %2350 = vmatpush1.bf16.msra.mxu0 %v2325
      %2351 = vmatprep.subr.bf16.mxu0 0
      %2352 = vmatpush1.bf16.msra.mxu0 %v2324
      %2353 = vmatprep.subr.bf16.mxu0 0
      %2354 = vmatpush1.bf16.msra.mxu0 %v2323
      %2355 = vmatprep.subr.bf16.mxu0 0
      %2356 = vmatpush2.bf16.msra.mxu0 0
      %2357 = vmatprep.subr.bf16.mxu0 0
      %2358 = vmatpush2.bf16.msra.mxu0 0
      %2359 = vmatprep.subr.bf16.mxu0 0
      %2360 = vmatpush2.bf16.msra.mxu0 0
      %2361 = vmatprep.subr.bf16.mxu0 0
      %2362 = vmatpush2.bf16.msra.mxu0 0
      %2363 = vmatprep.subr.bf16.mxu0 0
      %2364 = vmatpush2.bf16.msra.mxu0 0
      %2365 = vmatprep.subr.bf16.mxu0 0
      %2366 = vmatpush2.bf16.msra.mxu0 0
      %2367 = vmatprep.subr.bf16.mxu0 0
      %2368 = vmatpush2.bf16.msra.mxu0 0
      %2369 = vmatprep.subr.bf16.mxu0 0
      %2370 = vmatpush2.bf16.msra.mxu0 0
      %2371 = vmatprep.mubr.bf16.mxu0 0
      %2372 = vmatmul.mubr.bf16.gmra.mxu0 %v2282
      %v2373 = vpop.f32.mrf.mxu0
      %v2374 = vadd.f32 %v2289, %v2373
      %v2375 = vpop.f32.mrf.mxu0
      %v2376 = vpop.f32.mrf.mxu0
      %v2377 = vadd.f32 %v2289, %v2376
      %v2378 = vpop.f32.mrf.mxu0
      %2379 = vmatprep.mubr.bf16.mxu0 0
      %2380 = vmatmul.mubr.bf16.gmra.mxu0 %v2283
      %v2381 = vpop.f32.mrf.mxu0
      %v2382 = vadd.f32 %v2289, %v2381
      %v2383 = vpop.f32.mrf.mxu0
      %v2384 = vpop.f32.mrf.mxu0
      %v2385 = vadd.f32 %v2289, %v2384
      %v2386 = vpop.f32.mrf.mxu0
      %2387 = vdwg.mxu0
      %v2388 = vadd.f32 %v926, %v2374
      %v2389 = vadd.f32 %v927, %v2377
      %v2390 = vadd.f32 %v928, %v2382
      %v2391 = vadd.f32 %v929, %v2385
      %v2392 = vld [vmem:[%s706] sm:$0x1]
      %v2393 = vld [vmem:[%s709] sm:$0x1]
      %2394 = vadd.xlane.f32.xlu0 %v2388
      %v2395 = vpop.xlane.xlu0 %2394
      %2396 = vadd.xlane.f32.xlu0 %v2389
      %v2397 = vpop.xlane.xlu0 %2396
      %2398 = vadd.xlane.f32.xlu0 %v2390
      %v2399 = vpop.xlane.xlu0 %2398
      %2400 = vadd.xlane.f32.xlu0 %v2391
      %v2401 = vpop.xlane.xlu0 %2400
      %v2402 = vrcp.pop 128.0
      %v2403 = vmul.f32 %v2395, %v2402
      %v2404 = vmul.f32 %v2397, %v2402
      %v2405 = vmul.f32 %v2399, %v2402
      %v2406 = vmul.f32 %v2401, %v2402
      %v2407 = vsub.f32 %v2388, %v2403
      %v2408 = vsub.f32 %v2389, %v2404
      %v2409 = vsub.f32 %v2390, %v2405
      %v2410 = vsub.f32 %v2391, %v2406
      %v2411 = vmul.f32 %v2407, %v2407
      %v2412 = vmul.f32 %v2408, %v2408
      %v2413 = vmul.f32 %v2409, %v2409
      %v2414 = vmul.f32 %v2410, %v2410
      %2415 = vadd.xlane.f32.xlu0 %v2411
      %v2416 = vpop.xlane.xlu0 %2415
      %2417 = vadd.xlane.f32.xlu0 %v2412
      %v2418 = vpop.xlane.xlu0 %2417
      %2419 = vadd.xlane.f32.xlu0 %v2413
      %v2420 = vpop.xlane.xlu0 %2419
      %2421 = vadd.xlane.f32.xlu0 %v2414
      %v2422 = vpop.xlane.xlu0 %2421
      %v2423 = vmul.f32 %v2416, %v2402
      %v2424 = vmul.f32 %v2418, %v2402
      %v2425 = vmul.f32 %v2420, %v2402
      %v2426 = vmul.f32 %v2422, %v2402
      %v2427 = vadd.f32 %v2423, 1e-05
      %v2428 = vadd.f32 %v2424, 1e-05
      %v2429 = vadd.f32 %v2425, 1e-05
      %v2430 = vadd.f32 %v2426, 1e-05
      %v2431 = vrsqrt.pop %v2427
      %v2432 = vrsqrt.pop %v2428
      %v2433 = vrsqrt.pop %v2429
      %v2434 = vrsqrt.pop %v2430
      %v2435 = vmul.f32 %v2407, %v2431
      %v2436 = vmul.f32 %v2408, %v2432
      %v2437 = vmul.f32 %v2409, %v2433
      %v2438 = vmul.f32 %v2410, %v2434
      %v2440 = vlaneseq
      %v2441 = vshrl.u32 %v2440, 7
      %v2442 = vsub.s32 0, %v2441
      %v2443 = vrot.slane %v2392, %v2442
      %v2445 = vmul.f32 %v2435, %v2443
      %v2446 = vmul.f32 %v2436, %v2443
      %v2447 = vmul.f32 %v2437, %v2443
      %v2448 = vmul.f32 %v2438, %v2443
      %v2450 = vlaneseq
      %v2451 = vshrl.u32 %v2450, 7
      %v2452 = vsub.s32 0, %v2451
      %v2453 = vrot.slane %v2393, %v2452
      %v2455 = vadd.f32 %v2445, %v2453
      %v2456 = vadd.f32 %v2446, %v2453
      %v2457 = vadd.f32 %v2447, %v2453
      %v2458 = vadd.f32 %v2448, %v2453
      %v2459 = vld [vmem:[%s714] sm:$0xff]
      %v2460 = vld [vmem:[%s714 + $0x8] sm:$0xff]
      %v2461 = vld [vmem:[%s714 + $0x10] sm:$0xff]
      %v2462 = vld [vmem:[%s714 + $0x18] sm:$0xff]
      %v2463 = vld [vmem:[%s714 + $0x20] sm:$0xff]
      %v2464 = vld [vmem:[%s714 + $0x28] sm:$0xff]
      %v2465 = vld [vmem:[%s714 + $0x30] sm:$0xff]
      %v2466 = vld [vmem:[%s714 + $0x38] sm:$0xff]
      %v2467 = vld [vmem:[%s714 + $0x40] sm:$0xff]
      %v2468 = vld [vmem:[%s714 + $0x48] sm:$0xff]
      %v2469 = vld [vmem:[%s714 + $0x50] sm:$0xff]
      %v2470 = vld [vmem:[%s714 + $0x58] sm:$0xff]
      %v2471 = vld [vmem:[%s714 + $0x60] sm:$0xff]
      %v2472 = vld [vmem:[%s714 + $0x68] sm:$0xff]
      %v2473 = vld [vmem:[%s714 + $0x70] sm:$0xff]
      %v2474 = vld [vmem:[%s714 + $0x78] sm:$0xff]
      %v2475 = vld [vmem:[%s714 + $0x80] sm:$0xff]
      %v2476 = vld [vmem:[%s714 + $0x88] sm:$0xff]
      %v2477 = vld [vmem:[%s714 + $0x90] sm:$0xff]
      %v2478 = vld [vmem:[%s714 + $0x98] sm:$0xff]
      %v2479 = vld [vmem:[%s714 + $0xa0] sm:$0xff]
      %v2480 = vld [vmem:[%s714 + $0xa8] sm:$0xff]
      %v2481 = vld [vmem:[%s714 + $0xb0] sm:$0xff]
      %v2482 = vld [vmem:[%s714 + $0xb8] sm:$0xff]
      %v2483 = vld [vmem:[%s714 + $0xc0] sm:$0xff]
      %v2484 = vld [vmem:[%s714 + $0xc8] sm:$0xff]
      %v2485 = vld [vmem:[%s714 + $0xd0] sm:$0xff]
      %v2486 = vld [vmem:[%s714 + $0xd8] sm:$0xff]
      %v2487 = vld [vmem:[%s714 + $0xe0] sm:$0xff]
      %v2488 = vld [vmem:[%s714 + $0xe8] sm:$0xff]
      %v2489 = vld [vmem:[%s714 + $0xf0] sm:$0xff]
      %v2490 = vld [vmem:[%s714 + $0xf8] sm:$0xff]
      %v2491 = vpack.c.bf16 %v2456, %v2455
      %v2492 = vpack.c.bf16 %v2458, %v2457
      %v2493 = vld [vmem:[%s718] sm:$0xf]
      %v2495 = vlaneseq
      %v2496 = vshrl.u32 %v2495, 7
      %v2497 = vsub.s32 0, %v2496
      %v2498 = vrot.slane %v2493, %v2497
      %v2499 = vlaneseq
      %v2500 = vshrl.u32 %v2499, 7
      %v2501 = vsub.s32 1, %v2500
      %v2502 = vrot.slane %v2493, %v2501
      %v2503 = vlaneseq
      %v2504 = vshrl.u32 %v2503, 7
      %v2505 = vsub.s32 2, %v2504
      %v2506 = vrot.slane %v2493, %v2505
      %v2507 = vlaneseq
      %v2508 = vshrl.u32 %v2507, 7
      %v2509 = vsub.s32 3, %v2508
      %v2510 = vrot.slane %v2493, %v2509
      %v2547 = vunpack.c.l.b16 %v2459
      %v2548 = vunpack.c.h.b16 %v2459
      %v2549 = vunpack.c.l.b16 %v2460
      %v2550 = vunpack.c.h.b16 %v2460
      %v2551 = vunpack.c.l.b16 %v2461
      %v2552 = vunpack.c.h.b16 %v2461
      %v2553 = vunpack.c.l.b16 %v2462
      %v2554 = vunpack.c.h.b16 %v2462
      %v2555 = vunpack.c.l.b16 %v2463
      %v2556 = vunpack.c.h.b16 %v2463
      %v2557 = vunpack.c.l.b16 %v2464
      %v2558 = vunpack.c.h.b16 %v2464
      %v2559 = vunpack.c.l.b16 %v2465
      %v2560 = vunpack.c.h.b16 %v2465
      %v2561 = vunpack.c.l.b16 %v2466
      %v2562 = vunpack.c.h.b16 %v2466
      %v2563 = vunpack.c.l.b16 %v2467
      %v2564 = vunpack.c.h.b16 %v2467
      %v2565 = vunpack.c.l.b16 %v2468
      %v2566 = vunpack.c.h.b16 %v2468
      %v2567 = vunpack.c.l.b16 %v2469
      %v2568 = vunpack.c.h.b16 %v2469
      %v2569 = vunpack.c.l.b16 %v2470
      %v2570 = vunpack.c.h.b16 %v2470
      %v2571 = vunpack.c.l.b16 %v2471
      %v2572 = vunpack.c.h.b16 %v2471
      %v2573 = vunpack.c.l.b16 %v2472
      %v2574 = vunpack.c.h.b16 %v2472
      %v2575 = vunpack.c.l.b16 %v2473
      %v2576 = vunpack.c.h.b16 %v2473
      %v2577 = vunpack.c.l.b16 %v2474
      %v2578 = vunpack.c.h.b16 %v2474
      %v2579 = vunpack.c.l.b16 %v2475
      %v2580 = vunpack.c.h.b16 %v2475
      %v2581 = vunpack.c.l.b16 %v2476
      %v2582 = vunpack.c.h.b16 %v2476
      %v2583 = vunpack.c.l.b16 %v2477
      %v2584 = vunpack.c.h.b16 %v2477
      %v2585 = vunpack.c.l.b16 %v2478
      %v2586 = vunpack.c.h.b16 %v2478
      %v2587 = vunpack.c.l.b16 %v2479
      %v2588 = vunpack.c.h.b16 %v2479
      %v2589 = vunpack.c.l.b16 %v2480
      %v2590 = vunpack.c.h.b16 %v2480
      %v2591 = vunpack.c.l.b16 %v2481
      %v2592 = vunpack.c.h.b16 %v2481
      %v2593 = vunpack.c.l.b16 %v2482
      %v2594 = vunpack.c.h.b16 %v2482
      %v2595 = vunpack.c.l.b16 %v2483
      %v2596 = vunpack.c.h.b16 %v2483
      %v2597 = vunpack.c.l.b16 %v2484
      %v2598 = vunpack.c.h.b16 %v2484
      %v2599 = vunpack.c.l.b16 %v2485
      %v2600 = vunpack.c.h.b16 %v2485
      %v2601 = vunpack.c.l.b16 %v2486
      %v2602 = vunpack.c.h.b16 %v2486
      %v2603 = vunpack.c.l.b16 %v2487
      %v2604 = vunpack.c.h.b16 %v2487
      %v2605 = vunpack.c.l.b16 %v2488
      %v2606 = vunpack.c.h.b16 %v2488
      %v2607 = vunpack.c.l.b16 %v2489
      %v2608 = vunpack.c.h.b16 %v2489
      %v2609 = vunpack.c.l.b16 %v2490
      %v2610 = vunpack.c.h.b16 %v2490
      %v2611 = vpack.c.b16 %v2551, %v2547
      %v2612 = vpack.c.b16 %v2552, %v2548
      %v2613 = vpack.c.b16 %v2553, %v2549
      %v2614 = vpack.c.b16 %v2554, %v2550
      %v2615 = vpack.c.b16 %v2559, %v2555
      %v2616 = vpack.c.b16 %v2560, %v2556
      %v2617 = vpack.c.b16 %v2561, %v2557
      %v2618 = vpack.c.b16 %v2562, %v2558
      %v2619 = vpack.c.b16 %v2567, %v2563
      %v2620 = vpack.c.b16 %v2568, %v2564
      %v2621 = vpack.c.b16 %v2569, %v2565
      %v2622 = vpack.c.b16 %v2570, %v2566
      %v2623 = vpack.c.b16 %v2575, %v2571
      %v2624 = vpack.c.b16 %v2576, %v2572
      %v2625 = vpack.c.b16 %v2577, %v2573
      %v2626 = vpack.c.b16 %v2578, %v2574
      %v2627 = vpack.c.b16 %v2583, %v2579
      %v2628 = vpack.c.b16 %v2584, %v2580
      %v2629 = vpack.c.b16 %v2585, %v2581
      %v2630 = vpack.c.b16 %v2586, %v2582
      %v2631 = vpack.c.b16 %v2591, %v2587
      %v2632 = vpack.c.b16 %v2592, %v2588
      %v2633 = vpack.c.b16 %v2593, %v2589
      %v2634 = vpack.c.b16 %v2594, %v2590
      %v2635 = vpack.c.b16 %v2599, %v2595
      %v2636 = vpack.c.b16 %v2600, %v2596
      %v2637 = vpack.c.b16 %v2601, %v2597
      %v2638 = vpack.c.b16 %v2602, %v2598
      %v2639 = vpack.c.b16 %v2607, %v2603
      %v2640 = vpack.c.b16 %v2608, %v2604
      %v2641 = vpack.c.b16 %v2609, %v2605
      %v2642 = vpack.c.b16 %v2610, %v2606
      %2675 = vmatprep.subr.bf16.mxu0 %v2640
      %2676 = vmatpush1.bf16.msra.mxu0 %v2639
      %2677 = vmatprep.subr.bf16.mxu0 %v2636
      %2678 = vmatpush1.bf16.msra.mxu0 %v2635
      %2679 = vmatprep.subr.bf16.mxu0 %v2632
      %2680 = vmatpush1.bf16.msra.mxu0 %v2631
      %2681 = vmatprep.subr.bf16.mxu0 %v2628
      %2682 = vmatpush1.bf16.msra.mxu0 %v2627
      %2683 = vmatprep.subr.bf16.mxu0 %v2624
      %2684 = vmatpush1.bf16.msra.mxu0 %v2623
      %2685 = vmatprep.subr.bf16.mxu0 %v2620
      %2686 = vmatpush1.bf16.msra.mxu0 %v2619
      %2687 = vmatprep.subr.bf16.mxu0 %v2616
      %2688 = vmatpush1.bf16.msra.mxu0 %v2615
      %2689 = vmatprep.subr.bf16.mxu0 %v2612
      %2690 = vmatpush1.bf16.msra.mxu0 %v2611
      %2691 = vmatprep.subr.bf16.mxu0 0
      %2692 = vmatpush2.bf16.msra.mxu0 0
      %2693 = vmatprep.subr.bf16.mxu0 0
      %2694 = vmatpush2.bf16.msra.mxu0 0
      %2695 = vmatprep.subr.bf16.mxu0 0
      %2696 = vmatpush2.bf16.msra.mxu0 0
      %2697 = vmatprep.subr.bf16.mxu0 0
      %2698 = vmatpush2.bf16.msra.mxu0 0
      %2699 = vmatprep.subr.bf16.mxu0 0
      %2700 = vmatpush2.bf16.msra.mxu0 0
      %2701 = vmatprep.subr.bf16.mxu0 0
      %2702 = vmatpush2.bf16.msra.mxu0 0
      %2703 = vmatprep.subr.bf16.mxu0 0
      %2704 = vmatpush2.bf16.msra.mxu0 0
      %2705 = vmatprep.subr.bf16.mxu0 0
      %2706 = vmatpush2.bf16.msra.mxu0 0
      %2707 = vmatprep.mubr.bf16.mxu0 0
      %2708 = vmatmul.mubr.bf16.gmra.mxu0 %v2491
      %v2709 = vpop.f32.mrf.mxu0
      %v2710 = vadd.f32 %v2498, %v2709
      %v2711 = vpop.f32.mrf.mxu0
      %v2712 = vadd.f32 %v2502, %v2711
      %v2713 = vpop.f32.mrf.mxu0
      %v2714 = vadd.f32 %v2498, %v2713
      %v2715 = vpop.f32.mrf.mxu0
      %v2716 = vadd.f32 %v2502, %v2715
      %2717 = vmatprep.mubr.bf16.mxu0 0
      %2718 = vmatmul.mubr.bf16.gmra.mxu0 %v2492
      %v2719 = vpop.f32.mrf.mxu0
      %v2720 = vadd.f32 %v2498, %v2719
      %v2721 = vpop.f32.mrf.mxu0
      %v2722 = vadd.f32 %v2502, %v2721
      %v2723 = vpop.f32.mrf.mxu0
      %v2724 = vadd.f32 %v2498, %v2723
      %v2725 = vpop.f32.mrf.mxu0
      %v2726 = vadd.f32 %v2502, %v2725
      %2727 = vdwg.mxu0
      %2728 = vmatprep.subr.bf16.mxu0 %v2642
      %2729 = vmatpush1.bf16.msra.mxu0 %v2641
      %2730 = vmatprep.subr.bf16.mxu0 %v2638
      %2731 = vmatpush1.bf16.msra.mxu0 %v2637
      %2732 = vmatprep.subr.bf16.mxu0 %v2634
      %2733 = vmatpush1.bf16.msra.mxu0 %v2633
      %2734 = vmatprep.subr.bf16.mxu0 %v2630
      %2735 = vmatpush1.bf16.msra.mxu0 %v2629
      %2736 = vmatprep.subr.bf16.mxu0 %v2626
      %2737 = vmatpush1.bf16.msra.mxu0 %v2625
      %2738 = vmatprep.subr.bf16.mxu0 %v2622
      %2739 = vmatpush1.bf16.msra.mxu0 %v2621
      %2740 = vmatprep.subr.bf16.mxu0 %v2618
      %2741 = vmatpush1.bf16.msra.mxu0 %v2617
      %2742 = vmatprep.subr.bf16.mxu0 %v2614
      %2743 = vmatpush1.bf16.msra.mxu0 %v2613
      %2744 = vmatprep.subr.bf16.mxu0 0
      %2745 = vmatpush2.bf16.msra.mxu0 0
      %2746 = vmatprep.subr.bf16.mxu0 0
      %2747 = vmatpush2.bf16.msra.mxu0 0
      %2748 = vmatprep.subr.bf16.mxu0 0
      %2749 = vmatpush2.bf16.msra.mxu0 0
      %2750 = vmatprep.subr.bf16.mxu0 0
      %2751 = vmatpush2.bf16.msra.mxu0 0
      %2752 = vmatprep.subr.bf16.mxu0 0
      %2753 = vmatpush2.bf16.msra.mxu0 0
      %2754 = vmatprep.subr.bf16.mxu0 0
      %2755 = vmatpush2.bf16.msra.mxu0 0
      %2756 = vmatprep.subr.bf16.mxu0 0
      %2757 = vmatpush2.bf16.msra.mxu0 0
      %2758 = vmatprep.subr.bf16.mxu0 0
      %2759 = vmatpush2.bf16.msra.mxu0 0
      %2760 = vmatprep.mubr.bf16.mxu0 0
      %2761 = vmatmul.mubr.bf16.gmra.mxu0 %v2491
      %v2762 = vpop.f32.mrf.mxu0
      %v2763 = vadd.f32 %v2506, %v2762
      %v2764 = vpop.f32.mrf.mxu0
      %v2765 = vadd.f32 %v2510, %v2764
      %v2766 = vpop.f32.mrf.mxu0
      %v2767 = vadd.f32 %v2506, %v2766
      %v2768 = vpop.f32.mrf.mxu0
      %v2769 = vadd.f32 %v2510, %v2768
      %2770 = vmatprep.mubr.bf16.mxu0 0
      %2771 = vmatmul.mubr.bf16.gmra.mxu0 %v2492
      %v2772 = vpop.f32.mrf.mxu0
      %v2773 = vadd.f32 %v2506, %v2772
      %v2774 = vpop.f32.mrf.mxu0
      %v2775 = vadd.f32 %v2510, %v2774
      %v2776 = vpop.f32.mrf.mxu0
      %v2777 = vadd.f32 %v2506, %v2776
      %v2778 = vpop.f32.mrf.mxu0
      %v2779 = vadd.f32 %v2510, %v2778
      %2780 = vdwg.mxu0
      %v2781 = vmul.f32 %v2710, %v2710
      %v2782 = vmul.f32 %v2712, %v2712
      %v2783 = vmul.f32 %v2763, %v2763
      %v2784 = vmul.f32 %v2765, %v2765
      %v2785 = vmul.f32 %v2714, %v2714
      %v2786 = vmul.f32 %v2716, %v2716
      %v2787 = vmul.f32 %v2767, %v2767
      %v2788 = vmul.f32 %v2769, %v2769
      %v2789 = vmul.f32 %v2720, %v2720
      %v2790 = vmul.f32 %v2722, %v2722
      %v2791 = vmul.f32 %v2773, %v2773
      %v2792 = vmul.f32 %v2775, %v2775
      %v2793 = vmul.f32 %v2724, %v2724
      %v2794 = vmul.f32 %v2726, %v2726
      %v2795 = vmul.f32 %v2777, %v2777
      %v2796 = vmul.f32 %v2779, %v2779
      %v2797 = vmul.f32 %v2710, %v2781
      %v2798 = vmul.f32 %v2712, %v2782
      %v2799 = vmul.f32 %v2763, %v2783
      %v2800 = vmul.f32 %v2765, %v2784
      %v2801 = vmul.f32 %v2714, %v2785
      %v2802 = vmul.f32 %v2716, %v2786
      %v2803 = vmul.f32 %v2767, %v2787
      %v2804 = vmul.f32 %v2769, %v2788
      %v2805 = vmul.f32 %v2720, %v2789
      %v2806 = vmul.f32 %v2722, %v2790
      %v2807 = vmul.f32 %v2773, %v2791
      %v2808 = vmul.f32 %v2775, %v2792
      %v2809 = vmul.f32 %v2724, %v2793
      %v2810 = vmul.f32 %v2726, %v2794
      %v2811 = vmul.f32 %v2777, %v2795
      %v2812 = vmul.f32 %v2779, %v2796
      %v2813 = vmul.f32 %v2797, 0.044715
      %v2814 = vmul.f32 %v2798, 0.044715
      %v2815 = vmul.f32 %v2799, 0.044715
      %v2816 = vmul.f32 %v2800, 0.044715
      %v2817 = vmul.f32 %v2801, 0.044715
      %v2818 = vmul.f32 %v2802, 0.044715
      %v2819 = vmul.f32 %v2803, 0.044715
      %v2820 = vmul.f32 %v2804, 0.044715
      %v2821 = vmul.f32 %v2805, 0.044715
      %v2822 = vmul.f32 %v2806, 0.044715
      %v2823 = vmul.f32 %v2807, 0.044715
      %v2824 = vmul.f32 %v2808, 0.044715
      %v2825 = vmul.f32 %v2809, 0.044715
      %v2826 = vmul.f32 %v2810, 0.044715
      %v2827 = vmul.f32 %v2811, 0.044715
      %v2828 = vmul.f32 %v2812, 0.044715
      %v2829 = vadd.f32 %v2710, %v2813
      %v2830 = vadd.f32 %v2712, %v2814
      %v2831 = vadd.f32 %v2763, %v2815
      %v2832 = vadd.f32 %v2765, %v2816
      %v2833 = vadd.f32 %v2714, %v2817
      %v2834 = vadd.f32 %v2716, %v2818
      %v2835 = vadd.f32 %v2767, %v2819
      %v2836 = vadd.f32 %v2769, %v2820
      %v2837 = vadd.f32 %v2720, %v2821
      %v2838 = vadd.f32 %v2722, %v2822
      %v2839 = vadd.f32 %v2773, %v2823
      %v2840 = vadd.f32 %v2775, %v2824
      %v2841 = vadd.f32 %v2724, %v2825
      %v2842 = vadd.f32 %v2726, %v2826
      %v2843 = vadd.f32 %v2777, %v2827
      %v2844 = vadd.f32 %v2779, %v2828
      %v2845 = vmul.f32 %v2829, 0.7978846
      %v2846 = vmul.f32 %v2830, 0.7978846
      %v2847 = vmul.f32 %v2831, 0.7978846
      %v2848 = vmul.f32 %v2832, 0.7978846
      %v2849 = vmul.f32 %v2833, 0.7978846
      %v2850 = vmul.f32 %v2834, 0.7978846
      %v2851 = vmul.f32 %v2835, 0.7978846
      %v2852 = vmul.f32 %v2836, 0.7978846
      %v2853 = vmul.f32 %v2837, 0.7978846
      %v2854 = vmul.f32 %v2838, 0.7978846
      %v2855 = vmul.f32 %v2839, 0.7978846
      %v2856 = vmul.f32 %v2840, 0.7978846
      %v2857 = vmul.f32 %v2841, 0.7978846
      %v2858 = vmul.f32 %v2842, 0.7978846
      %v2859 = vmul.f32 %v2843, 0.7978846
      %v2860 = vmul.f32 %v2844, 0.7978846
      %v2861 = vtanh.pop %v2845
      %v2862 = vtanh.pop %v2846
      %v2863 = vtanh.pop %v2847
      %v2864 = vtanh.pop %v2848
      %v2865 = vtanh.pop %v2849
      %v2866 = vtanh.pop %v2850
      %v2867 = vtanh.pop %v2851
      %v2868 = vtanh.pop %v2852
      %v2869 = vtanh.pop %v2853
      %v2870 = vtanh.pop %v2854
      %v2871 = vtanh.pop %v2855
      %v2872 = vtanh.pop %v2856
      %v2873 = vtanh.pop %v2857
      %v2874 = vtanh.pop %v2858
      %v2875 = vtanh.pop %v2859
      %v2876 = vtanh.pop %v2860
      %v2877 = vadd.f32 %v2861, 1.0
      %v2878 = vadd.f32 %v2862, 1.0
      %v2879 = vadd.f32 %v2863, 1.0
      %v2880 = vadd.f32 %v2864, 1.0
      %v2881 = vadd.f32 %v2865, 1.0
      %v2882 = vadd.f32 %v2866, 1.0
      %v2883 = vadd.f32 %v2867, 1.0
      %v2884 = vadd.f32 %v2868, 1.0
      %v2885 = vadd.f32 %v2869, 1.0
      %v2886 = vadd.f32 %v2870, 1.0
      %v2887 = vadd.f32 %v2871, 1.0
      %v2888 = vadd.f32 %v2872, 1.0
      %v2889 = vadd.f32 %v2873, 1.0
      %v2890 = vadd.f32 %v2874, 1.0
      %v2891 = vadd.f32 %v2875, 1.0
      %v2892 = vadd.f32 %v2876, 1.0
      %v2893 = vmul.f32 %v2877, 0.5
      %v2894 = vmul.f32 %v2878, 0.5
      %v2895 = vmul.f32 %v2879, 0.5
      %v2896 = vmul.f32 %v2880, 0.5
      %v2897 = vmul.f32 %v2881, 0.5
      %v2898 = vmul.f32 %v2882, 0.5
      %v2899 = vmul.f32 %v2883, 0.5
      %v2900 = vmul.f32 %v2884, 0.5
      %v2901 = vmul.f32 %v2885, 0.5
      %v2902 = vmul.f32 %v2886, 0.5
      %v2903 = vmul.f32 %v2887, 0.5
      %v2904 = vmul.f32 %v2888, 0.5
      %v2905 = vmul.f32 %v2889, 0.5
      %v2906 = vmul.f32 %v2890, 0.5
      %v2907 = vmul.f32 %v2891, 0.5
      %v2908 = vmul.f32 %v2892, 0.5
      %v2909 = vmul.f32 %v2710, %v2893
      %v2910 = vmul.f32 %v2712, %v2894
      %v2911 = vmul.f32 %v2763, %v2895
      %v2912 = vmul.f32 %v2765, %v2896
      %v2913 = vmul.f32 %v2714, %v2897
      %v2914 = vmul.f32 %v2716, %v2898
      %v2915 = vmul.f32 %v2767, %v2899
      %v2916 = vmul.f32 %v2769, %v2900
      %v2917 = vmul.f32 %v2720, %v2901
      %v2918 = vmul.f32 %v2722, %v2902
      %v2919 = vmul.f32 %v2773, %v2903
      %v2920 = vmul.f32 %v2775, %v2904
      %v2921 = vmul.f32 %v2724, %v2905
      %v2922 = vmul.f32 %v2726, %v2906
      %v2923 = vmul.f32 %v2777, %v2907
      %v2924 = vmul.f32 %v2779, %v2908
      %v2925 = vld [vmem:[%s723] sm:$0xf]
      %v2926 = vld [vmem:[%s723 + $0x4] sm:$0xf]
      %v2927 = vld [vmem:[%s723 + $0x8] sm:$0xf]
      %v2928 = vld [vmem:[%s723 + $0xc] sm:$0xf]
      %v2929 = vld [vmem:[%s723 + $0x10] sm:$0xf]
      %v2930 = vld [vmem:[%s723 + $0x14] sm:$0xf]
      %v2931 = vld [vmem:[%s723 + $0x18] sm:$0xf]
      %v2932 = vld [vmem:[%s723 + $0x1c] sm:$0xf]
      %v2933 = vld [vmem:[%s723 + $0x20] sm:$0xf]
      %v2934 = vld [vmem:[%s723 + $0x24] sm:$0xf]
      %v2935 = vld [vmem:[%s723 + $0x28] sm:$0xf]
      %v2936 = vld [vmem:[%s723 + $0x2c] sm:$0xf]
      %v2937 = vld [vmem:[%s723 + $0x30] sm:$0xf]
      %v2938 = vld [vmem:[%s723 + $0x34] sm:$0xf]
      %v2939 = vld [vmem:[%s723 + $0x38] sm:$0xf]
      %v2940 = vld [vmem:[%s723 + $0x3c] sm:$0xf]
      %v2941 = vld [vmem:[%s723 + $0x40] sm:$0xf]
      %v2942 = vld [vmem:[%s723 + $0x44] sm:$0xf]
      %v2943 = vld [vmem:[%s723 + $0x48] sm:$0xf]
      %v2944 = vld [vmem:[%s723 + $0x4c] sm:$0xf]
      %v2945 = vld [vmem:[%s723 + $0x50] sm:$0xf]
      %v2946 = vld [vmem:[%s723 + $0x54] sm:$0xf]
      %v2947 = vld [vmem:[%s723 + $0x58] sm:$0xf]
      %v2948 = vld [vmem:[%s723 + $0x5c] sm:$0xf]
      %v2949 = vld [vmem:[%s723 + $0x60] sm:$0xf]
      %v2950 = vld [vmem:[%s723 + $0x64] sm:$0xf]
      %v2951 = vld [vmem:[%s723 + $0x68] sm:$0xf]
      %v2952 = vld [vmem:[%s723 + $0x6c] sm:$0xf]
      %v2953 = vld [vmem:[%s723 + $0x70] sm:$0xf]
      %v2954 = vld [vmem:[%s723 + $0x74] sm:$0xf]
      %v2955 = vld [vmem:[%s723 + $0x78] sm:$0xf]
      %v2956 = vld [vmem:[%s723 + $0x7c] sm:$0xf]
      %v2957 = vld [vmem:[%s723 + $0x80] sm:$0xf]
      %v2958 = vld [vmem:[%s723 + $0x84] sm:$0xf]
      %v2959 = vld [vmem:[%s723 + $0x88] sm:$0xf]
      %v2960 = vld [vmem:[%s723 + $0x8c] sm:$0xf]
      %v2961 = vld [vmem:[%s723 + $0x90] sm:$0xf]
      %v2962 = vld [vmem:[%s723 + $0x94] sm:$0xf]
      %v2963 = vld [vmem:[%s723 + $0x98] sm:$0xf]
      %v2964 = vld [vmem:[%s723 + $0x9c] sm:$0xf]
      %v2965 = vld [vmem:[%s723 + $0xa0] sm:$0xf]
      %v2966 = vld [vmem:[%s723 + $0xa4] sm:$0xf]
      %v2967 = vld [vmem:[%s723 + $0xa8] sm:$0xf]
      %v2968 = vld [vmem:[%s723 + $0xac] sm:$0xf]
      %v2969 = vld [vmem:[%s723 + $0xb0] sm:$0xf]
      %v2970 = vld [vmem:[%s723 + $0xb4] sm:$0xf]
      %v2971 = vld [vmem:[%s723 + $0xb8] sm:$0xf]
      %v2972 = vld [vmem:[%s723 + $0xbc] sm:$0xf]
      %v2973 = vld [vmem:[%s723 + $0xc0] sm:$0xf]
      %v2974 = vld [vmem:[%s723 + $0xc4] sm:$0xf]
      %v2975 = vld [vmem:[%s723 + $0xc8] sm:$0xf]
      %v2976 = vld [vmem:[%s723 + $0xcc] sm:$0xf]
      %v2977 = vld [vmem:[%s723 + $0xd0] sm:$0xf]
      %v2978 = vld [vmem:[%s723 + $0xd4] sm:$0xf]
      %v2979 = vld [vmem:[%s723 + $0xd8] sm:$0xf]
      %v2980 = vld [vmem:[%s723 + $0xdc] sm:$0xf]
      %v2981 = vld [vmem:[%s723 + $0xe0] sm:$0xf]
      %v2982 = vld [vmem:[%s723 + $0xe4] sm:$0xf]
      %v2983 = vld [vmem:[%s723 + $0xe8] sm:$0xf]
      %v2984 = vld [vmem:[%s723 + $0xec] sm:$0xf]
      %v2985 = vld [vmem:[%s723 + $0xf0] sm:$0xf]
      %v2986 = vld [vmem:[%s723 + $0xf4] sm:$0xf]
      %v2987 = vld [vmem:[%s723 + $0xf8] sm:$0xf]
      %v2988 = vld [vmem:[%s723 + $0xfc] sm:$0xf]
      %v2989 = vpack.c.bf16 %v2913, %v2909
      %v2990 = vpack.c.bf16 %v2914, %v2910
      %v2991 = vpack.c.bf16 %v2915, %v2911
      %v2992 = vpack.c.bf16 %v2916, %v2912
      %v2993 = vpack.c.bf16 %v2921, %v2917
      %v2994 = vpack.c.bf16 %v2922, %v2918
      %v2995 = vpack.c.bf16 %v2923, %v2919
      %v2996 = vpack.c.bf16 %v2924, %v2920
      %v2997 = vld [vmem:[%s726] sm:$0x1]
      %v2999 = vlaneseq
      %v3000 = vshrl.u32 %v2999, 7
      %v3001 = vsub.s32 0, %v3000
      %v3002 = vrot.slane %v2997, %v3001
      %v3068 = vunpack.c.l.b16 %v2925
      %v3069 = vunpack.c.l.b16 %v2926
      %v3070 = vunpack.c.l.b16 %v2927
      %v3071 = vunpack.c.l.b16 %v2928
      %v3072 = vunpack.c.l.b16 %v2929
      %v3073 = vunpack.c.l.b16 %v2930
      %v3074 = vunpack.c.l.b16 %v2931
      %v3075 = vunpack.c.l.b16 %v2932
      %v3076 = vunpack.c.l.b16 %v2933
      %v3077 = vunpack.c.l.b16 %v2934
      %v3078 = vunpack.c.l.b16 %v2935
      %v3079 = vunpack.c.l.b16 %v2936
      %v3080 = vunpack.c.l.b16 %v2937
      %v3081 = vunpack.c.l.b16 %v2938
      %v3082 = vunpack.c.l.b16 %v2939
      %v3083 = vunpack.c.l.b16 %v2940
      %v3084 = vunpack.c.l.b16 %v2941
      %v3085 = vunpack.c.l.b16 %v2942
      %v3086 = vunpack.c.l.b16 %v2943
      %v3087 = vunpack.c.l.b16 %v2944
      %v3088 = vunpack.c.l.b16 %v2945
      %v3089 = vunpack.c.l.b16 %v2946
      %v3090 = vunpack.c.l.b16 %v2947
      %v3091 = vunpack.c.l.b16 %v2948
      %v3092 = vunpack.c.l.b16 %v2949
      %v3093 = vunpack.c.l.b16 %v2950
      %v3094 = vunpack.c.l.b16 %v2951
      %v3095 = vunpack.c.l.b16 %v2952
      %v3096 = vunpack.c.l.b16 %v2953
      %v3097 = vunpack.c.l.b16 %v2954
      %v3098 = vunpack.c.l.b16 %v2955
      %v3099 = vunpack.c.l.b16 %v2956
      %v3100 = vunpack.c.l.b16 %v2957
      %v3101 = vunpack.c.l.b16 %v2958
      %v3102 = vunpack.c.l.b16 %v2959
      %v3103 = vunpack.c.l.b16 %v2960
      %v3104 = vunpack.c.l.b16 %v2961
      %v3105 = vunpack.c.l.b16 %v2962
      %v3106 = vunpack.c.l.b16 %v2963
      %v3107 = vunpack.c.l.b16 %v2964
      %v3108 = vunpack.c.l.b16 %v2965
      %v3109 = vunpack.c.l.b16 %v2966
      %v3110 = vunpack.c.l.b16 %v2967
      %v3111 = vunpack.c.l.b16 %v2968
      %v3112 = vunpack.c.l.b16 %v2969
      %v3113 = vunpack.c.l.b16 %v2970
      %v3114 = vunpack.c.l.b16 %v2971
      %v3115 = vunpack.c.l.b16 %v2972
      %v3116 = vunpack.c.l.b16 %v2973
      %v3117 = vunpack.c.l.b16 %v2974
      %v3118 = vunpack.c.l.b16 %v2975
      %v3119 = vunpack.c.l.b16 %v2976
      %v3120 = vunpack.c.l.b16 %v2977
      %v3121 = vunpack.c.l.b16 %v2978
      %v3122 = vunpack.c.l.b16 %v2979
      %v3123 = vunpack.c.l.b16 %v2980
      %v3124 = vunpack.c.l.b16 %v2981
      %v3125 = vunpack.c.l.b16 %v2982
      %v3126 = vunpack.c.l.b16 %v2983
      %v3127 = vunpack.c.l.b16 %v2984
      %v3128 = vunpack.c.l.b16 %v2985
      %v3129 = vunpack.c.l.b16 %v2986
      %v3130 = vunpack.c.l.b16 %v2987
      %v3131 = vunpack.c.l.b16 %v2988
      %v3132 = vpack.c.b16 %v3069, %v3068
      %v3133 = vpack.c.b16 %v3071, %v3070
      %v3134 = vpack.c.b16 %v3073, %v3072
      %v3135 = vpack.c.b16 %v3075, %v3074
      %v3136 = vpack.c.b16 %v3077, %v3076
      %v3137 = vpack.c.b16 %v3079, %v3078
      %v3138 = vpack.c.b16 %v3081, %v3080
      %v3139 = vpack.c.b16 %v3083, %v3082
      %v3140 = vpack.c.b16 %v3085, %v3084
      %v3141 = vpack.c.b16 %v3087, %v3086
      %v3142 = vpack.c.b16 %v3089, %v3088
      %v3143 = vpack.c.b16 %v3091, %v3090
      %v3144 = vpack.c.b16 %v3093, %v3092
      %v3145 = vpack.c.b16 %v3095, %v3094
      %v3146 = vpack.c.b16 %v3097, %v3096
      %v3147 = vpack.c.b16 %v3099, %v3098
      %v3148 = vpack.c.b16 %v3101, %v3100
      %v3149 = vpack.c.b16 %v3103, %v3102
      %v3150 = vpack.c.b16 %v3105, %v3104
      %v3151 = vpack.c.b16 %v3107, %v3106
      %v3152 = vpack.c.b16 %v3109, %v3108
      %v3153 = vpack.c.b16 %v3111, %v3110
      %v3154 = vpack.c.b16 %v3113, %v3112
      %v3155 = vpack.c.b16 %v3115, %v3114
      %v3156 = vpack.c.b16 %v3117, %v3116
      %v3157 = vpack.c.b16 %v3119, %v3118
      %v3158 = vpack.c.b16 %v3121, %v3120
      %v3159 = vpack.c.b16 %v3123, %v3122
      %v3160 = vpack.c.b16 %v3125, %v3124
      %v3161 = vpack.c.b16 %v3127, %v3126
      %v3162 = vpack.c.b16 %v3129, %v3128
      %v3163 = vpack.c.b16 %v3131, %v3130
      %3196 = vmatprep.subr.bf16.mxu0 0
      %3197 = vmatpush1.bf16.msra.mxu0 %v3139
      %3198 = vmatprep.subr.bf16.mxu0 0
      %3199 = vmatpush1.bf16.msra.mxu0 %v3138
      %3200 = vmatprep.subr.bf16.mxu0 0
      %3201 = vmatpush1.bf16.msra.mxu0 %v3137
      %3202 = vmatprep.subr.bf16.mxu0 0
      %3203 = vmatpush1.bf16.msra.mxu0 %v3136
      %3204 = vmatprep.subr.bf16.mxu0 0
      %3205 = vmatpush1.bf16.msra.mxu0 %v3135
      %3206 = vmatprep.subr.bf16.mxu0 0
      %3207 = vmatpush1.bf16.msra.mxu0 %v3134
      %3208 = vmatprep.subr.bf16.mxu0 0
      %3209 = vmatpush1.bf16.msra.mxu0 %v3133
      %3210 = vmatprep.subr.bf16.mxu0 0
      %3211 = vmatpush1.bf16.msra.mxu0 %v3132
      %3212 = vmatprep.subr.bf16.mxu0 0
      %3213 = vmatpush2.bf16.msra.mxu0 %v3147
      %3214 = vmatprep.subr.bf16.mxu0 0
      %3215 = vmatpush2.bf16.msra.mxu0 %v3146
      %3216 = vmatprep.subr.bf16.mxu0 0
      %3217 = vmatpush2.bf16.msra.mxu0 %v3145
      %3218 = vmatprep.subr.bf16.mxu0 0
      %3219 = vmatpush2.bf16.msra.mxu0 %v3144
      %3220 = vmatprep.subr.bf16.mxu0 0
      %3221 = vmatpush2.bf16.msra.mxu0 %v3143
      %3222 = vmatprep.subr.bf16.mxu0 0
      %3223 = vmatpush2.bf16.msra.mxu0 %v3142
      %3224 = vmatprep.subr.bf16.mxu0 0
      %3225 = vmatpush2.bf16.msra.mxu0 %v3141
      %3226 = vmatprep.subr.bf16.mxu0 0
      %3227 = vmatpush2.bf16.msra.mxu0 %v3140
      %3228 = vmatprep.mubr.bf16.mxu0 %v2990
      %3229 = vmatmul.mubr.bf16.gmra.mxu0 %v2989
      %v3230 = vpop.f32.mrf.mxu0
      %v3231 = vadd.f32 %v3002, %v3230
      %v3232 = vpop.f32.mrf.mxu0
      %v3233 = vpop.f32.mrf.mxu0
      %v3234 = vadd.f32 %v3002, %v3233
      %v3235 = vpop.f32.mrf.mxu0
      %3236 = vmatprep.mubr.bf16.mxu0 %v2994
      %3237 = vmatmul.mubr.bf16.gmra.mxu0 %v2993
      %v3238 = vpop.f32.mrf.mxu0
      %v3239 = vadd.f32 %v3002, %v3238
      %v3240 = vpop.f32.mrf.mxu0
      %v3241 = vpop.f32.mrf.mxu0
      %v3242 = vadd.f32 %v3002, %v3241
      %v3243 = vpop.f32.mrf.mxu0
      %3244 = vdwg.mxu0
      %3245 = vmatprep.subr.bf16.mxu0 0
      %3246 = vmatpush1.bf16.msra.mxu0 %v3155
      %3247 = vmatprep.subr.bf16.mxu0 0
      %3248 = vmatpush1.bf16.msra.mxu0 %v3154
      %3249 = vmatprep.subr.bf16.mxu0 0
      %3250 = vmatpush1.bf16.msra.mxu0 %v3153
      %3251 = vmatprep.subr.bf16.mxu0 0
      %3252 = vmatpush1.bf16.msra.mxu0 %v3152
      %3253 = vmatprep.subr.bf16.mxu0 0
      %3254 = vmatpush1.bf16.msra.mxu0 %v3151
      %3255 = vmatprep.subr.bf16.mxu0 0
      %3256 = vmatpush1.bf16.msra.mxu0 %v3150
      %3257 = vmatprep.subr.bf16.mxu0 0
      %3258 = vmatpush1.bf16.msra.mxu0 %v3149
      %3259 = vmatprep.subr.bf16.mxu0 0
      %3260 = vmatpush1.bf16.msra.mxu0 %v3148
      %3261 = vmatprep.subr.bf16.mxu0 0
      %3262 = vmatpush2.bf16.msra.mxu0 %v3163
      %3263 = vmatprep.subr.bf16.mxu0 0
      %3264 = vmatpush2.bf16.msra.mxu0 %v3162
      %3265 = vmatprep.subr.bf16.mxu0 0
      %3266 = vmatpush2.bf16.msra.mxu0 %v3161
      %3267 = vmatprep.subr.bf16.mxu0 0
      %3268 = vmatpush2.bf16.msra.mxu0 %v3160
      %3269 = vmatprep.subr.bf16.mxu0 0
      %3270 = vmatpush2.bf16.msra.mxu0 %v3159
      %3271 = vmatprep.subr.bf16.mxu0 0
      %3272 = vmatpush2.bf16.msra.mxu0 %v3158
      %3273 = vmatprep.subr.bf16.mxu0 0
      %3274 = vmatpush2.bf16.msra.mxu0 %v3157
      %3275 = vmatprep.subr.bf16.mxu0 0
      %3276 = vmatpush2.bf16.msra.mxu0 %v3156
      %3277 = vmatprep.mubr.bf16.mxu0 %v2992
      %3278 = vmatmul.mubr.bf16.gmra.mxu0 %v2991
      %v3279 = vpop.f32.mrf.mxu0
      %v3280 = vadd.f32 %v3231, %v3279
      %v3281 = vpop.f32.mrf.mxu0
      %v3282 = vpop.f32.mrf.mxu0
      %v3283 = vadd.f32 %v3234, %v3282
      %v3284 = vpop.f32.mrf.mxu0
      %3285 = vmatprep.mubr.bf16.mxu0 %v2996
      %3286 = vmatmul.mubr.bf16.gmra.mxu0 %v2995
      %v3287 = vpop.f32.mrf.mxu0
      %v3288 = vadd.f32 %v3239, %v3287
      %v3289 = vpop.f32.mrf.mxu0
      %v3290 = vpop.f32.mrf.mxu0
      %v3291 = vadd.f32 %v3242, %v3290
      %v3292 = vpop.f32.mrf.mxu0
      %3293 = vdwg.mxu0
      %v3294 = vadd.f32 %v2455, %v3280
      %v3295 = vadd.f32 %v2456, %v3283
      %v3296 = vadd.f32 %v2457, %v3288
      %v3297 = vadd.f32 %v2458, %v3291
      %v3298 = vld [vmem:[%s729] sm:$0x1]
      %v3299 = vld [vmem:[%s732] sm:$0x1]
      %3300 = vadd.xlane.f32.xlu0 %v3294
      %v3301 = vpop.xlane.xlu0 %3300
      %3302 = vadd.xlane.f32.xlu0 %v3295
      %v3303 = vpop.xlane.xlu0 %3302
      %3304 = vadd.xlane.f32.xlu0 %v3296
      %v3305 = vpop.xlane.xlu0 %3304
      %3306 = vadd.xlane.f32.xlu0 %v3297
      %v3307 = vpop.xlane.xlu0 %3306
      %v3308 = vmul.f32 %v3301, %v2402
      %v3309 = vmul.f32 %v3303, %v2402
      %v3310 = vmul.f32 %v3305, %v2402
      %v3311 = vmul.f32 %v3307, %v2402
      %v3312 = vsub.f32 %v3294, %v3308
      %v3313 = vsub.f32 %v3295, %v3309
      %v3314 = vsub.f32 %v3296, %v3310
      %v3315 = vsub.f32 %v3297, %v3311
      %v3316 = vmul.f32 %v3312, %v3312
      %v3317 = vmul.f32 %v3313, %v3313
      %v3318 = vmul.f32 %v3314, %v3314
      %v3319 = vmul.f32 %v3315, %v3315
      %3320 = vadd.xlane.f32.xlu0 %v3316
      %v3321 = vpop.xlane.xlu0 %3320
      %3322 = vadd.xlane.f32.xlu0 %v3317
      %v3323 = vpop.xlane.xlu0 %3322
      %3324 = vadd.xlane.f32.xlu0 %v3318
      %v3325 = vpop.xlane.xlu0 %3324
      %3326 = vadd.xlane.f32.xlu0 %v3319
      %v3327 = vpop.xlane.xlu0 %3326
      %v3328 = vmul.f32 %v3321, %v2402
      %v3329 = vmul.f32 %v3323, %v2402
      %v3330 = vmul.f32 %v3325, %v2402
      %v3331 = vmul.f32 %v3327, %v2402
      %v3332 = vadd.f32 %v3328, 1e-05
      %v3333 = vadd.f32 %v3329, 1e-05
      %v3334 = vadd.f32 %v3330, 1e-05
      %v3335 = vadd.f32 %v3331, 1e-05
      %v3336 = vrsqrt.pop %v3332
      %v3337 = vrsqrt.pop %v3333
      %v3338 = vrsqrt.pop %v3334
      %v3339 = vrsqrt.pop %v3335
      %v3340 = vmul.f32 %v3312, %v3336
      %v3341 = vmul.f32 %v3313, %v3337
      %v3342 = vmul.f32 %v3314, %v3338
      %v3343 = vmul.f32 %v3315, %v3339
      %v3345 = vlaneseq
      %v3346 = vshrl.u32 %v3345, 7
      %v3347 = vsub.s32 0, %v3346
      %v3348 = vrot.slane %v3298, %v3347
      %v3350 = vmul.f32 %v3340, %v3348
      %v3351 = vmul.f32 %v3341, %v3348
      %v3352 = vmul.f32 %v3342, %v3348
      %v3353 = vmul.f32 %v3343, %v3348
      %v3355 = vlaneseq
      %v3356 = vshrl.u32 %v3355, 7
      %v3357 = vsub.s32 0, %v3356
      %v3358 = vrot.slane %v3299, %v3357
      %v3360 = vadd.f32 %v3350, %v3358
      %v3361 = vadd.f32 %v3351, %v3358
      %v3362 = vadd.f32 %v3352, %v3358
      %v3363 = vadd.f32 %v3353, %v3358
      %3364 = vst [vmem:[%s738] sm:$0xff] %v3360
      %3365 = vst [vmem:[%s738 + $0x8] sm:$0xff] %v3361
      %3366 = vst [vmem:[%s738 + $0x10] sm:$0xff] %v3362
      %3367 = vst [vmem:[%s738 + $0x18] sm:$0xff] %v3363
      %s3368 = smul.u32 2, %s31
      %p3369 = scmp.lt.s32.totalorder %s3368, 1
      %s3370 = scalar_select %p3369, %s3368, 1
      %s3371 = smul.addr %s3370, 2
      %s3372 = smul.addr %s3371, 8
      %s3373 = scalar_lea.vmem %s16, %s3372
      // Predicated region
      $region89: #{forward.3} parent=83 // pred_check
        %p3374 = pneg %p458
      $region90: #{forward.3} parent=83 // pred_check_branch
        %3376 = sbr.rel (%p3374) target = $region92
      $region91: #{forward.3} parent=83 // pred_region
        %s3377 = smul.u32 2, %s31
      $region92: #{forward.3} parent=83 // pred_fallthru
        _
      // Predicated region
      $region93: #{forward.3} parent=83 // pred_check
        %p3378 = pneg %p458
      $region94: #{forward.3} parent=83 // pred_check_branch
        %3380 = sbr.rel (%p3378) target = $region96
      $region95: #{forward.3} parent=83 // pred_region
        %s3381 = smul.u32 2, %s31
        %p3382 = scmp.lt.s32.totalorder %s3381, 1
        %s3383 = scalar_select %p3382, %s3381, 1
        %s3384 = smul.addr %s3383, 2
        %s3385 = smul.addr %s3384, 8
        %s3386 = scalar_lea.vmem %s16, %s3385
      $region96: #{forward.3} parent=83 // pred_fallthru
        _
    $region84: #{forward.3} parent=5 // pred_fallthru
      _
    %p3387 = scmp.le.s32.totalorder 2, %s22
    // Predicated region
    $region97: #{forward.3} parent=5 // pred_check
      %p3388 = pneg %p3387
    $region98: #{forward.3} parent=5 // pred_check_branch
      %3390 = sbr.rel (%p3388) target = $region100
    $region99: #{forward.3} parent=5 // pred_region
      %s3391 = ssub.s32 %s22, 2
    $region100: #{forward.3} parent=5 // pred_fallthru
      _
  $region6: #{forward.3} parent=0 // loop_footer
    %s26 = sadd.s32 1, %s22
  $region7: #{forward.3} parent=0 // loop_footer_branch
    %21 = sbr.rel target = $region3
  $region8: #{forward.3} parent=0 // loop_exit
    _

// kernel: forward.4
$region0: #{forward.4}
  #allocation0 [shape = 'u32[]', space=smem, size = 0x4, offset = 0x4, fixed_abs, tag = 'smem constant byte address 0x4 - core index']
  #allocation1 [shape = 'u32[144,128]{1,0:T(1,128)}', space=vmem, size = 0x12000, scoped, tag = 'internal scratch']
  #allocation2 [shape = 'f32[2,8,128]{2,1,0:T(8,128)}', space=vmem, size = 0x2000, scoped, tag = 'scratch operand']
  %s0 = inlined_call_operand.vmem [shape: f32[2,8,8], index: 0, kind: input, shape index: {}]
  %s1 = inlined_call_operand.vmem [shape: bf16[8,128], index: 1, kind: input, shape index: {}]
  %s2 = inlined_call_operand.vmem [shape: f32[1,128], index: 2, kind: input, shape index: {}]
  %s3 = inlined_call_operand.vmem [shape: f32[1,8,128], index: 3, kind: input, shape index: {}]
  %s4 = inlined_call_operand.vmem [shape: bf16[1,128,384], index: 4, kind: input, shape index: {}]
  %s5 = inlined_call_operand.vmem [shape: f32[1,1,384], index: 5, kind: input, shape index: {}]
  %s6 = inlined_call_operand.vmem [shape: bf16[1,128,128], index: 6, kind: input, shape index: {}]
  %s7 = inlined_call_operand.vmem [shape: f32[1,1,128], index: 7, kind: input, shape index: {}]
  %s8 = inlined_call_operand.vmem [shape: f32[1,1,128], index: 8, kind: input, shape index: {}]
  %s9 = inlined_call_operand.vmem [shape: f32[1,1,128], index: 9, kind: input, shape index: {}]
  %s10 = inlined_call_operand.vmem [shape: bf16[1,128,512], index: 10, kind: input, shape index: {}]
  %s11 = inlined_call_operand.vmem [shape: f32[1,1,512], index: 11, kind: input, shape index: {}]
  %s12 = inlined_call_operand.vmem [shape: bf16[1,512,128], index: 12, kind: input, shape index: {}]
  %s13 = inlined_call_operand.vmem [shape: f32[1,1,128], index: 13, kind: input, shape index: {}]
  %s14 = inlined_call_operand.vmem [shape: f32[1,1,128], index: 14, kind: input, shape index: {}]
  %s15 = inlined_call_operand.vmem [shape: f32[1,1,128], index: 15, kind: input, shape index: {}]
  %s16 = inlined_call_operand.vmem [shape: f32[2,8,128], index: 16, kind: output, shape index: {}]
  %s17 = sld [smem:[#allocation0]]
  $region78: #{forward.4} parent=0
    _
  %s19 = ssub.s32 1, %s17
  %s20 = scalar_select 0, %s19, %s17
  // Predicated region
  $region2: #{forward.4} parent=0 // pred_check
    _
  $region3: #{forward.4} parent=0 // pred_check_branch
    %22 = sbr.rel (0) target = $region5
  $region4: #{forward.4} parent=0 // pred_region
    _
  $region5: #{forward.4} parent=0 // pred_fallthru
    _
  // Predicated region
  $region6: #{forward.4} parent=0 // pred_check
    _
  $region7: #{forward.4} parent=0 // pred_check_branch
    %24 = sbr.rel (0) target = $region9
  $region8: #{forward.4} parent=0 // pred_region
    _
  $region9: #{forward.4} parent=0 // pred_fallthru
    _
  // Predicated region
  $region10: #{forward.4} parent=0 // pred_check
    _
  $region11: #{forward.4} parent=0 // pred_check_branch
    %26 = sbr.rel (0) target = $region13
  $region12: #{forward.4} parent=0 // pred_region
    _
  $region13: #{forward.4} parent=0 // pred_fallthru
    _
  // Predicated region
  $region14: #{forward.4} parent=0 // pred_check
    _
  $region15: #{forward.4} parent=0 // pred_check_branch
    %28 = sbr.rel (0) target = $region17
  $region16: #{forward.4} parent=0 // pred_region
    _
  $region17: #{forward.4} parent=0 // pred_fallthru
    _
  // Predicated region
  $region18: #{forward.4} parent=0 // pred_check
    _
  $region19: #{forward.4} parent=0 // pred_check_branch
    %30 = sbr.rel (0) target = $region21
  $region20: #{forward.4} parent=0 // pred_region
    _
  $region21: #{forward.4} parent=0 // pred_fallthru
    _
  // Predicated region
  $region22: #{forward.4} parent=0 // pred_check
    _
  $region23: #{forward.4} parent=0 // pred_check_branch
    %32 = sbr.rel (0) target = $region25
  $region24: #{forward.4} parent=0 // pred_region
    _
  $region25: #{forward.4} parent=0 // pred_fallthru
    _
  // Predicated region
  $region26: #{forward.4} parent=0 // pred_check
    _
  $region27: #{forward.4} parent=0 // pred_check_branch
    %34 = sbr.rel (0) target = $region29
  $region28: #{forward.4} parent=0 // pred_region
    _
  $region29: #{forward.4} parent=0 // pred_fallthru
    _
  // Predicated region
  $region30: #{forward.4} parent=0 // pred_check
    _
  $region31: #{forward.4} parent=0 // pred_check_branch
    %36 = sbr.rel (0) target = $region33
  $region32: #{forward.4} parent=0 // pred_region
    _
  $region33: #{forward.4} parent=0 // pred_fallthru
    _
  // Predicated region
  $region34: #{forward.4} parent=0 // pred_check
    _
  $region35: #{forward.4} parent=0 // pred_check_branch
    %38 = sbr.rel (0) target = $region37
  $region36: #{forward.4} parent=0 // pred_region
    _
  $region37: #{forward.4} parent=0 // pred_fallthru
    _
  // Predicated region
  $region38: #{forward.4} parent=0 // pred_check
    _
  $region39: #{forward.4} parent=0 // pred_check_branch
    %40 = sbr.rel (0) target = $region41
  $region40: #{forward.4} parent=0 // pred_region
    _
  $region41: #{forward.4} parent=0 // pred_fallthru
    _
  // Predicated region
  $region42: #{forward.4} parent=0 // pred_check
    _
  $region43: #{forward.4} parent=0 // pred_check_branch
    %42 = sbr.rel (0) target = $region45
  $region44: #{forward.4} parent=0 // pred_region
    _
  $region45: #{forward.4} parent=0 // pred_fallthru
    _
  // Predicated region
  $region46: #{forward.4} parent=0 // pred_check
    _
  $region47: #{forward.4} parent=0 // pred_check_branch
    %44 = sbr.rel (0) target = $region49
  $region48: #{forward.4} parent=0 // pred_region
    _
  $region49: #{forward.4} parent=0 // pred_fallthru
    _
  // Predicated region
  $region50: #{forward.4} parent=0 // pred_check
    _
  $region51: #{forward.4} parent=0 // pred_check_branch
    %46 = sbr.rel (0) target = $region53
  $region52: #{forward.4} parent=0 // pred_region
    _
  $region53: #{forward.4} parent=0 // pred_fallthru
    _
  // Predicated region
  $region54: #{forward.4} parent=0 // pred_check
    _
  $region55: #{forward.4} parent=0 // pred_check_branch
    %48 = sbr.rel (0) target = $region57
  $region56: #{forward.4} parent=0 // pred_region
    _
  $region57: #{forward.4} parent=0 // pred_fallthru
    _
  // Predicated region
  $region58: #{forward.4} parent=0 // pred_check
    _
  $region59: #{forward.4} parent=0 // pred_check_branch
    %50 = sbr.rel (0) target = $region61
  $region60: #{forward.4} parent=0 // pred_region
    _
  $region61: #{forward.4} parent=0 // pred_fallthru
    _
  // Predicated region
  $region62: #{forward.4} parent=0 // pred_check
    _
  $region63: #{forward.4} parent=0 // pred_check_branch
    %52 = sbr.rel (0) target = $region65
  $region64: #{forward.4} parent=0 // pred_region
    _
  $region65: #{forward.4} parent=0 // pred_fallthru
    _
  %p54 = scmp.eq.s32.totalorder 0, 0
  // Predicated region
  $region66: #{forward.4} parent=0 // pred_check
    %p55 = pneg %p54
  $region67: #{forward.4} parent=0 // pred_check_branch
    %57 = sbr.rel (%p55) target = $region69
  $region68: #{forward.4} parent=0 // pred_region
    %v58 = vld [vmem:[%s0] sm:$0xff]
    %v59 = vld [vmem:[%s0 + $0x8] sm:$0xff]
    %v60 = vld [vmem:[%s1] sm:$0xf]
    %v61 = vpack.c.bf16 %v59, %v58
    %v62 = vld [vmem:[%s2] sm:$0x1]
    %v64 = vlaneseq
    %v65 = vshrl.u32 %v64, 7
    %v66 = vsub.s32 0, %v65
    %v67 = vrot.slane %v62, %v66
    %vm69 = vcmask 64512
    %v71 = vsel %vm69, %v61, 0
    %vm73 = vcmask 1043456
    %v75 = vsel %vm73, %v60, 0
    %77 = vmatprep.subr.bf16.mxu0 0
    %78 = vmatpush1.bf16.msra.mxu0 0
    %79 = vmatprep.subr.bf16.mxu0 0
    %80 = vmatpush1.bf16.msra.mxu0 0
    %81 = vmatprep.subr.bf16.mxu0 0
    %82 = vmatpush1.bf16.msra.mxu0 0
    %83 = vmatprep.subr.bf16.mxu0 0
    %84 = vmatpush1.bf16.msra.mxu0 0
    %85 = vmatprep.subr.bf16.mxu0 0
    %86 = vmatpush1.bf16.msra.mxu0 0
    %87 = vmatprep.subr.bf16.mxu0 0
    %88 = vmatpush1.bf16.msra.mxu0 0
    %89 = vmatprep.subr.bf16.mxu0 0
    %90 = vmatpush1.bf16.msra.mxu0 0
    %91 = vmatprep.subr.bf16.mxu0 0
    %92 = vmatpush1.bf16.msra.mxu0 %v75
    %93 = vmatprep.subr.bf16.mxu0 0
    %94 = vmatpush2.bf16.msra.mxu0 0
    %95 = vmatprep.subr.bf16.mxu0 0
    %96 = vmatpush2.bf16.msra.mxu0 0
    %97 = vmatprep.subr.bf16.mxu0 0
    %98 = vmatpush2.bf16.msra.mxu0 0
    %99 = vmatprep.subr.bf16.mxu0 0
    %100 = vmatpush2.bf16.msra.mxu0 0
    %101 = vmatprep.subr.bf16.mxu0 0
    %102 = vmatpush2.bf16.msra.mxu0 0
    %103 = vmatprep.subr.bf16.mxu0 0
    %104 = vmatpush2.bf16.msra.mxu0 0
    %105 = vmatprep.subr.bf16.mxu0 0
    %106 = vmatpush2.bf16.msra.mxu0 0
    %107 = vmatprep.subr.bf16.mxu0 0
    %108 = vmatpush2.bf16.msra.mxu0 0
    %109 = vmatprep.mubr.bf16.mxu0 0
    %110 = vmatmul.mubr.bf16.gmra.mxu0 %v71
    %v111 = vpop.f32.mrf.mxu0
    %v112 = vadd.f32 %v67, %v111
    %v113 = vpop.f32.mrf.mxu0
    %v114 = vpop.f32.mrf.mxu0
    %v115 = vadd.f32 %v67, %v114
    %v116 = vpop.f32.mrf.mxu0
    %117 = vdwg.mxu0
    %v118 = vld [vmem:[%s3] sm:$0xff]
    %v119 = vadd.f32 %v112, %v118
    %v120 = vadd.f32 %v115, %v118
    %121 = vst [vmem:[%s16] sm:$0xff] %v119
    %122 = vst [vmem:[%s16 + $0x8] sm:$0xff] %v120
  $region69: #{forward.4} parent=0 // pred_fallthru
    _
  %v123 = vld [vmem:[%s16] sm:$0xff]
  %v124 = vld [vmem:[%s16 + $0x8] sm:$0xff]
  %v125 = vld [vmem:[%s4] sm:$0xff]
  %v126 = vld [vmem:[%s4 + $0x8] sm:$0xf]
  %v127 = vld [vmem:[%s4 + $0xc] sm:$0xff]
  %v128 = vld [vmem:[%s4 + $0x14] sm:$0xf]
  %v129 = vld [vmem:[%s4 + $0x18] sm:$0xff]
  %v130 = vld [vmem:[%s4 + $0x20] sm:$0xf]
  %v131 = vld [vmem:[%s4 + $0x24] sm:$0xff]
  %v132 = vld [vmem:[%s4 + $0x2c] sm:$0xf]
  %v133 = vld [vmem:[%s4 + $0x30] sm:$0xff]
  %v134 = vld [vmem:[%s4 + $0x38] sm:$0xf]
  %v135 = vld [vmem:[%s4 + $0x3c] sm:$0xff]
  %v136 = vld [vmem:[%s4 + $0x44] sm:$0xf]
  %v137 = vld [vmem:[%s4 + $0x48] sm:$0xff]
  %v138 = vld [vmem:[%s4 + $0x50] sm:$0xf]
  %v139 = vld [vmem:[%s4 + $0x54] sm:$0xff]
  %v140 = vld [vmem:[%s4 + $0x5c] sm:$0xf]
  %v141 = vld [vmem:[%s4 + $0x60] sm:$0xff]
  %v142 = vld [vmem:[%s4 + $0x68] sm:$0xf]
  %v143 = vld [vmem:[%s4 + $0x6c] sm:$0xff]
  %v144 = vld [vmem:[%s4 + $0x74] sm:$0xf]
  %v145 = vld [vmem:[%s4 + $0x78] sm:$0xff]
  %v146 = vld [vmem:[%s4 + $0x80] sm:$0xf]
  %v147 = vld [vmem:[%s4 + $0x84] sm:$0xff]
  %v148 = vld [vmem:[%s4 + $0x8c] sm:$0xf]
  %v149 = vld [vmem:[%s4 + $0x90] sm:$0xff]
  %v150 = vld [vmem:[%s4 + $0x98] sm:$0xf]
  %v151 = vld [vmem:[%s4 + $0x9c] sm:$0xff]
  %v152 = vld [vmem:[%s4 + $0xa4] sm:$0xf]
  %v153 = vld [vmem:[%s4 + $0xa8] sm:$0xff]
  %v154 = vld [vmem:[%s4 + $0xb0] sm:$0xf]
  %v155 = vld [vmem:[%s4 + $0xb4] sm:$0xff]
  %v156 = vld [vmem:[%s4 + $0xbc] sm:$0xf]
  %v157 = vpack.c.bf16 %v124, %v123
  %v158 = vld [vmem:[%s5] sm:$0x7]
  %v160 = vlaneseq
  %v161 = vshrl.u32 %v160, 7
  %v162 = vsub.s32 0, %v161
  %v163 = vrot.slane %v158, %v162
  %v164 = vlaneseq
  %v165 = vshrl.u32 %v164, 7
  %v166 = vsub.s32 1, %v165
  %v167 = vrot.slane %v158, %v166
  %v168 = vlaneseq
  %v169 = vshrl.u32 %v168, 7
  %v170 = vsub.s32 2, %v169
  %v171 = vrot.slane %v158, %v170
  %v207 = vunpack.c.l.b16 %v125
  %v208 = vunpack.c.h.b16 %v125
  %v209 = vunpack.c.l.b16 %v126
  %v210 = vunpack.c.l.b16 %v127
  %v211 = vunpack.c.h.b16 %v127
  %v212 = vunpack.c.l.b16 %v128
  %v213 = vunpack.c.l.b16 %v129
  %v214 = vunpack.c.h.b16 %v129
  %v215 = vunpack.c.l.b16 %v130
  %v216 = vunpack.c.l.b16 %v131
  %v217 = vunpack.c.h.b16 %v131
  %v218 = vunpack.c.l.b16 %v132
  %v219 = vunpack.c.l.b16 %v133
  %v220 = vunpack.c.h.b16 %v133
  %v221 = vunpack.c.l.b16 %v134
  %v222 = vunpack.c.l.b16 %v135
  %v223 = vunpack.c.h.b16 %v135
  %v224 = vunpack.c.l.b16 %v136
  %v225 = vunpack.c.l.b16 %v137
  %v226 = vunpack.c.h.b16 %v137
  %v227 = vunpack.c.l.b16 %v138
  %v228 = vunpack.c.l.b16 %v139
  %v229 = vunpack.c.h.b16 %v139
  %v230 = vunpack.c.l.b16 %v140
  %v231 = vunpack.c.l.b16 %v141
  %v232 = vunpack.c.h.b16 %v141
  %v233 = vunpack.c.l.b16 %v142
  %v234 = vunpack.c.l.b16 %v143
  %v235 = vunpack.c.h.b16 %v143
  %v236 = vunpack.c.l.b16 %v144
  %v237 = vunpack.c.l.b16 %v145
  %v238 = vunpack.c.h.b16 %v145
  %v239 = vunpack.c.l.b16 %v146
  %v240 = vunpack.c.l.b16 %v147
  %v241 = vunpack.c.h.b16 %v147
  %v242 = vunpack.c.l.b16 %v148
  %v243 = vunpack.c.l.b16 %v149
  %v244 = vunpack.c.h.b16 %v149
  %v245 = vunpack.c.l.b16 %v150
  %v246 = vunpack.c.l.b16 %v151
  %v247 = vunpack.c.h.b16 %v151
  %v248 = vunpack.c.l.b16 %v152
  %v249 = vunpack.c.l.b16 %v153
  %v250 = vunpack.c.h.b16 %v153
  %v251 = vunpack.c.l.b16 %v154
  %v252 = vunpack.c.l.b16 %v155
  %v253 = vunpack.c.h.b16 %v155
  %v254 = vunpack.c.l.b16 %v156
  %v255 = vpack.c.b16 %v210, %v207
  %v256 = vpack.c.b16 %v211, %v208
  %v257 = vpack.c.b16 %v212, %v209
  %v258 = vpack.c.b16 %v216, %v213
  %v259 = vpack.c.b16 %v217, %v214
  %v260 = vpack.c.b16 %v218, %v215
  %v261 = vpack.c.b16 %v222, %v219
  %v262 = vpack.c.b16 %v223, %v220
  %v263 = vpack.c.b16 %v224, %v221
  %v264 = vpack.c.b16 %v228, %v225
  %v265 = vpack.c.b16 %v229, %v226
  %v266 = vpack.c.b16 %v230, %v227
  %v267 = vpack.c.b16 %v234, %v231
  %v268 = vpack.c.b16 %v235, %v232
  %v269 = vpack.c.b16 %v236, %v233
  %v270 = vpack.c.b16 %v240, %v237
  %v271 = vpack.c.b16 %v241, %v238
  %v272 = vpack.c.b16 %v242, %v239
  %v273 = vpack.c.b16 %v246, %v243
  %v274 = vpack.c.b16 %v247, %v244
  %v275 = vpack.c.b16 %v248, %v245
  %v276 = vpack.c.b16 %v252, %v249
  %v277 = vpack.c.b16 %v253, %v250
  %v278 = vpack.c.b16 %v254, %v251
  %303 = vmatprep.subr.bf16.mxu0 %v277
  %304 = vmatpush1.bf16.msra.mxu0 %v276
  %305 = vmatprep.subr.bf16.mxu0 %v274
  %306 = vmatpush1.bf16.msra.mxu0 %v273
  %307 = vmatprep.subr.bf16.mxu0 %v271
  %308 = vmatpush1.bf16.msra.mxu0 %v270
  %309 = vmatprep.subr.bf16.mxu0 %v268
  %310 = vmatpush1.bf16.msra.mxu0 %v267
  %311 = vmatprep.subr.bf16.mxu0 %v265
  %312 = vmatpush1.bf16.msra.mxu0 %v264
  %313 = vmatprep.subr.bf16.mxu0 %v262
  %314 = vmatpush1.bf16.msra.mxu0 %v261
  %315 = vmatprep.subr.bf16.mxu0 %v259
  %316 = vmatpush1.bf16.msra.mxu0 %v258
  %317 = vmatprep.subr.bf16.mxu0 %v256
  %318 = vmatpush1.bf16.msra.mxu0 %v255
  %319 = vmatprep.subr.bf16.mxu0 0
  %320 = vmatpush2.bf16.msra.mxu0 0
  %321 = vmatprep.subr.bf16.mxu0 0
  %322 = vmatpush2.bf16.msra.mxu0 0
  %323 = vmatprep.subr.bf16.mxu0 0
  %324 = vmatpush2.bf16.msra.mxu0 0
  %325 = vmatprep.subr.bf16.mxu0 0
  %326 = vmatpush2.bf16.msra.mxu0 0
  %327 = vmatprep.subr.bf16.mxu0 0
  %328 = vmatpush2.bf16.msra.mxu0 0
  %329 = vmatprep.subr.bf16.mxu0 0
  %330 = vmatpush2.bf16.msra.mxu0 0
  %331 = vmatprep.subr.bf16.mxu0 0
  %332 = vmatpush2.bf16.msra.mxu0 0
  %333 = vmatprep.subr.bf16.mxu0 0
  %334 = vmatpush2.bf16.msra.mxu0 0
  %335 = vmatprep.mubr.bf16.mxu0 0
  %336 = vmatmul.mubr.bf16.gmra.mxu0 %v157
  %v337 = vpop.f32.mrf.mxu0
  %v338 = vadd.f32 %v163, %v337
  %v339 = vpop.f32.mrf.mxu0
  %v340 = vadd.f32 %v167, %v339
  %v341 = vpop.f32.mrf.mxu0
  %v342 = vadd.f32 %v163, %v341
  %v343 = vpop.f32.mrf.mxu0
  %v344 = vadd.f32 %v167, %v343
  %345 = vdwg.mxu0
  %346 = vmatprep.subr.bf16.mxu0 0
  %347 = vmatpush1.bf16.msra.mxu0 %v278
  %348 = vmatprep.subr.bf16.mxu0 0
  %349 = vmatpush1.bf16.msra.mxu0 %v275
  %350 = vmatprep.subr.bf16.mxu0 0
  %351 = vmatpush1.bf16.msra.mxu0 %v272
  %352 = vmatprep.subr.bf16.mxu0 0
  %353 = vmatpush1.bf16.msra.mxu0 %v269
  %354 = vmatprep.subr.bf16.mxu0 0
  %355 = vmatpush1.bf16.msra.mxu0 %v266
  %356 = vmatprep.subr.bf16.mxu0 0
  %357 = vmatpush1.bf16.msra.mxu0 %v263
  %358 = vmatprep.subr.bf16.mxu0 0
  %359 = vmatpush1.bf16.msra.mxu0 %v260
  %360 = vmatprep.subr.bf16.mxu0 0
  %361 = vmatpush1.bf16.msra.mxu0 %v257
  %362 = vmatprep.subr.bf16.mxu0 0
  %363 = vmatpush2.bf16.msra.mxu0 0
  %364 = vmatprep.subr.bf16.mxu0 0
  %365 = vmatpush2.bf16.msra.mxu0 0
  %366 = vmatprep.subr.bf16.mxu0 0
  %367 = vmatpush2.bf16.msra.mxu0 0
  %368 = vmatprep.subr.bf16.mxu0 0
  %369 = vmatpush2.bf16.msra.mxu0 0
  %370 = vmatprep.subr.bf16.mxu0 0
  %371 = vmatpush2.bf16.msra.mxu0 0
  %372 = vmatprep.subr.bf16.mxu0 0
  %373 = vmatpush2.bf16.msra.mxu0 0
  %374 = vmatprep.subr.bf16.mxu0 0
  %375 = vmatpush2.bf16.msra.mxu0 0
  %376 = vmatprep.subr.bf16.mxu0 0
  %377 = vmatpush2.bf16.msra.mxu0 0
  %378 = vmatprep.mubr.bf16.mxu0 0
  %379 = vmatmul.mubr.bf16.gmra.mxu0 %v157
  %v380 = vpop.f32.mrf.mxu0
  %v381 = vadd.f32 %v171, %v380
  %v382 = vpop.f32.mrf.mxu0
  %v383 = vpop.f32.mrf.mxu0
  %v384 = vadd.f32 %v171, %v383
  %v385 = vpop.f32.mrf.mxu0
  %386 = vdwg.mxu0
  %v387 = vpack.c.bf16 %v338, %v338
  %v388 = vpack.c.bf16 %v342, %v342
  %v389 = vpack.c.bf16 %v340, %v340
  %v390 = vpack.c.bf16 %v344, %v344
  %v391 = vpack.c.bf16 %v381, %v381
  %v392 = vpack.c.bf16 %v384, %v384
  %vm393 = vcmask 261120
  %v395 = vsel %vm393, %v387, 0
  %v398 = vsel %vm393, %v389, 0
  %400 = vmatprep.subr.bf16.mxu0 0
  %401 = vmatpush1.bf16.xpose.msra.mxu0 0
  %402 = vmatprep.subr.bf16.mxu0 0
  %403 = vmatpush1.bf16.xpose.msra.mxu0 0
  %404 = vmatprep.subr.bf16.mxu0 0
  %405 = vmatpush1.bf16.xpose.msra.mxu0 0
  %406 = vmatprep.subr.bf16.mxu0 0
  %407 = vmatpush1.bf16.xpose.msra.mxu0 0
  %408 = vmatprep.subr.bf16.mxu0 0
  %409 = vmatpush1.bf16.xpose.msra.mxu0 0
  %410 = vmatprep.subr.bf16.mxu0 0
  %411 = vmatpush1.bf16.xpose.msra.mxu0 0
  %412 = vmatprep.subr.bf16.mxu0 0
  %413 = vmatpush1.bf16.xpose.msra.mxu0 0
  %414 = vmatprep.subr.bf16.mxu0 0
  %415 = vmatpush1.bf16.xpose.msra.mxu0 %v398
  %416 = vmatprep.subr.bf16.mxu0 0
  %417 = vmatpush2.bf16.xpose.msra.mxu0 0
  %418 = vmatprep.subr.bf16.mxu0 0
  %419 = vmatpush2.bf16.xpose.msra.mxu0 0
  %420 = vmatprep.subr.bf16.mxu0 0
  %421 = vmatpush2.bf16.xpose.msra.mxu0 0
  %422 = vmatprep.subr.bf16.mxu0 0
  %423 = vmatpush2.bf16.xpose.msra.mxu0 0
  %424 = vmatprep.subr.bf16.mxu0 0
  %425 = vmatpush2.bf16.xpose.msra.mxu0 0
  %426 = vmatprep.subr.bf16.mxu0 0
  %427 = vmatpush2.bf16.xpose.msra.mxu0 0
  %428 = vmatprep.subr.bf16.mxu0 0
  %429 = vmatpush2.bf16.xpose.msra.mxu0 0
  %430 = vmatprep.subr.bf16.mxu0 0
  %431 = vmatpush2.bf16.xpose.msra.mxu0 0
  %432 = vmatprep.mubr.bf16.mxu0 0
  %433 = vmatmul.mubr.bf16.gmra.mxu0 %v395
  %v434 = vpop.f32.mrf.mxu0
  %v435 = vadd.f32 0.0, %v434
  %v436 = vpop.f32.mrf.mxu0
  %v437 = vpop.f32.mrf.mxu0
  %v438 = vpop.f32.mrf.mxu0
  %439 = vdwg.mxu0
  %v441 = vsel %vm393, %v388, 0
  %v444 = vsel %vm393, %v390, 0
  %446 = vmatprep.subr.bf16.mxu0 0
  %447 = vmatpush1.bf16.xpose.msra.mxu0 0
  %448 = vmatprep.subr.bf16.mxu0 0
  %449 = vmatpush1.bf16.xpose.msra.mxu0 0
  %450 = vmatprep.subr.bf16.mxu0 0
  %451 = vmatpush1.bf16.xpose.msra.mxu0 0
  %452 = vmatprep.subr.bf16.mxu0 0
  %453 = vmatpush1.bf16.xpose.msra.mxu0 0
  %454 = vmatprep.subr.bf16.mxu0 0
  %455 = vmatpush1.bf16.xpose.msra.mxu0 0
  %456 = vmatprep.subr.bf16.mxu0 0
  %457 = vmatpush1.bf16.xpose.msra.mxu0 0
  %458 = vmatprep.subr.bf16.mxu0 0
  %459 = vmatpush1.bf16.xpose.msra.mxu0 0
  %460 = vmatprep.subr.bf16.mxu0 0
  %461 = vmatpush1.bf16.xpose.msra.mxu0 %v444
  %462 = vmatprep.subr.bf16.mxu0 0
  %463 = vmatpush2.bf16.xpose.msra.mxu0 0
  %464 = vmatprep.subr.bf16.mxu0 0
  %465 = vmatpush2.bf16.xpose.msra.mxu0 0
  %466 = vmatprep.subr.bf16.mxu0 0
  %467 = vmatpush2.bf16.xpose.msra.mxu0 0
  %468 = vmatprep.subr.bf16.mxu0 0
  %469 = vmatpush2.bf16.xpose.msra.mxu0 0
  %470 = vmatprep.subr.bf16.mxu0 0
  %471 = vmatpush2.bf16.xpose.msra.mxu0 0
  %472 = vmatprep.subr.bf16.mxu0 0
  %473 = vmatpush2.bf16.xpose.msra.mxu0 0
  %474 = vmatprep.subr.bf16.mxu0 0
  %475 = vmatpush2.bf16.xpose.msra.mxu0 0
  %476 = vmatprep.subr.bf16.mxu0 0
  %477 = vmatpush2.bf16.xpose.msra.mxu0 0
  %478 = vmatprep.mubr.bf16.mxu0 0
  %479 = vmatmul.mubr.bf16.gmra.mxu0 %v441
  %v480 = vpop.f32.mrf.mxu0
  %v481 = vadd.f32 0.0, %v480
  %v482 = vpop.f32.mrf.mxu0
  %v483 = vpop.f32.mrf.mxu0
  %v484 = vpop.f32.mrf.mxu0
  %485 = vdwg.mxu0
  %v486 = vmul.f32 %v435, 0.17677669
  %v487 = vmul.f32 %v481, 0.17677669
  %vm488 = vcmask 64512
  %v489 = vsel %vm488, %v486, -inf
  %490 = vmax.xlane.f32.xlu0 %v489
  %v491 = vpop.xlane.xlu0 %490
  %v492 = vsel %vm488, %v487, -inf
  %493 = vmax.xlane.f32.xlu0 %v492
  %v494 = vpop.xlane.xlu0 %493
  %v495 = vsub.f32 %v486, %v491
  %v496 = vsub.f32 %v487, %v494
  %v497 = vmul.f32 %v495, 1.442695
  %v498 = vpow.pop %v497
  %v499 = vmul.f32 %v496, 1.442695
  %v500 = vpow.pop %v499
  %v501 = vsel %vm488, %v498, 0.0
  %502 = vadd.xlane.f32.xlu0 %v501
  %v503 = vpop.xlane.xlu0 %502
  %v504 = vsel %vm488, %v500, 0.0
  %505 = vadd.xlane.f32.xlu0 %v504
  %v506 = vpop.xlane.xlu0 %505
  %v507 = vrcp.pop %v503
  %v508 = vrcp.pop %v506
  %v509 = vmul.f32 %v498, %v507
  %v510 = vmul.f32 %v500, %v508
  %v511 = vpack.c.bf16 %v509, %v509
  %v512 = vpack.c.bf16 %v510, %v510
  %v514 = vsel %vm488, %v511, 0
  %vm516 = vcmask 1043456
  %v518 = vsel %vm516, %v391, 0
  %520 = vmatprep.subr.bf16.mxu0 0
  %521 = vmatpush1.bf16.msra.mxu0 0
  %522 = vmatprep.subr.bf16.mxu0 0
  %523 = vmatpush1.bf16.msra.mxu0 0
  %524 = vmatprep.subr.bf16.mxu0 0
  %525 = vmatpush1.bf16.msra.mxu0 0
  %526 = vmatprep.subr.bf16.mxu0 0
  %527 = vmatpush1.bf16.msra.mxu0 0
  %528 = vmatprep.subr.bf16.mxu0 0
  %529 = vmatpush1.bf16.msra.mxu0 0
  %530 = vmatprep.subr.bf16.mxu0 0
  %531 = vmatpush1.bf16.msra.mxu0 0
  %532 = vmatprep.subr.bf16.mxu0 0
  %533 = vmatpush1.bf16.msra.mxu0 0
  %534 = vmatprep.subr.bf16.mxu0 0
  %535 = vmatpush1.bf16.msra.mxu0 %v518
  %536 = vmatprep.subr.bf16.mxu0 0
  %537 = vmatpush2.bf16.msra.mxu0 0
  %538 = vmatprep.subr.bf16.mxu0 0
  %539 = vmatpush2.bf16.msra.mxu0 0
  %540 = vmatprep.subr.bf16.mxu0 0
  %541 = vmatpush2.bf16.msra.mxu0 0
  %542 = vmatprep.subr.bf16.mxu0 0
  %543 = vmatpush2.bf16.msra.mxu0 0
  %544 = vmatprep.subr.bf16.mxu0 0
  %545 = vmatpush2.bf16.msra.mxu0 0
  %546 = vmatprep.subr.bf16.mxu0 0
  %547 = vmatpush2.bf16.msra.mxu0 0
  %548 = vmatprep.subr.bf16.mxu0 0
  %549 = vmatpush2.bf16.msra.mxu0 0
  %550 = vmatprep.subr.bf16.mxu0 0
  %551 = vmatpush2.bf16.msra.mxu0 0
  %552 = vmatprep.mubr.bf16.mxu0 0
  %553 = vmatmul.mubr.bf16.gmra.mxu0 %v514
  %v554 = vpop.f32.mrf.mxu0
  %v555 = vadd.f32 0.0, %v554
  %v556 = vpop.f32.mrf.mxu0
  %v557 = vpop.f32.mrf.mxu0
  %v558 = vpop.f32.mrf.mxu0
  %559 = vdwg.mxu0
  %v561 = vsel %vm488, %v512, 0
  %v564 = vsel %vm516, %v392, 0
  %566 = vmatprep.subr.bf16.mxu0 0
  %567 = vmatpush1.bf16.msra.mxu0 0
  %568 = vmatprep.subr.bf16.mxu0 0
  %569 = vmatpush1.bf16.msra.mxu0 0
  %570 = vmatprep.subr.bf16.mxu0 0
  %571 = vmatpush1.bf16.msra.mxu0 0
  %572 = vmatprep.subr.bf16.mxu0 0
  %573 = vmatpush1.bf16.msra.mxu0 0
  %574 = vmatprep.subr.bf16.mxu0 0
  %575 = vmatpush1.bf16.msra.mxu0 0
  %576 = vmatprep.subr.bf16.mxu0 0
  %577 = vmatpush1.bf16.msra.mxu0 0
  %578 = vmatprep.subr.bf16.mxu0 0
  %579 = vmatpush1.bf16.msra.mxu0 0
  %580 = vmatprep.subr.bf16.mxu0 0
  %581 = vmatpush1.bf16.msra.mxu0 %v564
  %582 = vmatprep.subr.bf16.mxu0 0
  %583 = vmatpush2.bf16.msra.mxu0 0
  %584 = vmatprep.subr.bf16.mxu0 0
  %585 = vmatpush2.bf16.msra.mxu0 0
  %586 = vmatprep.subr.bf16.mxu0 0
  %587 = vmatpush2.bf16.msra.mxu0 0
  %588 = vmatprep.subr.bf16.mxu0 0
  %589 = vmatpush2.bf16.msra.mxu0 0
  %590 = vmatprep.subr.bf16.mxu0 0
  %591 = vmatpush2.bf16.msra.mxu0 0
  %592 = vmatprep.subr.bf16.mxu0 0
  %593 = vmatpush2.bf16.msra.mxu0 0
  %594 = vmatprep.subr.bf16.mxu0 0
  %595 = vmatpush2.bf16.msra.mxu0 0
  %596 = vmatprep.subr.bf16.mxu0 0
  %597 = vmatpush2.bf16.msra.mxu0 0
  %598 = vmatprep.mubr.bf16.mxu0 0
  %599 = vmatmul.mubr.bf16.gmra.mxu0 %v561
  %v600 = vpop.f32.mrf.mxu0
  %v601 = vadd.f32 0.0, %v600
  %v602 = vpop.f32.mrf.mxu0
  %v603 = vpop.f32.mrf.mxu0
  %v604 = vpop.f32.mrf.mxu0
  %605 = vdwg.mxu0
  %606 = vst.msk [vmem:[#allocation2] sm:$0xff] %vm393, %v555
  %607 = vst.msk [vmem:[#allocation2 + $0x8] sm:$0xff] %vm393, %v601
  %609 = vrot.lane.b32.xlu0 %v387, 96
  %v610 = vpop.permute.xlu0 %609
  %612 = vrot.lane.b32.xlu0 %v389, 96
  %v613 = vpop.permute.xlu0 %612
  %v615 = vsel %vm393, %v610, 0
  %v618 = vsel %vm393, %v613, 0
  %620 = vmatprep.subr.bf16.mxu0 0
  %621 = vmatpush1.bf16.xpose.msra.mxu0 0
  %622 = vmatprep.subr.bf16.mxu0 0
  %623 = vmatpush1.bf16.xpose.msra.mxu0 0
  %624 = vmatprep.subr.bf16.mxu0 0
  %625 = vmatpush1.bf16.xpose.msra.mxu0 0
  %626 = vmatprep.subr.bf16.mxu0 0
  %627 = vmatpush1.bf16.xpose.msra.mxu0 0
  %628 = vmatprep.subr.bf16.mxu0 0
  %629 = vmatpush1.bf16.xpose.msra.mxu0 0
  %630 = vmatprep.subr.bf16.mxu0 0
  %631 = vmatpush1.bf16.xpose.msra.mxu0 0
  %632 = vmatprep.subr.bf16.mxu0 0
  %633 = vmatpush1.bf16.xpose.msra.mxu0 0
  %634 = vmatprep.subr.bf16.mxu0 0
  %635 = vmatpush1.bf16.xpose.msra.mxu0 %v618
  %636 = vmatprep.subr.bf16.mxu0 0
  %637 = vmatpush2.bf16.xpose.msra.mxu0 0
  %638 = vmatprep.subr.bf16.mxu0 0
  %639 = vmatpush2.bf16.xpose.msra.mxu0 0
  %640 = vmatprep.subr.bf16.mxu0 0
  %641 = vmatpush2.bf16.xpose.msra.mxu0 0
  %642 = vmatprep.subr.bf16.mxu0 0
  %643 = vmatpush2.bf16.xpose.msra.mxu0 0
  %644 = vmatprep.subr.bf16.mxu0 0
  %645 = vmatpush2.bf16.xpose.msra.mxu0 0
  %646 = vmatprep.subr.bf16.mxu0 0
  %647 = vmatpush2.bf16.xpose.msra.mxu0 0
  %648 = vmatprep.subr.bf16.mxu0 0
  %649 = vmatpush2.bf16.xpose.msra.mxu0 0
  %650 = vmatprep.subr.bf16.mxu0 0
  %651 = vmatpush2.bf16.xpose.msra.mxu0 0
  %652 = vmatprep.mubr.bf16.mxu0 0
  %653 = vmatmul.mubr.bf16.gmra.mxu0 %v615
  %v654 = vpop.f32.mrf.mxu0
  %v655 = vadd.f32 0.0, %v654
  %v656 = vpop.f32.mrf.mxu0
  %v657 = vpop.f32.mrf.mxu0
  %v658 = vpop.f32.mrf.mxu0
  %659 = vdwg.mxu0
  %661 = vrot.lane.b32.xlu0 %v388, 96
  %v662 = vpop.permute.xlu0 %661
  %664 = vrot.lane.b32.xlu0 %v390, 96
  %v665 = vpop.permute.xlu0 %664
  %v667 = vsel %vm393, %v662, 0
  %v670 = vsel %vm393, %v665, 0
  %672 = vmatprep.subr.bf16.mxu0 0
  %673 = vmatpush1.bf16.xpose.msra.mxu0 0
  %674 = vmatprep.subr.bf16.mxu0 0
  %675 = vmatpush1.bf16.xpose.msra.mxu0 0
  %676 = vmatprep.subr.bf16.mxu0 0
  %677 = vmatpush1.bf16.xpose.msra.mxu0 0
  %678 = vmatprep.subr.bf16.mxu0 0
  %679 = vmatpush1.bf16.xpose.msra.mxu0 0
  %680 = vmatprep.subr.bf16.mxu0 0
  %681 = vmatpush1.bf16.xpose.msra.mxu0 0
  %682 = vmatprep.subr.bf16.mxu0 0
  %683 = vmatpush1.bf16.xpose.msra.mxu0 0
  %684 = vmatprep.subr.bf16.mxu0 0
  %685 = vmatpush1.bf16.xpose.msra.mxu0 0
  %686 = vmatprep.subr.bf16.mxu0 0
  %687 = vmatpush1.bf16.xpose.msra.mxu0 %v670
  %688 = vmatprep.subr.bf16.mxu0 0
  %689 = vmatpush2.bf16.xpose.msra.mxu0 0
  %690 = vmatprep.subr.bf16.mxu0 0
  %691 = vmatpush2.bf16.xpose.msra.mxu0 0
  %692 = vmatprep.subr.bf16.mxu0 0
  %693 = vmatpush2.bf16.xpose.msra.mxu0 0
  %694 = vmatprep.subr.bf16.mxu0 0
  %695 = vmatpush2.bf16.xpose.msra.mxu0 0
  %696 = vmatprep.subr.bf16.mxu0 0
  %697 = vmatpush2.bf16.xpose.msra.mxu0 0
  %698 = vmatprep.subr.bf16.mxu0 0
  %699 = vmatpush2.bf16.xpose.msra.mxu0 0
  %700 = vmatprep.subr.bf16.mxu0 0
  %701 = vmatpush2.bf16.xpose.msra.mxu0 0
  %702 = vmatprep.subr.bf16.mxu0 0
  %703 = vmatpush2.bf16.xpose.msra.mxu0 0
  %704 = vmatprep.mubr.bf16.mxu0 0
  %705 = vmatmul.mubr.bf16.gmra.mxu0 %v667
  %v706 = vpop.f32.mrf.mxu0
  %v707 = vadd.f32 0.0, %v706
  %v708 = vpop.f32.mrf.mxu0
  %v709 = vpop.f32.mrf.mxu0
  %v710 = vpop.f32.mrf.mxu0
  %711 = vdwg.mxu0
  %v712 = vmul.f32 %v655, 0.17677669
  %v713 = vmul.f32 %v707, 0.17677669
  %v714 = vsel %vm488, %v712, -inf
  %715 = vmax.xlane.f32.xlu0 %v714
  %v716 = vpop.xlane.xlu0 %715
  %v717 = vsel %vm488, %v713, -inf
  %718 = vmax.xlane.f32.xlu0 %v717
  %v719 = vpop.xlane.xlu0 %718
  %v720 = vsub.f32 %v712, %v716
  %v721 = vsub.f32 %v713, %v719
  %v722 = vmul.f32 %v720, 1.442695
  %v723 = vpow.pop %v722
  %v724 = vmul.f32 %v721, 1.442695
  %v725 = vpow.pop %v724
  %v726 = vsel %vm488, %v723, 0.0
  %727 = vadd.xlane.f32.xlu0 %v726
  %v728 = vpop.xlane.xlu0 %727
  %v729 = vsel %vm488, %v725, 0.0
  %730 = vadd.xlane.f32.xlu0 %v729
  %v731 = vpop.xlane.xlu0 %730
  %v732 = vrcp.pop %v728
  %v733 = vrcp.pop %v731
  %v734 = vmul.f32 %v723, %v732
  %v735 = vmul.f32 %v725, %v733
  %v736 = vpack.c.bf16 %v734, %v734
  %v737 = vpack.c.bf16 %v735, %v735
  %739 = vrot.lane.b32.xlu0 %v391, 96
  %v740 = vpop.permute.xlu0 %739
  %v742 = vsel %vm488, %v736, 0
  %v745 = vsel %vm516, %v740, 0
  %747 = vmatprep.subr.bf16.mxu0 0
  %748 = vmatpush1.bf16.msra.mxu0 0
  %749 = vmatprep.subr.bf16.mxu0 0
  %750 = vmatpush1.bf16.msra.mxu0 0
  %751 = vmatprep.subr.bf16.mxu0 0
  %752 = vmatpush1.bf16.msra.mxu0 0
  %753 = vmatprep.subr.bf16.mxu0 0
  %754 = vmatpush1.bf16.msra.mxu0 0
  %755 = vmatprep.subr.bf16.mxu0 0
  %756 = vmatpush1.bf16.msra.mxu0 0
  %757 = vmatprep.subr.bf16.mxu0 0
  %758 = vmatpush1.bf16.msra.mxu0 0
  %759 = vmatprep.subr.bf16.mxu0 0
  %760 = vmatpush1.bf16.msra.mxu0 0
  %761 = vmatprep.subr.bf16.mxu0 0
  %762 = vmatpush1.bf16.msra.mxu0 %v745
  %763 = vmatprep.subr.bf16.mxu0 0
  %764 = vmatpush2.bf16.msra.mxu0 0
  %765 = vmatprep.subr.bf16.mxu0 0
  %766 = vmatpush2.bf16.msra.mxu0 0
  %767 = vmatprep.subr.bf16.mxu0 0
  %768 = vmatpush2.bf16.msra.mxu0 0
  %769 = vmatprep.subr.bf16.mxu0 0
  %770 = vmatpush2.bf16.msra.mxu0 0
  %771 = vmatprep.subr.bf16.mxu0 0
  %772 = vmatpush2.bf16.msra.mxu0 0
  %773 = vmatprep.subr.bf16.mxu0 0
  %774 = vmatpush2.bf16.msra.mxu0 0
  %775 = vmatprep.subr.bf16.mxu0 0
  %776 = vmatpush2.bf16.msra.mxu0 0
  %777 = vmatprep.subr.bf16.mxu0 0
  %778 = vmatpush2.bf16.msra.mxu0 0
  %779 = vmatprep.mubr.bf16.mxu0 0
  %780 = vmatmul.mubr.bf16.gmra.mxu0 %v742
  %v781 = vpop.f32.mrf.mxu0
  %v782 = vadd.f32 0.0, %v781
  %v783 = vpop.f32.mrf.mxu0
  %v784 = vpop.f32.mrf.mxu0
  %v785 = vpop.f32.mrf.mxu0
  %786 = vdwg.mxu0
  %788 = vrot.lane.b32.xlu0 %v392, 96
  %v789 = vpop.permute.xlu0 %788
  %v791 = vsel %vm488, %v737, 0
  %v794 = vsel %vm516, %v789, 0
  %796 = vmatprep.subr.bf16.mxu0 0
  %797 = vmatpush1.bf16.msra.mxu0 0
  %798 = vmatprep.subr.bf16.mxu0 0
  %799 = vmatpush1.bf16.msra.mxu0 0
  %800 = vmatprep.subr.bf16.mxu0 0
  %801 = vmatpush1.bf16.msra.mxu0 0
  %802 = vmatprep.subr.bf16.mxu0 0
  %803 = vmatpush1.bf16.msra.mxu0 0
  %804 = vmatprep.subr.bf16.mxu0 0
  %805 = vmatpush1.bf16.msra.mxu0 0
  %806 = vmatprep.subr.bf16.mxu0 0
  %807 = vmatpush1.bf16.msra.mxu0 0
  %808 = vmatprep.subr.bf16.mxu0 0
  %809 = vmatpush1.bf16.msra.mxu0 0
  %810 = vmatprep.subr.bf16.mxu0 0
  %811 = vmatpush1.bf16.msra.mxu0 %v794
  %812 = vmatprep.subr.bf16.mxu0 0
  %813 = vmatpush2.bf16.msra.mxu0 0
  %814 = vmatprep.subr.bf16.mxu0 0
  %815 = vmatpush2.bf16.msra.mxu0 0
  %816 = vmatprep.subr.bf16.mxu0 0
  %817 = vmatpush2.bf16.msra.mxu0 0
  %818 = vmatprep.subr.bf16.mxu0 0
  %819 = vmatpush2.bf16.msra.mxu0 0
  %820 = vmatprep.subr.bf16.mxu0 0
  %821 = vmatpush2.bf16.msra.mxu0 0
  %822 = vmatprep.subr.bf16.mxu0 0
  %823 = vmatpush2.bf16.msra.mxu0 0
  %824 = vmatprep.subr.bf16.mxu0 0
  %825 = vmatpush2.bf16.msra.mxu0 0
  %826 = vmatprep.subr.bf16.mxu0 0
  %827 = vmatpush2.bf16.msra.mxu0 0
  %828 = vmatprep.mubr.bf16.mxu0 0
  %829 = vmatmul.mubr.bf16.gmra.mxu0 %v791
  %v830 = vpop.f32.mrf.mxu0
  %v831 = vadd.f32 0.0, %v830
  %v832 = vpop.f32.mrf.mxu0
  %v833 = vpop.f32.mrf.mxu0
  %v834 = vpop.f32.mrf.mxu0
  %835 = vdwg.mxu0
  %838 = vrot.lane.b32.xlu0 %v782, 32
  %v839 = vpop.permute.xlu0 %838
  %840 = vrot.lane.b32.xlu0 %v831, 32
  %v841 = vpop.permute.xlu0 %840
  %vm844 = vcmask 523520
  %845 = vst.msk [vmem:[#allocation2] sm:$0xff] %vm844, %v839
  %846 = vst.msk [vmem:[#allocation2 + $0x8] sm:$0xff] %vm844, %v841
  %847 = vrot.lane.b32.xlu0 %v387, 64
  %v848 = vpop.permute.xlu0 %847
  %849 = vrot.lane.b32.xlu0 %v389, 64
  %v850 = vpop.permute.xlu0 %849
  %v852 = vsel %vm393, %v848, 0
  %v855 = vsel %vm393, %v850, 0
  %857 = vmatprep.subr.bf16.mxu0 0
  %858 = vmatpush1.bf16.xpose.msra.mxu0 0
  %859 = vmatprep.subr.bf16.mxu0 0
  %860 = vmatpush1.bf16.xpose.msra.mxu0 0
  %861 = vmatprep.subr.bf16.mxu0 0
  %862 = vmatpush1.bf16.xpose.msra.mxu0 0
  %863 = vmatprep.subr.bf16.mxu0 0
  %864 = vmatpush1.bf16.xpose.msra.mxu0 0
  %865 = vmatprep.subr.bf16.mxu0 0
  %866 = vmatpush1.bf16.xpose.msra.mxu0 0
  %867 = vmatprep.subr.bf16.mxu0 0
  %868 = vmatpush1.bf16.xpose.msra.mxu0 0
  %869 = vmatprep.subr.bf16.mxu0 0
  %870 = vmatpush1.bf16.xpose.msra.mxu0 0
  %871 = vmatprep.subr.bf16.mxu0 0
  %872 = vmatpush1.bf16.xpose.msra.mxu0 %v855
  %873 = vmatprep.subr.bf16.mxu0 0
  %874 = vmatpush2.bf16.xpose.msra.mxu0 0
  %875 = vmatprep.subr.bf16.mxu0 0
  %876 = vmatpush2.bf16.xpose.msra.mxu0 0
  %877 = vmatprep.subr.bf16.mxu0 0
  %878 = vmatpush2.bf16.xpose.msra.mxu0 0
  %879 = vmatprep.subr.bf16.mxu0 0
  %880 = vmatpush2.bf16.xpose.msra.mxu0 0
  %881 = vmatprep.subr.bf16.mxu0 0
  %882 = vmatpush2.bf16.xpose.msra.mxu0 0
  %883 = vmatprep.subr.bf16.mxu0 0
  %884 = vmatpush2.bf16.xpose.msra.mxu0 0
  %885 = vmatprep.subr.bf16.mxu0 0
  %886 = vmatpush2.bf16.xpose.msra.mxu0 0
  %887 = vmatprep.subr.bf16.mxu0 0
  %888 = vmatpush2.bf16.xpose.msra.mxu0 0
  %889 = vmatprep.mubr.bf16.mxu0 0
  %890 = vmatmul.mubr.bf16.gmra.mxu0 %v852
  %v891 = vpop.f32.mrf.mxu0
  %v892 = vadd.f32 0.0, %v891
  %v893 = vpop.f32.mrf.mxu0
  %v894 = vpop.f32.mrf.mxu0
  %v895 = vpop.f32.mrf.mxu0
  %896 = vdwg.mxu0
  %897 = vrot.lane.b32.xlu0 %v388, 64
  %v898 = vpop.permute.xlu0 %897
  %899 = vrot.lane.b32.xlu0 %v390, 64
  %v900 = vpop.permute.xlu0 %899
  %v902 = vsel %vm393, %v898, 0
  %v905 = vsel %vm393, %v900, 0
  %907 = vmatprep.subr.bf16.mxu0 0
  %908 = vmatpush1.bf16.xpose.msra.mxu0 0
  %909 = vmatprep.subr.bf16.mxu0 0
  %910 = vmatpush1.bf16.xpose.msra.mxu0 0
  %911 = vmatprep.subr.bf16.mxu0 0
  %912 = vmatpush1.bf16.xpose.msra.mxu0 0
  %913 = vmatprep.subr.bf16.mxu0 0
  %914 = vmatpush1.bf16.xpose.msra.mxu0 0
  %915 = vmatprep.subr.bf16.mxu0 0
  %916 = vmatpush1.bf16.xpose.msra.mxu0 0
  %917 = vmatprep.subr.bf16.mxu0 0
  %918 = vmatpush1.bf16.xpose.msra.mxu0 0
  %919 = vmatprep.subr.bf16.mxu0 0
  %920 = vmatpush1.bf16.xpose.msra.mxu0 0
  %921 = vmatprep.subr.bf16.mxu0 0
  %922 = vmatpush1.bf16.xpose.msra.mxu0 %v905
  %923 = vmatprep.subr.bf16.mxu0 0
  %924 = vmatpush2.bf16.xpose.msra.mxu0 0
  %925 = vmatprep.subr.bf16.mxu0 0
  %926 = vmatpush2.bf16.xpose.msra.mxu0 0
  %927 = vmatprep.subr.bf16.mxu0 0
  %928 = vmatpush2.bf16.xpose.msra.mxu0 0
  %929 = vmatprep.subr.bf16.mxu0 0
  %930 = vmatpush2.bf16.xpose.msra.mxu0 0
  %931 = vmatprep.subr.bf16.mxu0 0
  %932 = vmatpush2.bf16.xpose.msra.mxu0 0
  %933 = vmatprep.subr.bf16.mxu0 0
  %934 = vmatpush2.bf16.xpose.msra.mxu0 0
  %935 = vmatprep.subr.bf16.mxu0 0
  %936 = vmatpush2.bf16.xpose.msra.mxu0 0
  %937 = vmatprep.subr.bf16.mxu0 0
  %938 = vmatpush2.bf16.xpose.msra.mxu0 0
  %939 = vmatprep.mubr.bf16.mxu0 0
  %940 = vmatmul.mubr.bf16.gmra.mxu0 %v902
  %v941 = vpop.f32.mrf.mxu0
  %v942 = vadd.f32 0.0, %v941
  %v943 = vpop.f32.mrf.mxu0
  %v944 = vpop.f32.mrf.mxu0
  %v945 = vpop.f32.mrf.mxu0
  %946 = vdwg.mxu0
  %v947 = vmul.f32 %v892, 0.17677669
  %v948 = vmul.f32 %v942, 0.17677669
  %v949 = vsel %vm488, %v947, -inf
  %950 = vmax.xlane.f32.xlu0 %v949
  %v951 = vpop.xlane.xlu0 %950
  %v952 = vsel %vm488, %v948, -inf
  %953 = vmax.xlane.f32.xlu0 %v952
  %v954 = vpop.xlane.xlu0 %953
  %v955 = vsub.f32 %v947, %v951
  %v956 = vsub.f32 %v948, %v954
  %v957 = vmul.f32 %v955, 1.442695
  %v958 = vpow.pop %v957
  %v959 = vmul.f32 %v956, 1.442695
  %v960 = vpow.pop %v959
  %v961 = vsel %vm488, %v958, 0.0
  %962 = vadd.xlane.f32.xlu0 %v961
  %v963 = vpop.xlane.xlu0 %962
  %v964 = vsel %vm488, %v960, 0.0
  %965 = vadd.xlane.f32.xlu0 %v964
  %v966 = vpop.xlane.xlu0 %965
  %v967 = vrcp.pop %v963
  %v968 = vrcp.pop %v966
  %v969 = vmul.f32 %v958, %v967
  %v970 = vmul.f32 %v960, %v968
  %v971 = vpack.c.bf16 %v969, %v969
  %v972 = vpack.c.bf16 %v970, %v970
  %973 = vrot.lane.b32.xlu0 %v391, 64
  %v974 = vpop.permute.xlu0 %973
  %v976 = vsel %vm488, %v971, 0
  %v979 = vsel %vm516, %v974, 0
  %981 = vmatprep.subr.bf16.mxu0 0
  %982 = vmatpush1.bf16.msra.mxu0 0
  %983 = vmatprep.subr.bf16.mxu0 0
  %984 = vmatpush1.bf16.msra.mxu0 0
  %985 = vmatprep.subr.bf16.mxu0 0
  %986 = vmatpush1.bf16.msra.mxu0 0
  %987 = vmatprep.subr.bf16.mxu0 0
  %988 = vmatpush1.bf16.msra.mxu0 0
  %989 = vmatprep.subr.bf16.mxu0 0
  %990 = vmatpush1.bf16.msra.mxu0 0
  %991 = vmatprep.subr.bf16.mxu0 0
  %992 = vmatpush1.bf16.msra.mxu0 0
  %993 = vmatprep.subr.bf16.mxu0 0
  %994 = vmatpush1.bf16.msra.mxu0 0
  %995 = vmatprep.subr.bf16.mxu0 0
  %996 = vmatpush1.bf16.msra.mxu0 %v979
  %997 = vmatprep.subr.bf16.mxu0 0
  %998 = vmatpush2.bf16.msra.mxu0 0
  %999 = vmatprep.subr.bf16.mxu0 0
  %1000 = vmatpush2.bf16.msra.mxu0 0
  %1001 = vmatprep.subr.bf16.mxu0 0
  %1002 = vmatpush2.bf16.msra.mxu0 0
  %1003 = vmatprep.subr.bf16.mxu0 0
  %1004 = vmatpush2.bf16.msra.mxu0 0
  %1005 = vmatprep.subr.bf16.mxu0 0
  %1006 = vmatpush2.bf16.msra.mxu0 0
  %1007 = vmatprep.subr.bf16.mxu0 0
  %1008 = vmatpush2.bf16.msra.mxu0 0
  %1009 = vmatprep.subr.bf16.mxu0 0
  %1010 = vmatpush2.bf16.msra.mxu0 0
  %1011 = vmatprep.subr.bf16.mxu0 0
  %1012 = vmatpush2.bf16.msra.mxu0 0
  %1013 = vmatprep.mubr.bf16.mxu0 0
  %1014 = vmatmul.mubr.bf16.gmra.mxu0 %v976
  %v1015 = vpop.f32.mrf.mxu0
  %v1016 = vadd.f32 0.0, %v1015
  %v1017 = vpop.f32.mrf.mxu0
  %v1018 = vpop.f32.mrf.mxu0
  %v1019 = vpop.f32.mrf.mxu0
  %1020 = vdwg.mxu0
  %1021 = vrot.lane.b32.xlu0 %v392, 64
  %v1022 = vpop.permute.xlu0 %1021
  %v1024 = vsel %vm488, %v972, 0
  %v1027 = vsel %vm516, %v1022, 0
  %1029 = vmatprep.subr.bf16.mxu0 0
  %1030 = vmatpush1.bf16.msra.mxu0 0
  %1031 = vmatprep.subr.bf16.mxu0 0
  %1032 = vmatpush1.bf16.msra.mxu0 0
  %1033 = vmatprep.subr.bf16.mxu0 0
  %1034 = vmatpush1.bf16.msra.mxu0 0
  %1035 = vmatprep.subr.bf16.mxu0 0
  %1036 = vmatpush1.bf16.msra.mxu0 0
  %1037 = vmatprep.subr.bf16.mxu0 0
  %1038 = vmatpush1.bf16.msra.mxu0 0
  %1039 = vmatprep.subr.bf16.mxu0 0
  %1040 = vmatpush1.bf16.msra.mxu0 0
  %1041 = vmatprep.subr.bf16.mxu0 0
  %1042 = vmatpush1.bf16.msra.mxu0 0
  %1043 = vmatprep.subr.bf16.mxu0 0
  %1044 = vmatpush1.bf16.msra.mxu0 %v1027
  %1045 = vmatprep.subr.bf16.mxu0 0
  %1046 = vmatpush2.bf16.msra.mxu0 0
  %1047 = vmatprep.subr.bf16.mxu0 0
  %1048 = vmatpush2.bf16.msra.mxu0 0
  %1049 = vmatprep.subr.bf16.mxu0 0
  %1050 = vmatpush2.bf16.msra.mxu0 0
  %1051 = vmatprep.subr.bf16.mxu0 0
  %1052 = vmatpush2.bf16.msra.mxu0 0
  %1053 = vmatprep.subr.bf16.mxu0 0
  %1054 = vmatpush2.bf16.msra.mxu0 0
  %1055 = vmatprep.subr.bf16.mxu0 0
  %1056 = vmatpush2.bf16.msra.mxu0 0
  %1057 = vmatprep.subr.bf16.mxu0 0
  %1058 = vmatpush2.bf16.msra.mxu0 0
  %1059 = vmatprep.subr.bf16.mxu0 0
  %1060 = vmatpush2.bf16.msra.mxu0 0
  %1061 = vmatprep.mubr.bf16.mxu0 0
  %1062 = vmatmul.mubr.bf16.gmra.mxu0 %v1024
  %v1063 = vpop.f32.mrf.mxu0
  %v1064 = vadd.f32 0.0, %v1063
  %v1065 = vpop.f32.mrf.mxu0
  %v1066 = vpop.f32.mrf.mxu0
  %v1067 = vpop.f32.mrf.mxu0
  %1068 = vdwg.mxu0
  %1071 = vrot.lane.b32.xlu0 %v1016, 64
  %v1072 = vpop.permute.xlu0 %1071
  %1073 = vrot.lane.b32.xlu0 %v1064, 64
  %v1074 = vpop.permute.xlu0 %1073
  %vm1077 = vcmask 785920
  %1078 = vst.msk [vmem:[#allocation2] sm:$0xff] %vm1077, %v1072
  %1079 = vst.msk [vmem:[#allocation2 + $0x8] sm:$0xff] %vm1077, %v1074
  %1080 = vrot.lane.b32.xlu0 %v387, 32
  %v1081 = vpop.permute.xlu0 %1080
  %1082 = vrot.lane.b32.xlu0 %v389, 32
  %v1083 = vpop.permute.xlu0 %1082
  %v1085 = vsel %vm393, %v1081, 0
  %v1088 = vsel %vm393, %v1083, 0
  %1090 = vmatprep.subr.bf16.mxu0 0
  %1091 = vmatpush1.bf16.xpose.msra.mxu0 0
  %1092 = vmatprep.subr.bf16.mxu0 0
  %1093 = vmatpush1.bf16.xpose.msra.mxu0 0
  %1094 = vmatprep.subr.bf16.mxu0 0
  %1095 = vmatpush1.bf16.xpose.msra.mxu0 0
  %1096 = vmatprep.subr.bf16.mxu0 0
  %1097 = vmatpush1.bf16.xpose.msra.mxu0 0
  %1098 = vmatprep.subr.bf16.mxu0 0
  %1099 = vmatpush1.bf16.xpose.msra.mxu0 0
  %1100 = vmatprep.subr.bf16.mxu0 0
  %1101 = vmatpush1.bf16.xpose.msra.mxu0 0
  %1102 = vmatprep.subr.bf16.mxu0 0
  %1103 = vmatpush1.bf16.xpose.msra.mxu0 0
  %1104 = vmatprep.subr.bf16.mxu0 0
  %1105 = vmatpush1.bf16.xpose.msra.mxu0 %v1088
  %1106 = vmatprep.subr.bf16.mxu0 0
  %1107 = vmatpush2.bf16.xpose.msra.mxu0 0
  %1108 = vmatprep.subr.bf16.mxu0 0
  %1109 = vmatpush2.bf16.xpose.msra.mxu0 0
  %1110 = vmatprep.subr.bf16.mxu0 0
  %1111 = vmatpush2.bf16.xpose.msra.mxu0 0
  %1112 = vmatprep.subr.bf16.mxu0 0
  %1113 = vmatpush2.bf16.xpose.msra.mxu0 0
  %1114 = vmatprep.subr.bf16.mxu0 0
  %1115 = vmatpush2.bf16.xpose.msra.mxu0 0
  %1116 = vmatprep.subr.bf16.mxu0 0
  %1117 = vmatpush2.bf16.xpose.msra.mxu0 0
  %1118 = vmatprep.subr.bf16.mxu0 0
  %1119 = vmatpush2.bf16.xpose.msra.mxu0 0
  %1120 = vmatprep.subr.bf16.mxu0 0
  %1121 = vmatpush2.bf16.xpose.msra.mxu0 0
  %1122 = vmatprep.mubr.bf16.mxu0 0
  %1123 = vmatmul.mubr.bf16.gmra.mxu0 %v1085
  %v1124 = vpop.f32.mrf.mxu0
  %v1125 = vadd.f32 0.0, %v1124
  %v1126 = vpop.f32.mrf.mxu0
  %v1127 = vpop.f32.mrf.mxu0
  %v1128 = vpop.f32.mrf.mxu0
  %1129 = vdwg.mxu0
  %1130 = vrot.lane.b32.xlu0 %v388, 32
  %v1131 = vpop.permute.xlu0 %1130
  %1132 = vrot.lane.b32.xlu0 %v390, 32
  %v1133 = vpop.permute.xlu0 %1132
  %v1135 = vsel %vm393, %v1131, 0
  %v1138 = vsel %vm393, %v1133, 0
  %1140 = vmatprep.subr.bf16.mxu0 0
  %1141 = vmatpush1.bf16.xpose.msra.mxu0 0
  %1142 = vmatprep.subr.bf16.mxu0 0
  %1143 = vmatpush1.bf16.xpose.msra.mxu0 0
  %1144 = vmatprep.subr.bf16.mxu0 0
  %1145 = vmatpush1.bf16.xpose.msra.mxu0 0
  %1146 = vmatprep.subr.bf16.mxu0 0
  %1147 = vmatpush1.bf16.xpose.msra.mxu0 0
  %1148 = vmatprep.subr.bf16.mxu0 0
  %1149 = vmatpush1.bf16.xpose.msra.mxu0 0
  %1150 = vmatprep.subr.bf16.mxu0 0
  %1151 = vmatpush1.bf16.xpose.msra.mxu0 0
  %1152 = vmatprep.subr.bf16.mxu0 0
  %1153 = vmatpush1.bf16.xpose.msra.mxu0 0
  %1154 = vmatprep.subr.bf16.mxu0 0
  %1155 = vmatpush1.bf16.xpose.msra.mxu0 %v1138
  %1156 = vmatprep.subr.bf16.mxu0 0
  %1157 = vmatpush2.bf16.xpose.msra.mxu0 0
  %1158 = vmatprep.subr.bf16.mxu0 0
  %1159 = vmatpush2.bf16.xpose.msra.mxu0 0
  %1160 = vmatprep.subr.bf16.mxu0 0
  %1161 = vmatpush2.bf16.xpose.msra.mxu0 0
  %1162 = vmatprep.subr.bf16.mxu0 0
  %1163 = vmatpush2.bf16.xpose.msra.mxu0 0
  %1164 = vmatprep.subr.bf16.mxu0 0
  %1165 = vmatpush2.bf16.xpose.msra.mxu0 0
  %1166 = vmatprep.subr.bf16.mxu0 0
  %1167 = vmatpush2.bf16.xpose.msra.mxu0 0
  %1168 = vmatprep.subr.bf16.mxu0 0
  %1169 = vmatpush2.bf16.xpose.msra.mxu0 0
  %1170 = vmatprep.subr.bf16.mxu0 0
  %1171 = vmatpush2.bf16.xpose.msra.mxu0 0
  %1172 = vmatprep.mubr.bf16.mxu0 0
  %1173 = vmatmul.mubr.bf16.gmra.mxu0 %v1135
  %v1174 = vpop.f32.mrf.mxu0
  %v1175 = vadd.f32 0.0, %v1174
  %v1176 = vpop.f32.mrf.mxu0
  %v1177 = vpop.f32.mrf.mxu0
  %v1178 = vpop.f32.mrf.mxu0
  %1179 = vdwg.mxu0
  %v1180 = vmul.f32 %v1125, 0.17677669
  %v1181 = vmul.f32 %v1175, 0.17677669
  %v1182 = vsel %vm488, %v1180, -inf
  %1183 = vmax.xlane.f32.xlu0 %v1182
  %v1184 = vpop.xlane.xlu0 %1183
  %v1185 = vsel %vm488, %v1181, -inf
  %1186 = vmax.xlane.f32.xlu0 %v1185
  %v1187 = vpop.xlane.xlu0 %1186
  %v1188 = vsub.f32 %v1180, %v1184
  %v1189 = vsub.f32 %v1181, %v1187
  %v1190 = vmul.f32 %v1188, 1.442695
  %v1191 = vpow.pop %v1190
  %v1192 = vmul.f32 %v1189, 1.442695
  %v1193 = vpow.pop %v1192
  %v1194 = vsel %vm488, %v1191, 0.0
  %1195 = vadd.xlane.f32.xlu0 %v1194
  %v1196 = vpop.xlane.xlu0 %1195
  %v1197 = vsel %vm488, %v1193, 0.0
  %1198 = vadd.xlane.f32.xlu0 %v1197
  %v1199 = vpop.xlane.xlu0 %1198
  %v1200 = vrcp.pop %v1196
  %v1201 = vrcp.pop %v1199
  %v1202 = vmul.f32 %v1191, %v1200
  %v1203 = vmul.f32 %v1193, %v1201
  %v1204 = vpack.c.bf16 %v1202, %v1202
  %v1205 = vpack.c.bf16 %v1203, %v1203
  %1206 = vrot.lane.b32.xlu0 %v391, 32
  %v1207 = vpop.permute.xlu0 %1206
  %v1209 = vsel %vm488, %v1204, 0
  %v1212 = vsel %vm516, %v1207, 0
  %1214 = vmatprep.subr.bf16.mxu0 0
  %1215 = vmatpush1.bf16.msra.mxu0 0
  %1216 = vmatprep.subr.bf16.mxu0 0
  %1217 = vmatpush1.bf16.msra.mxu0 0
  %1218 = vmatprep.subr.bf16.mxu0 0
  %1219 = vmatpush1.bf16.msra.mxu0 0
  %1220 = vmatprep.subr.bf16.mxu0 0
  %1221 = vmatpush1.bf16.msra.mxu0 0
  %1222 = vmatprep.subr.bf16.mxu0 0
  %1223 = vmatpush1.bf16.msra.mxu0 0
  %1224 = vmatprep.subr.bf16.mxu0 0
  %1225 = vmatpush1.bf16.msra.mxu0 0
  %1226 = vmatprep.subr.bf16.mxu0 0
  %1227 = vmatpush1.bf16.msra.mxu0 0
  %1228 = vmatprep.subr.bf16.mxu0 0
  %1229 = vmatpush1.bf16.msra.mxu0 %v1212
  %1230 = vmatprep.subr.bf16.mxu0 0
  %1231 = vmatpush2.bf16.msra.mxu0 0
  %1232 = vmatprep.subr.bf16.mxu0 0
  %1233 = vmatpush2.bf16.msra.mxu0 0
  %1234 = vmatprep.subr.bf16.mxu0 0
  %1235 = vmatpush2.bf16.msra.mxu0 0
  %1236 = vmatprep.subr.bf16.mxu0 0
  %1237 = vmatpush2.bf16.msra.mxu0 0
  %1238 = vmatprep.subr.bf16.mxu0 0
  %1239 = vmatpush2.bf16.msra.mxu0 0
  %1240 = vmatprep.subr.bf16.mxu0 0
  %1241 = vmatpush2.bf16.msra.mxu0 0
  %1242 = vmatprep.subr.bf16.mxu0 0
  %1243 = vmatpush2.bf16.msra.mxu0 0
  %1244 = vmatprep.subr.bf16.mxu0 0
  %1245 = vmatpush2.bf16.msra.mxu0 0
  %1246 = vmatprep.mubr.bf16.mxu0 0
  %1247 = vmatmul.mubr.bf16.gmra.mxu0 %v1209
  %v1248 = vpop.f32.mrf.mxu0
  %v1249 = vadd.f32 0.0, %v1248
  %v1250 = vpop.f32.mrf.mxu0
  %v1251 = vpop.f32.mrf.mxu0
  %v1252 = vpop.f32.mrf.mxu0
  %1253 = vdwg.mxu0
  %1254 = vrot.lane.b32.xlu0 %v392, 32
  %v1255 = vpop.permute.xlu0 %1254
  %v1257 = vsel %vm488, %v1205, 0
  %v1260 = vsel %vm516, %v1255, 0
  %1262 = vmatprep.subr.bf16.mxu0 0
  %1263 = vmatpush1.bf16.msra.mxu0 0
  %1264 = vmatprep.subr.bf16.mxu0 0
  %1265 = vmatpush1.bf16.msra.mxu0 0
  %1266 = vmatprep.subr.bf16.mxu0 0
  %1267 = vmatpush1.bf16.msra.mxu0 0
  %1268 = vmatprep.subr.bf16.mxu0 0
  %1269 = vmatpush1.bf16.msra.mxu0 0
  %1270 = vmatprep.subr.bf16.mxu0 0
  %1271 = vmatpush1.bf16.msra.mxu0 0
  %1272 = vmatprep.subr.bf16.mxu0 0
  %1273 = vmatpush1.bf16.msra.mxu0 0
  %1274 = vmatprep.subr.bf16.mxu0 0
  %1275 = vmatpush1.bf16.msra.mxu0 0
  %1276 = vmatprep.subr.bf16.mxu0 0
  %1277 = vmatpush1.bf16.msra.mxu0 %v1260
  %1278 = vmatprep.subr.bf16.mxu0 0
  %1279 = vmatpush2.bf16.msra.mxu0 0
  %1280 = vmatprep.subr.bf16.mxu0 0
  %1281 = vmatpush2.bf16.msra.mxu0 0
  %1282 = vmatprep.subr.bf16.mxu0 0
  %1283 = vmatpush2.bf16.msra.mxu0 0
  %1284 = vmatprep.subr.bf16.mxu0 0
  %1285 = vmatpush2.bf16.msra.mxu0 0
  %1286 = vmatprep.subr.bf16.mxu0 0
  %1287 = vmatpush2.bf16.msra.mxu0 0
  %1288 = vmatprep.subr.bf16.mxu0 0
  %1289 = vmatpush2.bf16.msra.mxu0 0
  %1290 = vmatprep.subr.bf16.mxu0 0
  %1291 = vmatpush2.bf16.msra.mxu0 0
  %1292 = vmatprep.subr.bf16.mxu0 0
  %1293 = vmatpush2.bf16.msra.mxu0 0
  %1294 = vmatprep.mubr.bf16.mxu0 0
  %1295 = vmatmul.mubr.bf16.gmra.mxu0 %v1257
  %v1296 = vpop.f32.mrf.mxu0
  %v1297 = vadd.f32 0.0, %v1296
  %v1298 = vpop.f32.mrf.mxu0
  %v1299 = vpop.f32.mrf.mxu0
  %v1300 = vpop.f32.mrf.mxu0
  %1301 = vdwg.mxu0
  %1304 = vrot.lane.b32.xlu0 %v1249, 96
  %v1305 = vpop.permute.xlu0 %1304
  %1306 = vrot.lane.b32.xlu0 %v1297, 96
  %v1307 = vpop.permute.xlu0 %1306
  %vm1310 = vcmask 1048320
  %1311 = vst.msk [vmem:[#allocation2] sm:$0xff] %vm1310, %v1305
  %1312 = vst.msk [vmem:[#allocation2 + $0x8] sm:$0xff] %vm1310, %v1307
  %v1313 = vld [vmem:[#allocation2] sm:$0xff]
  %v1314 = vld [vmem:[#allocation2 + $0x8] sm:$0xff]
  %v1315 = vld [vmem:[%s6] sm:$0xf]
  %v1316 = vld [vmem:[%s6 + $0x4] sm:$0xf]
  %v1317 = vld [vmem:[%s6 + $0x8] sm:$0xf]
  %v1318 = vld [vmem:[%s6 + $0xc] sm:$0xf]
  %v1319 = vld [vmem:[%s6 + $0x10] sm:$0xf]
  %v1320 = vld [vmem:[%s6 + $0x14] sm:$0xf]
  %v1321 = vld [vmem:[%s6 + $0x18] sm:$0xf]
  %v1322 = vld [vmem:[%s6 + $0x1c] sm:$0xf]
  %v1323 = vld [vmem:[%s6 + $0x20] sm:$0xf]
  %v1324 = vld [vmem:[%s6 + $0x24] sm:$0xf]
  %v1325 = vld [vmem:[%s6 + $0x28] sm:$0xf]
  %v1326 = vld [vmem:[%s6 + $0x2c] sm:$0xf]
  %v1327 = vld [vmem:[%s6 + $0x30] sm:$0xf]
  %v1328 = vld [vmem:[%s6 + $0x34] sm:$0xf]
  %v1329 = vld [vmem:[%s6 + $0x38] sm:$0xf]
  %v1330 = vld [vmem:[%s6 + $0x3c] sm:$0xf]
  %v1331 = vpack.c.bf16 %v1314, %v1313
  %v1332 = vld [vmem:[%s7] sm:$0x1]
  %v1334 = vlaneseq
  %v1335 = vshrl.u32 %v1334, 7
  %v1336 = vsub.s32 0, %v1335
  %v1337 = vrot.slane %v1332, %v1336
  %v1355 = vunpack.c.l.b16 %v1315
  %v1356 = vunpack.c.l.b16 %v1316
  %v1357 = vunpack.c.l.b16 %v1317
  %v1358 = vunpack.c.l.b16 %v1318
  %v1359 = vunpack.c.l.b16 %v1319
  %v1360 = vunpack.c.l.b16 %v1320
  %v1361 = vunpack.c.l.b16 %v1321
  %v1362 = vunpack.c.l.b16 %v1322
  %v1363 = vunpack.c.l.b16 %v1323
  %v1364 = vunpack.c.l.b16 %v1324
  %v1365 = vunpack.c.l.b16 %v1325
  %v1366 = vunpack.c.l.b16 %v1326
  %v1367 = vunpack.c.l.b16 %v1327
  %v1368 = vunpack.c.l.b16 %v1328
  %v1369 = vunpack.c.l.b16 %v1329
  %v1370 = vunpack.c.l.b16 %v1330
  %v1371 = vpack.c.b16 %v1356, %v1355
  %v1372 = vpack.c.b16 %v1358, %v1357
  %v1373 = vpack.c.b16 %v1360, %v1359
  %v1374 = vpack.c.b16 %v1362, %v1361
  %v1375 = vpack.c.b16 %v1364, %v1363
  %v1376 = vpack.c.b16 %v1366, %v1365
  %v1377 = vpack.c.b16 %v1368, %v1367
  %v1378 = vpack.c.b16 %v1370, %v1369
  %1387 = vmatprep.subr.bf16.mxu0 0
  %1388 = vmatpush1.bf16.msra.mxu0 %v1378
  %1389 = vmatprep.subr.bf16.mxu0 0
  %1390 = vmatpush1.bf16.msra.mxu0 %v1377
  %1391 = vmatprep.subr.bf16.mxu0 0
  %1392 = vmatpush1.bf16.msra.mxu0 %v1376
  %1393 = vmatprep.subr.bf16.mxu0 0
  %1394 = vmatpush1.bf16.msra.mxu0 %v1375
  %1395 = vmatprep.subr.bf16.mxu0 0
  %1396 = vmatpush1.bf16.msra.mxu0 %v1374
  %1397 = vmatprep.subr.bf16.mxu0 0
  %1398 = vmatpush1.bf16.msra.mxu0 %v1373
  %1399 = vmatprep.subr.bf16.mxu0 0
  %1400 = vmatpush1.bf16.msra.mxu0 %v1372
  %1401 = vmatprep.subr.bf16.mxu0 0
  %1402 = vmatpush1.bf16.msra.mxu0 %v1371
  %1403 = vmatprep.subr.bf16.mxu0 0
  %1404 = vmatpush2.bf16.msra.mxu0 0
  %1405 = vmatprep.subr.bf16.mxu0 0
  %1406 = vmatpush2.bf16.msra.mxu0 0
  %1407 = vmatprep.subr.bf16.mxu0 0
  %1408 = vmatpush2.bf16.msra.mxu0 0
  %1409 = vmatprep.subr.bf16.mxu0 0
  %1410 = vmatpush2.bf16.msra.mxu0 0
  %1411 = vmatprep.subr.bf16.mxu0 0
  %1412 = vmatpush2.bf16.msra.mxu0 0
  %1413 = vmatprep.subr.bf16.mxu0 0
  %1414 = vmatpush2.bf16.msra.mxu0 0
  %1415 = vmatprep.subr.bf16.mxu0 0
  %1416 = vmatpush2.bf16.msra.mxu0 0
  %1417 = vmatprep.subr.bf16.mxu0 0
  %1418 = vmatpush2.bf16.msra.mxu0 0
  %1419 = vmatprep.mubr.bf16.mxu0 0
  %1420 = vmatmul.mubr.bf16.gmra.mxu0 %v1331
  %v1421 = vpop.f32.mrf.mxu0
  %v1422 = vadd.f32 %v1337, %v1421
  %v1423 = vpop.f32.mrf.mxu0
  %v1424 = vpop.f32.mrf.mxu0
  %v1425 = vadd.f32 %v1337, %v1424
  %v1426 = vpop.f32.mrf.mxu0
  %1427 = vdwg.mxu0
  %v1428 = vadd.f32 %v123, %v1422
  %v1429 = vadd.f32 %v124, %v1425
  %v1430 = vld [vmem:[%s8] sm:$0x1]
  %v1431 = vld [vmem:[%s9] sm:$0x1]
  %1432 = vadd.xlane.f32.xlu0 %v1428
  %v1433 = vpop.xlane.xlu0 %1432
  %1434 = vadd.xlane.f32.xlu0 %v1429
  %v1435 = vpop.xlane.xlu0 %1434
  %v1436 = vrcp.pop 128.0
  %v1437 = vmul.f32 %v1433, %v1436
  %v1438 = vmul.f32 %v1435, %v1436
  %v1439 = vsub.f32 %v1428, %v1437
  %v1440 = vsub.f32 %v1429, %v1438
  %v1441 = vmul.f32 %v1439, %v1439
  %v1442 = vmul.f32 %v1440, %v1440
  %1443 = vadd.xlane.f32.xlu0 %v1441
  %v1444 = vpop.xlane.xlu0 %1443
  %1445 = vadd.xlane.f32.xlu0 %v1442
  %v1446 = vpop.xlane.xlu0 %1445
  %v1447 = vmul.f32 %v1444, %v1436
  %v1448 = vmul.f32 %v1446, %v1436
  %v1449 = vadd.f32 %v1447, 1e-05
  %v1450 = vadd.f32 %v1448, 1e-05
  %v1451 = vrsqrt.pop %v1449
  %v1452 = vrsqrt.pop %v1450
  %v1453 = vmul.f32 %v1439, %v1451
  %v1454 = vmul.f32 %v1440, %v1452
  %v1456 = vlaneseq
  %v1457 = vshrl.u32 %v1456, 7
  %v1458 = vsub.s32 0, %v1457
  %v1459 = vrot.slane %v1430, %v1458
  %v1461 = vmul.f32 %v1453, %v1459
  %v1462 = vmul.f32 %v1454, %v1459
  %v1464 = vlaneseq
  %v1465 = vshrl.u32 %v1464, 7
  %v1466 = vsub.s32 0, %v1465
  %v1467 = vrot.slane %v1431, %v1466
  %v1469 = vadd.f32 %v1461, %v1467
  %v1470 = vadd.f32 %v1462, %v1467
  %v1471 = vld [vmem:[%s10] sm:$0xff]
  %v1472 = vld [vmem:[%s10 + $0x8] sm:$0xff]
  %v1473 = vld [vmem:[%s10 + $0x10] sm:$0xff]
  %v1474 = vld [vmem:[%s10 + $0x18] sm:$0xff]
  %v1475 = vld [vmem:[%s10 + $0x20] sm:$0xff]
  %v1476 = vld [vmem:[%s10 + $0x28] sm:$0xff]
  %v1477 = vld [vmem:[%s10 + $0x30] sm:$0xff]
  %v1478 = vld [vmem:[%s10 + $0x38] sm:$0xff]
  %v1479 = vld [vmem:[%s10 + $0x40] sm:$0xff]
  %v1480 = vld [vmem:[%s10 + $0x48] sm:$0xff]
  %v1481 = vld [vmem:[%s10 + $0x50] sm:$0xff]
  %v1482 = vld [vmem:[%s10 + $0x58] sm:$0xff]
  %v1483 = vld [vmem:[%s10 + $0x60] sm:$0xff]
  %v1484 = vld [vmem:[%s10 + $0x68] sm:$0xff]
  %v1485 = vld [vmem:[%s10 + $0x70] sm:$0xff]
  %v1486 = vld [vmem:[%s10 + $0x78] sm:$0xff]
  %v1487 = vld [vmem:[%s10 + $0x80] sm:$0xff]
  %v1488 = vld [vmem:[%s10 + $0x88] sm:$0xff]
  %v1489 = vld [vmem:[%s10 + $0x90] sm:$0xff]
  %v1490 = vld [vmem:[%s10 + $0x98] sm:$0xff]
  %v1491 = vld [vmem:[%s10 + $0xa0] sm:$0xff]
  %v1492 = vld [vmem:[%s10 + $0xa8] sm:$0xff]
  %v1493 = vld [vmem:[%s10 + $0xb0] sm:$0xff]
  %v1494 = vld [vmem:[%s10 + $0xb8] sm:$0xff]
  %v1495 = vld [vmem:[%s10 + $0xc0] sm:$0xff]
  %v1496 = vld [vmem:[%s10 + $0xc8] sm:$0xff]
  %v1497 = vld [vmem:[%s10 + $0xd0] sm:$0xff]
  %v1498 = vld [vmem:[%s10 + $0xd8] sm:$0xff]
  %v1499 = vld [vmem:[%s10 + $0xe0] sm:$0xff]
  %v1500 = vld [vmem:[%s10 + $0xe8] sm:$0xff]
  %v1501 = vld [vmem:[%s10 + $0xf0] sm:$0xff]
  %v1502 = vld [vmem:[%s10 + $0xf8] sm:$0xff]
  %v1503 = vpack.c.bf16 %v1470, %v1469
  %v1504 = vld [vmem:[%s11] sm:$0xf]
  %v1506 = vlaneseq
  %v1507 = vshrl.u32 %v1506, 7
  %v1508 = vsub.s32 0, %v1507
  %v1509 = vrot.slane %v1504, %v1508
  %v1510 = vlaneseq
  %v1511 = vshrl.u32 %v1510, 7
  %v1512 = vsub.s32 1, %v1511
  %v1513 = vrot.slane %v1504, %v1512
  %v1514 = vlaneseq
  %v1515 = vshrl.u32 %v1514, 7
  %v1516 = vsub.s32 2, %v1515
  %v1517 = vrot.slane %v1504, %v1516
  %v1518 = vlaneseq
  %v1519 = vshrl.u32 %v1518, 7
  %v1520 = vsub.s32 3, %v1519
  %v1521 = vrot.slane %v1504, %v1520
  %v1558 = vunpack.c.l.b16 %v1471
  %v1559 = vunpack.c.h.b16 %v1471
  %v1560 = vunpack.c.l.b16 %v1472
  %v1561 = vunpack.c.h.b16 %v1472
  %v1562 = vunpack.c.l.b16 %v1473
  %v1563 = vunpack.c.h.b16 %v1473
  %v1564 = vunpack.c.l.b16 %v1474
  %v1565 = vunpack.c.h.b16 %v1474
  %v1566 = vunpack.c.l.b16 %v1475
  %v1567 = vunpack.c.h.b16 %v1475
  %v1568 = vunpack.c.l.b16 %v1476
  %v1569 = vunpack.c.h.b16 %v1476
  %v1570 = vunpack.c.l.b16 %v1477
  %v1571 = vunpack.c.h.b16 %v1477
  %v1572 = vunpack.c.l.b16 %v1478
  %v1573 = vunpack.c.h.b16 %v1478
  %v1574 = vunpack.c.l.b16 %v1479
  %v1575 = vunpack.c.h.b16 %v1479
  %v1576 = vunpack.c.l.b16 %v1480
  %v1577 = vunpack.c.h.b16 %v1480
  %v1578 = vunpack.c.l.b16 %v1481
  %v1579 = vunpack.c.h.b16 %v1481
  %v1580 = vunpack.c.l.b16 %v1482
  %v1581 = vunpack.c.h.b16 %v1482
  %v1582 = vunpack.c.l.b16 %v1483
  %v1583 = vunpack.c.h.b16 %v1483
  %v1584 = vunpack.c.l.b16 %v1484
  %v1585 = vunpack.c.h.b16 %v1484
  %v1586 = vunpack.c.l.b16 %v1485
  %v1587 = vunpack.c.h.b16 %v1485
  %v1588 = vunpack.c.l.b16 %v1486
  %v1589 = vunpack.c.h.b16 %v1486
  %v1590 = vunpack.c.l.b16 %v1487
  %v1591 = vunpack.c.h.b16 %v1487
  %v1592 = vunpack.c.l.b16 %v1488
  %v1593 = vunpack.c.h.b16 %v1488
  %v1594 = vunpack.c.l.b16 %v1489
  %v1595 = vunpack.c.h.b16 %v1489
  %v1596 = vunpack.c.l.b16 %v1490
  %v1597 = vunpack.c.h.b16 %v1490
  %v1598 = vunpack.c.l.b16 %v1491
  %v1599 = vunpack.c.h.b16 %v1491
  %v1600 = vunpack.c.l.b16 %v1492
  %v1601 = vunpack.c.h.b16 %v1492
  %v1602 = vunpack.c.l.b16 %v1493
  %v1603 = vunpack.c.h.b16 %v1493
  %v1604 = vunpack.c.l.b16 %v1494
  %v1605 = vunpack.c.h.b16 %v1494
  %v1606 = vunpack.c.l.b16 %v1495
  %v1607 = vunpack.c.h.b16 %v1495
  %v1608 = vunpack.c.l.b16 %v1496
  %v1609 = vunpack.c.h.b16 %v1496
  %v1610 = vunpack.c.l.b16 %v1497
  %v1611 = vunpack.c.h.b16 %v1497
  %v1612 = vunpack.c.l.b16 %v1498
  %v1613 = vunpack.c.h.b16 %v1498
  %v1614 = vunpack.c.l.b16 %v1499
  %v1615 = vunpack.c.h.b16 %v1499
  %v1616 = vunpack.c.l.b16 %v1500
  %v1617 = vunpack.c.h.b16 %v1500
  %v1618 = vunpack.c.l.b16 %v1501
  %v1619 = vunpack.c.h.b16 %v1501
  %v1620 = vunpack.c.l.b16 %v1502
  %v1621 = vunpack.c.h.b16 %v1502
  %v1622 = vpack.c.b16 %v1562, %v1558
  %v1623 = vpack.c.b16 %v1563, %v1559
  %v1624 = vpack.c.b16 %v1564, %v1560
  %v1625 = vpack.c.b16 %v1565, %v1561
  %v1626 = vpack.c.b16 %v1570, %v1566
  %v1627 = vpack.c.b16 %v1571, %v1567
  %v1628 = vpack.c.b16 %v1572, %v1568
  %v1629 = vpack.c.b16 %v1573, %v1569
  %v1630 = vpack.c.b16 %v1578, %v1574
  %v1631 = vpack.c.b16 %v1579, %v1575
  %v1632 = vpack.c.b16 %v1580, %v1576
  %v1633 = vpack.c.b16 %v1581, %v1577
  %v1634 = vpack.c.b16 %v1586, %v1582
  %v1635 = vpack.c.b16 %v1587, %v1583
  %v1636 = vpack.c.b16 %v1588, %v1584
  %v1637 = vpack.c.b16 %v1589, %v1585
  %v1638 = vpack.c.b16 %v1594, %v1590
  %v1639 = vpack.c.b16 %v1595, %v1591
  %v1640 = vpack.c.b16 %v1596, %v1592
  %v1641 = vpack.c.b16 %v1597, %v1593
  %v1642 = vpack.c.b16 %v1602, %v1598
  %v1643 = vpack.c.b16 %v1603, %v1599
  %v1644 = vpack.c.b16 %v1604, %v1600
  %v1645 = vpack.c.b16 %v1605, %v1601
  %v1646 = vpack.c.b16 %v1610, %v1606
  %v1647 = vpack.c.b16 %v1611, %v1607
  %v1648 = vpack.c.b16 %v1612, %v1608
  %v1649 = vpack.c.b16 %v1613, %v1609
  %v1650 = vpack.c.b16 %v1618, %v1614
  %v1651 = vpack.c.b16 %v1619, %v1615
  %v1652 = vpack.c.b16 %v1620, %v1616
  %v1653 = vpack.c.b16 %v1621, %v1617
  %1686 = vmatprep.subr.bf16.mxu0 %v1651
  %1687 = vmatpush1.bf16.msra.mxu0 %v1650
  %1688 = vmatprep.subr.bf16.mxu0 %v1647
  %1689 = vmatpush1.bf16.msra.mxu0 %v1646
  %1690 = vmatprep.subr.bf16.mxu0 %v1643
  %1691 = vmatpush1.bf16.msra.mxu0 %v1642
  %1692 = vmatprep.subr.bf16.mxu0 %v1639
  %1693 = vmatpush1.bf16.msra.mxu0 %v1638
  %1694 = vmatprep.subr.bf16.mxu0 %v1635
  %1695 = vmatpush1.bf16.msra.mxu0 %v1634
  %1696 = vmatprep.subr.bf16.mxu0 %v1631
  %1697 = vmatpush1.bf16.msra.mxu0 %v1630
  %1698 = vmatprep.subr.bf16.mxu0 %v1627
  %1699 = vmatpush1.bf16.msra.mxu0 %v1626
  %1700 = vmatprep.subr.bf16.mxu0 %v1623
  %1701 = vmatpush1.bf16.msra.mxu0 %v1622
  %1702 = vmatprep.subr.bf16.mxu0 0
  %1703 = vmatpush2.bf16.msra.mxu0 0
  %1704 = vmatprep.subr.bf16.mxu0 0
  %1705 = vmatpush2.bf16.msra.mxu0 0
  %1706 = vmatprep.subr.bf16.mxu0 0
  %1707 = vmatpush2.bf16.msra.mxu0 0
  %1708 = vmatprep.subr.bf16.mxu0 0
  %1709 = vmatpush2.bf16.msra.mxu0 0
  %1710 = vmatprep.subr.bf16.mxu0 0
  %1711 = vmatpush2.bf16.msra.mxu0 0
  %1712 = vmatprep.subr.bf16.mxu0 0
  %1713 = vmatpush2.bf16.msra.mxu0 0
  %1714 = vmatprep.subr.bf16.mxu0 0
  %1715 = vmatpush2.bf16.msra.mxu0 0
  %1716 = vmatprep.subr.bf16.mxu0 0
  %1717 = vmatpush2.bf16.msra.mxu0 0
  %1718 = vmatprep.mubr.bf16.mxu0 0
  %1719 = vmatmul.mubr.bf16.gmra.mxu0 %v1503
  %v1720 = vpop.f32.mrf.mxu0
  %v1721 = vadd.f32 %v1509, %v1720
  %v1722 = vpop.f32.mrf.mxu0
  %v1723 = vadd.f32 %v1513, %v1722
  %v1724 = vpop.f32.mrf.mxu0
  %v1725 = vadd.f32 %v1509, %v1724
  %v1726 = vpop.f32.mrf.mxu0
  %v1727 = vadd.f32 %v1513, %v1726
  %1728 = vdwg.mxu0
  %1729 = vmatprep.subr.bf16.mxu0 %v1653
  %1730 = vmatpush1.bf16.msra.mxu0 %v1652
  %1731 = vmatprep.subr.bf16.mxu0 %v1649
  %1732 = vmatpush1.bf16.msra.mxu0 %v1648
  %1733 = vmatprep.subr.bf16.mxu0 %v1645
  %1734 = vmatpush1.bf16.msra.mxu0 %v1644
  %1735 = vmatprep.subr.bf16.mxu0 %v1641
  %1736 = vmatpush1.bf16.msra.mxu0 %v1640
  %1737 = vmatprep.subr.bf16.mxu0 %v1637
  %1738 = vmatpush1.bf16.msra.mxu0 %v1636
  %1739 = vmatprep.subr.bf16.mxu0 %v1633
  %1740 = vmatpush1.bf16.msra.mxu0 %v1632
  %1741 = vmatprep.subr.bf16.mxu0 %v1629
  %1742 = vmatpush1.bf16.msra.mxu0 %v1628
  %1743 = vmatprep.subr.bf16.mxu0 %v1625
  %1744 = vmatpush1.bf16.msra.mxu0 %v1624
  %1745 = vmatprep.subr.bf16.mxu0 0
  %1746 = vmatpush2.bf16.msra.mxu0 0
  %1747 = vmatprep.subr.bf16.mxu0 0
  %1748 = vmatpush2.bf16.msra.mxu0 0
  %1749 = vmatprep.subr.bf16.mxu0 0
  %1750 = vmatpush2.bf16.msra.mxu0 0
  %1751 = vmatprep.subr.bf16.mxu0 0
  %1752 = vmatpush2.bf16.msra.mxu0 0
  %1753 = vmatprep.subr.bf16.mxu0 0
  %1754 = vmatpush2.bf16.msra.mxu0 0
  %1755 = vmatprep.subr.bf16.mxu0 0
  %1756 = vmatpush2.bf16.msra.mxu0 0
  %1757 = vmatprep.subr.bf16.mxu0 0
  %1758 = vmatpush2.bf16.msra.mxu0 0
  %1759 = vmatprep.subr.bf16.mxu0 0
  %1760 = vmatpush2.bf16.msra.mxu0 0
  %1761 = vmatprep.mubr.bf16.mxu0 0
  %1762 = vmatmul.mubr.bf16.gmra.mxu0 %v1503
  %v1763 = vpop.f32.mrf.mxu0
  %v1764 = vadd.f32 %v1517, %v1763
  %v1765 = vpop.f32.mrf.mxu0
  %v1766 = vadd.f32 %v1521, %v1765
  %v1767 = vpop.f32.mrf.mxu0
  %v1768 = vadd.f32 %v1517, %v1767
  %v1769 = vpop.f32.mrf.mxu0
  %v1770 = vadd.f32 %v1521, %v1769
  %1771 = vdwg.mxu0
  %v1772 = vmul.f32 %v1721, %v1721
  %v1773 = vmul.f32 %v1723, %v1723
  %v1774 = vmul.f32 %v1764, %v1764
  %v1775 = vmul.f32 %v1766, %v1766
  %v1776 = vmul.f32 %v1725, %v1725
  %v1777 = vmul.f32 %v1727, %v1727
  %v1778 = vmul.f32 %v1768, %v1768
  %v1779 = vmul.f32 %v1770, %v1770
  %v1780 = vmul.f32 %v1721, %v1772
  %v1781 = vmul.f32 %v1723, %v1773
  %v1782 = vmul.f32 %v1764, %v1774
  %v1783 = vmul.f32 %v1766, %v1775
  %v1784 = vmul.f32 %v1725, %v1776
  %v1785 = vmul.f32 %v1727, %v1777
  %v1786 = vmul.f32 %v1768, %v1778
  %v1787 = vmul.f32 %v1770, %v1779
  %v1788 = vmul.f32 %v1780, 0.044715
  %v1789 = vmul.f32 %v1781, 0.044715
  %v1790 = vmul.f32 %v1782, 0.044715
  %v1791 = vmul.f32 %v1783, 0.044715
  %v1792 = vmul.f32 %v1784, 0.044715
  %v1793 = vmul.f32 %v1785, 0.044715
  %v1794 = vmul.f32 %v1786, 0.044715
  %v1795 = vmul.f32 %v1787, 0.044715
  %v1796 = vadd.f32 %v1721, %v1788
  %v1797 = vadd.f32 %v1723, %v1789
  %v1798 = vadd.f32 %v1764, %v1790
  %v1799 = vadd.f32 %v1766, %v1791
  %v1800 = vadd.f32 %v1725, %v1792
  %v1801 = vadd.f32 %v1727, %v1793
  %v1802 = vadd.f32 %v1768, %v1794
  %v1803 = vadd.f32 %v1770, %v1795
  %v1804 = vmul.f32 %v1796, 0.7978846
  %v1805 = vmul.f32 %v1797, 0.7978846
  %v1806 = vmul.f32 %v1798, 0.7978846
  %v1807 = vmul.f32 %v1799, 0.7978846
  %v1808 = vmul.f32 %v1800, 0.7978846
  %v1809 = vmul.f32 %v1801, 0.7978846
  %v1810 = vmul.f32 %v1802, 0.7978846
  %v1811 = vmul.f32 %v1803, 0.7978846
  %v1812 = vtanh.pop %v1804
  %v1813 = vtanh.pop %v1805
  %v1814 = vtanh.pop %v1806
  %v1815 = vtanh.pop %v1807
  %v1816 = vtanh.pop %v1808
  %v1817 = vtanh.pop %v1809
  %v1818 = vtanh.pop %v1810
  %v1819 = vtanh.pop %v1811
  %v1820 = vadd.f32 %v1812, 1.0
  %v1821 = vadd.f32 %v1813, 1.0
  %v1822 = vadd.f32 %v1814, 1.0
  %v1823 = vadd.f32 %v1815, 1.0
  %v1824 = vadd.f32 %v1816, 1.0
  %v1825 = vadd.f32 %v1817, 1.0
  %v1826 = vadd.f32 %v1818, 1.0
  %v1827 = vadd.f32 %v1819, 1.0
  %v1828 = vmul.f32 %v1820, 0.5
  %v1829 = vmul.f32 %v1821, 0.5
  %v1830 = vmul.f32 %v1822, 0.5
  %v1831 = vmul.f32 %v1823, 0.5
  %v1832 = vmul.f32 %v1824, 0.5
  %v1833 = vmul.f32 %v1825, 0.5
  %v1834 = vmul.f32 %v1826, 0.5
  %v1835 = vmul.f32 %v1827, 0.5
  %v1836 = vmul.f32 %v1721, %v1828
  %v1837 = vmul.f32 %v1723, %v1829
  %v1838 = vmul.f32 %v1764, %v1830
  %v1839 = vmul.f32 %v1766, %v1831
  %v1840 = vmul.f32 %v1725, %v1832
  %v1841 = vmul.f32 %v1727, %v1833
  %v1842 = vmul.f32 %v1768, %v1834
  %v1843 = vmul.f32 %v1770, %v1835
  %v1844 = vld [vmem:[%s12] sm:$0xf]
  %v1845 = vld [vmem:[%s12 + $0x4] sm:$0xf]
  %v1846 = vld [vmem:[%s12 + $0x8] sm:$0xf]
  %v1847 = vld [vmem:[%s12 + $0xc] sm:$0xf]
  %v1848 = vld [vmem:[%s12 + $0x10] sm:$0xf]
  %v1849 = vld [vmem:[%s12 + $0x14] sm:$0xf]
  %v1850 = vld [vmem:[%s12 + $0x18] sm:$0xf]
  %v1851 = vld [vmem:[%s12 + $0x1c] sm:$0xf]
  %v1852 = vld [vmem:[%s12 + $0x20] sm:$0xf]
  %v1853 = vld [vmem:[%s12 + $0x24] sm:$0xf]
  %v1854 = vld [vmem:[%s12 + $0x28] sm:$0xf]
  %v1855 = vld [vmem:[%s12 + $0x2c] sm:$0xf]
  %v1856 = vld [vmem:[%s12 + $0x30] sm:$0xf]
  %v1857 = vld [vmem:[%s12 + $0x34] sm:$0xf]
  %v1858 = vld [vmem:[%s12 + $0x38] sm:$0xf]
  %v1859 = vld [vmem:[%s12 + $0x3c] sm:$0xf]
  %v1860 = vld [vmem:[%s12 + $0x40] sm:$0xf]
  %v1861 = vld [vmem:[%s12 + $0x44] sm:$0xf]
  %v1862 = vld [vmem:[%s12 + $0x48] sm:$0xf]
  %v1863 = vld [vmem:[%s12 + $0x4c] sm:$0xf]
  %v1864 = vld [vmem:[%s12 + $0x50] sm:$0xf]
  %v1865 = vld [vmem:[%s12 + $0x54] sm:$0xf]
  %v1866 = vld [vmem:[%s12 + $0x58] sm:$0xf]
  %v1867 = vld [vmem:[%s12 + $0x5c] sm:$0xf]
  %v1868 = vld [vmem:[%s12 + $0x60] sm:$0xf]
  %v1869 = vld [vmem:[%s12 + $0x64] sm:$0xf]
  %v1870 = vld [vmem:[%s12 + $0x68] sm:$0xf]
  %v1871 = vld [vmem:[%s12 + $0x6c] sm:$0xf]
  %v1872 = vld [vmem:[%s12 + $0x70] sm:$0xf]
  %v1873 = vld [vmem:[%s12 + $0x74] sm:$0xf]
  %v1874 = vld [vmem:[%s12 + $0x78] sm:$0xf]
  %v1875 = vld [vmem:[%s12 + $0x7c] sm:$0xf]
  %v1876 = vld [vmem:[%s12 + $0x80] sm:$0xf]
  %v1877 = vld [vmem:[%s12 + $0x84] sm:$0xf]
  %v1878 = vld [vmem:[%s12 + $0x88] sm:$0xf]
  %v1879 = vld [vmem:[%s12 + $0x8c] sm:$0xf]
  %v1880 = vld [vmem:[%s12 + $0x90] sm:$0xf]
  %v1881 = vld [vmem:[%s12 + $0x94] sm:$0xf]
  %v1882 = vld [vmem:[%s12 + $0x98] sm:$0xf]
  %v1883 = vld [vmem:[%s12 + $0x9c] sm:$0xf]
  %v1884 = vld [vmem:[%s12 + $0xa0] sm:$0xf]
  %v1885 = vld [vmem:[%s12 + $0xa4] sm:$0xf]
  %v1886 = vld [vmem:[%s12 + $0xa8] sm:$0xf]
  %v1887 = vld [vmem:[%s12 + $0xac] sm:$0xf]
  %v1888 = vld [vmem:[%s12 + $0xb0] sm:$0xf]
  %v1889 = vld [vmem:[%s12 + $0xb4] sm:$0xf]
  %v1890 = vld [vmem:[%s12 + $0xb8] sm:$0xf]
  %v1891 = vld [vmem:[%s12 + $0xbc] sm:$0xf]
  %v1892 = vld [vmem:[%s12 + $0xc0] sm:$0xf]
  %v1893 = vld [vmem:[%s12 + $0xc4] sm:$0xf]
  %v1894 = vld [vmem:[%s12 + $0xc8] sm:$0xf]
  %v1895 = vld [vmem:[%s12 + $0xcc] sm:$0xf]
  %v1896 = vld [vmem:[%s12 + $0xd0] sm:$0xf]
  %v1897 = vld [vmem:[%s12 + $0xd4] sm:$0xf]
  %v1898 = vld [vmem:[%s12 + $0xd8] sm:$0xf]
  %v1899 = vld [vmem:[%s12 + $0xdc] sm:$0xf]
  %v1900 = vld [vmem:[%s12 + $0xe0] sm:$0xf]
  %v1901 = vld [vmem:[%s12 + $0xe4] sm:$0xf]
  %v1902 = vld [vmem:[%s12 + $0xe8] sm:$0xf]
  %v1903 = vld [vmem:[%s12 + $0xec] sm:$0xf]
  %v1904 = vld [vmem:[%s12 + $0xf0] sm:$0xf]
  %v1905 = vld [vmem:[%s12 + $0xf4] sm:$0xf]
  %v1906 = vld [vmem:[%s12 + $0xf8] sm:$0xf]
  %v1907 = vld [vmem:[%s12 + $0xfc] sm:$0xf]
  %v1908 = vpack.c.bf16 %v1840, %v1836
  %v1909 = vpack.c.bf16 %v1841, %v1837
  %v1910 = vpack.c.bf16 %v1842, %v1838
  %v1911 = vpack.c.bf16 %v1843, %v1839
  %v1912 = vld [vmem:[%s13] sm:$0x1]
  %v1914 = vlaneseq
  %v1915 = vshrl.u32 %v1914, 7
  %v1916 = vsub.s32 0, %v1915
  %v1917 = vrot.slane %v1912, %v1916
  %v1983 = vunpack.c.l.b16 %v1844
  %v1984 = vunpack.c.l.b16 %v1845
  %v1985 = vunpack.c.l.b16 %v1846
  %v1986 = vunpack.c.l.b16 %v1847
  %v1987 = vunpack.c.l.b16 %v1848
  %v1988 = vunpack.c.l.b16 %v1849
  %v1989 = vunpack.c.l.b16 %v1850
  %v1990 = vunpack.c.l.b16 %v1851
  %v1991 = vunpack.c.l.b16 %v1852
  %v1992 = vunpack.c.l.b16 %v1853
  %v1993 = vunpack.c.l.b16 %v1854
  %v1994 = vunpack.c.l.b16 %v1855
  %v1995 = vunpack.c.l.b16 %v1856
  %v1996 = vunpack.c.l.b16 %v1857
  %v1997 = vunpack.c.l.b16 %v1858
  %v1998 = vunpack.c.l.b16 %v1859
  %v1999 = vunpack.c.l.b16 %v1860
  %v2000 = vunpack.c.l.b16 %v1861
  %v2001 = vunpack.c.l.b16 %v1862
  %v2002 = vunpack.c.l.b16 %v1863
  %v2003 = vunpack.c.l.b16 %v1864
  %v2004 = vunpack.c.l.b16 %v1865
  %v2005 = vunpack.c.l.b16 %v1866
  %v2006 = vunpack.c.l.b16 %v1867
  %v2007 = vunpack.c.l.b16 %v1868
  %v2008 = vunpack.c.l.b16 %v1869
  %v2009 = vunpack.c.l.b16 %v1870
  %v2010 = vunpack.c.l.b16 %v1871
  %v2011 = vunpack.c.l.b16 %v1872
  %v2012 = vunpack.c.l.b16 %v1873
  %v2013 = vunpack.c.l.b16 %v1874
  %v2014 = vunpack.c.l.b16 %v1875
  %v2015 = vunpack.c.l.b16 %v1876
  %v2016 = vunpack.c.l.b16 %v1877
  %v2017 = vunpack.c.l.b16 %v1878
  %v2018 = vunpack.c.l.b16 %v1879
  %v2019 = vunpack.c.l.b16 %v1880
  %v2020 = vunpack.c.l.b16 %v1881
  %v2021 = vunpack.c.l.b16 %v1882
  %v2022 = vunpack.c.l.b16 %v1883
  %v2023 = vunpack.c.l.b16 %v1884
  %v2024 = vunpack.c.l.b16 %v1885
  %v2025 = vunpack.c.l.b16 %v1886
  %v2026 = vunpack.c.l.b16 %v1887
  %v2027 = vunpack.c.l.b16 %v1888
  %v2028 = vunpack.c.l.b16 %v1889
  %v2029 = vunpack.c.l.b16 %v1890
  %v2030 = vunpack.c.l.b16 %v1891
  %v2031 = vunpack.c.l.b16 %v1892
  %v2032 = vunpack.c.l.b16 %v1893
  %v2033 = vunpack.c.l.b16 %v1894
  %v2034 = vunpack.c.l.b16 %v1895
  %v2035 = vunpack.c.l.b16 %v1896
  %v2036 = vunpack.c.l.b16 %v1897
  %v2037 = vunpack.c.l.b16 %v1898
  %v2038 = vunpack.c.l.b16 %v1899
  %v2039 = vunpack.c.l.b16 %v1900
  %v2040 = vunpack.c.l.b16 %v1901
  %v2041 = vunpack.c.l.b16 %v1902
  %v2042 = vunpack.c.l.b16 %v1903
  %v2043 = vunpack.c.l.b16 %v1904
  %v2044 = vunpack.c.l.b16 %v1905
  %v2045 = vunpack.c.l.b16 %v1906
  %v2046 = vunpack.c.l.b16 %v1907
  %v2047 = vpack.c.b16 %v1984, %v1983
  %v2048 = vpack.c.b16 %v1986, %v1985
  %v2049 = vpack.c.b16 %v1988, %v1987
  %v2050 = vpack.c.b16 %v1990, %v1989
  %v2051 = vpack.c.b16 %v1992, %v1991
  %v2052 = vpack.c.b16 %v1994, %v1993
  %v2053 = vpack.c.b16 %v1996, %v1995
  %v2054 = vpack.c.b16 %v1998, %v1997
  %v2055 = vpack.c.b16 %v2000, %v1999
  %v2056 = vpack.c.b16 %v2002, %v2001
  %v2057 = vpack.c.b16 %v2004, %v2003
  %v2058 = vpack.c.b16 %v2006, %v2005
  %v2059 = vpack.c.b16 %v2008, %v2007
  %v2060 = vpack.c.b16 %v2010, %v2009
  %v2061 = vpack.c.b16 %v2012, %v2011
  %v2062 = vpack.c.b16 %v2014, %v2013
  %v2063 = vpack.c.b16 %v2016, %v2015
  %v2064 = vpack.c.b16 %v2018, %v2017
  %v2065 = vpack.c.b16 %v2020, %v2019
  %v2066 = vpack.c.b16 %v2022, %v2021
  %v2067 = vpack.c.b16 %v2024, %v2023
  %v2068 = vpack.c.b16 %v2026, %v2025
  %v2069 = vpack.c.b16 %v2028, %v2027
  %v2070 = vpack.c.b16 %v2030, %v2029
  %v2071 = vpack.c.b16 %v2032, %v2031
  %v2072 = vpack.c.b16 %v2034, %v2033
  %v2073 = vpack.c.b16 %v2036, %v2035
  %v2074 = vpack.c.b16 %v2038, %v2037
  %v2075 = vpack.c.b16 %v2040, %v2039
  %v2076 = vpack.c.b16 %v2042, %v2041
  %v2077 = vpack.c.b16 %v2044, %v2043
  %v2078 = vpack.c.b16 %v2046, %v2045
  %2111 = vmatprep.subr.bf16.mxu0 0
  %2112 = vmatpush1.bf16.msra.mxu0 %v2054
  %2113 = vmatprep.subr.bf16.mxu0 0
  %2114 = vmatpush1.bf16.msra.mxu0 %v2053
  %2115 = vmatprep.subr.bf16.mxu0 0
  %2116 = vmatpush1.bf16.msra.mxu0 %v2052
  %2117 = vmatprep.subr.bf16.mxu0 0
  %2118 = vmatpush1.bf16.msra.mxu0 %v2051
  %2119 = vmatprep.subr.bf16.mxu0 0
  %2120 = vmatpush1.bf16.msra.mxu0 %v2050
  %2121 = vmatprep.subr.bf16.mxu0 0
  %2122 = vmatpush1.bf16.msra.mxu0 %v2049
  %2123 = vmatprep.subr.bf16.mxu0 0
  %2124 = vmatpush1.bf16.msra.mxu0 %v2048
  %2125 = vmatprep.subr.bf16.mxu0 0
  %2126 = vmatpush1.bf16.msra.mxu0 %v2047
  %2127 = vmatprep.subr.bf16.mxu0 0
  %2128 = vmatpush2.bf16.msra.mxu0 %v2062
  %2129 = vmatprep.subr.bf16.mxu0 0
  %2130 = vmatpush2.bf16.msra.mxu0 %v2061
  %2131 = vmatprep.subr.bf16.mxu0 0
  %2132 = vmatpush2.bf16.msra.mxu0 %v2060
  %2133 = vmatprep.subr.bf16.mxu0 0
  %2134 = vmatpush2.bf16.msra.mxu0 %v2059
  %2135 = vmatprep.subr.bf16.mxu0 0
  %2136 = vmatpush2.bf16.msra.mxu0 %v2058
  %2137 = vmatprep.subr.bf16.mxu0 0
  %2138 = vmatpush2.bf16.msra.mxu0 %v2057
  %2139 = vmatprep.subr.bf16.mxu0 0
  %2140 = vmatpush2.bf16.msra.mxu0 %v2056
  %2141 = vmatprep.subr.bf16.mxu0 0
  %2142 = vmatpush2.bf16.msra.mxu0 %v2055
  %2143 = vmatprep.mubr.bf16.mxu0 %v1909
  %2144 = vmatmul.mubr.bf16.gmra.mxu0 %v1908
  %v2145 = vpop.f32.mrf.mxu0
  %v2146 = vadd.f32 %v1917, %v2145
  %v2147 = vpop.f32.mrf.mxu0
  %v2148 = vpop.f32.mrf.mxu0
  %v2149 = vadd.f32 %v1917, %v2148
  %v2150 = vpop.f32.mrf.mxu0
  %2151 = vdwg.mxu0
  %2152 = vmatprep.subr.bf16.mxu0 0
  %2153 = vmatpush1.bf16.msra.mxu0 %v2070
  %2154 = vmatprep.subr.bf16.mxu0 0
  %2155 = vmatpush1.bf16.msra.mxu0 %v2069
  %2156 = vmatprep.subr.bf16.mxu0 0
  %2157 = vmatpush1.bf16.msra.mxu0 %v2068
  %2158 = vmatprep.subr.bf16.mxu0 0
  %2159 = vmatpush1.bf16.msra.mxu0 %v2067
  %2160 = vmatprep.subr.bf16.mxu0 0
  %2161 = vmatpush1.bf16.msra.mxu0 %v2066
  %2162 = vmatprep.subr.bf16.mxu0 0
  %2163 = vmatpush1.bf16.msra.mxu0 %v2065
  %2164 = vmatprep.subr.bf16.mxu0 0
  %2165 = vmatpush1.bf16.msra.mxu0 %v2064
  %2166 = vmatprep.subr.bf16.mxu0 0
  %2167 = vmatpush1.bf16.msra.mxu0 %v2063
  %2168 = vmatprep.subr.bf16.mxu0 0
  %2169 = vmatpush2.bf16.msra.mxu0 %v2078
  %2170 = vmatprep.subr.bf16.mxu0 0
  %2171 = vmatpush2.bf16.msra.mxu0 %v2077
  %2172 = vmatprep.subr.bf16.mxu0 0
  %2173 = vmatpush2.bf16.msra.mxu0 %v2076
  %2174 = vmatprep.subr.bf16.mxu0 0
  %2175 = vmatpush2.bf16.msra.mxu0 %v2075
  %2176 = vmatprep.subr.bf16.mxu0 0
  %2177 = vmatpush2.bf16.msra.mxu0 %v2074
  %2178 = vmatprep.subr.bf16.mxu0 0
  %2179 = vmatpush2.bf16.msra.mxu0 %v2073
  %2180 = vmatprep.subr.bf16.mxu0 0
  %2181 = vmatpush2.bf16.msra.mxu0 %v2072
  %2182 = vmatprep.subr.bf16.mxu0 0
  %2183 = vmatpush2.bf16.msra.mxu0 %v2071
  %2184 = vmatprep.mubr.bf16.mxu0 %v1911
  %2185 = vmatmul.mubr.bf16.gmra.mxu0 %v1910
  %v2186 = vpop.f32.mrf.mxu0
  %v2187 = vadd.f32 %v2146, %v2186
  %v2188 = vpop.f32.mrf.mxu0
  %v2189 = vpop.f32.mrf.mxu0
  %v2190 = vadd.f32 %v2149, %v2189
  %v2191 = vpop.f32.mrf.mxu0
  %2192 = vdwg.mxu0
  %v2193 = vadd.f32 %v1469, %v2187
  %v2194 = vadd.f32 %v1470, %v2190
  %v2195 = vld [vmem:[%s14] sm:$0x1]
  %v2196 = vld [vmem:[%s15] sm:$0x1]
  %2197 = vadd.xlane.f32.xlu0 %v2193
  %v2198 = vpop.xlane.xlu0 %2197
  %2199 = vadd.xlane.f32.xlu0 %v2194
  %v2200 = vpop.xlane.xlu0 %2199
  %v2201 = vmul.f32 %v2198, %v1436
  %v2202 = vmul.f32 %v2200, %v1436
  %v2203 = vsub.f32 %v2193, %v2201
  %v2204 = vsub.f32 %v2194, %v2202
  %v2205 = vmul.f32 %v2203, %v2203
  %v2206 = vmul.f32 %v2204, %v2204
  %2207 = vadd.xlane.f32.xlu0 %v2205
  %v2208 = vpop.xlane.xlu0 %2207
  %2209 = vadd.xlane.f32.xlu0 %v2206
  %v2210 = vpop.xlane.xlu0 %2209
  %v2211 = vmul.f32 %v2208, %v1436
  %v2212 = vmul.f32 %v2210, %v1436
  %v2213 = vadd.f32 %v2211, 1e-05
  %v2214 = vadd.f32 %v2212, 1e-05
  %v2215 = vrsqrt.pop %v2213
  %v2216 = vrsqrt.pop %v2214
  %v2217 = vmul.f32 %v2203, %v2215
  %v2218 = vmul.f32 %v2204, %v2216
  %v2220 = vlaneseq
  %v2221 = vshrl.u32 %v2220, 7
  %v2222 = vsub.s32 0, %v2221
  %v2223 = vrot.slane %v2195, %v2222
  %v2225 = vmul.f32 %v2217, %v2223
  %v2226 = vmul.f32 %v2218, %v2223
  %v2228 = vlaneseq
  %v2229 = vshrl.u32 %v2228, 7
  %v2230 = vsub.s32 0, %v2229
  %v2231 = vrot.slane %v2196, %v2230
  %v2233 = vadd.f32 %v2225, %v2231
  %v2234 = vadd.f32 %v2226, %v2231
  %2235 = vst [vmem:[%s16] sm:$0xff] %v2233
  %2236 = vst [vmem:[%s16 + $0x8] sm:$0xff] %v2234
  // Predicated region
  $region70: #{forward.4} parent=0 // pred_check
    _
  $region71: #{forward.4} parent=0 // pred_check_branch
    %2238 = sbr.rel (0) target = $region73
  $region72: #{forward.4} parent=0 // pred_region
    _
  $region73: #{forward.4} parent=0 // pred_fallthru
    _
  // Predicated region
  $region74: #{forward.4} parent=0 // pred_check
    _
  $region75: #{forward.4} parent=0 // pred_check_branch
    %2240 = sbr.rel (0) target = $region77
  $region76: #{forward.4} parent=0 // pred_region
    _
  $region77: #{forward.4} parent=0 // pred_fallthru
    _

</llo_original>
